<compile_context>
chip_gen: v6e
topology: v6e:2x2x1
jax: 0.10.0
libtpu: 0.0.40
codegen_flags: <defaults>
</compile_context>

<pallas_src>
import functools

import jax
import jax.numpy as jnp
from jax.experimental import pallas as pl
from jax.experimental.pallas import tpu as pltpu

EPS = 1e-5  # LayerNorm epsilon, use_fast_variance=False semantics, no affine on x.


def _ln(x):
    """LayerNorm over last axis, no affine, f32 math."""
    mu = jnp.mean(x, axis=-1, keepdims=True)
    xc = x - mu
    var = jnp.mean(xc * xc, axis=-1, keepdims=True)
    return xc * jax.lax.rsqrt(var + EPS)


# Order must match the kernel signature (weights section).
_P_NAMES = (
    "gamma_q", "w_adaln_q", "b_scale_q",
    "gamma_k", "w_adaln_k", "b_scale_k",
    "w_qg", "b_qg", "w_kv",
    "w_t2", "w_azc", "b_azc",
)


def _cross_attention_kernel(*refs, num_head, head_key_dim, head_value_dim, has_pair):
    if has_pair:
        (xq_ref, xk_ref, mq_ref, mk_ref, plog_ref, scq_ref, sck_ref,
         gq_ref, wqa_ref, bqs_ref,
         gk_ref, wka_ref, bks_ref,
         wqg_ref, bqg_ref, wkv_ref,
         wt2_ref, wazc_ref, bazc_ref,
         out_ref) = refs
    else:
        plog_ref = None
        (xq_ref, xk_ref, mq_ref, mk_ref, scq_ref, sck_ref,
         gq_ref, wqa_ref, bqs_ref,
         gk_ref, wka_ref, bks_ref,
         wqg_ref, bqg_ref, wkv_ref,
         wt2_ref, wazc_ref, bazc_ref,
         out_ref) = refs

    f32, bf16 = jnp.float32, jnp.bfloat16
    H, dk, dv = num_head, head_key_dim, head_value_dim
    Bt, N_q, C = xq_ref.shape
    N_k = xk_ref.shape[1]

    # Fold batch tile into the matmul row dimension (shared weights across batch).
    xq_raw = xq_ref[...].astype(f32).reshape(Bt * N_q, C)
    xk_raw = xk_ref[...].astype(f32).reshape(Bt * N_k, C)
    scq_raw = scq_ref[...].astype(f32).reshape(Bt * N_q, C)
    sck_raw = sck_ref[...].astype(f32).reshape(Bt * N_k, C)

    # --- AdaptiveLayerNorm (queries): fused [scale | bias] projection ---
    scq_n = (_ln(scq_raw) * gq_ref[...]).astype(bf16)
    sb_q = jnp.dot(scq_n, wqa_ref[...], preferred_element_type=f32)
    xq = jax.nn.sigmoid(sb_q[:, :C] + bqs_ref[...]) * _ln(xq_raw) + sb_q[:, C:]

    # --- AdaptiveLayerNorm (keys) ---
    sck_n = (_ln(sck_raw) * gk_ref[...]).astype(bf16)
    sb_k = jnp.dot(sck_n, wka_ref[...], preferred_element_type=f32)
    xk = jax.nn.sigmoid(sb_k[:, :C] + bks_ref[...]) * _ln(xk_raw) + sb_k[:, C:]

    # --- fused projections: [q | gate] from xq, [k | v] from xk (bf16 on MXU) ---
    qg = jnp.dot(xq.astype(bf16), wqg_ref[...], preferred_element_type=f32) + bqg_ref[...]
    q = qg[:, :H * dk]
    gate = qg[:, H * dk:]
    kv = jnp.dot(xk.astype(bf16), wkv_ref[...], preferred_element_type=f32)
    k = kv[:, :H * dk]
    v = kv[:, H * dk:]

    # --- head-major layout -> single batched attention matmul (no per-head loop) ---
    qh = jnp.transpose(q.reshape(Bt, N_q, H, dk), (0, 2, 1, 3)).reshape(Bt * H, N_q, dk)
    kh = jnp.transpose(k.reshape(Bt, N_k, H, dk), (0, 2, 1, 3)).reshape(Bt * H, N_k, dk)
    vh = jnp.transpose(v.reshape(Bt, N_k, H, dv), (0, 2, 1, 3)).reshape(Bt * H, N_k, dv)

    qk_scale = dk ** (-0.5)
    logits = jnp.einsum('bqd,bkd->bqk',
                        (qh * qk_scale).astype(bf16), kh.astype(bf16),
                        preferred_element_type=f32).reshape(Bt, H, N_q, N_k)

    # --- bias fused in-kernel: torch-parity mask term (+ pair logits if given) ---
    mq = mq_ref[...].astype(f32).reshape(Bt, N_q)
    mk = mk_ref[...].astype(f32).reshape(Bt, N_k)
    mask_bias = 1e9 * (mq - 1.0)[:, None, :, None] * (mk - 1.0)[:, None, None, :]
    logits = logits + mask_bias                       # broadcast over H
    if has_pair:
        logits = logits + plog_ref[...].astype(f32)
    logits = logits.reshape(Bt * H, N_q, N_k)

    m = jnp.max(logits, axis=-1, keepdims=True)
    p = jnp.exp(logits - m)
    w = p * pl.reciprocal(jnp.sum(p, axis=-1, keepdims=True), approx=True)
    wa = jnp.einsum('bqk,bkd->bqd', w.astype(bf16), vh.astype(bf16),
                    preferred_element_type=f32)                       # (Bt*H, N_q, dv)
    wa = jnp.transpose(wa.reshape(Bt, H, N_q, dv), (0, 2, 1, 3)).reshape(Bt * N_q, H * dv)

    # --- gating + AdaptiveZeroInit (cond uses RAW single_cond_q) ---
    wa = wa * jax.nn.sigmoid(gate)
    proj = jnp.dot(wa.astype(bf16), wt2_ref[...], preferred_element_type=f32)
    cond = jnp.dot(scq_raw.astype(bf16), wazc_ref[...],
                   preferred_element_type=f32) + bazc_ref[...]
    out = jax.nn.sigmoid(cond) * proj
    out_ref[...] = out.reshape(Bt, N_q, C).astype(out_ref.dtype)


def cross_attention(params, x_q, x_k, mask_q, mask_k, pair_logits=None,
                    single_cond_q=None, single_cond_k=None,
                    *, num_head, key_dim, value_dim, batch_tile=None):
    B, N_q, C = x_q.shape
    N_k = x_k.shape[1]
    H = num_head
    dk = key_dim // H
    dv = value_dim // H
    assert single_cond_q is not None and single_cond_k is not None
    has_pair = pair_logits is not None

    # Fold several batch elements per grid step so matmul M >= ~128 rows.
    if batch_tile is None:
        batch_tile = min(B, max(1, 128 // N_q))
        while B % batch_tile:
            batch_tile -= 1
    bt = batch_tile
    grid = (B // bt,)

    # Reshape masks so the last two BlockSpec dims are full -> always (8,128)-legal.
    mq3 = mask_q.astype(jnp.float32).reshape(B, 1, N_q)
    mk3 = mask_k.astype(jnp.float32).reshape(B, 1, N_k)

    weights = [params[n] for n in _P_NAMES]

    data_specs = [
        pl.BlockSpec((bt, N_q, C), lambda i: (i, 0, 0)),              # x_q
        pl.BlockSpec((bt, N_k, C), lambda i: (i, 0, 0)),              # x_k
        pl.BlockSpec((bt, 1, N_q), lambda i: (i, 0, 0)),              # mask_q
        pl.BlockSpec((bt, 1, N_k), lambda i: (i, 0, 0)),              # mask_k
    ]
    data_args = [x_q, x_k, mq3, mk3]
    if has_pair:
        data_specs.append(pl.BlockSpec((bt, H, N_q, N_k), lambda i: (i, 0, 0, 0)))
        data_args.append(pair_logits)
    data_specs += [
        pl.BlockSpec((bt, N_q, C), lambda i: (i, 0, 0)),              # single_cond_q
        pl.BlockSpec((bt, N_k, C), lambda i: (i, 0, 0)),              # single_cond_k
    ]
    data_args += [single_cond_q, single_cond_k]

    weight_specs = [pl.BlockSpec(w.shape, lambda i: (0, 0)) for w in weights]  # all 2-D

    kernel = functools.partial(_cross_attention_kernel, num_head=H,
                               head_key_dim=dk, head_value_dim=dv,
                               has_pair=has_pair)
    return pl.pallas_call(
        kernel,
        grid=grid,
        in_specs=data_specs + weight_specs,
        out_specs=pl.BlockSpec((bt, N_q, C), lambda i: (i, 0, 0)),
        out_shape=jax.ShapeDtypeStruct((B, N_q, C), x_q.dtype),
        compiler_params=pltpu.CompilerParams(dimension_semantics=("parallel",)),
    )(*data_args, *weights)


# ----------------------------------------------------------------------------
# Pure-JAX reference (mirrors the torch module, f32 everywhere) for validation.
# ----------------------------------------------------------------------------
def cross_attention_reference(params, x_q, x_k, mask_q, mask_k, pair_logits,
                              single_cond_q, single_cond_k,
                              *, num_head, key_dim, value_dim):
    f32 = jnp.float32
    C = x_q.shape[-1]
    H, dk, dv = num_head, key_dim // num_head, value_dim // num_head

    mq = mask_q.astype(f32)
    mk = mask_k.astype(f32)
    bias = 1e9 * (mq - 1.0)[..., None, :, None] * (mk - 1.0)[..., None, None, :]
    if pair_logits is not None:
        bias = bias + pair_logits

    def adaln(x, sc, gamma, w_adaln, b_scale):
        sc_n = _ln(sc) * gamma
        sb = sc_n @ w_adaln.astype(f32)
        return jax.nn.sigmoid(sb[..., :C] + b_scale) * _ln(x) + sb[..., C:]

    xq = adaln(x_q, single_cond_q, params["gamma_q"], params["w_adaln_q"], params["b_scale_q"])
    xk = adaln(x_k, single_cond_k, params["gamma_k"], params["w_adaln_k"], params["b_scale_k"])

    qg = xq @ params["w_qg"].astype(f32) + params["b_qg"]
    q = qg[..., :H * dk].reshape(*xq.shape[:-1], H, dk)
    gate = qg[..., H * dk:]
    kv = xk @ params["w_kv"].astype(f32)
    k = kv[..., :H * dk].reshape(*xk.shape[:-1], H, dk)
    v = kv[..., H * dk:].reshape(*xk.shape[:-1], H, dv)

    logits = jnp.einsum('bqhd,bkhd->bhqk', q * dk ** (-0.5), k) + bias
    w = jax.nn.softmax(logits, axis=-1)
    wa = jnp.einsum('bhqk,bkhd->bqhd', w, v).reshape(*xq.shape[:-1], H * dv)
    wa = wa * jax.nn.sigmoid(gate)
    out = wa @ params["w_t2"].astype(f32)
    cond = single_cond_q @ params["w_azc"].astype(f32) + params["b_azc"]
    return jax.nn.sigmoid(cond) * out


# ----------------------------------------------------------------------------
# Deterministic synthetic parameters (fused layouts; matmul weights in bf16).
# ----------------------------------------------------------------------------
def init_params(key, *, C, H, dk, dv):
    it = iter(jax.random.split(key, 20))

    def nrm(shape, scale=0.05):
        return scale * jax.random.normal(next(it), shape, jnp.float32)

    gamma_q = 1.0 + nrm((1, C), 0.1)
    gamma_k = 1.0 + nrm((1, C), 0.1)
    w_scale_q, w_bias_q, b_scale_q = nrm((C, C)), nrm((C, C)), nrm((1, C))
    w_scale_k, w_bias_k, b_scale_k = nrm((C, C)), nrm((C, C)), nrm((1, C))
    w_q, b_q = nrm((C, H * dk)), nrm((1, H * dk))
    w_k, w_v = nrm((C, H * dk)), nrm((C, H * dv))
    w_gate = nrm((C, C))                       # gating_query (no bias)
    w_t2 = nrm((H * dv, C))                    # AdaptiveZeroInit.transition2 (no bias)
    w_azc, b_azc = nrm((C, C)), nrm((1, C))    # adaptive_zero_cond

    bf16 = jnp.bfloat16
    return {
        "gamma_q": gamma_q,
        "w_adaln_q": jnp.concatenate([w_scale_q, w_bias_q], axis=1).astype(bf16),
        "b_scale_q": b_scale_q,
        "gamma_k": gamma_k,
        "w_adaln_k": jnp.concatenate([w_scale_k, w_bias_k], axis=1).astype(bf16),
        "b_scale_k": b_scale_k,
        "w_qg": jnp.concatenate([w_q, w_gate], axis=1).astype(bf16),
        "b_qg": jnp.concatenate([b_q, jnp.zeros((1, C), jnp.float32)], axis=1),
        "w_kv": jnp.concatenate([w_k, w_v], axis=1).astype(bf16),
        "w_t2": w_t2.astype(bf16),
        "w_azc": w_azc.astype(bf16),
        "b_azc": b_azc,
    }


if __name__ == "__main__":
    # Small shapes consistent with the module config defaults:
    # key_dim = value_dim = 128, num_head = 4 -> per-head dim 32; 16 queries, 32 keys.
    B, N_q, N_k = 4, 16, 32
    H, key_dim, value_dim = 4, 128, 128
    C = value_dim
    dk, dv = key_dim // H, value_dim // H

    key = jax.random.PRNGKey(0)
    kp, k1, k2, k3, k4, k5, k6, k7 = jax.random.split(key, 8)

    params = init_params(kp, C=C, H=H, dk=dk, dv=dv)
    x_q = jax.random.normal(k1, (B, N_q, C), jnp.float32)
    x_k = jax.random.normal(k2, (B, N_k, C), jnp.float32)
    single_cond_q = jax.random.normal(k3, (B, N_q, C), jnp.float32)
    single_cond_k = jax.random.normal(k4, (B, N_k, C), jnp.float32)
    pair_logits = 0.5 * jax.random.normal(k5, (B, H, N_q, N_k), jnp.float32)
    mask_q = (jax.random.uniform(k6, (B, N_q)) > 0.1).astype(jnp.float32)
    mask_k = (jax.random.uniform(k7, (B, N_k)) > 0.1).astype(jnp.float32)

    # With pair_logits
    out = cross_attention(params, x_q, x_k, mask_q, mask_k, pair_logits,
                          single_cond_q, single_cond_k,
                          num_head=H, key_dim=key_dim, value_dim=value_dim)
    out = jax.block_until_ready(out)
    ref = cross_attention_reference(params, x_q, x_k, mask_q, mask_k, pair_logits,
                                    single_cond_q, single_cond_k,
                                    num_head=H, key_dim=key_dim, value_dim=value_dim)
    assert out.shape == (B, N_q, C), out.shape
    assert bool(jnp.isfinite(out).all())
    max_err = float(jnp.max(jnp.abs(out - ref)))
    assert max_err < 5e-2, f"max abs err vs reference (with pair_logits): {max_err}"

    # Without pair_logits (specialized kernel, no zero tensor in HBM)
    out2 = cross_attention(params, x_q, x_k, mask_q, mask_k, None,
                           single_cond_q, single_cond_k,
                           num_head=H, key_dim=key_dim, value_dim=value_dim)
    out2 = jax.block_until_ready(out2)
    ref2 = cross_attention_reference(params, x_q, x_k, mask_q, mask_k, None,
                                     single_cond_q, single_cond_k,
                                     num_head=H, key_dim=key_dim, value_dim=value_dim)
    max_err2 = float(jnp.max(jnp.abs(out2 - ref2)))
    assert max_err2 < 5e-2, f"max abs err vs reference (no pair_logits): {max_err2}"

    print("KERNEL_OK")
</pallas_src>

<mosaic_0001>
module attributes {stable_mosaic.version = 11 : i64} {
  func.func @_cross_attention_kernel(%arg0: i32, %arg1: memref<4x16x128xf32, #tpu.memory_space<vmem>>, %arg2: memref<4x32x128xf32, #tpu.memory_space<vmem>>, %arg3: memref<4x1x16xf32, #tpu.memory_space<vmem>>, %arg4: memref<4x1x32xf32, #tpu.memory_space<vmem>>, %arg5: memref<4x4x16x32xf32, #tpu.memory_space<vmem>>, %arg6: memref<4x16x128xf32, #tpu.memory_space<vmem>>, %arg7: memref<4x32x128xf32, #tpu.memory_space<vmem>>, %arg8: memref<1x128xf32, #tpu.memory_space<vmem>>, %arg9: memref<128x256xbf16, #tpu.memory_space<vmem>>, %arg10: memref<1x128xf32, #tpu.memory_space<vmem>>, %arg11: memref<1x128xf32, #tpu.memory_space<vmem>>, %arg12: memref<128x256xbf16, #tpu.memory_space<vmem>>, %arg13: memref<1x128xf32, #tpu.memory_space<vmem>>, %arg14: memref<128x256xbf16, #tpu.memory_space<vmem>>, %arg15: memref<1x256xf32, #tpu.memory_space<vmem>>, %arg16: memref<128x256xbf16, #tpu.memory_space<vmem>>, %arg17: memref<128x128xbf16, #tpu.memory_space<vmem>>, %arg18: memref<128x128xbf16, #tpu.memory_space<vmem>>, %arg19: memref<1x128xf32, #tpu.memory_space<vmem>>, %arg20: memref<4x16x128xf32, #tpu.memory_space<vmem>>) attributes {dimension_semantics = [#tpu.dimension_semantics<parallel>], iteration_bounds = array<i64: 1>, scalar_prefetch = 0 : i64, scratch_operands = 0 : i64, tpu.core_type = #tpu.core_type<tc>, window_params = [{transform_indices = @transform_0, window_bounds = array<i64: 4, 16, 128>}, {transform_indices = @transform_1, window_bounds = array<i64: 4, 32, 128>}, {transform_indices = @transform_2, window_bounds = array<i64: 4, 1, 16>}, {transform_indices = @transform_3, window_bounds = array<i64: 4, 1, 32>}, {transform_indices = @transform_4, window_bounds = array<i64: 4, 4, 16, 32>}, {transform_indices = @transform_5, window_bounds = array<i64: 4, 16, 128>}, {transform_indices = @transform_6, window_bounds = array<i64: 4, 32, 128>}, {pipeline_mode = #tpu.pipeline_mode<synchronous>, transform_indices = @transform_7, window_bounds = array<i64: 1, 128>}, {pipeline_mode = #tpu.pipeline_mode<synchronous>, transform_indices = @transform_8, window_bounds = array<i64: 128, 256>}, {pipeline_mode = #tpu.pipeline_mode<synchronous>, transform_indices = @transform_9, window_bounds = array<i64: 1, 128>}, {pipeline_mode = #tpu.pipeline_mode<synchronous>, transform_indices = @transform_10, window_bounds = array<i64: 1, 128>}, {pipeline_mode = #tpu.pipeline_mode<synchronous>, transform_indices = @transform_11, window_bounds = array<i64: 128, 256>}, {pipeline_mode = #tpu.pipeline_mode<synchronous>, transform_indices = @transform_12, window_bounds = array<i64: 1, 128>}, {pipeline_mode = #tpu.pipeline_mode<synchronous>, transform_indices = @transform_13, window_bounds = array<i64: 128, 256>}, {pipeline_mode = #tpu.pipeline_mode<synchronous>, transform_indices = @transform_14, window_bounds = array<i64: 1, 256>}, {pipeline_mode = #tpu.pipeline_mode<synchronous>, transform_indices = @transform_15, window_bounds = array<i64: 128, 256>}, {pipeline_mode = #tpu.pipeline_mode<synchronous>, transform_indices = @transform_16, window_bounds = array<i64: 128, 128>}, {pipeline_mode = #tpu.pipeline_mode<synchronous>, transform_indices = @transform_17, window_bounds = array<i64: 128, 128>}, {pipeline_mode = #tpu.pipeline_mode<synchronous>, transform_indices = @transform_18, window_bounds = array<i64: 1, 128>}, {transform_indices = @transform_19, window_bounds = array<i64: 4, 16, 128>}]} {
    %c0 = arith.constant 0 : index
    %c0_0 = arith.constant 0 : index
    %c0_1 = arith.constant 0 : index
    %0 = vector.load %arg1[%c0, %c0_0, %c0_1] : memref<4x16x128xf32, #tpu.memory_space<vmem>>, vector<4x16x128xf32>
    %1 = vector.shape_cast %0 : vector<4x16x128xf32> to vector<64x128xf32>
    %c0_2 = arith.constant 0 : index
    %c0_3 = arith.constant 0 : index
    %c0_4 = arith.constant 0 : index
    %2 = vector.load %arg2[%c0_2, %c0_3, %c0_4] : memref<4x32x128xf32, #tpu.memory_space<vmem>>, vector<4x32x128xf32>
    %3 = vector.shape_cast %2 : vector<4x32x128xf32> to vector<128x128xf32>
    %c0_5 = arith.constant 0 : index
    %c0_6 = arith.constant 0 : index
    %c0_7 = arith.constant 0 : index
    %4 = vector.load %arg6[%c0_5, %c0_6, %c0_7] : memref<4x16x128xf32, #tpu.memory_space<vmem>>, vector<4x16x128xf32>
    %5 = vector.shape_cast %4 : vector<4x16x128xf32> to vector<64x128xf32>
    %c0_8 = arith.constant 0 : index
    %c0_9 = arith.constant 0 : index
    %c0_10 = arith.constant 0 : index
    %6 = vector.load %arg7[%c0_8, %c0_9, %c0_10] : memref<4x32x128xf32, #tpu.memory_space<vmem>>, vector<4x32x128xf32>
    %7 = vector.shape_cast %6 : vector<4x32x128xf32> to vector<128x128xf32>
    %cst = arith.constant dense<0.000000e+00> : vector<64xf32>
    %8 = vector.multi_reduction <add>, %5, %cst [1] : vector<64x128xf32> to vector<64xf32>
    %9 = vector.shape_cast %8 : vector<64xf32> to vector<64x1xf32>
    %cst_11 = arith.constant 1.280000e+02 : f32
    %10 = vector.broadcast %cst_11 : f32 to vector<64x1xf32>
    %11 = arith.divf %9, %10 : vector<64x1xf32>
    %12 = vector.broadcast %11 : vector<64x1xf32> to vector<64x128xf32>
    %13 = arith.subf %5, %12 : vector<64x128xf32>
    %14 = arith.mulf %13, %13 : vector<64x128xf32>
    %cst_12 = arith.constant dense<0.000000e+00> : vector<64xf32>
    %15 = vector.multi_reduction <add>, %14, %cst_12 [1] : vector<64x128xf32> to vector<64xf32>
    %16 = vector.shape_cast %15 : vector<64xf32> to vector<64x1xf32>
    %cst_13 = arith.constant 1.280000e+02 : f32
    %17 = vector.broadcast %cst_13 : f32 to vector<64x1xf32>
    %18 = arith.divf %16, %17 : vector<64x1xf32>
    %cst_14 = arith.constant 9.99999974E-6 : f32
    %19 = vector.broadcast %cst_14 : f32 to vector<64x1xf32>
    %20 = arith.addf %18, %19 : vector<64x1xf32>
    %21 = math.rsqrt %20 : vector<64x1xf32>
    %22 = vector.broadcast %21 : vector<64x1xf32> to vector<64x128xf32>
    %23 = arith.mulf %13, %22 : vector<64x128xf32>
    %c0_15 = arith.constant 0 : index
    %c0_16 = arith.constant 0 : index
    %24 = vector.load %arg8[%c0_15, %c0_16] : memref<1x128xf32, #tpu.memory_space<vmem>>, vector<1x128xf32>
    %25 = vector.broadcast %24 : vector<1x128xf32> to vector<64x128xf32>
    %26 = arith.mulf %23, %25 : vector<64x128xf32>
    %27 = arith.truncf %26 : vector<64x128xf32> to vector<64x128xbf16>
    %c0_17 = arith.constant 0 : index
    %c0_18 = arith.constant 0 : index
    %28 = vector.load %arg9[%c0_17, %c0_18] : memref<128x256xbf16, #tpu.memory_space<vmem>>, vector<128x256xbf16>
    %cst_19 = arith.constant dense<0.000000e+00> : vector<64x256xf32>
    %29 = tpu.matmul %27, %28, %cst_19 {dimension_numbers = #tpu.dot_dimension_numbers<[1], [0], [0], [1], [0, 0, 1, 1], [], []>} : vector<64x128xbf16>, vector<128x256xbf16>, vector<64x256xf32> -> vector<64x256xf32>
    %30 = vector.extract_strided_slice %29 {offsets = [0, 0], sizes = [64, 128], strides = [1, 1]} : vector<64x256xf32> to vector<64x128xf32>
    %c0_20 = arith.constant 0 : index
    %c0_21 = arith.constant 0 : index
    %31 = vector.load %arg10[%c0_20, %c0_21] : memref<1x128xf32, #tpu.memory_space<vmem>>, vector<1x128xf32>
    %32 = vector.broadcast %31 : vector<1x128xf32> to vector<64x128xf32>
    %33 = arith.addf %30, %32 : vector<64x128xf32>
    %34 = arith.negf %33 : vector<64x128xf32>
    %35 = math.exp %34 : vector<64x128xf32>
    %cst_22 = arith.constant 1.000000e+00 : f32
    %36 = vector.broadcast %cst_22 : f32 to vector<64x128xf32>
    %37 = arith.addf %36, %35 : vector<64x128xf32>
    %38 = arith.divf %36, %37 : vector<64x128xf32>
    %cst_23 = arith.constant dense<0.000000e+00> : vector<64xf32>
    %39 = vector.multi_reduction <add>, %1, %cst_23 [1] : vector<64x128xf32> to vector<64xf32>
    %40 = vector.shape_cast %39 : vector<64xf32> to vector<64x1xf32>
    %cst_24 = arith.constant 1.280000e+02 : f32
    %41 = vector.broadcast %cst_24 : f32 to vector<64x1xf32>
    %42 = arith.divf %40, %41 : vector<64x1xf32>
    %43 = vector.broadcast %42 : vector<64x1xf32> to vector<64x128xf32>
    %44 = arith.subf %1, %43 : vector<64x128xf32>
    %45 = arith.mulf %44, %44 : vector<64x128xf32>
    %cst_25 = arith.constant dense<0.000000e+00> : vector<64xf32>
    %46 = vector.multi_reduction <add>, %45, %cst_25 [1] : vector<64x128xf32> to vector<64xf32>
    %47 = vector.shape_cast %46 : vector<64xf32> to vector<64x1xf32>
    %cst_26 = arith.constant 1.280000e+02 : f32
    %48 = vector.broadcast %cst_26 : f32 to vector<64x1xf32>
    %49 = arith.divf %47, %48 : vector<64x1xf32>
    %cst_27 = arith.constant 9.99999974E-6 : f32
    %50 = vector.broadcast %cst_27 : f32 to vector<64x1xf32>
    %51 = arith.addf %49, %50 : vector<64x1xf32>
    %52 = math.rsqrt %51 : vector<64x1xf32>
    %53 = vector.broadcast %52 : vector<64x1xf32> to vector<64x128xf32>
    %54 = arith.mulf %44, %53 : vector<64x128xf32>
    %55 = arith.mulf %38, %54 : vector<64x128xf32>
    %56 = vector.extract_strided_slice %29 {offsets = [0, 128], sizes = [64, 128], strides = [1, 1]} : vector<64x256xf32> to vector<64x128xf32>
    %57 = arith.addf %55, %56 : vector<64x128xf32>
    %cst_28 = arith.constant dense<0.000000e+00> : vector<128xf32>
    %58 = vector.multi_reduction <add>, %7, %cst_28 [1] : vector<128x128xf32> to vector<128xf32>
    %59 = vector.shape_cast %58 : vector<128xf32> to vector<128x1xf32>
    %cst_29 = arith.constant 1.280000e+02 : f32
    %60 = vector.broadcast %cst_29 : f32 to vector<128x1xf32>
    %61 = arith.divf %59, %60 : vector<128x1xf32>
    %62 = vector.broadcast %61 : vector<128x1xf32> to vector<128x128xf32>
    %63 = arith.subf %7, %62 : vector<128x128xf32>
    %64 = arith.mulf %63, %63 : vector<128x128xf32>
    %cst_30 = arith.constant dense<0.000000e+00> : vector<128xf32>
    %65 = vector.multi_reduction <add>, %64, %cst_30 [1] : vector<128x128xf32> to vector<128xf32>
    %66 = vector.shape_cast %65 : vector<128xf32> to vector<128x1xf32>
    %cst_31 = arith.constant 1.280000e+02 : f32
    %67 = vector.broadcast %cst_31 : f32 to vector<128x1xf32>
    %68 = arith.divf %66, %67 : vector<128x1xf32>
    %cst_32 = arith.constant 9.99999974E-6 : f32
    %69 = vector.broadcast %cst_32 : f32 to vector<128x1xf32>
    %70 = arith.addf %68, %69 : vector<128x1xf32>
    %71 = math.rsqrt %70 : vector<128x1xf32>
    %72 = vector.broadcast %71 : vector<128x1xf32> to vector<128x128xf32>
    %73 = arith.mulf %63, %72 : vector<128x128xf32>
    %c0_33 = arith.constant 0 : index
    %c0_34 = arith.constant 0 : index
    %74 = vector.load %arg11[%c0_33, %c0_34] : memref<1x128xf32, #tpu.memory_space<vmem>>, vector<1x128xf32>
    %75 = vector.broadcast %74 : vector<1x128xf32> to vector<128x128xf32>
    %76 = arith.mulf %73, %75 : vector<128x128xf32>
    %77 = arith.truncf %76 : vector<128x128xf32> to vector<128x128xbf16>
    %c0_35 = arith.constant 0 : index
    %c0_36 = arith.constant 0 : index
    %78 = vector.load %arg12[%c0_35, %c0_36] : memref<128x256xbf16, #tpu.memory_space<vmem>>, vector<128x256xbf16>
    %cst_37 = arith.constant dense<0.000000e+00> : vector<128x256xf32>
    %79 = tpu.matmul %77, %78, %cst_37 {dimension_numbers = #tpu.dot_dimension_numbers<[1], [0], [0], [1], [0, 0, 1, 1], [], []>} : vector<128x128xbf16>, vector<128x256xbf16>, vector<128x256xf32> -> vector<128x256xf32>
    %80 = vector.extract_strided_slice %79 {offsets = [0, 0], sizes = [128, 128], strides = [1, 1]} : vector<128x256xf32> to vector<128x128xf32>
    %c0_38 = arith.constant 0 : index
    %c0_39 = arith.constant 0 : index
    %81 = vector.load %arg13[%c0_38, %c0_39] : memref<1x128xf32, #tpu.memory_space<vmem>>, vector<1x128xf32>
    %82 = vector.broadcast %81 : vector<1x128xf32> to vector<128x128xf32>
    %83 = arith.addf %80, %82 : vector<128x128xf32>
    %84 = arith.negf %83 : vector<128x128xf32>
    %85 = math.exp %84 : vector<128x128xf32>
    %cst_40 = arith.constant 1.000000e+00 : f32
    %86 = vector.broadcast %cst_40 : f32 to vector<128x128xf32>
    %87 = arith.addf %86, %85 : vector<128x128xf32>
    %88 = arith.divf %86, %87 : vector<128x128xf32>
    %cst_41 = arith.constant dense<0.000000e+00> : vector<128xf32>
    %89 = vector.multi_reduction <add>, %3, %cst_41 [1] : vector<128x128xf32> to vector<128xf32>
    %90 = vector.shape_cast %89 : vector<128xf32> to vector<128x1xf32>
    %cst_42 = arith.constant 1.280000e+02 : f32
    %91 = vector.broadcast %cst_42 : f32 to vector<128x1xf32>
    %92 = arith.divf %90, %91 : vector<128x1xf32>
    %93 = vector.broadcast %92 : vector<128x1xf32> to vector<128x128xf32>
    %94 = arith.subf %3, %93 : vector<128x128xf32>
    %95 = arith.mulf %94, %94 : vector<128x128xf32>
    %cst_43 = arith.constant dense<0.000000e+00> : vector<128xf32>
    %96 = vector.multi_reduction <add>, %95, %cst_43 [1] : vector<128x128xf32> to vector<128xf32>
    %97 = vector.shape_cast %96 : vector<128xf32> to vector<128x1xf32>
    %cst_44 = arith.constant 1.280000e+02 : f32
    %98 = vector.broadcast %cst_44 : f32 to vector<128x1xf32>
    %99 = arith.divf %97, %98 : vector<128x1xf32>
    %cst_45 = arith.constant 9.99999974E-6 : f32
    %100 = vector.broadcast %cst_45 : f32 to vector<128x1xf32>
    %101 = arith.addf %99, %100 : vector<128x1xf32>
    %102 = math.rsqrt %101 : vector<128x1xf32>
    %103 = vector.broadcast %102 : vector<128x1xf32> to vector<128x128xf32>
    %104 = arith.mulf %94, %103 : vector<128x128xf32>
    %105 = arith.mulf %88, %104 : vector<128x128xf32>
    %106 = vector.extract_strided_slice %79 {offsets = [0, 128], sizes = [128, 128], strides = [1, 1]} : vector<128x256xf32> to vector<128x128xf32>
    %107 = arith.addf %105, %106 : vector<128x128xf32>
    %108 = arith.truncf %57 : vector<64x128xf32> to vector<64x128xbf16>
    %c0_46 = arith.constant 0 : index
    %c0_47 = arith.constant 0 : index
    %109 = vector.load %arg14[%c0_46, %c0_47] : memref<128x256xbf16, #tpu.memory_space<vmem>>, vector<128x256xbf16>
    %cst_48 = arith.constant dense<0.000000e+00> : vector<64x256xf32>
    %110 = tpu.matmul %108, %109, %cst_48 {dimension_numbers = #tpu.dot_dimension_numbers<[1], [0], [0], [1], [0, 0, 1, 1], [], []>} : vector<64x128xbf16>, vector<128x256xbf16>, vector<64x256xf32> -> vector<64x256xf32>
    %c0_49 = arith.constant 0 : index
    %c0_50 = arith.constant 0 : index
    %111 = vector.load %arg15[%c0_49, %c0_50] : memref<1x256xf32, #tpu.memory_space<vmem>>, vector<1x256xf32>
    %112 = vector.broadcast %111 : vector<1x256xf32> to vector<64x256xf32>
    %113 = arith.addf %110, %112 : vector<64x256xf32>
    %114 = vector.extract_strided_slice %113 {offsets = [0, 0], sizes = [64, 128], strides = [1, 1]} : vector<64x256xf32> to vector<64x128xf32>
    %115 = vector.extract_strided_slice %113 {offsets = [0, 128], sizes = [64, 128], strides = [1, 1]} : vector<64x256xf32> to vector<64x128xf32>
    %116 = arith.truncf %107 : vector<128x128xf32> to vector<128x128xbf16>
    %c0_51 = arith.constant 0 : index
    %c0_52 = arith.constant 0 : index
    %117 = vector.load %arg16[%c0_51, %c0_52] : memref<128x256xbf16, #tpu.memory_space<vmem>>, vector<128x256xbf16>
    %cst_53 = arith.constant dense<0.000000e+00> : vector<128x256xf32>
    %118 = tpu.matmul %116, %117, %cst_53 {dimension_numbers = #tpu.dot_dimension_numbers<[1], [0], [0], [1], [0, 0, 1, 1], [], []>} : vector<128x128xbf16>, vector<128x256xbf16>, vector<128x256xf32> -> vector<128x256xf32>
    %119 = vector.extract_strided_slice %118 {offsets = [0, 0], sizes = [128, 128], strides = [1, 1]} : vector<128x256xf32> to vector<128x128xf32>
    %120 = vector.extract_strided_slice %118 {offsets = [0, 128], sizes = [128, 128], strides = [1, 1]} : vector<128x256xf32> to vector<128x128xf32>
    %121 = vector.shape_cast %114 : vector<64x128xf32> to vector<4x16x4x32xf32>
    %122 = tpu.transpose %121, [0, 2, 1, 3] : vector<4x16x4x32xf32> -> vector<4x4x16x32xf32>
    %123 = vector.shape_cast %122 : vector<4x4x16x32xf32> to vector<16x16x32xf32>
    %124 = vector.shape_cast %119 : vector<128x128xf32> to vector<4x32x4x32xf32>
    %125 = tpu.transpose %124, [0, 2, 1, 3] : vector<4x32x4x32xf32> -> vector<4x4x32x32xf32>
    %126 = vector.shape_cast %125 : vector<4x4x32x32xf32> to vector<16x32x32xf32>
    %127 = vector.shape_cast %120 : vector<128x128xf32> to vector<4x32x4x32xf32>
    %128 = tpu.transpose %127, [0, 2, 1, 3] : vector<4x32x4x32xf32> -> vector<4x4x32x32xf32>
    %129 = vector.shape_cast %128 : vector<4x4x32x32xf32> to vector<16x32x32xf32>
    %cst_54 = arith.constant 0.176776692 : f32
    %130 = vector.broadcast %cst_54 : f32 to vector<16x16x32xf32>
    %131 = arith.mulf %123, %130 : vector<16x16x32xf32>
    %132 = arith.truncf %131 : vector<16x16x32xf32> to vector<16x16x32xbf16>
    %133 = arith.truncf %126 : vector<16x32x32xf32> to vector<16x32x32xbf16>
    "tpu.trace_start"() <{level = 10 : i32, message = "bqd,bkd->bqk"}> : () -> ()
    %cst_55 = arith.constant dense<0.000000e+00> : vector<16x16x32xf32>
    %134 = tpu.matmul %132, %133, %cst_55 {dimension_numbers = #tpu.dot_dimension_numbers<[2], [2], [1], [1], [0, 0, 0, 1, 1, 1], [0], [0]>} : vector<16x16x32xbf16>, vector<16x32x32xbf16>, vector<16x16x32xf32> -> vector<16x16x32xf32>
    "tpu.trace_stop"() : () -> ()
    %135 = vector.shape_cast %134 : vector<16x16x32xf32> to vector<4x4x16x32xf32>
    %c0_56 = arith.constant 0 : index
    %c0_57 = arith.constant 0 : index
    %c0_58 = arith.constant 0 : index
    %136 = vector.load %arg3[%c0_56, %c0_57, %c0_58] : memref<4x1x16xf32, #tpu.memory_space<vmem>>, vector<4x1x16xf32>
    %137 = vector.shape_cast %136 : vector<4x1x16xf32> to vector<4x16xf32>
    %c0_59 = arith.constant 0 : index
    %c0_60 = arith.constant 0 : index
    %c0_61 = arith.constant 0 : index
    %138 = vector.load %arg4[%c0_59, %c0_60, %c0_61] : memref<4x1x32xf32, #tpu.memory_space<vmem>>, vector<4x1x32xf32>
    %139 = vector.shape_cast %138 : vector<4x1x32xf32> to vector<4x32xf32>
    %cst_62 = arith.constant 1.000000e+00 : f32
    %140 = vector.broadcast %cst_62 : f32 to vector<4x16xf32>
    %141 = arith.subf %137, %140 : vector<4x16xf32>
    %142 = vector.shape_cast %141 : vector<4x16xf32> to vector<4x1x16x1xf32>
    %cst_63 = arith.constant 1.000000e+09 : f32
    %143 = vector.broadcast %cst_63 : f32 to vector<4x1x16x1xf32>
    %144 = arith.mulf %143, %142 : vector<4x1x16x1xf32>
    %cst_64 = arith.constant 1.000000e+00 : f32
    %145 = vector.broadcast %cst_64 : f32 to vector<4x32xf32>
    %146 = arith.subf %139, %145 : vector<4x32xf32>
    %147 = vector.shape_cast %146 : vector<4x32xf32> to vector<4x1x1x32xf32>
    %148 = vector.broadcast %144 : vector<4x1x16x1xf32> to vector<4x1x16x32xf32>
    %149 = vector.broadcast %147 : vector<4x1x1x32xf32> to vector<4x1x16x32xf32>
    %150 = arith.mulf %148, %149 : vector<4x1x16x32xf32>
    %151 = vector.broadcast %150 : vector<4x1x16x32xf32> to vector<4x4x16x32xf32>
    %152 = arith.addf %135, %151 : vector<4x4x16x32xf32>
    %c0_65 = arith.constant 0 : index
    %c0_66 = arith.constant 0 : index
    %c0_67 = arith.constant 0 : index
    %c0_68 = arith.constant 0 : index
    %153 = vector.load %arg5[%c0_65, %c0_66, %c0_67, %c0_68] : memref<4x4x16x32xf32, #tpu.memory_space<vmem>>, vector<4x4x16x32xf32>
    %154 = arith.addf %152, %153 : vector<4x4x16x32xf32>
    %155 = vector.shape_cast %154 : vector<4x4x16x32xf32> to vector<16x16x32xf32>
    %cst_69 = arith.constant dense<0xFF800000> : vector<16x16xf32>
    %156 = vector.multi_reduction <maximumf>, %155, %cst_69 [2] : vector<16x16x32xf32> to vector<16x16xf32>
    %157 = vector.shape_cast %156 : vector<16x16xf32> to vector<16x16x1xf32>
    %158 = vector.broadcast %157 : vector<16x16x1xf32> to vector<16x16x32xf32>
    %159 = arith.subf %155, %158 : vector<16x16x32xf32>
    %160 = math.exp %159 : vector<16x16x32xf32>
    %cst_70 = arith.constant dense<0.000000e+00> : vector<16x16xf32>
    %161 = vector.multi_reduction <add>, %160, %cst_70 [2] : vector<16x16x32xf32> to vector<16x16xf32>
    %162 = vector.shape_cast %161 : vector<16x16xf32> to vector<16x16x1xf32>
    %163 = tpu.reciprocal %162 {approx = true} : vector<16x16x1xf32> -> vector<16x16x1xf32>
    %164 = vector.broadcast %163 : vector<16x16x1xf32> to vector<16x16x32xf32>
    %165 = arith.mulf %160, %164 : vector<16x16x32xf32>
    %166 = arith.truncf %165 : vector<16x16x32xf32> to vector<16x16x32xbf16>
    %167 = arith.truncf %129 : vector<16x32x32xf32> to vector<16x32x32xbf16>
    "tpu.trace_start"() <{level = 10 : i32, message = "bqk,bkd->bqd"}> : () -> ()
    %cst_71 = arith.constant dense<0.000000e+00> : vector<16x16x32xf32>
    %168 = tpu.matmul %166, %167, %cst_71 {dimension_numbers = #tpu.dot_dimension_numbers<[2], [1], [1], [2], [0, 0, 0, 1, 1, 2], [0], [0]>} : vector<16x16x32xbf16>, vector<16x32x32xbf16>, vector<16x16x32xf32> -> vector<16x16x32xf32>
    "tpu.trace_stop"() : () -> ()
    %169 = vector.shape_cast %168 : vector<16x16x32xf32> to vector<4x4x16x32xf32>
    %170 = tpu.transpose %169, [0, 2, 1, 3] : vector<4x4x16x32xf32> -> vector<4x16x4x32xf32>
    %171 = vector.shape_cast %170 : vector<4x16x4x32xf32> to vector<64x128xf32>
    %172 = arith.negf %115 : vector<64x128xf32>
    %173 = math.exp %172 : vector<64x128xf32>
    %cst_72 = arith.constant 1.000000e+00 : f32
    %174 = vector.broadcast %cst_72 : f32 to vector<64x128xf32>
    %175 = arith.addf %174, %173 : vector<64x128xf32>
    %176 = arith.divf %174, %175 : vector<64x128xf32>
    %177 = arith.mulf %171, %176 : vector<64x128xf32>
    %178 = arith.truncf %177 : vector<64x128xf32> to vector<64x128xbf16>
    %c0_73 = arith.constant 0 : index
    %c0_74 = arith.constant 0 : index
    %179 = vector.load %arg17[%c0_73, %c0_74] : memref<128x128xbf16, #tpu.memory_space<vmem>>, vector<128x128xbf16>
    %cst_75 = arith.constant dense<0.000000e+00> : vector<64x128xf32>
    %180 = tpu.matmul %178, %179, %cst_75 {dimension_numbers = #tpu.dot_dimension_numbers<[1], [0], [0], [1], [0, 0, 1, 1], [], []>} : vector<64x128xbf16>, vector<128x128xbf16>, vector<64x128xf32> -> vector<64x128xf32>
    %181 = arith.truncf %5 : vector<64x128xf32> to vector<64x128xbf16>
    %c0_76 = arith.constant 0 : index
    %c0_77 = arith.constant 0 : index
    %182 = vector.load %arg18[%c0_76, %c0_77] : memref<128x128xbf16, #tpu.memory_space<vmem>>, vector<128x128xbf16>
    %cst_78 = arith.constant dense<0.000000e+00> : vector<64x128xf32>
    %183 = tpu.matmul %181, %182, %cst_78 {dimension_numbers = #tpu.dot_dimension_numbers<[1], [0], [0], [1], [0, 0, 1, 1], [], []>} : vector<64x128xbf16>, vector<128x128xbf16>, vector<64x128xf32> -> vector<64x128xf32>
    %c0_79 = arith.constant 0 : index
    %c0_80 = arith.constant 0 : index
    %184 = vector.load %arg19[%c0_79, %c0_80] : memref<1x128xf32, #tpu.memory_space<vmem>>, vector<1x128xf32>
    %185 = vector.broadcast %184 : vector<1x128xf32> to vector<64x128xf32>
    %186 = arith.addf %183, %185 : vector<64x128xf32>
    %187 = arith.negf %186 : vector<64x128xf32>
    %188 = math.exp %187 : vector<64x128xf32>
    %cst_81 = arith.constant 1.000000e+00 : f32
    %189 = vector.broadcast %cst_81 : f32 to vector<64x128xf32>
    %190 = arith.addf %189, %188 : vector<64x128xf32>
    %191 = arith.divf %189, %190 : vector<64x128xf32>
    %192 = arith.mulf %191, %180 : vector<64x128xf32>
    %193 = vector.shape_cast %192 : vector<64x128xf32> to vector<4x16x128xf32>
    %c0_82 = arith.constant 0 : index
    %c0_83 = arith.constant 0 : index
    %c0_84 = arith.constant 0 : index
    %194 = vector.load %arg20[%c0_82, %c0_83, %c0_84] : memref<4x16x128xf32, #tpu.memory_space<vmem>>, vector<4x16x128xf32>
    tpu.vector_store %arg20[%c0_82, %c0_83, %c0_84], %193 {strides = array<i32>} : memref<4x16x128xf32, #tpu.memory_space<vmem>>, vector<4x16x128xf32>,
    return
  }
  func.func @transform_0(%arg0: i32) -> (i32, i32, i32) {
    %c0_i32 = arith.constant 0 : i32
    %c0_i32_0 = arith.constant 0 : i32
    %c0_i32_1 = arith.constant 0 : i32
    return %arg0, %c0_i32, %c0_i32_0 : i32, i32, i32
  }
  func.func @transform_1(%arg0: i32) -> (i32, i32, i32) {
    %c0_i32 = arith.constant 0 : i32
    %c0_i32_0 = arith.constant 0 : i32
    %c0_i32_1 = arith.constant 0 : i32
    return %arg0, %c0_i32, %c0_i32_0 : i32, i32, i32
  }
  func.func @transform_2(%arg0: i32) -> (i32, i32, i32) {
    %c0_i32 = arith.constant 0 : i32
    %c0_i32_0 = arith.constant 0 : i32
    %c0_i32_1 = arith.constant 0 : i32
    return %arg0, %c0_i32, %c0_i32_0 : i32, i32, i32
  }
  func.func @transform_3(%arg0: i32) -> (i32, i32, i32) {
    %c0_i32 = arith.constant 0 : i32
    %c0_i32_0 = arith.constant 0 : i32
    %c0_i32_1 = arith.constant 0 : i32
    return %arg0, %c0_i32, %c0_i32_0 : i32, i32, i32
  }
  func.func @transform_4(%arg0: i32) -> (i32, i32, i32, i32) {
    %c0_i32 = arith.constant 0 : i32
    %c0_i32_0 = arith.constant 0 : i32
    %c0_i32_1 = arith.constant 0 : i32
    %c0_i32_2 = arith.constant 0 : i32
    return %arg0, %c0_i32, %c0_i32_0, %c0_i32_1 : i32, i32, i32, i32
  }
  func.func @transform_5(%arg0: i32) -> (i32, i32, i32) {
    %c0_i32 = arith.constant 0 : i32
    %c0_i32_0 = arith.constant 0 : i32
    %c0_i32_1 = arith.constant 0 : i32
    return %arg0, %c0_i32, %c0_i32_0 : i32, i32, i32
  }
  func.func @transform_6(%arg0: i32) -> (i32, i32, i32) {
    %c0_i32 = arith.constant 0 : i32
    %c0_i32_0 = arith.constant 0 : i32
    %c0_i32_1 = arith.constant 0 : i32
    return %arg0, %c0_i32, %c0_i32_0 : i32, i32, i32
  }
  func.func @transform_7(%arg0: i32) -> (i32, i32) {
    %c0_i32 = arith.constant 0 : i32
    %c0_i32_0 = arith.constant 0 : i32
    %c0_i32_1 = arith.constant 0 : i32
    return %c0_i32, %c0_i32_0 : i32, i32
  }
  func.func @transform_8(%arg0: i32) -> (i32, i32) {
    %c0_i32 = arith.constant 0 : i32
    %c0_i32_0 = arith.constant 0 : i32
    %c0_i32_1 = arith.constant 0 : i32
    return %c0_i32, %c0_i32_0 : i32, i32
  }
  func.func @transform_9(%arg0: i32) -> (i32, i32) {
    %c0_i32 = arith.constant 0 : i32
    %c0_i32_0 = arith.constant 0 : i32
    %c0_i32_1 = arith.constant 0 : i32
    return %c0_i32, %c0_i32_0 : i32, i32
  }
  func.func @transform_10(%arg0: i32) -> (i32, i32) {
    %c0_i32 = arith.constant 0 : i32
    %c0_i32_0 = arith.constant 0 : i32
    %c0_i32_1 = arith.constant 0 : i32
    return %c0_i32, %c0_i32_0 : i32, i32
  }
  func.func @transform_11(%arg0: i32) -> (i32, i32) {
    %c0_i32 = arith.constant 0 : i32
    %c0_i32_0 = arith.constant 0 : i32
    %c0_i32_1 = arith.constant 0 : i32
    return %c0_i32, %c0_i32_0 : i32, i32
  }
  func.func @transform_12(%arg0: i32) -> (i32, i32) {
    %c0_i32 = arith.constant 0 : i32
    %c0_i32_0 = arith.constant 0 : i32
    %c0_i32_1 = arith.constant 0 : i32
    return %c0_i32, %c0_i32_0 : i32, i32
  }
  func.func @transform_13(%arg0: i32) -> (i32, i32) {
    %c0_i32 = arith.constant 0 : i32
    %c0_i32_0 = arith.constant 0 : i32
    %c0_i32_1 = arith.constant 0 : i32
    return %c0_i32, %c0_i32_0 : i32, i32
  }
  func.func @transform_14(%arg0: i32) -> (i32, i32) {
    %c0_i32 = arith.constant 0 : i32
    %c0_i32_0 = arith.constant 0 : i32
    %c0_i32_1 = arith.constant 0 : i32
    return %c0_i32, %c0_i32_0 : i32, i32
  }
  func.func @transform_15(%arg0: i32) -> (i32, i32) {
    %c0_i32 = arith.constant 0 : i32
    %c0_i32_0 = arith.constant 0 : i32
    %c0_i32_1 = arith.constant 0 : i32
    return %c0_i32, %c0_i32_0 : i32, i32
  }
  func.func @transform_16(%arg0: i32) -> (i32, i32) {
    %c0_i32 = arith.constant 0 : i32
    %c0_i32_0 = arith.constant 0 : i32
    %c0_i32_1 = arith.constant 0 : i32
    return %c0_i32, %c0_i32_0 : i32, i32
  }
  func.func @transform_17(%arg0: i32) -> (i32, i32) {
    %c0_i32 = arith.constant 0 : i32
    %c0_i32_0 = arith.constant 0 : i32
    %c0_i32_1 = arith.constant 0 : i32
    return %c0_i32, %c0_i32_0 : i32, i32
  }
  func.func @transform_18(%arg0: i32) -> (i32, i32) {
    %c0_i32 = arith.constant 0 : i32
    %c0_i32_0 = arith.constant 0 : i32
    %c0_i32_1 = arith.constant 0 : i32
    return %c0_i32, %c0_i32_0 : i32, i32
  }
  func.func @transform_19(%arg0: i32) -> (i32, i32, i32) {
    %c0_i32 = arith.constant 0 : i32
    %c0_i32_0 = arith.constant 0 : i32
    %c0_i32_1 = arith.constant 0 : i32
    return %arg0, %c0_i32, %c0_i32_0 : i32, i32, i32
  }
}

</mosaic_0001>

<llo_original>
// kernel: tpu_custom_call.1
$region0: #{tpu_custom_call.1}
  #allocation0 [shape = 'u32[]', space=smem, size = 0x4, offset = 0x4, fixed_abs, tag = 'smem constant byte address 0x4 - core index']
  #allocation1 [shape = 'u32[144,128]{1,0:T(1,128)}', space=vmem, size = 0x12000, scoped, tag = 'internal scratch']
  %s0 = inlined_call_operand.hbm [shape: f32[4,16,128], index: 0, kind: input, shape index: {}]
  %s1 = inlined_call_operand.hbm [shape: f32[4,32,128], index: 1, kind: input, shape index: {}]
  %s2 = inlined_call_operand.hbm [shape: f32[4,1,16], index: 2, kind: input, shape index: {}]
  %s3 = inlined_call_operand.vmem [shape: f32[4,1,32], index: 3, kind: input, shape index: {}]
  %s4 = inlined_call_operand.hbm [shape: f32[4,4,16,32], index: 4, kind: input, shape index: {}]
  %s5 = inlined_call_operand.hbm [shape: f32[4,16,128], index: 5, kind: input, shape index: {}]
  %s6 = inlined_call_operand.hbm [shape: f32[4,32,128], index: 6, kind: input, shape index: {}]
  %s7 = inlined_call_operand.vmem [shape: f32[1,128], index: 7, kind: input, shape index: {}]
  %s8 = inlined_call_operand.hbm [shape: bf16[128,256], index: 8, kind: input, shape index: {}]
  %s9 = inlined_call_operand.vmem [shape: f32[1,128], index: 9, kind: input, shape index: {}]
  %s10 = inlined_call_operand.vmem [shape: f32[1,128], index: 10, kind: input, shape index: {}]
  %s11 = inlined_call_operand.hbm [shape: bf16[128,256], index: 11, kind: input, shape index: {}]
  %s12 = inlined_call_operand.vmem [shape: f32[1,128], index: 12, kind: input, shape index: {}]
  %s13 = inlined_call_operand.hbm [shape: bf16[128,256], index: 13, kind: input, shape index: {}]
  %s14 = inlined_call_operand.vmem [shape: f32[1,256], index: 14, kind: input, shape index: {}]
  %s15 = inlined_call_operand.hbm [shape: bf16[128,256], index: 15, kind: input, shape index: {}]
  %s16 = inlined_call_operand.hbm [shape: bf16[128,128], index: 16, kind: input, shape index: {}]
  %s17 = inlined_call_operand.hbm [shape: bf16[128,128], index: 17, kind: input, shape index: {}]
  %s18 = inlined_call_operand.vmem [shape: f32[1,128], index: 18, kind: input, shape index: {}]
  %s19 = inlined_call_operand.hbm [shape: f32[4,16,128], index: 19, kind: output, shape index: {}]
  %s20 = sld [smem:[#allocation0]]
  $region134: #{tpu_custom_call.1} parent=0
    _
  %s22 = ssub.s32 1, %s20
  %s23 = scalar_select 0, %s22, %s20
  $region1: #{tpu_custom_call.1} parent=0
    #allocation2 [shape = 'u8[32768]{0}', space=vmem, size = 0x8000, scoped, tag = 'input window, operand 0, single buffered']
    #allocation3 [shape = 's32[1]{0}', space=sflag, size = 0x4, scoped, tag = 'scoped memory for tpu_custom_call.1']
    #allocation4 [shape = 's32[1]{0}', space=sflag, size = 0x4, scoped, tag = 'scoped memory for tpu_custom_call.1']
    #allocation5 [shape = 'u8[65536]{0}', space=vmem, size = 0x10000, scoped, tag = 'input window, operand 1, single buffered']
    #allocation6 [shape = 's32[1]{0}', space=sflag, size = 0x4, scoped, tag = 'scoped memory for tpu_custom_call.1']
    #allocation7 [shape = 'u8[2048]{0}', space=vmem, size = 0x800, scoped, tag = 'input window, operand 2, single buffered']
    #allocation8 [shape = 'u8[131072]{0}', space=vmem, size = 0x20000, scoped, tag = 'input window, operand 4, single buffered']
    #allocation9 [shape = 's32[1]{0}', space=sflag, size = 0x4, scoped, tag = 'scoped memory for tpu_custom_call.1']
    #allocation10 [shape = 'u8[32768]{0}', space=vmem, size = 0x8000, scoped, tag = 'input window, operand 5, single buffered']
    #allocation11 [shape = 'u8[65536]{0}', space=vmem, size = 0x10000, scoped, tag = 'input window, operand 6, single buffered']
    #allocation12 [shape = 's32[1]{0}', space=sflag, size = 0x4, scoped, tag = 'scoped memory for tpu_custom_call.1']
    #allocation13 [shape = 'u8[65536]{0}', space=vmem, size = 0x10000, scoped, tag = 'input window, operand 8, single buffered']
    #allocation14 [shape = 'u8[65536]{0}', space=vmem, size = 0x10000, scoped, tag = 'input window, operand 11, single buffered']
    #allocation15 [shape = 's32[1]{0}', space=sflag, size = 0x4, scoped, tag = 'scoped memory for tpu_custom_call.1']
    #allocation16 [shape = 'u8[65536]{0}', space=vmem, size = 0x10000, scoped, tag = 'input window, operand 13, single buffered']
    #allocation17 [shape = 'u8[65536]{0}', space=vmem, size = 0x10000, scoped, tag = 'input window, operand 15, single buffered']
    #allocation18 [shape = 's32[1]{0}', space=sflag, size = 0x4, scoped, tag = 'scoped memory for tpu_custom_call.1']
    #allocation19 [shape = 'u8[32768]{0}', space=vmem, size = 0x8000, scoped, tag = 'input window, operand 16, single buffered']
    #allocation20 [shape = 'u8[32768]{0}', space=vmem, size = 0x8000, scoped, tag = 'input window, operand 17, single buffered']
    #allocation21 [shape = 's32[1]{0}', space=sflag, size = 0x4, scoped, tag = 'scoped memory for tpu_custom_call.1']
    #allocation22 [shape = 'u8[32768]{0}', space=vmem, size = 0x8000, scoped, tag = 'output window, operand 0, single buffered']
    %24 = vsyncpa [#allocation3], 0
    %25 = vsyncpa [#allocation6], 0
    %26 = vsyncpa [#allocation9], 0
    %27 = vsyncpa [#allocation12], 0
    %28 = vsyncpa [#allocation15], 0
    %29 = vsyncpa [#allocation18], 0
    %30 = vsyncpa [#allocation21], 0
    %31 = vsyncpa [#allocation4], 0
    // Predicated region
    $region2: #{tpu_custom_call.1} parent=1 // pred_check
      _
    $region3: #{tpu_custom_call.1} parent=1 // pred_check_branch
      %33 = sbr.rel (0) target = $region5
    $region4: #{tpu_custom_call.1} parent=1 // pred_region
      %s35 = ssub.s32 1024, 1024
      %36 = vsyncadd [#allocation3], %s35
      %s37 = sshll.u32 [#allocation2], 4
      %s38 = int_to_ptr.vmem [resolvable:$true] %s37
      %43 = dma.hbm_to_vmem [thread:$0]  %s0, 1024, %s38, [#allocation3], 128, 128, 8
    $region5: #{tpu_custom_call.1} parent=1 // pred_fallthru
      _
    // Predicated region
    $region6: #{tpu_custom_call.1} parent=1 // pred_check
      _
    $region7: #{tpu_custom_call.1} parent=1 // pred_check_branch
      %45 = sbr.rel (0) target = $region9
    $region8: #{tpu_custom_call.1} parent=1 // pred_region
      %s47 = ssub.s32 2048, 2048
      %48 = vsyncadd [#allocation6], %s47
      %s49 = sshll.u32 [#allocation5], 4
      %s50 = int_to_ptr.vmem [resolvable:$true] %s49
      %55 = dma.hbm_to_vmem [thread:$0]  %s1, 2048, %s50, [#allocation6], 128, 128, 8
    $region9: #{tpu_custom_call.1} parent=1 // pred_fallthru
      _
    // Predicated region
    $region10: #{tpu_custom_call.1} parent=1 // pred_check
      _
    $region11: #{tpu_custom_call.1} parent=1 // pred_check_branch
      %57 = sbr.rel (0) target = $region13
    $region12: #{tpu_custom_call.1} parent=1 // pred_region
      %s59 = ssub.s32 64, 64
      %60 = vsyncadd [#allocation6], %s59
      %s61 = sshll.u32 [#allocation7], 4
      %s62 = int_to_ptr.vmem [resolvable:$true] %s61
      %67 = dma.hbm_to_vmem [thread:$0]  %s2, 64, %s62, [#allocation6], 16, 16, 1
    $region13: #{tpu_custom_call.1} parent=1 // pred_fallthru
      _
    // Predicated region
    $region14: #{tpu_custom_call.1} parent=1 // pred_check
      _
    $region15: #{tpu_custom_call.1} parent=1 // pred_check_branch
      %69 = sbr.rel (0) target = $region17
    $region16: #{tpu_custom_call.1} parent=1 // pred_region
      _
    $region17: #{tpu_custom_call.1} parent=1 // pred_fallthru
      _
    // Predicated region
    $region18: #{tpu_custom_call.1} parent=1 // pred_check
      _
    $region19: #{tpu_custom_call.1} parent=1 // pred_check_branch
      %71 = sbr.rel (0) target = $region21
    $region20: #{tpu_custom_call.1} parent=1 // pred_region
      %s73 = ssub.s32 4096, 4096
      %74 = vsyncadd [#allocation9], %s73
      %s75 = sshll.u32 [#allocation8], 4
      %s76 = int_to_ptr.vmem [resolvable:$true] %s75
      %81 = dma.hbm_to_vmem [thread:$0]  %s4, 4096, %s76, [#allocation9], 128, 128, 8
    $region21: #{tpu_custom_call.1} parent=1 // pred_fallthru
      _
    // Predicated region
    $region22: #{tpu_custom_call.1} parent=1 // pred_check
      _
    $region23: #{tpu_custom_call.1} parent=1 // pred_check_branch
      %83 = sbr.rel (0) target = $region25
    $region24: #{tpu_custom_call.1} parent=1 // pred_region
      %s85 = ssub.s32 1024, 1024
      %86 = vsyncadd [#allocation9], %s85
      %s87 = sshll.u32 [#allocation10], 4
      %s88 = int_to_ptr.vmem [resolvable:$true] %s87
      %93 = dma.hbm_to_vmem [thread:$0]  %s5, 1024, %s88, [#allocation9], 128, 128, 8
    $region25: #{tpu_custom_call.1} parent=1 // pred_fallthru
      _
    // Predicated region
    $region26: #{tpu_custom_call.1} parent=1 // pred_check
      _
    $region27: #{tpu_custom_call.1} parent=1 // pred_check_branch
      %95 = sbr.rel (0) target = $region29
    $region28: #{tpu_custom_call.1} parent=1 // pred_region
      %s97 = ssub.s32 2048, 2048
      %98 = vsyncadd [#allocation12], %s97
      %s99 = sshll.u32 [#allocation11], 4
      %s100 = int_to_ptr.vmem [resolvable:$true] %s99
      %105 = dma.hbm_to_vmem [thread:$0]  %s6, 2048, %s100, [#allocation12], 128, 128, 8
    $region29: #{tpu_custom_call.1} parent=1 // pred_fallthru
      _
    // Predicated region
    $region30: #{tpu_custom_call.1} parent=1 // pred_check
      _
    $region31: #{tpu_custom_call.1} parent=1 // pred_check_branch
      %107 = sbr.rel (0) target = $region33
    $region32: #{tpu_custom_call.1} parent=1 // pred_region
      _
    $region33: #{tpu_custom_call.1} parent=1 // pred_fallthru
      _
    // Predicated region
    $region34: #{tpu_custom_call.1} parent=1 // pred_check
      _
    $region35: #{tpu_custom_call.1} parent=1 // pred_check_branch
      %109 = sbr.rel (0) target = $region37
    $region36: #{tpu_custom_call.1} parent=1 // pred_region
      %s111 = ssub.s32 2048, 2048
      %112 = vsyncadd [#allocation12], %s111
      %s113 = sshll.u32 [#allocation13], 4
      %s114 = int_to_ptr.vmem [resolvable:$true] %s113
      %119 = dma.hbm_to_vmem [thread:$0]  %s8, 2048, %s114, [#allocation12], 128, 128, 8
    $region37: #{tpu_custom_call.1} parent=1 // pred_fallthru
      _
    // Predicated region
    $region38: #{tpu_custom_call.1} parent=1 // pred_check
      _
    $region39: #{tpu_custom_call.1} parent=1 // pred_check_branch
      %121 = sbr.rel (0) target = $region41
    $region40: #{tpu_custom_call.1} parent=1 // pred_region
      _
    $region41: #{tpu_custom_call.1} parent=1 // pred_fallthru
      _
    // Predicated region
    $region42: #{tpu_custom_call.1} parent=1 // pred_check
      _
    $region43: #{tpu_custom_call.1} parent=1 // pred_check_branch
      %123 = sbr.rel (0) target = $region45
    $region44: #{tpu_custom_call.1} parent=1 // pred_region
      _
    $region45: #{tpu_custom_call.1} parent=1 // pred_fallthru
      _
    // Predicated region
    $region46: #{tpu_custom_call.1} parent=1 // pred_check
      _
    $region47: #{tpu_custom_call.1} parent=1 // pred_check_branch
      %125 = sbr.rel (0) target = $region49
    $region48: #{tpu_custom_call.1} parent=1 // pred_region
      %s127 = ssub.s32 2048, 2048
      %128 = vsyncadd [#allocation15], %s127
      %s129 = sshll.u32 [#allocation14], 4
      %s130 = int_to_ptr.vmem [resolvable:$true] %s129
      %135 = dma.hbm_to_vmem [thread:$0]  %s11, 2048, %s130, [#allocation15], 128, 128, 8
    $region49: #{tpu_custom_call.1} parent=1 // pred_fallthru
      _
    // Predicated region
    $region50: #{tpu_custom_call.1} parent=1 // pred_check
      _
    $region51: #{tpu_custom_call.1} parent=1 // pred_check_branch
      %137 = sbr.rel (0) target = $region53
    $region52: #{tpu_custom_call.1} parent=1 // pred_region
      _
    $region53: #{tpu_custom_call.1} parent=1 // pred_fallthru
      _
    // Predicated region
    $region54: #{tpu_custom_call.1} parent=1 // pred_check
      _
    $region55: #{tpu_custom_call.1} parent=1 // pred_check_branch
      %139 = sbr.rel (0) target = $region57
    $region56: #{tpu_custom_call.1} parent=1 // pred_region
      %s141 = ssub.s32 2048, 2048
      %142 = vsyncadd [#allocation15], %s141
      %s143 = sshll.u32 [#allocation16], 4
      %s144 = int_to_ptr.vmem [resolvable:$true] %s143
      %149 = dma.hbm_to_vmem [thread:$0]  %s13, 2048, %s144, [#allocation15], 128, 128, 8
    $region57: #{tpu_custom_call.1} parent=1 // pred_fallthru
      _
    // Predicated region
    $region58: #{tpu_custom_call.1} parent=1 // pred_check
      _
    $region59: #{tpu_custom_call.1} parent=1 // pred_check_branch
      %151 = sbr.rel (0) target = $region61
    $region60: #{tpu_custom_call.1} parent=1 // pred_region
      _
    $region61: #{tpu_custom_call.1} parent=1 // pred_fallthru
      _
    // Predicated region
    $region62: #{tpu_custom_call.1} parent=1 // pred_check
      _
    $region63: #{tpu_custom_call.1} parent=1 // pred_check_branch
      %153 = sbr.rel (0) target = $region65
    $region64: #{tpu_custom_call.1} parent=1 // pred_region
      %s155 = ssub.s32 2048, 2048
      %156 = vsyncadd [#allocation18], %s155
      %s157 = sshll.u32 [#allocation17], 4
      %s158 = int_to_ptr.vmem [resolvable:$true] %s157
      %163 = dma.hbm_to_vmem [thread:$0]  %s15, 2048, %s158, [#allocation18], 128, 128, 8
    $region65: #{tpu_custom_call.1} parent=1 // pred_fallthru
      _
    // Predicated region
    $region66: #{tpu_custom_call.1} parent=1 // pred_check
      _
    $region67: #{tpu_custom_call.1} parent=1 // pred_check_branch
      %165 = sbr.rel (0) target = $region69
    $region68: #{tpu_custom_call.1} parent=1 // pred_region
      %s167 = ssub.s32 1024, 1024
      %168 = vsyncadd [#allocation18], %s167
      %s169 = sshll.u32 [#allocation19], 4
      %s170 = int_to_ptr.vmem [resolvable:$true] %s169
      %175 = dma.hbm_to_vmem [thread:$0]  %s16, 1024, %s170, [#allocation18], 64, 64, 4
    $region69: #{tpu_custom_call.1} parent=1 // pred_fallthru
      _
    // Predicated region
    $region70: #{tpu_custom_call.1} parent=1 // pred_check
      _
    $region71: #{tpu_custom_call.1} parent=1 // pred_check_branch
      %177 = sbr.rel (0) target = $region73
    $region72: #{tpu_custom_call.1} parent=1 // pred_region
      %s179 = ssub.s32 1024, 1024
      %180 = vsyncadd [#allocation21], %s179
      %s181 = sshll.u32 [#allocation20], 4
      %s182 = int_to_ptr.vmem [resolvable:$true] %s181
      %187 = dma.hbm_to_vmem [thread:$0]  %s17, 1024, %s182, [#allocation21], 64, 64, 4
    $region73: #{tpu_custom_call.1} parent=1 // pred_fallthru
      _
    // Predicated region
    $region74: #{tpu_custom_call.1} parent=1 // pred_check
      _
    $region75: #{tpu_custom_call.1} parent=1 // pred_check_branch
      %189 = sbr.rel (0) target = $region77
    $region76: #{tpu_custom_call.1} parent=1 // pred_region
      _
    $region77: #{tpu_custom_call.1} parent=1 // pred_fallthru
      _
    // Predicated region
    $region78: #{tpu_custom_call.1} parent=1 // pred_check
      _
    $region79: #{tpu_custom_call.1} parent=1 // pred_check_branch
      %191 = sbr.rel (0) target = $region81
    $region80: #{tpu_custom_call.1} parent=1 // pred_region
      %192 = dma.done [#allocation3], 1024
    $region81: #{tpu_custom_call.1} parent=1 // pred_fallthru
      _
    // Predicated region
    $region82: #{tpu_custom_call.1} parent=1 // pred_check
      _
    $region83: #{tpu_custom_call.1} parent=1 // pred_check_branch
      %194 = sbr.rel (0) target = $region85
    $region84: #{tpu_custom_call.1} parent=1 // pred_region
      %195 = dma.done [#allocation6], 2048
    $region85: #{tpu_custom_call.1} parent=1 // pred_fallthru
      _
    // Predicated region
    $region86: #{tpu_custom_call.1} parent=1 // pred_check
      _
    $region87: #{tpu_custom_call.1} parent=1 // pred_check_branch
      %197 = sbr.rel (0) target = $region89
    $region88: #{tpu_custom_call.1} parent=1 // pred_region
      %198 = dma.done [#allocation6], 64
    $region89: #{tpu_custom_call.1} parent=1 // pred_fallthru
      _
    // Predicated region
    $region90: #{tpu_custom_call.1} parent=1 // pred_check
      _
    $region91: #{tpu_custom_call.1} parent=1 // pred_check_branch
      %200 = sbr.rel (0) target = $region93
    $region92: #{tpu_custom_call.1} parent=1 // pred_region
      %201 = dma.done [#allocation9], 4096
    $region93: #{tpu_custom_call.1} parent=1 // pred_fallthru
      _
    // Predicated region
    $region94: #{tpu_custom_call.1} parent=1 // pred_check
      _
    $region95: #{tpu_custom_call.1} parent=1 // pred_check_branch
      %203 = sbr.rel (0) target = $region97
    $region96: #{tpu_custom_call.1} parent=1 // pred_region
      %204 = dma.done [#allocation9], 1024
    $region97: #{tpu_custom_call.1} parent=1 // pred_fallthru
      _
    // Predicated region
    $region98: #{tpu_custom_call.1} parent=1 // pred_check
      _
    $region99: #{tpu_custom_call.1} parent=1 // pred_check_branch
      %206 = sbr.rel (0) target = $region101
    $region100: #{tpu_custom_call.1} parent=1 // pred_region
      %207 = dma.done [#allocation12], 2048
    $region101: #{tpu_custom_call.1} parent=1 // pred_fallthru
      _
    // Predicated region
    $region102: #{tpu_custom_call.1} parent=1 // pred_check
      _
    $region103: #{tpu_custom_call.1} parent=1 // pred_check_branch
      %209 = sbr.rel (0) target = $region105
    $region104: #{tpu_custom_call.1} parent=1 // pred_region
      %210 = dma.done [#allocation12], 2048
    $region105: #{tpu_custom_call.1} parent=1 // pred_fallthru
      _
    // Predicated region
    $region106: #{tpu_custom_call.1} parent=1 // pred_check
      _
    $region107: #{tpu_custom_call.1} parent=1 // pred_check_branch
      %212 = sbr.rel (0) target = $region109
    $region108: #{tpu_custom_call.1} parent=1 // pred_region
      %213 = dma.done [#allocation15], 2048
    $region109: #{tpu_custom_call.1} parent=1 // pred_fallthru
      _
    // Predicated region
    $region110: #{tpu_custom_call.1} parent=1 // pred_check
      _
    $region111: #{tpu_custom_call.1} parent=1 // pred_check_branch
      %215 = sbr.rel (0) target = $region113
    $region112: #{tpu_custom_call.1} parent=1 // pred_region
      %216 = dma.done [#allocation15], 2048
    $region113: #{tpu_custom_call.1} parent=1 // pred_fallthru
      _
    // Predicated region
    $region114: #{tpu_custom_call.1} parent=1 // pred_check
      _
    $region115: #{tpu_custom_call.1} parent=1 // pred_check_branch
      %218 = sbr.rel (0) target = $region117
    $region116: #{tpu_custom_call.1} parent=1 // pred_region
      %219 = dma.done [#allocation18], 2048
    $region117: #{tpu_custom_call.1} parent=1 // pred_fallthru
      _
    // Predicated region
    $region118: #{tpu_custom_call.1} parent=1 // pred_check
      _
    $region119: #{tpu_custom_call.1} parent=1 // pred_check_branch
      %221 = sbr.rel (0) target = $region121
    $region120: #{tpu_custom_call.1} parent=1 // pred_region
      %222 = dma.done [#allocation18], 1024
    $region121: #{tpu_custom_call.1} parent=1 // pred_fallthru
      _
    // Predicated region
    $region122: #{tpu_custom_call.1} parent=1 // pred_check
      _
    $region123: #{tpu_custom_call.1} parent=1 // pred_check_branch
      %224 = sbr.rel (0) target = $region125
    $region124: #{tpu_custom_call.1} parent=1 // pred_region
      %225 = dma.done [#allocation21], 1024
    $region125: #{tpu_custom_call.1} parent=1 // pred_fallthru
      _
    %v227 = vld [vmem:[#allocation2] sm:$0xff]
    %v228 = vld [vmem:[#allocation2 + $0x8] sm:$0xff]
    %v229 = vld [vmem:[#allocation2 + $0x10] sm:$0xff]
    %v230 = vld [vmem:[#allocation2 + $0x18] sm:$0xff]
    %v231 = vld [vmem:[#allocation2 + $0x20] sm:$0xff]
    %v232 = vld [vmem:[#allocation2 + $0x28] sm:$0xff]
    %v233 = vld [vmem:[#allocation2 + $0x30] sm:$0xff]
    %v234 = vld [vmem:[#allocation2 + $0x38] sm:$0xff]
    %v235 = vld [vmem:[#allocation5] sm:$0xff]
    %v236 = vld [vmem:[#allocation5 + $0x8] sm:$0xff]
    %v237 = vld [vmem:[#allocation5 + $0x10] sm:$0xff]
    %v238 = vld [vmem:[#allocation5 + $0x18] sm:$0xff]
    %v239 = vld [vmem:[#allocation5 + $0x20] sm:$0xff]
    %v240 = vld [vmem:[#allocation5 + $0x28] sm:$0xff]
    %v241 = vld [vmem:[#allocation5 + $0x30] sm:$0xff]
    %v242 = vld [vmem:[#allocation5 + $0x38] sm:$0xff]
    %v243 = vld [vmem:[#allocation5 + $0x40] sm:$0xff]
    %v244 = vld [vmem:[#allocation5 + $0x48] sm:$0xff]
    %v245 = vld [vmem:[#allocation5 + $0x50] sm:$0xff]
    %v246 = vld [vmem:[#allocation5 + $0x58] sm:$0xff]
    %v247 = vld [vmem:[#allocation5 + $0x60] sm:$0xff]
    %v248 = vld [vmem:[#allocation5 + $0x68] sm:$0xff]
    %v249 = vld [vmem:[#allocation5 + $0x70] sm:$0xff]
    %v250 = vld [vmem:[#allocation5 + $0x78] sm:$0xff]
    %v251 = vld [vmem:[#allocation10] sm:$0xff]
    %v252 = vld [vmem:[#allocation10 + $0x8] sm:$0xff]
    %v253 = vld [vmem:[#allocation10 + $0x10] sm:$0xff]
    %v254 = vld [vmem:[#allocation10 + $0x18] sm:$0xff]
    %v255 = vld [vmem:[#allocation10 + $0x20] sm:$0xff]
    %v256 = vld [vmem:[#allocation10 + $0x28] sm:$0xff]
    %v257 = vld [vmem:[#allocation10 + $0x30] sm:$0xff]
    %v258 = vld [vmem:[#allocation10 + $0x38] sm:$0xff]
    %v259 = vld [vmem:[#allocation11] sm:$0xff]
    %v260 = vld [vmem:[#allocation11 + $0x8] sm:$0xff]
    %v261 = vld [vmem:[#allocation11 + $0x10] sm:$0xff]
    %v262 = vld [vmem:[#allocation11 + $0x18] sm:$0xff]
    %v263 = vld [vmem:[#allocation11 + $0x20] sm:$0xff]
    %v264 = vld [vmem:[#allocation11 + $0x28] sm:$0xff]
    %v265 = vld [vmem:[#allocation11 + $0x30] sm:$0xff]
    %v266 = vld [vmem:[#allocation11 + $0x38] sm:$0xff]
    %v267 = vld [vmem:[#allocation11 + $0x40] sm:$0xff]
    %v268 = vld [vmem:[#allocation11 + $0x48] sm:$0xff]
    %v269 = vld [vmem:[#allocation11 + $0x50] sm:$0xff]
    %v270 = vld [vmem:[#allocation11 + $0x58] sm:$0xff]
    %v271 = vld [vmem:[#allocation11 + $0x60] sm:$0xff]
    %v272 = vld [vmem:[#allocation11 + $0x68] sm:$0xff]
    %v273 = vld [vmem:[#allocation11 + $0x70] sm:$0xff]
    %v274 = vld [vmem:[#allocation11 + $0x78] sm:$0xff]
    %275 = vadd.xlane.f32.xlu0 %v251
    %v276 = vpop.xlane.xlu0 %275
    %277 = vadd.xlane.f32.xlu0 %v252
    %v278 = vpop.xlane.xlu0 %277
    %279 = vadd.xlane.f32.xlu0 %v253
    %v280 = vpop.xlane.xlu0 %279
    %281 = vadd.xlane.f32.xlu0 %v254
    %v282 = vpop.xlane.xlu0 %281
    %283 = vadd.xlane.f32.xlu0 %v255
    %v284 = vpop.xlane.xlu0 %283
    %285 = vadd.xlane.f32.xlu0 %v256
    %v286 = vpop.xlane.xlu0 %285
    %287 = vadd.xlane.f32.xlu0 %v257
    %v288 = vpop.xlane.xlu0 %287
    %289 = vadd.xlane.f32.xlu0 %v258
    %v290 = vpop.xlane.xlu0 %289
    %v291 = vrcp.pop 128.0
    %v292 = vmul.f32 %v276, %v291
    %v293 = vmul.f32 %v278, %v291
    %v294 = vmul.f32 %v280, %v291
    %v295 = vmul.f32 %v282, %v291
    %v296 = vmul.f32 %v284, %v291
    %v297 = vmul.f32 %v286, %v291
    %v298 = vmul.f32 %v288, %v291
    %v299 = vmul.f32 %v290, %v291
    %v300 = vsub.f32 %v251, %v292
    %v301 = vsub.f32 %v252, %v293
    %v302 = vsub.f32 %v253, %v294
    %v303 = vsub.f32 %v254, %v295
    %v304 = vsub.f32 %v255, %v296
    %v305 = vsub.f32 %v256, %v297
    %v306 = vsub.f32 %v257, %v298
    %v307 = vsub.f32 %v258, %v299
    %v308 = vmul.f32 %v300, %v300
    %v309 = vmul.f32 %v301, %v301
    %v310 = vmul.f32 %v302, %v302
    %v311 = vmul.f32 %v303, %v303
    %v312 = vmul.f32 %v304, %v304
    %v313 = vmul.f32 %v305, %v305
    %v314 = vmul.f32 %v306, %v306
    %v315 = vmul.f32 %v307, %v307
    %316 = vadd.xlane.f32.xlu0 %v308
    %v317 = vpop.xlane.xlu0 %316
    %318 = vadd.xlane.f32.xlu0 %v309
    %v319 = vpop.xlane.xlu0 %318
    %320 = vadd.xlane.f32.xlu0 %v310
    %v321 = vpop.xlane.xlu0 %320
    %322 = vadd.xlane.f32.xlu0 %v311
    %v323 = vpop.xlane.xlu0 %322
    %324 = vadd.xlane.f32.xlu0 %v312
    %v325 = vpop.xlane.xlu0 %324
    %326 = vadd.xlane.f32.xlu0 %v313
    %v327 = vpop.xlane.xlu0 %326
    %328 = vadd.xlane.f32.xlu0 %v314
    %v329 = vpop.xlane.xlu0 %328
    %330 = vadd.xlane.f32.xlu0 %v315
    %v331 = vpop.xlane.xlu0 %330
    %v332 = vmul.f32 %v317, %v291
    %v333 = vmul.f32 %v319, %v291
    %v334 = vmul.f32 %v321, %v291
    %v335 = vmul.f32 %v323, %v291
    %v336 = vmul.f32 %v325, %v291
    %v337 = vmul.f32 %v327, %v291
    %v338 = vmul.f32 %v329, %v291
    %v339 = vmul.f32 %v331, %v291
    %v340 = vadd.f32 %v332, 1e-05
    %v341 = vadd.f32 %v333, 1e-05
    %v342 = vadd.f32 %v334, 1e-05
    %v343 = vadd.f32 %v335, 1e-05
    %v344 = vadd.f32 %v336, 1e-05
    %v345 = vadd.f32 %v337, 1e-05
    %v346 = vadd.f32 %v338, 1e-05
    %v347 = vadd.f32 %v339, 1e-05
    %v348 = vrsqrt.pop %v340
    %v349 = vrsqrt.pop %v341
    %v350 = vrsqrt.pop %v342
    %v351 = vrsqrt.pop %v343
    %v352 = vrsqrt.pop %v344
    %v353 = vrsqrt.pop %v345
    %v354 = vrsqrt.pop %v346
    %v355 = vrsqrt.pop %v347
    %v356 = vmul.f32 %v300, %v348
    %v357 = vmul.f32 %v301, %v349
    %v358 = vmul.f32 %v302, %v350
    %v359 = vmul.f32 %v303, %v351
    %v360 = vmul.f32 %v304, %v352
    %v361 = vmul.f32 %v305, %v353
    %v362 = vmul.f32 %v306, %v354
    %v363 = vmul.f32 %v307, %v355
    %v364 = vld [vmem:[%s7] sm:$0x1]
    %v366 = vlaneseq
    %v367 = vshrl.u32 %v366, 7
    %v368 = vsub.s32 0, %v367
    %v369 = vrot.slane %v364, %v368
    %v371 = vmul.f32 %v356, %v369
    %v372 = vmul.f32 %v357, %v369
    %v373 = vmul.f32 %v358, %v369
    %v374 = vmul.f32 %v359, %v369
    %v375 = vmul.f32 %v360, %v369
    %v376 = vmul.f32 %v361, %v369
    %v377 = vmul.f32 %v362, %v369
    %v378 = vmul.f32 %v363, %v369
    %v379 = vpack.c.bf16 %v372, %v371
    %v380 = vpack.c.bf16 %v374, %v373
    %v381 = vpack.c.bf16 %v376, %v375
    %v382 = vpack.c.bf16 %v378, %v377
    %v383 = vld [vmem:[#allocation13] sm:$0xff]
    %v384 = vld [vmem:[#allocation13 + $0x8] sm:$0xff]
    %v385 = vld [vmem:[#allocation13 + $0x10] sm:$0xff]
    %v386 = vld [vmem:[#allocation13 + $0x18] sm:$0xff]
    %v387 = vld [vmem:[#allocation13 + $0x20] sm:$0xff]
    %v388 = vld [vmem:[#allocation13 + $0x28] sm:$0xff]
    %v389 = vld [vmem:[#allocation13 + $0x30] sm:$0xff]
    %v390 = vld [vmem:[#allocation13 + $0x38] sm:$0xff]
    %v391 = vld [vmem:[#allocation13 + $0x40] sm:$0xff]
    %v392 = vld [vmem:[#allocation13 + $0x48] sm:$0xff]
    %v393 = vld [vmem:[#allocation13 + $0x50] sm:$0xff]
    %v394 = vld [vmem:[#allocation13 + $0x58] sm:$0xff]
    %v395 = vld [vmem:[#allocation13 + $0x60] sm:$0xff]
    %v396 = vld [vmem:[#allocation13 + $0x68] sm:$0xff]
    %v397 = vld [vmem:[#allocation13 + $0x70] sm:$0xff]
    %v398 = vld [vmem:[#allocation13 + $0x78] sm:$0xff]
    %v415 = vunpack.c.l.b16 %v383
    %v416 = vunpack.c.h.b16 %v383
    %v417 = vunpack.c.l.b16 %v384
    %v418 = vunpack.c.h.b16 %v384
    %v419 = vunpack.c.l.b16 %v385
    %v420 = vunpack.c.h.b16 %v385
    %v421 = vunpack.c.l.b16 %v386
    %v422 = vunpack.c.h.b16 %v386
    %v423 = vunpack.c.l.b16 %v387
    %v424 = vunpack.c.h.b16 %v387
    %v425 = vunpack.c.l.b16 %v388
    %v426 = vunpack.c.h.b16 %v388
    %v427 = vunpack.c.l.b16 %v389
    %v428 = vunpack.c.h.b16 %v389
    %v429 = vunpack.c.l.b16 %v390
    %v430 = vunpack.c.h.b16 %v390
    %v431 = vunpack.c.l.b16 %v391
    %v432 = vunpack.c.h.b16 %v391
    %v433 = vunpack.c.l.b16 %v392
    %v434 = vunpack.c.h.b16 %v392
    %v435 = vunpack.c.l.b16 %v393
    %v436 = vunpack.c.h.b16 %v393
    %v437 = vunpack.c.l.b16 %v394
    %v438 = vunpack.c.h.b16 %v394
    %v439 = vunpack.c.l.b16 %v395
    %v440 = vunpack.c.h.b16 %v395
    %v441 = vunpack.c.l.b16 %v396
    %v442 = vunpack.c.h.b16 %v396
    %v443 = vunpack.c.l.b16 %v397
    %v444 = vunpack.c.h.b16 %v397
    %v445 = vunpack.c.l.b16 %v398
    %v446 = vunpack.c.h.b16 %v398
    %v447 = vpack.c.b16 %v417, %v415
    %v448 = vpack.c.b16 %v418, %v416
    %v449 = vpack.c.b16 %v421, %v419
    %v450 = vpack.c.b16 %v422, %v420
    %v451 = vpack.c.b16 %v425, %v423
    %v452 = vpack.c.b16 %v426, %v424
    %v453 = vpack.c.b16 %v429, %v427
    %v454 = vpack.c.b16 %v430, %v428
    %v455 = vpack.c.b16 %v433, %v431
    %v456 = vpack.c.b16 %v434, %v432
    %v457 = vpack.c.b16 %v437, %v435
    %v458 = vpack.c.b16 %v438, %v436
    %v459 = vpack.c.b16 %v441, %v439
    %v460 = vpack.c.b16 %v442, %v440
    %v461 = vpack.c.b16 %v445, %v443
    %v462 = vpack.c.b16 %v446, %v444
    %479 = vmatprep.subr.bf16.mxu0 %v462
    %480 = vmatpush1.bf16.msra.mxu0 %v461
    %481 = vmatprep.subr.bf16.mxu0 %v460
    %482 = vmatpush1.bf16.msra.mxu0 %v459
    %483 = vmatprep.subr.bf16.mxu0 %v458
    %484 = vmatpush1.bf16.msra.mxu0 %v457
    %485 = vmatprep.subr.bf16.mxu0 %v456
    %486 = vmatpush1.bf16.msra.mxu0 %v455
    %487 = vmatprep.subr.bf16.mxu0 %v454
    %488 = vmatpush1.bf16.msra.mxu0 %v453
    %489 = vmatprep.subr.bf16.mxu0 %v452
    %490 = vmatpush1.bf16.msra.mxu0 %v451
    %491 = vmatprep.subr.bf16.mxu0 %v450
    %492 = vmatpush1.bf16.msra.mxu0 %v449
    %493 = vmatprep.subr.bf16.mxu0 %v448
    %494 = vmatpush1.bf16.msra.mxu0 %v447
    %495 = vmatprep.subr.bf16.mxu0 0
    %496 = vmatpush2.bf16.msra.mxu0 0
    %497 = vmatprep.subr.bf16.mxu0 0
    %498 = vmatpush2.bf16.msra.mxu0 0
    %499 = vmatprep.subr.bf16.mxu0 0
    %500 = vmatpush2.bf16.msra.mxu0 0
    %501 = vmatprep.subr.bf16.mxu0 0
    %502 = vmatpush2.bf16.msra.mxu0 0
    %503 = vmatprep.subr.bf16.mxu0 0
    %504 = vmatpush2.bf16.msra.mxu0 0
    %505 = vmatprep.subr.bf16.mxu0 0
    %506 = vmatpush2.bf16.msra.mxu0 0
    %507 = vmatprep.subr.bf16.mxu0 0
    %508 = vmatpush2.bf16.msra.mxu0 0
    %509 = vmatprep.subr.bf16.mxu0 0
    %510 = vmatpush2.bf16.msra.mxu0 0
    %511 = vmatprep.mubr.bf16.mxu0 0
    %512 = vmatmul.mubr.bf16.gmra.mxu0 %v379
    %v513 = vpop.f32.mrf.mxu0
    %v514 = vadd.f32 0.0, %v513
    %v515 = vpop.f32.mrf.mxu0
    %v516 = vadd.f32 0.0, %v515
    %v517 = vpop.f32.mrf.mxu0
    %v518 = vadd.f32 0.0, %v517
    %v519 = vpop.f32.mrf.mxu0
    %v520 = vadd.f32 0.0, %v519
    %521 = vmatprep.mubr.bf16.mxu0 0
    %522 = vmatmul.mubr.bf16.gmra.mxu0 %v380
    %v523 = vpop.f32.mrf.mxu0
    %v524 = vadd.f32 0.0, %v523
    %v525 = vpop.f32.mrf.mxu0
    %v526 = vadd.f32 0.0, %v525
    %v527 = vpop.f32.mrf.mxu0
    %v528 = vadd.f32 0.0, %v527
    %v529 = vpop.f32.mrf.mxu0
    %v530 = vadd.f32 0.0, %v529
    %531 = vmatprep.mubr.bf16.mxu0 0
    %532 = vmatmul.mubr.bf16.gmra.mxu0 %v381
    %v533 = vpop.f32.mrf.mxu0
    %v534 = vadd.f32 0.0, %v533
    %v535 = vpop.f32.mrf.mxu0
    %v536 = vadd.f32 0.0, %v535
    %v537 = vpop.f32.mrf.mxu0
    %v538 = vadd.f32 0.0, %v537
    %v539 = vpop.f32.mrf.mxu0
    %v540 = vadd.f32 0.0, %v539
    %541 = vmatprep.mubr.bf16.mxu0 0
    %542 = vmatmul.mubr.bf16.gmra.mxu0 %v382
    %v543 = vpop.f32.mrf.mxu0
    %v544 = vadd.f32 0.0, %v543
    %v545 = vpop.f32.mrf.mxu0
    %v546 = vadd.f32 0.0, %v545
    %v547 = vpop.f32.mrf.mxu0
    %v548 = vadd.f32 0.0, %v547
    %v549 = vpop.f32.mrf.mxu0
    %v550 = vadd.f32 0.0, %v549
    %551 = vdwg.mxu0
    %v552 = vld [vmem:[%s9] sm:$0x1]
    %v554 = vlaneseq
    %v555 = vshrl.u32 %v554, 7
    %v556 = vsub.s32 0, %v555
    %v557 = vrot.slane %v552, %v556
    %v559 = vadd.f32 %v514, %v557
    %v560 = vadd.f32 %v518, %v557
    %v561 = vadd.f32 %v524, %v557
    %v562 = vadd.f32 %v528, %v557
    %v563 = vadd.f32 %v534, %v557
    %v564 = vadd.f32 %v538, %v557
    %v565 = vadd.f32 %v544, %v557
    %v566 = vadd.f32 %v548, %v557
    %v567 = vxor.u32 %v559, 2147483648
    %v568 = vxor.u32 %v560, 2147483648
    %v569 = vxor.u32 %v561, 2147483648
    %v570 = vxor.u32 %v562, 2147483648
    %v571 = vxor.u32 %v563, 2147483648
    %v572 = vxor.u32 %v564, 2147483648
    %v573 = vxor.u32 %v565, 2147483648
    %v574 = vxor.u32 %v566, 2147483648
    %v575 = vmul.f32 %v567, 1.442695
    %v576 = vpow.pop %v575
    %v577 = vmul.f32 %v568, 1.442695
    %v578 = vpow.pop %v577
    %v579 = vmul.f32 %v569, 1.442695
    %v580 = vpow.pop %v579
    %v581 = vmul.f32 %v570, 1.442695
    %v582 = vpow.pop %v581
    %v583 = vmul.f32 %v571, 1.442695
    %v584 = vpow.pop %v583
    %v585 = vmul.f32 %v572, 1.442695
    %v586 = vpow.pop %v585
    %v587 = vmul.f32 %v573, 1.442695
    %v588 = vpow.pop %v587
    %v589 = vmul.f32 %v574, 1.442695
    %v590 = vpow.pop %v589
    %v591 = vadd.f32 %v576, 1.0
    %v592 = vadd.f32 %v578, 1.0
    %v593 = vadd.f32 %v580, 1.0
    %v594 = vadd.f32 %v582, 1.0
    %v595 = vadd.f32 %v584, 1.0
    %v596 = vadd.f32 %v586, 1.0
    %v597 = vadd.f32 %v588, 1.0
    %v598 = vadd.f32 %v590, 1.0
    %v599 = vrcp.pop %v591
    %v600 = vmul.f32 1.0, %v599
    %v601 = vrcp.pop %v592
    %v602 = vmul.f32 1.0, %v601
    %v603 = vrcp.pop %v593
    %v604 = vmul.f32 1.0, %v603
    %v605 = vrcp.pop %v594
    %v606 = vmul.f32 1.0, %v605
    %v607 = vrcp.pop %v595
    %v608 = vmul.f32 1.0, %v607
    %v609 = vrcp.pop %v596
    %v610 = vmul.f32 1.0, %v609
    %v611 = vrcp.pop %v597
    %v612 = vmul.f32 1.0, %v611
    %v613 = vrcp.pop %v598
    %v614 = vmul.f32 1.0, %v613
    %615 = vadd.xlane.f32.xlu0 %v227
    %v616 = vpop.xlane.xlu0 %615
    %617 = vadd.xlane.f32.xlu0 %v228
    %v618 = vpop.xlane.xlu0 %617
    %619 = vadd.xlane.f32.xlu0 %v229
    %v620 = vpop.xlane.xlu0 %619
    %621 = vadd.xlane.f32.xlu0 %v230
    %v622 = vpop.xlane.xlu0 %621
    %623 = vadd.xlane.f32.xlu0 %v231
    %v624 = vpop.xlane.xlu0 %623
    %625 = vadd.xlane.f32.xlu0 %v232
    %v626 = vpop.xlane.xlu0 %625
    %627 = vadd.xlane.f32.xlu0 %v233
    %v628 = vpop.xlane.xlu0 %627
    %629 = vadd.xlane.f32.xlu0 %v234
    %v630 = vpop.xlane.xlu0 %629
    %v631 = vmul.f32 %v616, %v291
    %v632 = vmul.f32 %v618, %v291
    %v633 = vmul.f32 %v620, %v291
    %v634 = vmul.f32 %v622, %v291
    %v635 = vmul.f32 %v624, %v291
    %v636 = vmul.f32 %v626, %v291
    %v637 = vmul.f32 %v628, %v291
    %v638 = vmul.f32 %v630, %v291
    %v639 = vsub.f32 %v227, %v631
    %v640 = vsub.f32 %v228, %v632
    %v641 = vsub.f32 %v229, %v633
    %v642 = vsub.f32 %v230, %v634
    %v643 = vsub.f32 %v231, %v635
    %v644 = vsub.f32 %v232, %v636
    %v645 = vsub.f32 %v233, %v637
    %v646 = vsub.f32 %v234, %v638
    %v647 = vmul.f32 %v639, %v639
    %v648 = vmul.f32 %v640, %v640
    %v649 = vmul.f32 %v641, %v641
    %v650 = vmul.f32 %v642, %v642
    %v651 = vmul.f32 %v643, %v643
    %v652 = vmul.f32 %v644, %v644
    %v653 = vmul.f32 %v645, %v645
    %v654 = vmul.f32 %v646, %v646
    %655 = vadd.xlane.f32.xlu0 %v647
    %v656 = vpop.xlane.xlu0 %655
    %657 = vadd.xlane.f32.xlu0 %v648
    %v658 = vpop.xlane.xlu0 %657
    %659 = vadd.xlane.f32.xlu0 %v649
    %v660 = vpop.xlane.xlu0 %659
    %661 = vadd.xlane.f32.xlu0 %v650
    %v662 = vpop.xlane.xlu0 %661
    %663 = vadd.xlane.f32.xlu0 %v651
    %v664 = vpop.xlane.xlu0 %663
    %665 = vadd.xlane.f32.xlu0 %v652
    %v666 = vpop.xlane.xlu0 %665
    %667 = vadd.xlane.f32.xlu0 %v653
    %v668 = vpop.xlane.xlu0 %667
    %669 = vadd.xlane.f32.xlu0 %v654
    %v670 = vpop.xlane.xlu0 %669
    %v671 = vmul.f32 %v656, %v291
    %v672 = vmul.f32 %v658, %v291
    %v673 = vmul.f32 %v660, %v291
    %v674 = vmul.f32 %v662, %v291
    %v675 = vmul.f32 %v664, %v291
    %v676 = vmul.f32 %v666, %v291
    %v677 = vmul.f32 %v668, %v291
    %v678 = vmul.f32 %v670, %v291
    %v679 = vadd.f32 %v671, 1e-05
    %v680 = vadd.f32 %v672, 1e-05
    %v681 = vadd.f32 %v673, 1e-05
    %v682 = vadd.f32 %v674, 1e-05
    %v683 = vadd.f32 %v675, 1e-05
    %v684 = vadd.f32 %v676, 1e-05
    %v685 = vadd.f32 %v677, 1e-05
    %v686 = vadd.f32 %v678, 1e-05
    %v687 = vrsqrt.pop %v679
    %v688 = vrsqrt.pop %v680
    %v689 = vrsqrt.pop %v681
    %v690 = vrsqrt.pop %v682
    %v691 = vrsqrt.pop %v683
    %v692 = vrsqrt.pop %v684
    %v693 = vrsqrt.pop %v685
    %v694 = vrsqrt.pop %v686
    %v695 = vmul.f32 %v639, %v687
    %v696 = vmul.f32 %v640, %v688
    %v697 = vmul.f32 %v641, %v689
    %v698 = vmul.f32 %v642, %v690
    %v699 = vmul.f32 %v643, %v691
    %v700 = vmul.f32 %v644, %v692
    %v701 = vmul.f32 %v645, %v693
    %v702 = vmul.f32 %v646, %v694
    %v703 = vmul.f32 %v600, %v695
    %v704 = vmul.f32 %v602, %v696
    %v705 = vmul.f32 %v604, %v697
    %v706 = vmul.f32 %v606, %v698
    %v707 = vmul.f32 %v608, %v699
    %v708 = vmul.f32 %v610, %v700
    %v709 = vmul.f32 %v612, %v701
    %v710 = vmul.f32 %v614, %v702
    %v711 = vadd.f32 %v703, %v516
    %v712 = vadd.f32 %v704, %v520
    %v713 = vadd.f32 %v705, %v526
    %v714 = vadd.f32 %v706, %v530
    %v715 = vadd.f32 %v707, %v536
    %v716 = vadd.f32 %v708, %v540
    %v717 = vadd.f32 %v709, %v546
    %v718 = vadd.f32 %v710, %v550
    %719 = vadd.xlane.f32.xlu0 %v259
    %v720 = vpop.xlane.xlu0 %719
    %721 = vadd.xlane.f32.xlu0 %v260
    %v722 = vpop.xlane.xlu0 %721
    %723 = vadd.xlane.f32.xlu0 %v261
    %v724 = vpop.xlane.xlu0 %723
    %725 = vadd.xlane.f32.xlu0 %v262
    %v726 = vpop.xlane.xlu0 %725
    %727 = vadd.xlane.f32.xlu0 %v263
    %v728 = vpop.xlane.xlu0 %727
    %729 = vadd.xlane.f32.xlu0 %v264
    %v730 = vpop.xlane.xlu0 %729
    %731 = vadd.xlane.f32.xlu0 %v265
    %v732 = vpop.xlane.xlu0 %731
    %733 = vadd.xlane.f32.xlu0 %v266
    %v734 = vpop.xlane.xlu0 %733
    %735 = vadd.xlane.f32.xlu0 %v267
    %v736 = vpop.xlane.xlu0 %735
    %737 = vadd.xlane.f32.xlu0 %v268
    %v738 = vpop.xlane.xlu0 %737
    %739 = vadd.xlane.f32.xlu0 %v269
    %v740 = vpop.xlane.xlu0 %739
    %741 = vadd.xlane.f32.xlu0 %v270
    %v742 = vpop.xlane.xlu0 %741
    %743 = vadd.xlane.f32.xlu0 %v271
    %v744 = vpop.xlane.xlu0 %743
    %745 = vadd.xlane.f32.xlu0 %v272
    %v746 = vpop.xlane.xlu0 %745
    %747 = vadd.xlane.f32.xlu0 %v273
    %v748 = vpop.xlane.xlu0 %747
    %749 = vadd.xlane.f32.xlu0 %v274
    %v750 = vpop.xlane.xlu0 %749
    %v751 = vmul.f32 %v720, %v291
    %v752 = vmul.f32 %v722, %v291
    %v753 = vmul.f32 %v724, %v291
    %v754 = vmul.f32 %v726, %v291
    %v755 = vmul.f32 %v728, %v291
    %v756 = vmul.f32 %v730, %v291
    %v757 = vmul.f32 %v732, %v291
    %v758 = vmul.f32 %v734, %v291
    %v759 = vmul.f32 %v736, %v291
    %v760 = vmul.f32 %v738, %v291
    %v761 = vmul.f32 %v740, %v291
    %v762 = vmul.f32 %v742, %v291
    %v763 = vmul.f32 %v744, %v291
    %v764 = vmul.f32 %v746, %v291
    %v765 = vmul.f32 %v748, %v291
    %v766 = vmul.f32 %v750, %v291
    %v767 = vsub.f32 %v259, %v751
    %v768 = vsub.f32 %v260, %v752
    %v769 = vsub.f32 %v261, %v753
    %v770 = vsub.f32 %v262, %v754
    %v771 = vsub.f32 %v263, %v755
    %v772 = vsub.f32 %v264, %v756
    %v773 = vsub.f32 %v265, %v757
    %v774 = vsub.f32 %v266, %v758
    %v775 = vsub.f32 %v267, %v759
    %v776 = vsub.f32 %v268, %v760
    %v777 = vsub.f32 %v269, %v761
    %v778 = vsub.f32 %v270, %v762
    %v779 = vsub.f32 %v271, %v763
    %v780 = vsub.f32 %v272, %v764
    %v781 = vsub.f32 %v273, %v765
    %v782 = vsub.f32 %v274, %v766
    %v783 = vmul.f32 %v767, %v767
    %v784 = vmul.f32 %v768, %v768
    %v785 = vmul.f32 %v769, %v769
    %v786 = vmul.f32 %v770, %v770
    %v787 = vmul.f32 %v771, %v771
    %v788 = vmul.f32 %v772, %v772
    %v789 = vmul.f32 %v773, %v773
    %v790 = vmul.f32 %v774, %v774
    %v791 = vmul.f32 %v775, %v775
    %v792 = vmul.f32 %v776, %v776
    %v793 = vmul.f32 %v777, %v777
    %v794 = vmul.f32 %v778, %v778
    %v795 = vmul.f32 %v779, %v779
    %v796 = vmul.f32 %v780, %v780
    %v797 = vmul.f32 %v781, %v781
    %v798 = vmul.f32 %v782, %v782
    %799 = vadd.xlane.f32.xlu0 %v783
    %v800 = vpop.xlane.xlu0 %799
    %801 = vadd.xlane.f32.xlu0 %v784
    %v802 = vpop.xlane.xlu0 %801
    %803 = vadd.xlane.f32.xlu0 %v785
    %v804 = vpop.xlane.xlu0 %803
    %805 = vadd.xlane.f32.xlu0 %v786
    %v806 = vpop.xlane.xlu0 %805
    %807 = vadd.xlane.f32.xlu0 %v787
    %v808 = vpop.xlane.xlu0 %807
    %809 = vadd.xlane.f32.xlu0 %v788
    %v810 = vpop.xlane.xlu0 %809
    %811 = vadd.xlane.f32.xlu0 %v789
    %v812 = vpop.xlane.xlu0 %811
    %813 = vadd.xlane.f32.xlu0 %v790
    %v814 = vpop.xlane.xlu0 %813
    %815 = vadd.xlane.f32.xlu0 %v791
    %v816 = vpop.xlane.xlu0 %815
    %817 = vadd.xlane.f32.xlu0 %v792
    %v818 = vpop.xlane.xlu0 %817
    %819 = vadd.xlane.f32.xlu0 %v793
    %v820 = vpop.xlane.xlu0 %819
    %821 = vadd.xlane.f32.xlu0 %v794
    %v822 = vpop.xlane.xlu0 %821
    %823 = vadd.xlane.f32.xlu0 %v795
    %v824 = vpop.xlane.xlu0 %823
    %825 = vadd.xlane.f32.xlu0 %v796
    %v826 = vpop.xlane.xlu0 %825
    %827 = vadd.xlane.f32.xlu0 %v797
    %v828 = vpop.xlane.xlu0 %827
    %829 = vadd.xlane.f32.xlu0 %v798
    %v830 = vpop.xlane.xlu0 %829
    %v831 = vmul.f32 %v800, %v291
    %v832 = vmul.f32 %v802, %v291
    %v833 = vmul.f32 %v804, %v291
    %v834 = vmul.f32 %v806, %v291
    %v835 = vmul.f32 %v808, %v291
    %v836 = vmul.f32 %v810, %v291
    %v837 = vmul.f32 %v812, %v291
    %v838 = vmul.f32 %v814, %v291
    %v839 = vmul.f32 %v816, %v291
    %v840 = vmul.f32 %v818, %v291
    %v841 = vmul.f32 %v820, %v291
    %v842 = vmul.f32 %v822, %v291
    %v843 = vmul.f32 %v824, %v291
    %v844 = vmul.f32 %v826, %v291
    %v845 = vmul.f32 %v828, %v291
    %v846 = vmul.f32 %v830, %v291
    %v847 = vadd.f32 %v831, 1e-05
    %v848 = vadd.f32 %v832, 1e-05
    %v849 = vadd.f32 %v833, 1e-05
    %v850 = vadd.f32 %v834, 1e-05
    %v851 = vadd.f32 %v835, 1e-05
    %v852 = vadd.f32 %v836, 1e-05
    %v853 = vadd.f32 %v837, 1e-05
    %v854 = vadd.f32 %v838, 1e-05
    %v855 = vadd.f32 %v839, 1e-05
    %v856 = vadd.f32 %v840, 1e-05
    %v857 = vadd.f32 %v841, 1e-05
    %v858 = vadd.f32 %v842, 1e-05
    %v859 = vadd.f32 %v843, 1e-05
    %v860 = vadd.f32 %v844, 1e-05
    %v861 = vadd.f32 %v845, 1e-05
    %v862 = vadd.f32 %v846, 1e-05
    %v863 = vrsqrt.pop %v847
    %v864 = vrsqrt.pop %v848
    %v865 = vrsqrt.pop %v849
    %v866 = vrsqrt.pop %v850
    %v867 = vrsqrt.pop %v851
    %v868 = vrsqrt.pop %v852
    %v869 = vrsqrt.pop %v853
    %v870 = vrsqrt.pop %v854
    %v871 = vrsqrt.pop %v855
    %v872 = vrsqrt.pop %v856
    %v873 = vrsqrt.pop %v857
    %v874 = vrsqrt.pop %v858
    %v875 = vrsqrt.pop %v859
    %v876 = vrsqrt.pop %v860
    %v877 = vrsqrt.pop %v861
    %v878 = vrsqrt.pop %v862
    %v879 = vmul.f32 %v767, %v863
    %v880 = vmul.f32 %v768, %v864
    %v881 = vmul.f32 %v769, %v865
    %v882 = vmul.f32 %v770, %v866
    %v883 = vmul.f32 %v771, %v867
    %v884 = vmul.f32 %v772, %v868
    %v885 = vmul.f32 %v773, %v869
    %v886 = vmul.f32 %v774, %v870
    %v887 = vmul.f32 %v775, %v871
    %v888 = vmul.f32 %v776, %v872
    %v889 = vmul.f32 %v777, %v873
    %v890 = vmul.f32 %v778, %v874
    %v891 = vmul.f32 %v779, %v875
    %v892 = vmul.f32 %v780, %v876
    %v893 = vmul.f32 %v781, %v877
    %v894 = vmul.f32 %v782, %v878
    %v895 = vld [vmem:[%s10] sm:$0x1]
    %v897 = vlaneseq
    %v898 = vshrl.u32 %v897, 7
    %v899 = vsub.s32 0, %v898
    %v900 = vrot.slane %v895, %v899
    %v902 = vmul.f32 %v879, %v900
    %v903 = vmul.f32 %v880, %v900
    %v904 = vmul.f32 %v881, %v900
    %v905 = vmul.f32 %v882, %v900
    %v906 = vmul.f32 %v883, %v900
    %v907 = vmul.f32 %v884, %v900
    %v908 = vmul.f32 %v885, %v900
    %v909 = vmul.f32 %v886, %v900
    %v910 = vmul.f32 %v887, %v900
    %v911 = vmul.f32 %v888, %v900
    %v912 = vmul.f32 %v889, %v900
    %v913 = vmul.f32 %v890, %v900
    %v914 = vmul.f32 %v891, %v900
    %v915 = vmul.f32 %v892, %v900
    %v916 = vmul.f32 %v893, %v900
    %v917 = vmul.f32 %v894, %v900
    %v918 = vpack.c.bf16 %v903, %v902
    %v919 = vpack.c.bf16 %v905, %v904
    %v920 = vpack.c.bf16 %v907, %v906
    %v921 = vpack.c.bf16 %v909, %v908
    %v922 = vpack.c.bf16 %v911, %v910
    %v923 = vpack.c.bf16 %v913, %v912
    %v924 = vpack.c.bf16 %v915, %v914
    %v925 = vpack.c.bf16 %v917, %v916
    %v926 = vld [vmem:[#allocation14] sm:$0xff]
    %v927 = vld [vmem:[#allocation14 + $0x8] sm:$0xff]
    %v928 = vld [vmem:[#allocation14 + $0x10] sm:$0xff]
    %v929 = vld [vmem:[#allocation14 + $0x18] sm:$0xff]
    %v930 = vld [vmem:[#allocation14 + $0x20] sm:$0xff]
    %v931 = vld [vmem:[#allocation14 + $0x28] sm:$0xff]
    %v932 = vld [vmem:[#allocation14 + $0x30] sm:$0xff]
    %v933 = vld [vmem:[#allocation14 + $0x38] sm:$0xff]
    %v934 = vld [vmem:[#allocation14 + $0x40] sm:$0xff]
    %v935 = vld [vmem:[#allocation14 + $0x48] sm:$0xff]
    %v936 = vld [vmem:[#allocation14 + $0x50] sm:$0xff]
    %v937 = vld [vmem:[#allocation14 + $0x58] sm:$0xff]
    %v938 = vld [vmem:[#allocation14 + $0x60] sm:$0xff]
    %v939 = vld [vmem:[#allocation14 + $0x68] sm:$0xff]
    %v940 = vld [vmem:[#allocation14 + $0x70] sm:$0xff]
    %v941 = vld [vmem:[#allocation14 + $0x78] sm:$0xff]
    %v958 = vunpack.c.l.b16 %v926
    %v959 = vunpack.c.h.b16 %v926
    %v960 = vunpack.c.l.b16 %v927
    %v961 = vunpack.c.h.b16 %v927
    %v962 = vunpack.c.l.b16 %v928
    %v963 = vunpack.c.h.b16 %v928
    %v964 = vunpack.c.l.b16 %v929
    %v965 = vunpack.c.h.b16 %v929
    %v966 = vunpack.c.l.b16 %v930
    %v967 = vunpack.c.h.b16 %v930
    %v968 = vunpack.c.l.b16 %v931
    %v969 = vunpack.c.h.b16 %v931
    %v970 = vunpack.c.l.b16 %v932
    %v971 = vunpack.c.h.b16 %v932
    %v972 = vunpack.c.l.b16 %v933
    %v973 = vunpack.c.h.b16 %v933
    %v974 = vunpack.c.l.b16 %v934
    %v975 = vunpack.c.h.b16 %v934
    %v976 = vunpack.c.l.b16 %v935
    %v977 = vunpack.c.h.b16 %v935
    %v978 = vunpack.c.l.b16 %v936
    %v979 = vunpack.c.h.b16 %v936
    %v980 = vunpack.c.l.b16 %v937
    %v981 = vunpack.c.h.b16 %v937
    %v982 = vunpack.c.l.b16 %v938
    %v983 = vunpack.c.h.b16 %v938
    %v984 = vunpack.c.l.b16 %v939
    %v985 = vunpack.c.h.b16 %v939
    %v986 = vunpack.c.l.b16 %v940
    %v987 = vunpack.c.h.b16 %v940
    %v988 = vunpack.c.l.b16 %v941
    %v989 = vunpack.c.h.b16 %v941
    %v990 = vpack.c.b16 %v960, %v958
    %v991 = vpack.c.b16 %v961, %v959
    %v992 = vpack.c.b16 %v964, %v962
    %v993 = vpack.c.b16 %v965, %v963
    %v994 = vpack.c.b16 %v968, %v966
    %v995 = vpack.c.b16 %v969, %v967
    %v996 = vpack.c.b16 %v972, %v970
    %v997 = vpack.c.b16 %v973, %v971
    %v998 = vpack.c.b16 %v976, %v974
    %v999 = vpack.c.b16 %v977, %v975
    %v1000 = vpack.c.b16 %v980, %v978
    %v1001 = vpack.c.b16 %v981, %v979
    %v1002 = vpack.c.b16 %v984, %v982
    %v1003 = vpack.c.b16 %v985, %v983
    %v1004 = vpack.c.b16 %v988, %v986
    %v1005 = vpack.c.b16 %v989, %v987
    %1022 = vmatprep.subr.bf16.mxu0 %v1005
    %1023 = vmatpush1.bf16.msra.mxu0 %v1004
    %1024 = vmatprep.subr.bf16.mxu0 %v1003
    %1025 = vmatpush1.bf16.msra.mxu0 %v1002
    %1026 = vmatprep.subr.bf16.mxu0 %v1001
    %1027 = vmatpush1.bf16.msra.mxu0 %v1000
    %1028 = vmatprep.subr.bf16.mxu0 %v999
    %1029 = vmatpush1.bf16.msra.mxu0 %v998
    %1030 = vmatprep.subr.bf16.mxu0 %v997
    %1031 = vmatpush1.bf16.msra.mxu0 %v996
    %1032 = vmatprep.subr.bf16.mxu0 %v995
    %1033 = vmatpush1.bf16.msra.mxu0 %v994
    %1034 = vmatprep.subr.bf16.mxu0 %v993
    %1035 = vmatpush1.bf16.msra.mxu0 %v992
    %1036 = vmatprep.subr.bf16.mxu0 %v991
    %1037 = vmatpush1.bf16.msra.mxu0 %v990
    %1038 = vmatprep.subr.bf16.mxu0 0
    %1039 = vmatpush2.bf16.msra.mxu0 0
    %1040 = vmatprep.subr.bf16.mxu0 0
    %1041 = vmatpush2.bf16.msra.mxu0 0
    %1042 = vmatprep.subr.bf16.mxu0 0
    %1043 = vmatpush2.bf16.msra.mxu0 0
    %1044 = vmatprep.subr.bf16.mxu0 0
    %1045 = vmatpush2.bf16.msra.mxu0 0
    %1046 = vmatprep.subr.bf16.mxu0 0
    %1047 = vmatpush2.bf16.msra.mxu0 0
    %1048 = vmatprep.subr.bf16.mxu0 0
    %1049 = vmatpush2.bf16.msra.mxu0 0
    %1050 = vmatprep.subr.bf16.mxu0 0
    %1051 = vmatpush2.bf16.msra.mxu0 0
    %1052 = vmatprep.subr.bf16.mxu0 0
    %1053 = vmatpush2.bf16.msra.mxu0 0
    %1054 = vmatprep.mubr.bf16.mxu0 0
    %1055 = vmatmul.mubr.bf16.gmra.mxu0 %v918
    %v1056 = vpop.f32.mrf.mxu0
    %v1057 = vadd.f32 0.0, %v1056
    %v1058 = vpop.f32.mrf.mxu0
    %v1059 = vadd.f32 0.0, %v1058
    %v1060 = vpop.f32.mrf.mxu0
    %v1061 = vadd.f32 0.0, %v1060
    %v1062 = vpop.f32.mrf.mxu0
    %v1063 = vadd.f32 0.0, %v1062
    %1064 = vmatprep.mubr.bf16.mxu0 0
    %1065 = vmatmul.mubr.bf16.gmra.mxu0 %v919
    %v1066 = vpop.f32.mrf.mxu0
    %v1067 = vadd.f32 0.0, %v1066
    %v1068 = vpop.f32.mrf.mxu0
    %v1069 = vadd.f32 0.0, %v1068
    %v1070 = vpop.f32.mrf.mxu0
    %v1071 = vadd.f32 0.0, %v1070
    %v1072 = vpop.f32.mrf.mxu0
    %v1073 = vadd.f32 0.0, %v1072
    %1074 = vmatprep.mubr.bf16.mxu0 0
    %1075 = vmatmul.mubr.bf16.gmra.mxu0 %v920
    %v1076 = vpop.f32.mrf.mxu0
    %v1077 = vadd.f32 0.0, %v1076
    %v1078 = vpop.f32.mrf.mxu0
    %v1079 = vadd.f32 0.0, %v1078
    %v1080 = vpop.f32.mrf.mxu0
    %v1081 = vadd.f32 0.0, %v1080
    %v1082 = vpop.f32.mrf.mxu0
    %v1083 = vadd.f32 0.0, %v1082
    %1084 = vmatprep.mubr.bf16.mxu0 0
    %1085 = vmatmul.mubr.bf16.gmra.mxu0 %v921
    %v1086 = vpop.f32.mrf.mxu0
    %v1087 = vadd.f32 0.0, %v1086
    %v1088 = vpop.f32.mrf.mxu0
    %v1089 = vadd.f32 0.0, %v1088
    %v1090 = vpop.f32.mrf.mxu0
    %v1091 = vadd.f32 0.0, %v1090
    %v1092 = vpop.f32.mrf.mxu0
    %v1093 = vadd.f32 0.0, %v1092
    %1094 = vmatprep.mubr.bf16.mxu0 0
    %1095 = vmatmul.mubr.bf16.gmra.mxu0 %v922
    %v1096 = vpop.f32.mrf.mxu0
    %v1097 = vadd.f32 0.0, %v1096
    %v1098 = vpop.f32.mrf.mxu0
    %v1099 = vadd.f32 0.0, %v1098
    %v1100 = vpop.f32.mrf.mxu0
    %v1101 = vadd.f32 0.0, %v1100
    %v1102 = vpop.f32.mrf.mxu0
    %v1103 = vadd.f32 0.0, %v1102
    %1104 = vmatprep.mubr.bf16.mxu0 0
    %1105 = vmatmul.mubr.bf16.gmra.mxu0 %v923
    %v1106 = vpop.f32.mrf.mxu0
    %v1107 = vadd.f32 0.0, %v1106
    %v1108 = vpop.f32.mrf.mxu0
    %v1109 = vadd.f32 0.0, %v1108
    %v1110 = vpop.f32.mrf.mxu0
    %v1111 = vadd.f32 0.0, %v1110
    %v1112 = vpop.f32.mrf.mxu0
    %v1113 = vadd.f32 0.0, %v1112
    %1114 = vmatprep.mubr.bf16.mxu0 0
    %1115 = vmatmul.mubr.bf16.gmra.mxu0 %v924
    %v1116 = vpop.f32.mrf.mxu0
    %v1117 = vadd.f32 0.0, %v1116
    %v1118 = vpop.f32.mrf.mxu0
    %v1119 = vadd.f32 0.0, %v1118
    %v1120 = vpop.f32.mrf.mxu0
    %v1121 = vadd.f32 0.0, %v1120
    %v1122 = vpop.f32.mrf.mxu0
    %v1123 = vadd.f32 0.0, %v1122
    %1124 = vmatprep.mubr.bf16.mxu0 0
    %1125 = vmatmul.mubr.bf16.gmra.mxu0 %v925
    %v1126 = vpop.f32.mrf.mxu0
    %v1127 = vadd.f32 0.0, %v1126
    %v1128 = vpop.f32.mrf.mxu0
    %v1129 = vadd.f32 0.0, %v1128
    %v1130 = vpop.f32.mrf.mxu0
    %v1131 = vadd.f32 0.0, %v1130
    %v1132 = vpop.f32.mrf.mxu0
    %v1133 = vadd.f32 0.0, %v1132
    %1134 = vdwg.mxu0
    %v1135 = vld [vmem:[%s12] sm:$0x1]
    %v1137 = vlaneseq
    %v1138 = vshrl.u32 %v1137, 7
    %v1139 = vsub.s32 0, %v1138
    %v1140 = vrot.slane %v1135, %v1139
    %v1142 = vadd.f32 %v1057, %v1140
    %v1143 = vadd.f32 %v1061, %v1140
    %v1144 = vadd.f32 %v1067, %v1140
    %v1145 = vadd.f32 %v1071, %v1140
    %v1146 = vadd.f32 %v1077, %v1140
    %v1147 = vadd.f32 %v1081, %v1140
    %v1148 = vadd.f32 %v1087, %v1140
    %v1149 = vadd.f32 %v1091, %v1140
    %v1150 = vadd.f32 %v1097, %v1140
    %v1151 = vadd.f32 %v1101, %v1140
    %v1152 = vadd.f32 %v1107, %v1140
    %v1153 = vadd.f32 %v1111, %v1140
    %v1154 = vadd.f32 %v1117, %v1140
    %v1155 = vadd.f32 %v1121, %v1140
    %v1156 = vadd.f32 %v1127, %v1140
    %v1157 = vadd.f32 %v1131, %v1140
    %v1158 = vxor.u32 %v1142, 2147483648
    %v1159 = vxor.u32 %v1143, 2147483648
    %v1160 = vxor.u32 %v1144, 2147483648
    %v1161 = vxor.u32 %v1145, 2147483648
    %v1162 = vxor.u32 %v1146, 2147483648
    %v1163 = vxor.u32 %v1147, 2147483648
    %v1164 = vxor.u32 %v1148, 2147483648
    %v1165 = vxor.u32 %v1149, 2147483648
    %v1166 = vxor.u32 %v1150, 2147483648
    %v1167 = vxor.u32 %v1151, 2147483648
    %v1168 = vxor.u32 %v1152, 2147483648
    %v1169 = vxor.u32 %v1153, 2147483648
    %v1170 = vxor.u32 %v1154, 2147483648
    %v1171 = vxor.u32 %v1155, 2147483648
    %v1172 = vxor.u32 %v1156, 2147483648
    %v1173 = vxor.u32 %v1157, 2147483648
    %v1174 = vmul.f32 %v1158, 1.442695
    %v1175 = vpow.pop %v1174
    %v1176 = vmul.f32 %v1159, 1.442695
    %v1177 = vpow.pop %v1176
    %v1178 = vmul.f32 %v1160, 1.442695
    %v1179 = vpow.pop %v1178
    %v1180 = vmul.f32 %v1161, 1.442695
    %v1181 = vpow.pop %v1180
    %v1182 = vmul.f32 %v1162, 1.442695
    %v1183 = vpow.pop %v1182
    %v1184 = vmul.f32 %v1163, 1.442695
    %v1185 = vpow.pop %v1184
    %v1186 = vmul.f32 %v1164, 1.442695
    %v1187 = vpow.pop %v1186
    %v1188 = vmul.f32 %v1165, 1.442695
    %v1189 = vpow.pop %v1188
    %v1190 = vmul.f32 %v1166, 1.442695
    %v1191 = vpow.pop %v1190
    %v1192 = vmul.f32 %v1167, 1.442695
    %v1193 = vpow.pop %v1192
    %v1194 = vmul.f32 %v1168, 1.442695
    %v1195 = vpow.pop %v1194
    %v1196 = vmul.f32 %v1169, 1.442695
    %v1197 = vpow.pop %v1196
    %v1198 = vmul.f32 %v1170, 1.442695
    %v1199 = vpow.pop %v1198
    %v1200 = vmul.f32 %v1171, 1.442695
    %v1201 = vpow.pop %v1200
    %v1202 = vmul.f32 %v1172, 1.442695
    %v1203 = vpow.pop %v1202
    %v1204 = vmul.f32 %v1173, 1.442695
    %v1205 = vpow.pop %v1204
    %v1206 = vadd.f32 %v1175, 1.0
    %v1207 = vadd.f32 %v1177, 1.0
    %v1208 = vadd.f32 %v1179, 1.0
    %v1209 = vadd.f32 %v1181, 1.0
    %v1210 = vadd.f32 %v1183, 1.0
    %v1211 = vadd.f32 %v1185, 1.0
    %v1212 = vadd.f32 %v1187, 1.0
    %v1213 = vadd.f32 %v1189, 1.0
    %v1214 = vadd.f32 %v1191, 1.0
    %v1215 = vadd.f32 %v1193, 1.0
    %v1216 = vadd.f32 %v1195, 1.0
    %v1217 = vadd.f32 %v1197, 1.0
    %v1218 = vadd.f32 %v1199, 1.0
    %v1219 = vadd.f32 %v1201, 1.0
    %v1220 = vadd.f32 %v1203, 1.0
    %v1221 = vadd.f32 %v1205, 1.0
    %v1222 = vrcp.pop %v1206
    %v1223 = vmul.f32 1.0, %v1222
    %v1224 = vrcp.pop %v1207
    %v1225 = vmul.f32 1.0, %v1224
    %v1226 = vrcp.pop %v1208
    %v1227 = vmul.f32 1.0, %v1226
    %v1228 = vrcp.pop %v1209
    %v1229 = vmul.f32 1.0, %v1228
    %v1230 = vrcp.pop %v1210
    %v1231 = vmul.f32 1.0, %v1230
    %v1232 = vrcp.pop %v1211
    %v1233 = vmul.f32 1.0, %v1232
    %v1234 = vrcp.pop %v1212
    %v1235 = vmul.f32 1.0, %v1234
    %v1236 = vrcp.pop %v1213
    %v1237 = vmul.f32 1.0, %v1236
    %v1238 = vrcp.pop %v1214
    %v1239 = vmul.f32 1.0, %v1238
    %v1240 = vrcp.pop %v1215
    %v1241 = vmul.f32 1.0, %v1240
    %v1242 = vrcp.pop %v1216
    %v1243 = vmul.f32 1.0, %v1242
    %v1244 = vrcp.pop %v1217
    %v1245 = vmul.f32 1.0, %v1244
    %v1246 = vrcp.pop %v1218
    %v1247 = vmul.f32 1.0, %v1246
    %v1248 = vrcp.pop %v1219
    %v1249 = vmul.f32 1.0, %v1248
    %v1250 = vrcp.pop %v1220
    %v1251 = vmul.f32 1.0, %v1250
    %v1252 = vrcp.pop %v1221
    %v1253 = vmul.f32 1.0, %v1252
    %1254 = vadd.xlane.f32.xlu0 %v235
    %v1255 = vpop.xlane.xlu0 %1254
    %1256 = vadd.xlane.f32.xlu0 %v236
    %v1257 = vpop.xlane.xlu0 %1256
    %1258 = vadd.xlane.f32.xlu0 %v237
    %v1259 = vpop.xlane.xlu0 %1258
    %1260 = vadd.xlane.f32.xlu0 %v238
    %v1261 = vpop.xlane.xlu0 %1260
    %1262 = vadd.xlane.f32.xlu0 %v239
    %v1263 = vpop.xlane.xlu0 %1262
    %1264 = vadd.xlane.f32.xlu0 %v240
    %v1265 = vpop.xlane.xlu0 %1264
    %1266 = vadd.xlane.f32.xlu0 %v241
    %v1267 = vpop.xlane.xlu0 %1266
    %1268 = vadd.xlane.f32.xlu0 %v242
    %v1269 = vpop.xlane.xlu0 %1268
    %1270 = vadd.xlane.f32.xlu0 %v243
    %v1271 = vpop.xlane.xlu0 %1270
    %1272 = vadd.xlane.f32.xlu0 %v244
    %v1273 = vpop.xlane.xlu0 %1272
    %1274 = vadd.xlane.f32.xlu0 %v245
    %v1275 = vpop.xlane.xlu0 %1274
    %1276 = vadd.xlane.f32.xlu0 %v246
    %v1277 = vpop.xlane.xlu0 %1276
    %1278 = vadd.xlane.f32.xlu0 %v247
    %v1279 = vpop.xlane.xlu0 %1278
    %1280 = vadd.xlane.f32.xlu0 %v248
    %v1281 = vpop.xlane.xlu0 %1280
    %1282 = vadd.xlane.f32.xlu0 %v249
    %v1283 = vpop.xlane.xlu0 %1282
    %1284 = vadd.xlane.f32.xlu0 %v250
    %v1285 = vpop.xlane.xlu0 %1284
    %v1286 = vmul.f32 %v1255, %v291
    %v1287 = vmul.f32 %v1257, %v291
    %v1288 = vmul.f32 %v1259, %v291
    %v1289 = vmul.f32 %v1261, %v291
    %v1290 = vmul.f32 %v1263, %v291
    %v1291 = vmul.f32 %v1265, %v291
    %v1292 = vmul.f32 %v1267, %v291
    %v1293 = vmul.f32 %v1269, %v291
    %v1294 = vmul.f32 %v1271, %v291
    %v1295 = vmul.f32 %v1273, %v291
    %v1296 = vmul.f32 %v1275, %v291
    %v1297 = vmul.f32 %v1277, %v291
    %v1298 = vmul.f32 %v1279, %v291
    %v1299 = vmul.f32 %v1281, %v291
    %v1300 = vmul.f32 %v1283, %v291
    %v1301 = vmul.f32 %v1285, %v291
    %v1302 = vsub.f32 %v235, %v1286
    %v1303 = vsub.f32 %v236, %v1287
    %v1304 = vsub.f32 %v237, %v1288
    %v1305 = vsub.f32 %v238, %v1289
    %v1306 = vsub.f32 %v239, %v1290
    %v1307 = vsub.f32 %v240, %v1291
    %v1308 = vsub.f32 %v241, %v1292
    %v1309 = vsub.f32 %v242, %v1293
    %v1310 = vsub.f32 %v243, %v1294
    %v1311 = vsub.f32 %v244, %v1295
    %v1312 = vsub.f32 %v245, %v1296
    %v1313 = vsub.f32 %v246, %v1297
    %v1314 = vsub.f32 %v247, %v1298
    %v1315 = vsub.f32 %v248, %v1299
    %v1316 = vsub.f32 %v249, %v1300
    %v1317 = vsub.f32 %v250, %v1301
    %v1318 = vmul.f32 %v1302, %v1302
    %v1319 = vmul.f32 %v1303, %v1303
    %v1320 = vmul.f32 %v1304, %v1304
    %v1321 = vmul.f32 %v1305, %v1305
    %v1322 = vmul.f32 %v1306, %v1306
    %v1323 = vmul.f32 %v1307, %v1307
    %v1324 = vmul.f32 %v1308, %v1308
    %v1325 = vmul.f32 %v1309, %v1309
    %v1326 = vmul.f32 %v1310, %v1310
    %v1327 = vmul.f32 %v1311, %v1311
    %v1328 = vmul.f32 %v1312, %v1312
    %v1329 = vmul.f32 %v1313, %v1313
    %v1330 = vmul.f32 %v1314, %v1314
    %v1331 = vmul.f32 %v1315, %v1315
    %v1332 = vmul.f32 %v1316, %v1316
    %v1333 = vmul.f32 %v1317, %v1317
    %1334 = vadd.xlane.f32.xlu0 %v1318
    %v1335 = vpop.xlane.xlu0 %1334
    %1336 = vadd.xlane.f32.xlu0 %v1319
    %v1337 = vpop.xlane.xlu0 %1336
    %1338 = vadd.xlane.f32.xlu0 %v1320
    %v1339 = vpop.xlane.xlu0 %1338
    %1340 = vadd.xlane.f32.xlu0 %v1321
    %v1341 = vpop.xlane.xlu0 %1340
    %1342 = vadd.xlane.f32.xlu0 %v1322
    %v1343 = vpop.xlane.xlu0 %1342
    %1344 = vadd.xlane.f32.xlu0 %v1323
    %v1345 = vpop.xlane.xlu0 %1344
    %1346 = vadd.xlane.f32.xlu0 %v1324
    %v1347 = vpop.xlane.xlu0 %1346
    %1348 = vadd.xlane.f32.xlu0 %v1325
    %v1349 = vpop.xlane.xlu0 %1348
    %1350 = vadd.xlane.f32.xlu0 %v1326
    %v1351 = vpop.xlane.xlu0 %1350
    %1352 = vadd.xlane.f32.xlu0 %v1327
    %v1353 = vpop.xlane.xlu0 %1352
    %1354 = vadd.xlane.f32.xlu0 %v1328
    %v1355 = vpop.xlane.xlu0 %1354
    %1356 = vadd.xlane.f32.xlu0 %v1329
    %v1357 = vpop.xlane.xlu0 %1356
    %1358 = vadd.xlane.f32.xlu0 %v1330
    %v1359 = vpop.xlane.xlu0 %1358
    %1360 = vadd.xlane.f32.xlu0 %v1331
    %v1361 = vpop.xlane.xlu0 %1360
    %1362 = vadd.xlane.f32.xlu0 %v1332
    %v1363 = vpop.xlane.xlu0 %1362
    %1364 = vadd.xlane.f32.xlu0 %v1333
    %v1365 = vpop.xlane.xlu0 %1364
    %v1366 = vmul.f32 %v1335, %v291
    %v1367 = vmul.f32 %v1337, %v291
    %v1368 = vmul.f32 %v1339, %v291
    %v1369 = vmul.f32 %v1341, %v291
    %v1370 = vmul.f32 %v1343, %v291
    %v1371 = vmul.f32 %v1345, %v291
    %v1372 = vmul.f32 %v1347, %v291
    %v1373 = vmul.f32 %v1349, %v291
    %v1374 = vmul.f32 %v1351, %v291
    %v1375 = vmul.f32 %v1353, %v291
    %v1376 = vmul.f32 %v1355, %v291
    %v1377 = vmul.f32 %v1357, %v291
    %v1378 = vmul.f32 %v1359, %v291
    %v1379 = vmul.f32 %v1361, %v291
    %v1380 = vmul.f32 %v1363, %v291
    %v1381 = vmul.f32 %v1365, %v291
    %v1382 = vadd.f32 %v1366, 1e-05
    %v1383 = vadd.f32 %v1367, 1e-05
    %v1384 = vadd.f32 %v1368, 1e-05
    %v1385 = vadd.f32 %v1369, 1e-05
    %v1386 = vadd.f32 %v1370, 1e-05
    %v1387 = vadd.f32 %v1371, 1e-05
    %v1388 = vadd.f32 %v1372, 1e-05
    %v1389 = vadd.f32 %v1373, 1e-05
    %v1390 = vadd.f32 %v1374, 1e-05
    %v1391 = vadd.f32 %v1375, 1e-05
    %v1392 = vadd.f32 %v1376, 1e-05
    %v1393 = vadd.f32 %v1377, 1e-05
    %v1394 = vadd.f32 %v1378, 1e-05
    %v1395 = vadd.f32 %v1379, 1e-05
    %v1396 = vadd.f32 %v1380, 1e-05
    %v1397 = vadd.f32 %v1381, 1e-05
    %v1398 = vrsqrt.pop %v1382
    %v1399 = vrsqrt.pop %v1383
    %v1400 = vrsqrt.pop %v1384
    %v1401 = vrsqrt.pop %v1385
    %v1402 = vrsqrt.pop %v1386
    %v1403 = vrsqrt.pop %v1387
    %v1404 = vrsqrt.pop %v1388
    %v1405 = vrsqrt.pop %v1389
    %v1406 = vrsqrt.pop %v1390
    %v1407 = vrsqrt.pop %v1391
    %v1408 = vrsqrt.pop %v1392
    %v1409 = vrsqrt.pop %v1393
    %v1410 = vrsqrt.pop %v1394
    %v1411 = vrsqrt.pop %v1395
    %v1412 = vrsqrt.pop %v1396
    %v1413 = vrsqrt.pop %v1397
    %v1414 = vmul.f32 %v1302, %v1398
    %v1415 = vmul.f32 %v1303, %v1399
    %v1416 = vmul.f32 %v1304, %v1400
    %v1417 = vmul.f32 %v1305, %v1401
    %v1418 = vmul.f32 %v1306, %v1402
    %v1419 = vmul.f32 %v1307, %v1403
    %v1420 = vmul.f32 %v1308, %v1404
    %v1421 = vmul.f32 %v1309, %v1405
    %v1422 = vmul.f32 %v1310, %v1406
    %v1423 = vmul.f32 %v1311, %v1407
    %v1424 = vmul.f32 %v1312, %v1408
    %v1425 = vmul.f32 %v1313, %v1409
    %v1426 = vmul.f32 %v1314, %v1410
    %v1427 = vmul.f32 %v1315, %v1411
    %v1428 = vmul.f32 %v1316, %v1412
    %v1429 = vmul.f32 %v1317, %v1413
    %v1430 = vmul.f32 %v1223, %v1414
    %v1431 = vmul.f32 %v1225, %v1415
    %v1432 = vmul.f32 %v1227, %v1416
    %v1433 = vmul.f32 %v1229, %v1417
    %v1434 = vmul.f32 %v1231, %v1418
    %v1435 = vmul.f32 %v1233, %v1419
    %v1436 = vmul.f32 %v1235, %v1420
    %v1437 = vmul.f32 %v1237, %v1421
    %v1438 = vmul.f32 %v1239, %v1422
    %v1439 = vmul.f32 %v1241, %v1423
    %v1440 = vmul.f32 %v1243, %v1424
    %v1441 = vmul.f32 %v1245, %v1425
    %v1442 = vmul.f32 %v1247, %v1426
    %v1443 = vmul.f32 %v1249, %v1427
    %v1444 = vmul.f32 %v1251, %v1428
    %v1445 = vmul.f32 %v1253, %v1429
    %v1446 = vadd.f32 %v1430, %v1059
    %v1447 = vadd.f32 %v1431, %v1063
    %v1448 = vadd.f32 %v1432, %v1069
    %v1449 = vadd.f32 %v1433, %v1073
    %v1450 = vadd.f32 %v1434, %v1079
    %v1451 = vadd.f32 %v1435, %v1083
    %v1452 = vadd.f32 %v1436, %v1089
    %v1453 = vadd.f32 %v1437, %v1093
    %v1454 = vadd.f32 %v1438, %v1099
    %v1455 = vadd.f32 %v1439, %v1103
    %v1456 = vadd.f32 %v1440, %v1109
    %v1457 = vadd.f32 %v1441, %v1113
    %v1458 = vadd.f32 %v1442, %v1119
    %v1459 = vadd.f32 %v1443, %v1123
    %v1460 = vadd.f32 %v1444, %v1129
    %v1461 = vadd.f32 %v1445, %v1133
    %v1462 = vpack.c.bf16 %v712, %v711
    %v1463 = vpack.c.bf16 %v714, %v713
    %v1464 = vpack.c.bf16 %v716, %v715
    %v1465 = vpack.c.bf16 %v718, %v717
    %v1466 = vld [vmem:[#allocation16] sm:$0xff]
    %v1467 = vld [vmem:[#allocation16 + $0x8] sm:$0xff]
    %v1468 = vld [vmem:[#allocation16 + $0x10] sm:$0xff]
    %v1469 = vld [vmem:[#allocation16 + $0x18] sm:$0xff]
    %v1470 = vld [vmem:[#allocation16 + $0x20] sm:$0xff]
    %v1471 = vld [vmem:[#allocation16 + $0x28] sm:$0xff]
    %v1472 = vld [vmem:[#allocation16 + $0x30] sm:$0xff]
    %v1473 = vld [vmem:[#allocation16 + $0x38] sm:$0xff]
    %v1474 = vld [vmem:[#allocation16 + $0x40] sm:$0xff]
    %v1475 = vld [vmem:[#allocation16 + $0x48] sm:$0xff]
    %v1476 = vld [vmem:[#allocation16 + $0x50] sm:$0xff]
    %v1477 = vld [vmem:[#allocation16 + $0x58] sm:$0xff]
    %v1478 = vld [vmem:[#allocation16 + $0x60] sm:$0xff]
    %v1479 = vld [vmem:[#allocation16 + $0x68] sm:$0xff]
    %v1480 = vld [vmem:[#allocation16 + $0x70] sm:$0xff]
    %v1481 = vld [vmem:[#allocation16 + $0x78] sm:$0xff]
    %v1482 = vld [vmem:[%s14] sm:$0x3]
    %v1484 = vlaneseq
    %v1485 = vshrl.u32 %v1484, 7
    %v1486 = vsub.s32 0, %v1485
    %v1487 = vrot.slane %v1482, %v1486
    %v1488 = vlaneseq
    %v1489 = vshrl.u32 %v1488, 7
    %v1490 = vsub.s32 1, %v1489
    %v1491 = vrot.slane %v1482, %v1490
    %v1510 = vunpack.c.l.b16 %v1466
    %v1511 = vunpack.c.h.b16 %v1466
    %v1512 = vunpack.c.l.b16 %v1467
    %v1513 = vunpack.c.h.b16 %v1467
    %v1514 = vunpack.c.l.b16 %v1468
    %v1515 = vunpack.c.h.b16 %v1468
    %v1516 = vunpack.c.l.b16 %v1469
    %v1517 = vunpack.c.h.b16 %v1469
    %v1518 = vunpack.c.l.b16 %v1470
    %v1519 = vunpack.c.h.b16 %v1470
    %v1520 = vunpack.c.l.b16 %v1471
    %v1521 = vunpack.c.h.b16 %v1471
    %v1522 = vunpack.c.l.b16 %v1472
    %v1523 = vunpack.c.h.b16 %v1472
    %v1524 = vunpack.c.l.b16 %v1473
    %v1525 = vunpack.c.h.b16 %v1473
    %v1526 = vunpack.c.l.b16 %v1474
    %v1527 = vunpack.c.h.b16 %v1474
    %v1528 = vunpack.c.l.b16 %v1475
    %v1529 = vunpack.c.h.b16 %v1475
    %v1530 = vunpack.c.l.b16 %v1476
    %v1531 = vunpack.c.h.b16 %v1476
    %v1532 = vunpack.c.l.b16 %v1477
    %v1533 = vunpack.c.h.b16 %v1477
    %v1534 = vunpack.c.l.b16 %v1478
    %v1535 = vunpack.c.h.b16 %v1478
    %v1536 = vunpack.c.l.b16 %v1479
    %v1537 = vunpack.c.h.b16 %v1479
    %v1538 = vunpack.c.l.b16 %v1480
    %v1539 = vunpack.c.h.b16 %v1480
    %v1540 = vunpack.c.l.b16 %v1481
    %v1541 = vunpack.c.h.b16 %v1481
    %v1542 = vpack.c.b16 %v1512, %v1510
    %v1543 = vpack.c.b16 %v1513, %v1511
    %v1544 = vpack.c.b16 %v1516, %v1514
    %v1545 = vpack.c.b16 %v1517, %v1515
    %v1546 = vpack.c.b16 %v1520, %v1518
    %v1547 = vpack.c.b16 %v1521, %v1519
    %v1548 = vpack.c.b16 %v1524, %v1522
    %v1549 = vpack.c.b16 %v1525, %v1523
    %v1550 = vpack.c.b16 %v1528, %v1526
    %v1551 = vpack.c.b16 %v1529, %v1527
    %v1552 = vpack.c.b16 %v1532, %v1530
    %v1553 = vpack.c.b16 %v1533, %v1531
    %v1554 = vpack.c.b16 %v1536, %v1534
    %v1555 = vpack.c.b16 %v1537, %v1535
    %v1556 = vpack.c.b16 %v1540, %v1538
    %v1557 = vpack.c.b16 %v1541, %v1539
    %1574 = vmatprep.subr.bf16.mxu0 %v1557
    %1575 = vmatpush1.bf16.msra.mxu0 %v1556
    %1576 = vmatprep.subr.bf16.mxu0 %v1555
    %1577 = vmatpush1.bf16.msra.mxu0 %v1554
    %1578 = vmatprep.subr.bf16.mxu0 %v1553
    %1579 = vmatpush1.bf16.msra.mxu0 %v1552
    %1580 = vmatprep.subr.bf16.mxu0 %v1551
    %1581 = vmatpush1.bf16.msra.mxu0 %v1550
    %1582 = vmatprep.subr.bf16.mxu0 %v1549
    %1583 = vmatpush1.bf16.msra.mxu0 %v1548
    %1584 = vmatprep.subr.bf16.mxu0 %v1547
    %1585 = vmatpush1.bf16.msra.mxu0 %v1546
    %1586 = vmatprep.subr.bf16.mxu0 %v1545
    %1587 = vmatpush1.bf16.msra.mxu0 %v1544
    %1588 = vmatprep.subr.bf16.mxu0 %v1543
    %1589 = vmatpush1.bf16.msra.mxu0 %v1542
    %1590 = vmatprep.subr.bf16.mxu0 0
    %1591 = vmatpush2.bf16.msra.mxu0 0
    %1592 = vmatprep.subr.bf16.mxu0 0
    %1593 = vmatpush2.bf16.msra.mxu0 0
    %1594 = vmatprep.subr.bf16.mxu0 0
    %1595 = vmatpush2.bf16.msra.mxu0 0
    %1596 = vmatprep.subr.bf16.mxu0 0
    %1597 = vmatpush2.bf16.msra.mxu0 0
    %1598 = vmatprep.subr.bf16.mxu0 0
    %1599 = vmatpush2.bf16.msra.mxu0 0
    %1600 = vmatprep.subr.bf16.mxu0 0
    %1601 = vmatpush2.bf16.msra.mxu0 0
    %1602 = vmatprep.subr.bf16.mxu0 0
    %1603 = vmatpush2.bf16.msra.mxu0 0
    %1604 = vmatprep.subr.bf16.mxu0 0
    %1605 = vmatpush2.bf16.msra.mxu0 0
    %1606 = vmatprep.mubr.bf16.mxu0 0
    %1607 = vmatmul.mubr.bf16.gmra.mxu0 %v1462
    %v1608 = vpop.f32.mrf.mxu0
    %v1609 = vadd.f32 %v1487, %v1608
    %v1610 = vpop.f32.mrf.mxu0
    %v1611 = vadd.f32 %v1491, %v1610
    %v1612 = vpop.f32.mrf.mxu0
    %v1613 = vadd.f32 %v1487, %v1612
    %v1614 = vpop.f32.mrf.mxu0
    %v1615 = vadd.f32 %v1491, %v1614
    %1616 = vmatprep.mubr.bf16.mxu0 0
    %1617 = vmatmul.mubr.bf16.gmra.mxu0 %v1463
    %v1618 = vpop.f32.mrf.mxu0
    %v1619 = vadd.f32 %v1487, %v1618
    %v1620 = vpop.f32.mrf.mxu0
    %v1621 = vadd.f32 %v1491, %v1620
    %v1622 = vpop.f32.mrf.mxu0
    %v1623 = vadd.f32 %v1487, %v1622
    %v1624 = vpop.f32.mrf.mxu0
    %v1625 = vadd.f32 %v1491, %v1624
    %1626 = vmatprep.mubr.bf16.mxu0 0
    %1627 = vmatmul.mubr.bf16.gmra.mxu0 %v1464
    %v1628 = vpop.f32.mrf.mxu0
    %v1629 = vadd.f32 %v1487, %v1628
    %v1630 = vpop.f32.mrf.mxu0
    %v1631 = vadd.f32 %v1491, %v1630
    %v1632 = vpop.f32.mrf.mxu0
    %v1633 = vadd.f32 %v1487, %v1632
    %v1634 = vpop.f32.mrf.mxu0
    %v1635 = vadd.f32 %v1491, %v1634
    %1636 = vmatprep.mubr.bf16.mxu0 0
    %1637 = vmatmul.mubr.bf16.gmra.mxu0 %v1465
    %v1638 = vpop.f32.mrf.mxu0
    %v1639 = vadd.f32 %v1487, %v1638
    %v1640 = vpop.f32.mrf.mxu0
    %v1641 = vadd.f32 %v1491, %v1640
    %v1642 = vpop.f32.mrf.mxu0
    %v1643 = vadd.f32 %v1487, %v1642
    %v1644 = vpop.f32.mrf.mxu0
    %v1645 = vadd.f32 %v1491, %v1644
    %1646 = vdwg.mxu0
    %v1647 = vpack.c.bf16 %v1447, %v1446
    %v1648 = vpack.c.bf16 %v1449, %v1448
    %v1649 = vpack.c.bf16 %v1451, %v1450
    %v1650 = vpack.c.bf16 %v1453, %v1452
    %v1651 = vpack.c.bf16 %v1455, %v1454
    %v1652 = vpack.c.bf16 %v1457, %v1456
    %v1653 = vpack.c.bf16 %v1459, %v1458
    %v1654 = vpack.c.bf16 %v1461, %v1460
    %v1655 = vld [vmem:[#allocation17] sm:$0xff]
    %v1656 = vld [vmem:[#allocation17 + $0x8] sm:$0xff]
    %v1657 = vld [vmem:[#allocation17 + $0x10] sm:$0xff]
    %v1658 = vld [vmem:[#allocation17 + $0x18] sm:$0xff]
    %v1659 = vld [vmem:[#allocation17 + $0x20] sm:$0xff]
    %v1660 = vld [vmem:[#allocation17 + $0x28] sm:$0xff]
    %v1661 = vld [vmem:[#allocation17 + $0x30] sm:$0xff]
    %v1662 = vld [vmem:[#allocation17 + $0x38] sm:$0xff]
    %v1663 = vld [vmem:[#allocation17 + $0x40] sm:$0xff]
    %v1664 = vld [vmem:[#allocation17 + $0x48] sm:$0xff]
    %v1665 = vld [vmem:[#allocation17 + $0x50] sm:$0xff]
    %v1666 = vld [vmem:[#allocation17 + $0x58] sm:$0xff]
    %v1667 = vld [vmem:[#allocation17 + $0x60] sm:$0xff]
    %v1668 = vld [vmem:[#allocation17 + $0x68] sm:$0xff]
    %v1669 = vld [vmem:[#allocation17 + $0x70] sm:$0xff]
    %v1670 = vld [vmem:[#allocation17 + $0x78] sm:$0xff]
    %v1687 = vunpack.c.l.b16 %v1655
    %v1688 = vunpack.c.h.b16 %v1655
    %v1689 = vunpack.c.l.b16 %v1656
    %v1690 = vunpack.c.h.b16 %v1656
    %v1691 = vunpack.c.l.b16 %v1657
    %v1692 = vunpack.c.h.b16 %v1657
    %v1693 = vunpack.c.l.b16 %v1658
    %v1694 = vunpack.c.h.b16 %v1658
    %v1695 = vunpack.c.l.b16 %v1659
    %v1696 = vunpack.c.h.b16 %v1659
    %v1697 = vunpack.c.l.b16 %v1660
    %v1698 = vunpack.c.h.b16 %v1660
    %v1699 = vunpack.c.l.b16 %v1661
    %v1700 = vunpack.c.h.b16 %v1661
    %v1701 = vunpack.c.l.b16 %v1662
    %v1702 = vunpack.c.h.b16 %v1662
    %v1703 = vunpack.c.l.b16 %v1663
    %v1704 = vunpack.c.h.b16 %v1663
    %v1705 = vunpack.c.l.b16 %v1664
    %v1706 = vunpack.c.h.b16 %v1664
    %v1707 = vunpack.c.l.b16 %v1665
    %v1708 = vunpack.c.h.b16 %v1665
    %v1709 = vunpack.c.l.b16 %v1666
    %v1710 = vunpack.c.h.b16 %v1666
    %v1711 = vunpack.c.l.b16 %v1667
    %v1712 = vunpack.c.h.b16 %v1667
    %v1713 = vunpack.c.l.b16 %v1668
    %v1714 = vunpack.c.h.b16 %v1668
    %v1715 = vunpack.c.l.b16 %v1669
    %v1716 = vunpack.c.h.b16 %v1669
    %v1717 = vunpack.c.l.b16 %v1670
    %v1718 = vunpack.c.h.b16 %v1670
    %v1719 = vpack.c.b16 %v1689, %v1687
    %v1720 = vpack.c.b16 %v1690, %v1688
    %v1721 = vpack.c.b16 %v1693, %v1691
    %v1722 = vpack.c.b16 %v1694, %v1692
    %v1723 = vpack.c.b16 %v1697, %v1695
    %v1724 = vpack.c.b16 %v1698, %v1696
    %v1725 = vpack.c.b16 %v1701, %v1699
    %v1726 = vpack.c.b16 %v1702, %v1700
    %v1727 = vpack.c.b16 %v1705, %v1703
    %v1728 = vpack.c.b16 %v1706, %v1704
    %v1729 = vpack.c.b16 %v1709, %v1707
    %v1730 = vpack.c.b16 %v1710, %v1708
    %v1731 = vpack.c.b16 %v1713, %v1711
    %v1732 = vpack.c.b16 %v1714, %v1712
    %v1733 = vpack.c.b16 %v1717, %v1715
    %v1734 = vpack.c.b16 %v1718, %v1716
    %1751 = vmatprep.subr.bf16.mxu0 %v1734
    %1752 = vmatpush1.bf16.msra.mxu0 %v1733
    %1753 = vmatprep.subr.bf16.mxu0 %v1732
    %1754 = vmatpush1.bf16.msra.mxu0 %v1731
    %1755 = vmatprep.subr.bf16.mxu0 %v1730
    %1756 = vmatpush1.bf16.msra.mxu0 %v1729
    %1757 = vmatprep.subr.bf16.mxu0 %v1728
    %1758 = vmatpush1.bf16.msra.mxu0 %v1727
    %1759 = vmatprep.subr.bf16.mxu0 %v1726
    %1760 = vmatpush1.bf16.msra.mxu0 %v1725
    %1761 = vmatprep.subr.bf16.mxu0 %v1724
    %1762 = vmatpush1.bf16.msra.mxu0 %v1723
    %1763 = vmatprep.subr.bf16.mxu0 %v1722
    %1764 = vmatpush1.bf16.msra.mxu0 %v1721
    %1765 = vmatprep.subr.bf16.mxu0 %v1720
    %1766 = vmatpush1.bf16.msra.mxu0 %v1719
    %1767 = vmatprep.subr.bf16.mxu0 0
    %1768 = vmatpush2.bf16.msra.mxu0 0
    %1769 = vmatprep.subr.bf16.mxu0 0
    %1770 = vmatpush2.bf16.msra.mxu0 0
    %1771 = vmatprep.subr.bf16.mxu0 0
    %1772 = vmatpush2.bf16.msra.mxu0 0
    %1773 = vmatprep.subr.bf16.mxu0 0
    %1774 = vmatpush2.bf16.msra.mxu0 0
    %1775 = vmatprep.subr.bf16.mxu0 0
    %1776 = vmatpush2.bf16.msra.mxu0 0
    %1777 = vmatprep.subr.bf16.mxu0 0
    %1778 = vmatpush2.bf16.msra.mxu0 0
    %1779 = vmatprep.subr.bf16.mxu0 0
    %1780 = vmatpush2.bf16.msra.mxu0 0
    %1781 = vmatprep.subr.bf16.mxu0 0
    %1782 = vmatpush2.bf16.msra.mxu0 0
    %1783 = vmatprep.mubr.bf16.mxu0 0
    %1784 = vmatmul.mubr.bf16.gmra.mxu0 %v1647
    %v1785 = vpop.f32.mrf.mxu0
    %v1786 = vadd.f32 0.0, %v1785
    %v1787 = vpop.f32.mrf.mxu0
    %v1788 = vadd.f32 0.0, %v1787
    %v1789 = vpop.f32.mrf.mxu0
    %v1790 = vadd.f32 0.0, %v1789
    %v1791 = vpop.f32.mrf.mxu0
    %v1792 = vadd.f32 0.0, %v1791
    %1793 = vmatprep.mubr.bf16.mxu0 0
    %1794 = vmatmul.mubr.bf16.gmra.mxu0 %v1648
    %v1795 = vpop.f32.mrf.mxu0
    %v1796 = vadd.f32 0.0, %v1795
    %v1797 = vpop.f32.mrf.mxu0
    %v1798 = vadd.f32 0.0, %v1797
    %v1799 = vpop.f32.mrf.mxu0
    %v1800 = vadd.f32 0.0, %v1799
    %v1801 = vpop.f32.mrf.mxu0
    %v1802 = vadd.f32 0.0, %v1801
    %1803 = vmatprep.mubr.bf16.mxu0 0
    %1804 = vmatmul.mubr.bf16.gmra.mxu0 %v1649
    %v1805 = vpop.f32.mrf.mxu0
    %v1806 = vadd.f32 0.0, %v1805
    %v1807 = vpop.f32.mrf.mxu0
    %v1808 = vadd.f32 0.0, %v1807
    %v1809 = vpop.f32.mrf.mxu0
    %v1810 = vadd.f32 0.0, %v1809
    %v1811 = vpop.f32.mrf.mxu0
    %v1812 = vadd.f32 0.0, %v1811
    %1813 = vmatprep.mubr.bf16.mxu0 0
    %1814 = vmatmul.mubr.bf16.gmra.mxu0 %v1650
    %v1815 = vpop.f32.mrf.mxu0
    %v1816 = vadd.f32 0.0, %v1815
    %v1817 = vpop.f32.mrf.mxu0
    %v1818 = vadd.f32 0.0, %v1817
    %v1819 = vpop.f32.mrf.mxu0
    %v1820 = vadd.f32 0.0, %v1819
    %v1821 = vpop.f32.mrf.mxu0
    %v1822 = vadd.f32 0.0, %v1821
    %1823 = vmatprep.mubr.bf16.mxu0 0
    %1824 = vmatmul.mubr.bf16.gmra.mxu0 %v1651
    %v1825 = vpop.f32.mrf.mxu0
    %v1826 = vadd.f32 0.0, %v1825
    %v1827 = vpop.f32.mrf.mxu0
    %v1828 = vadd.f32 0.0, %v1827
    %v1829 = vpop.f32.mrf.mxu0
    %v1830 = vadd.f32 0.0, %v1829
    %v1831 = vpop.f32.mrf.mxu0
    %v1832 = vadd.f32 0.0, %v1831
    %1833 = vmatprep.mubr.bf16.mxu0 0
    %1834 = vmatmul.mubr.bf16.gmra.mxu0 %v1652
    %v1835 = vpop.f32.mrf.mxu0
    %v1836 = vadd.f32 0.0, %v1835
    %v1837 = vpop.f32.mrf.mxu0
    %v1838 = vadd.f32 0.0, %v1837
    %v1839 = vpop.f32.mrf.mxu0
    %v1840 = vadd.f32 0.0, %v1839
    %v1841 = vpop.f32.mrf.mxu0
    %v1842 = vadd.f32 0.0, %v1841
    %1843 = vmatprep.mubr.bf16.mxu0 0
    %1844 = vmatmul.mubr.bf16.gmra.mxu0 %v1653
    %v1845 = vpop.f32.mrf.mxu0
    %v1846 = vadd.f32 0.0, %v1845
    %v1847 = vpop.f32.mrf.mxu0
    %v1848 = vadd.f32 0.0, %v1847
    %v1849 = vpop.f32.mrf.mxu0
    %v1850 = vadd.f32 0.0, %v1849
    %v1851 = vpop.f32.mrf.mxu0
    %v1852 = vadd.f32 0.0, %v1851
    %1853 = vmatprep.mubr.bf16.mxu0 0
    %1854 = vmatmul.mubr.bf16.gmra.mxu0 %v1654
    %v1855 = vpop.f32.mrf.mxu0
    %v1856 = vadd.f32 0.0, %v1855
    %v1857 = vpop.f32.mrf.mxu0
    %v1858 = vadd.f32 0.0, %v1857
    %v1859 = vpop.f32.mrf.mxu0
    %v1860 = vadd.f32 0.0, %v1859
    %v1861 = vpop.f32.mrf.mxu0
    %v1862 = vadd.f32 0.0, %v1861
    %1863 = vdwg.mxu0
    %1872 = vrot.lane.b32.xlu0 %v1609, 96
    %v1873 = vpop.permute.xlu0 %1872
    %1874 = vrot.lane.b32.xlu0 %v1613, 96
    %v1875 = vpop.permute.xlu0 %1874
    %1876 = vrot.lane.b32.xlu0 %v1619, 96
    %v1877 = vpop.permute.xlu0 %1876
    %1878 = vrot.lane.b32.xlu0 %v1623, 96
    %v1879 = vpop.permute.xlu0 %1878
    %1880 = vrot.lane.b32.xlu0 %v1629, 96
    %v1881 = vpop.permute.xlu0 %1880
    %1882 = vrot.lane.b32.xlu0 %v1633, 96
    %v1883 = vpop.permute.xlu0 %1882
    %1884 = vrot.lane.b32.xlu0 %v1639, 96
    %v1885 = vpop.permute.xlu0 %1884
    %1886 = vrot.lane.b32.xlu0 %v1643, 96
    %v1887 = vpop.permute.xlu0 %1886
    %1896 = vrot.lane.b32.xlu0 %v1609, 64
    %v1897 = vpop.permute.xlu0 %1896
    %1898 = vrot.lane.b32.xlu0 %v1613, 64
    %v1899 = vpop.permute.xlu0 %1898
    %1900 = vrot.lane.b32.xlu0 %v1619, 64
    %v1901 = vpop.permute.xlu0 %1900
    %1902 = vrot.lane.b32.xlu0 %v1623, 64
    %v1903 = vpop.permute.xlu0 %1902
    %1904 = vrot.lane.b32.xlu0 %v1629, 64
    %v1905 = vpop.permute.xlu0 %1904
    %1906 = vrot.lane.b32.xlu0 %v1633, 64
    %v1907 = vpop.permute.xlu0 %1906
    %1908 = vrot.lane.b32.xlu0 %v1639, 64
    %v1909 = vpop.permute.xlu0 %1908
    %1910 = vrot.lane.b32.xlu0 %v1643, 64
    %v1911 = vpop.permute.xlu0 %1910
    %1920 = vrot.lane.b32.xlu0 %v1609, 32
    %v1921 = vpop.permute.xlu0 %1920
    %1922 = vrot.lane.b32.xlu0 %v1613, 32
    %v1923 = vpop.permute.xlu0 %1922
    %1924 = vrot.lane.b32.xlu0 %v1619, 32
    %v1925 = vpop.permute.xlu0 %1924
    %1926 = vrot.lane.b32.xlu0 %v1623, 32
    %v1927 = vpop.permute.xlu0 %1926
    %1928 = vrot.lane.b32.xlu0 %v1629, 32
    %v1929 = vpop.permute.xlu0 %1928
    %1930 = vrot.lane.b32.xlu0 %v1633, 32
    %v1931 = vpop.permute.xlu0 %1930
    %1932 = vrot.lane.b32.xlu0 %v1639, 32
    %v1933 = vpop.permute.xlu0 %1932
    %1934 = vrot.lane.b32.xlu0 %v1643, 32
    %v1935 = vpop.permute.xlu0 %1934
    %v1944 = vcombine.low %v1609, %v1897
    %v1945 = vcombine.high %v1609, %v1897
    %v1947 = vunpack.c.l.s4 1983009808
    %v1948 = vunpack.c.0.s8 %v1947
    %v1949 = vlaneseq
    %v1950 = vshrl.u32 %v1949, 7
    %v1951 = vsub.s32 %v1948, %v1950
    %v1952 = vrot.slane %v1944, %v1951
    %v1954 = vunpack.c.l.s4 1983009808
    %v1955 = vunpack.c.0.s8 %v1954
    %v1956 = vlaneseq
    %v1957 = vshrl.u32 %v1956, 7
    %v1958 = vsub.s32 %v1955, %v1957
    %v1959 = vrot.slane %v1945, %v1958
    %v1960 = vcombine.low %v1873, %v1921
    %v1961 = vcombine.high %v1873, %v1921
    %v1963 = vunpack.c.l.s4 1983009808
    %v1964 = vunpack.c.0.s8 %v1963
    %v1965 = vlaneseq
    %v1966 = vshrl.u32 %v1965, 7
    %v1967 = vsub.s32 %v1964, %v1966
    %v1968 = vrot.slane %v1960, %v1967
    %v1970 = vunpack.c.l.s4 1983009808
    %v1971 = vunpack.c.0.s8 %v1970
    %v1972 = vlaneseq
    %v1973 = vshrl.u32 %v1972, 7
    %v1974 = vsub.s32 %v1971, %v1973
    %v1975 = vrot.slane %v1961, %v1974
    %v1976 = vcombine.low %v1952, %v1968
    %v1977 = vcombine.high %v1952, %v1968
    %v1979 = vunpack.c.l.s4 1934713408
    %v1980 = vunpack.c.0.s8 %v1979
    %v1981 = vlaneseq
    %v1982 = vshrl.u32 %v1981, 7
    %v1983 = vsub.s32 %v1980, %v1982
    %v1984 = vrot.slane %v1976, %v1983
    %v1986 = vunpack.c.l.s4 1934713408
    %v1987 = vunpack.c.0.s8 %v1986
    %v1988 = vlaneseq
    %v1989 = vshrl.u32 %v1988, 7
    %v1990 = vsub.s32 %v1987, %v1989
    %v1991 = vrot.slane %v1977, %v1990
    %v1992 = vcombine.low %v1959, %v1975
    %v1993 = vcombine.high %v1959, %v1975
    %v1995 = vunpack.c.l.s4 1934713408
    %v1996 = vunpack.c.0.s8 %v1995
    %v1997 = vlaneseq
    %v1998 = vshrl.u32 %v1997, 7
    %v1999 = vsub.s32 %v1996, %v1998
    %v2000 = vrot.slane %v1992, %v1999
    %v2002 = vunpack.c.l.s4 1934713408
    %v2003 = vunpack.c.0.s8 %v2002
    %v2004 = vlaneseq
    %v2005 = vshrl.u32 %v2004, 7
    %v2006 = vsub.s32 %v2003, %v2005
    %v2007 = vrot.slane %v1993, %v2006
    %v2008 = vcombine.high %v1984, 0.0
    %v2009 = vcombine.high %v1991, 0.0
    %v2010 = vcombine.high %v2000, 0.0
    %v2011 = vcombine.high %v2007, 0.0
    %v2012 = vcombine.low %v1613, %v1899
    %v2013 = vcombine.high %v1613, %v1899
    %v2015 = vunpack.c.l.s4 1983009808
    %v2016 = vunpack.c.0.s8 %v2015
    %v2017 = vlaneseq
    %v2018 = vshrl.u32 %v2017, 7
    %v2019 = vsub.s32 %v2016, %v2018
    %v2020 = vrot.slane %v2012, %v2019
    %v2022 = vunpack.c.l.s4 1983009808
    %v2023 = vunpack.c.0.s8 %v2022
    %v2024 = vlaneseq
    %v2025 = vshrl.u32 %v2024, 7
    %v2026 = vsub.s32 %v2023, %v2025
    %v2027 = vrot.slane %v2013, %v2026
    %v2028 = vcombine.low %v1875, %v1923
    %v2029 = vcombine.high %v1875, %v1923
    %v2031 = vunpack.c.l.s4 1983009808
    %v2032 = vunpack.c.0.s8 %v2031
    %v2033 = vlaneseq
    %v2034 = vshrl.u32 %v2033, 7
    %v2035 = vsub.s32 %v2032, %v2034
    %v2036 = vrot.slane %v2028, %v2035
    %v2038 = vunpack.c.l.s4 1983009808
    %v2039 = vunpack.c.0.s8 %v2038
    %v2040 = vlaneseq
    %v2041 = vshrl.u32 %v2040, 7
    %v2042 = vsub.s32 %v2039, %v2041
    %v2043 = vrot.slane %v2029, %v2042
    %v2044 = vcombine.low %v2020, %v2036
    %v2045 = vcombine.high %v2020, %v2036
    %v2047 = vunpack.c.l.s4 1934713408
    %v2048 = vunpack.c.0.s8 %v2047
    %v2049 = vlaneseq
    %v2050 = vshrl.u32 %v2049, 7
    %v2051 = vsub.s32 %v2048, %v2050
    %v2052 = vrot.slane %v2044, %v2051
    %v2054 = vunpack.c.l.s4 1934713408
    %v2055 = vunpack.c.0.s8 %v2054
    %v2056 = vlaneseq
    %v2057 = vshrl.u32 %v2056, 7
    %v2058 = vsub.s32 %v2055, %v2057
    %v2059 = vrot.slane %v2045, %v2058
    %v2060 = vcombine.low %v2027, %v2043
    %v2061 = vcombine.high %v2027, %v2043
    %v2063 = vunpack.c.l.s4 1934713408
    %v2064 = vunpack.c.0.s8 %v2063
    %v2065 = vlaneseq
    %v2066 = vshrl.u32 %v2065, 7
    %v2067 = vsub.s32 %v2064, %v2066
    %v2068 = vrot.slane %v2060, %v2067
    %v2070 = vunpack.c.l.s4 1934713408
    %v2071 = vunpack.c.0.s8 %v2070
    %v2072 = vlaneseq
    %v2073 = vshrl.u32 %v2072, 7
    %v2074 = vsub.s32 %v2071, %v2073
    %v2075 = vrot.slane %v2061, %v2074
    %v2076 = vcombine.high %v2052, 0.0
    %v2077 = vcombine.high %v2059, 0.0
    %v2078 = vcombine.high %v2068, 0.0
    %v2079 = vcombine.high %v2075, 0.0
    %v2080 = vcombine.low %v1619, %v1901
    %v2081 = vcombine.high %v1619, %v1901
    %v2083 = vunpack.c.l.s4 1983009808
    %v2084 = vunpack.c.0.s8 %v2083
    %v2085 = vlaneseq
    %v2086 = vshrl.u32 %v2085, 7
    %v2087 = vsub.s32 %v2084, %v2086
    %v2088 = vrot.slane %v2080, %v2087
    %v2090 = vunpack.c.l.s4 1983009808
    %v2091 = vunpack.c.0.s8 %v2090
    %v2092 = vlaneseq
    %v2093 = vshrl.u32 %v2092, 7
    %v2094 = vsub.s32 %v2091, %v2093
    %v2095 = vrot.slane %v2081, %v2094
    %v2096 = vcombine.low %v1877, %v1925
    %v2097 = vcombine.high %v1877, %v1925
    %v2099 = vunpack.c.l.s4 1983009808
    %v2100 = vunpack.c.0.s8 %v2099
    %v2101 = vlaneseq
    %v2102 = vshrl.u32 %v2101, 7
    %v2103 = vsub.s32 %v2100, %v2102
    %v2104 = vrot.slane %v2096, %v2103
    %v2106 = vunpack.c.l.s4 1983009808
    %v2107 = vunpack.c.0.s8 %v2106
    %v2108 = vlaneseq
    %v2109 = vshrl.u32 %v2108, 7
    %v2110 = vsub.s32 %v2107, %v2109
    %v2111 = vrot.slane %v2097, %v2110
    %v2112 = vcombine.low %v2088, %v2104
    %v2113 = vcombine.high %v2088, %v2104
    %v2115 = vunpack.c.l.s4 1934713408
    %v2116 = vunpack.c.0.s8 %v2115
    %v2117 = vlaneseq
    %v2118 = vshrl.u32 %v2117, 7
    %v2119 = vsub.s32 %v2116, %v2118
    %v2120 = vrot.slane %v2112, %v2119
    %v2122 = vunpack.c.l.s4 1934713408
    %v2123 = vunpack.c.0.s8 %v2122
    %v2124 = vlaneseq
    %v2125 = vshrl.u32 %v2124, 7
    %v2126 = vsub.s32 %v2123, %v2125
    %v2127 = vrot.slane %v2113, %v2126
    %v2128 = vcombine.low %v2095, %v2111
    %v2129 = vcombine.high %v2095, %v2111
    %v2131 = vunpack.c.l.s4 1934713408
    %v2132 = vunpack.c.0.s8 %v2131
    %v2133 = vlaneseq
    %v2134 = vshrl.u32 %v2133, 7
    %v2135 = vsub.s32 %v2132, %v2134
    %v2136 = vrot.slane %v2128, %v2135
    %v2138 = vunpack.c.l.s4 1934713408
    %v2139 = vunpack.c.0.s8 %v2138
    %v2140 = vlaneseq
    %v2141 = vshrl.u32 %v2140, 7
    %v2142 = vsub.s32 %v2139, %v2141
    %v2143 = vrot.slane %v2129, %v2142
    %v2144 = vcombine.high %v2120, 0.0
    %v2145 = vcombine.high %v2127, 0.0
    %v2146 = vcombine.high %v2136, 0.0
    %v2147 = vcombine.high %v2143, 0.0
    %v2148 = vcombine.low %v1623, %v1903
    %v2149 = vcombine.high %v1623, %v1903
    %v2151 = vunpack.c.l.s4 1983009808
    %v2152 = vunpack.c.0.s8 %v2151
    %v2153 = vlaneseq
    %v2154 = vshrl.u32 %v2153, 7
    %v2155 = vsub.s32 %v2152, %v2154
    %v2156 = vrot.slane %v2148, %v2155
    %v2158 = vunpack.c.l.s4 1983009808
    %v2159 = vunpack.c.0.s8 %v2158
    %v2160 = vlaneseq
    %v2161 = vshrl.u32 %v2160, 7
    %v2162 = vsub.s32 %v2159, %v2161
    %v2163 = vrot.slane %v2149, %v2162
    %v2164 = vcombine.low %v1879, %v1927
    %v2165 = vcombine.high %v1879, %v1927
    %v2167 = vunpack.c.l.s4 1983009808
    %v2168 = vunpack.c.0.s8 %v2167
    %v2169 = vlaneseq
    %v2170 = vshrl.u32 %v2169, 7
    %v2171 = vsub.s32 %v2168, %v2170
    %v2172 = vrot.slane %v2164, %v2171
    %v2174 = vunpack.c.l.s4 1983009808
    %v2175 = vunpack.c.0.s8 %v2174
    %v2176 = vlaneseq
    %v2177 = vshrl.u32 %v2176, 7
    %v2178 = vsub.s32 %v2175, %v2177
    %v2179 = vrot.slane %v2165, %v2178
    %v2180 = vcombine.low %v2156, %v2172
    %v2181 = vcombine.high %v2156, %v2172
    %v2183 = vunpack.c.l.s4 1934713408
    %v2184 = vunpack.c.0.s8 %v2183
    %v2185 = vlaneseq
    %v2186 = vshrl.u32 %v2185, 7
    %v2187 = vsub.s32 %v2184, %v2186
    %v2188 = vrot.slane %v2180, %v2187
    %v2190 = vunpack.c.l.s4 1934713408
    %v2191 = vunpack.c.0.s8 %v2190
    %v2192 = vlaneseq
    %v2193 = vshrl.u32 %v2192, 7
    %v2194 = vsub.s32 %v2191, %v2193
    %v2195 = vrot.slane %v2181, %v2194
    %v2196 = vcombine.low %v2163, %v2179
    %v2197 = vcombine.high %v2163, %v2179
    %v2199 = vunpack.c.l.s4 1934713408
    %v2200 = vunpack.c.0.s8 %v2199
    %v2201 = vlaneseq
    %v2202 = vshrl.u32 %v2201, 7
    %v2203 = vsub.s32 %v2200, %v2202
    %v2204 = vrot.slane %v2196, %v2203
    %v2206 = vunpack.c.l.s4 1934713408
    %v2207 = vunpack.c.0.s8 %v2206
    %v2208 = vlaneseq
    %v2209 = vshrl.u32 %v2208, 7
    %v2210 = vsub.s32 %v2207, %v2209
    %v2211 = vrot.slane %v2197, %v2210
    %v2212 = vcombine.high %v2188, 0.0
    %v2213 = vcombine.high %v2195, 0.0
    %v2214 = vcombine.high %v2204, 0.0
    %v2215 = vcombine.high %v2211, 0.0
    %v2216 = vcombine.low %v1629, %v1905
    %v2217 = vcombine.high %v1629, %v1905
    %v2219 = vunpack.c.l.s4 1983009808
    %v2220 = vunpack.c.0.s8 %v2219
    %v2221 = vlaneseq
    %v2222 = vshrl.u32 %v2221, 7
    %v2223 = vsub.s32 %v2220, %v2222
    %v2224 = vrot.slane %v2216, %v2223
    %v2226 = vunpack.c.l.s4 1983009808
    %v2227 = vunpack.c.0.s8 %v2226
    %v2228 = vlaneseq
    %v2229 = vshrl.u32 %v2228, 7
    %v2230 = vsub.s32 %v2227, %v2229
    %v2231 = vrot.slane %v2217, %v2230
    %v2232 = vcombine.low %v1881, %v1929
    %v2233 = vcombine.high %v1881, %v1929
    %v2235 = vunpack.c.l.s4 1983009808
    %v2236 = vunpack.c.0.s8 %v2235
    %v2237 = vlaneseq
    %v2238 = vshrl.u32 %v2237, 7
    %v2239 = vsub.s32 %v2236, %v2238
    %v2240 = vrot.slane %v2232, %v2239
    %v2242 = vunpack.c.l.s4 1983009808
    %v2243 = vunpack.c.0.s8 %v2242
    %v2244 = vlaneseq
    %v2245 = vshrl.u32 %v2244, 7
    %v2246 = vsub.s32 %v2243, %v2245
    %v2247 = vrot.slane %v2233, %v2246
    %v2248 = vcombine.low %v2224, %v2240
    %v2249 = vcombine.high %v2224, %v2240
    %v2251 = vunpack.c.l.s4 1934713408
    %v2252 = vunpack.c.0.s8 %v2251
    %v2253 = vlaneseq
    %v2254 = vshrl.u32 %v2253, 7
    %v2255 = vsub.s32 %v2252, %v2254
    %v2256 = vrot.slane %v2248, %v2255
    %v2258 = vunpack.c.l.s4 1934713408
    %v2259 = vunpack.c.0.s8 %v2258
    %v2260 = vlaneseq
    %v2261 = vshrl.u32 %v2260, 7
    %v2262 = vsub.s32 %v2259, %v2261
    %v2263 = vrot.slane %v2249, %v2262
    %v2264 = vcombine.low %v2231, %v2247
    %v2265 = vcombine.high %v2231, %v2247
    %v2267 = vunpack.c.l.s4 1934713408
    %v2268 = vunpack.c.0.s8 %v2267
    %v2269 = vlaneseq
    %v2270 = vshrl.u32 %v2269, 7
    %v2271 = vsub.s32 %v2268, %v2270
    %v2272 = vrot.slane %v2264, %v2271
    %v2274 = vunpack.c.l.s4 1934713408
    %v2275 = vunpack.c.0.s8 %v2274
    %v2276 = vlaneseq
    %v2277 = vshrl.u32 %v2276, 7
    %v2278 = vsub.s32 %v2275, %v2277
    %v2279 = vrot.slane %v2265, %v2278
    %v2280 = vcombine.high %v2256, 0.0
    %v2281 = vcombine.high %v2263, 0.0
    %v2282 = vcombine.high %v2272, 0.0
    %v2283 = vcombine.high %v2279, 0.0
    %v2284 = vcombine.low %v1633, %v1907
    %v2285 = vcombine.high %v1633, %v1907
    %v2287 = vunpack.c.l.s4 1983009808
    %v2288 = vunpack.c.0.s8 %v2287
    %v2289 = vlaneseq
    %v2290 = vshrl.u32 %v2289, 7
    %v2291 = vsub.s32 %v2288, %v2290
    %v2292 = vrot.slane %v2284, %v2291
    %v2294 = vunpack.c.l.s4 1983009808
    %v2295 = vunpack.c.0.s8 %v2294
    %v2296 = vlaneseq
    %v2297 = vshrl.u32 %v2296, 7
    %v2298 = vsub.s32 %v2295, %v2297
    %v2299 = vrot.slane %v2285, %v2298
    %v2300 = vcombine.low %v1883, %v1931
    %v2301 = vcombine.high %v1883, %v1931
    %v2303 = vunpack.c.l.s4 1983009808
    %v2304 = vunpack.c.0.s8 %v2303
    %v2305 = vlaneseq
    %v2306 = vshrl.u32 %v2305, 7
    %v2307 = vsub.s32 %v2304, %v2306
    %v2308 = vrot.slane %v2300, %v2307
    %v2310 = vunpack.c.l.s4 1983009808
    %v2311 = vunpack.c.0.s8 %v2310
    %v2312 = vlaneseq
    %v2313 = vshrl.u32 %v2312, 7
    %v2314 = vsub.s32 %v2311, %v2313
    %v2315 = vrot.slane %v2301, %v2314
    %v2316 = vcombine.low %v2292, %v2308
    %v2317 = vcombine.high %v2292, %v2308
    %v2319 = vunpack.c.l.s4 1934713408
    %v2320 = vunpack.c.0.s8 %v2319
    %v2321 = vlaneseq
    %v2322 = vshrl.u32 %v2321, 7
    %v2323 = vsub.s32 %v2320, %v2322
    %v2324 = vrot.slane %v2316, %v2323
    %v2326 = vunpack.c.l.s4 1934713408
    %v2327 = vunpack.c.0.s8 %v2326
    %v2328 = vlaneseq
    %v2329 = vshrl.u32 %v2328, 7
    %v2330 = vsub.s32 %v2327, %v2329
    %v2331 = vrot.slane %v2317, %v2330
    %v2332 = vcombine.low %v2299, %v2315
    %v2333 = vcombine.high %v2299, %v2315
    %v2335 = vunpack.c.l.s4 1934713408
    %v2336 = vunpack.c.0.s8 %v2335
    %v2337 = vlaneseq
    %v2338 = vshrl.u32 %v2337, 7
    %v2339 = vsub.s32 %v2336, %v2338
    %v2340 = vrot.slane %v2332, %v2339
    %v2342 = vunpack.c.l.s4 1934713408
    %v2343 = vunpack.c.0.s8 %v2342
    %v2344 = vlaneseq
    %v2345 = vshrl.u32 %v2344, 7
    %v2346 = vsub.s32 %v2343, %v2345
    %v2347 = vrot.slane %v2333, %v2346
    %v2348 = vcombine.high %v2324, 0.0
    %v2349 = vcombine.high %v2331, 0.0
    %v2350 = vcombine.high %v2340, 0.0
    %v2351 = vcombine.high %v2347, 0.0
    %v2352 = vcombine.low %v1639, %v1909
    %v2353 = vcombine.high %v1639, %v1909
    %v2355 = vunpack.c.l.s4 1983009808
    %v2356 = vunpack.c.0.s8 %v2355
    %v2357 = vlaneseq
    %v2358 = vshrl.u32 %v2357, 7
    %v2359 = vsub.s32 %v2356, %v2358
    %v2360 = vrot.slane %v2352, %v2359
    %v2362 = vunpack.c.l.s4 1983009808
    %v2363 = vunpack.c.0.s8 %v2362
    %v2364 = vlaneseq
    %v2365 = vshrl.u32 %v2364, 7
    %v2366 = vsub.s32 %v2363, %v2365
    %v2367 = vrot.slane %v2353, %v2366
    %v2368 = vcombine.low %v1885, %v1933
    %v2369 = vcombine.high %v1885, %v1933
    %v2371 = vunpack.c.l.s4 1983009808
    %v2372 = vunpack.c.0.s8 %v2371
    %v2373 = vlaneseq
    %v2374 = vshrl.u32 %v2373, 7
    %v2375 = vsub.s32 %v2372, %v2374
    %v2376 = vrot.slane %v2368, %v2375
    %v2378 = vunpack.c.l.s4 1983009808
    %v2379 = vunpack.c.0.s8 %v2378
    %v2380 = vlaneseq
    %v2381 = vshrl.u32 %v2380, 7
    %v2382 = vsub.s32 %v2379, %v2381
    %v2383 = vrot.slane %v2369, %v2382
    %v2384 = vcombine.low %v2360, %v2376
    %v2385 = vcombine.high %v2360, %v2376
    %v2387 = vunpack.c.l.s4 1934713408
    %v2388 = vunpack.c.0.s8 %v2387
    %v2389 = vlaneseq
    %v2390 = vshrl.u32 %v2389, 7
    %v2391 = vsub.s32 %v2388, %v2390
    %v2392 = vrot.slane %v2384, %v2391
    %v2394 = vunpack.c.l.s4 1934713408
    %v2395 = vunpack.c.0.s8 %v2394
    %v2396 = vlaneseq
    %v2397 = vshrl.u32 %v2396, 7
    %v2398 = vsub.s32 %v2395, %v2397
    %v2399 = vrot.slane %v2385, %v2398
    %v2400 = vcombine.low %v2367, %v2383
    %v2401 = vcombine.high %v2367, %v2383
    %v2403 = vunpack.c.l.s4 1934713408
    %v2404 = vunpack.c.0.s8 %v2403
    %v2405 = vlaneseq
    %v2406 = vshrl.u32 %v2405, 7
    %v2407 = vsub.s32 %v2404, %v2406
    %v2408 = vrot.slane %v2400, %v2407
    %v2410 = vunpack.c.l.s4 1934713408
    %v2411 = vunpack.c.0.s8 %v2410
    %v2412 = vlaneseq
    %v2413 = vshrl.u32 %v2412, 7
    %v2414 = vsub.s32 %v2411, %v2413
    %v2415 = vrot.slane %v2401, %v2414
    %v2416 = vcombine.high %v2392, 0.0
    %v2417 = vcombine.high %v2399, 0.0
    %v2418 = vcombine.high %v2408, 0.0
    %v2419 = vcombine.high %v2415, 0.0
    %v2420 = vcombine.low %v1643, %v1911
    %v2421 = vcombine.high %v1643, %v1911
    %v2423 = vunpack.c.l.s4 1983009808
    %v2424 = vunpack.c.0.s8 %v2423
    %v2425 = vlaneseq
    %v2426 = vshrl.u32 %v2425, 7
    %v2427 = vsub.s32 %v2424, %v2426
    %v2428 = vrot.slane %v2420, %v2427
    %v2430 = vunpack.c.l.s4 1983009808
    %v2431 = vunpack.c.0.s8 %v2430
    %v2432 = vlaneseq
    %v2433 = vshrl.u32 %v2432, 7
    %v2434 = vsub.s32 %v2431, %v2433
    %v2435 = vrot.slane %v2421, %v2434
    %v2436 = vcombine.low %v1887, %v1935
    %v2437 = vcombine.high %v1887, %v1935
    %v2439 = vunpack.c.l.s4 1983009808
    %v2440 = vunpack.c.0.s8 %v2439
    %v2441 = vlaneseq
    %v2442 = vshrl.u32 %v2441, 7
    %v2443 = vsub.s32 %v2440, %v2442
    %v2444 = vrot.slane %v2436, %v2443
    %v2446 = vunpack.c.l.s4 1983009808
    %v2447 = vunpack.c.0.s8 %v2446
    %v2448 = vlaneseq
    %v2449 = vshrl.u32 %v2448, 7
    %v2450 = vsub.s32 %v2447, %v2449
    %v2451 = vrot.slane %v2437, %v2450
    %v2452 = vcombine.low %v2428, %v2444
    %v2453 = vcombine.high %v2428, %v2444
    %v2455 = vunpack.c.l.s4 1934713408
    %v2456 = vunpack.c.0.s8 %v2455
    %v2457 = vlaneseq
    %v2458 = vshrl.u32 %v2457, 7
    %v2459 = vsub.s32 %v2456, %v2458
    %v2460 = vrot.slane %v2452, %v2459
    %v2462 = vunpack.c.l.s4 1934713408
    %v2463 = vunpack.c.0.s8 %v2462
    %v2464 = vlaneseq
    %v2465 = vshrl.u32 %v2464, 7
    %v2466 = vsub.s32 %v2463, %v2465
    %v2467 = vrot.slane %v2453, %v2466
    %v2468 = vcombine.low %v2435, %v2451
    %v2469 = vcombine.high %v2435, %v2451
    %v2471 = vunpack.c.l.s4 1934713408
    %v2472 = vunpack.c.0.s8 %v2471
    %v2473 = vlaneseq
    %v2474 = vshrl.u32 %v2473, 7
    %v2475 = vsub.s32 %v2472, %v2474
    %v2476 = vrot.slane %v2468, %v2475
    %v2478 = vunpack.c.l.s4 1934713408
    %v2479 = vunpack.c.0.s8 %v2478
    %v2480 = vlaneseq
    %v2481 = vshrl.u32 %v2480, 7
    %v2482 = vsub.s32 %v2479, %v2481
    %v2483 = vrot.slane %v2469, %v2482
    %v2484 = vcombine.high %v2460, 0.0
    %v2485 = vcombine.high %v2467, 0.0
    %v2486 = vcombine.high %v2476, 0.0
    %v2487 = vcombine.high %v2483, 0.0
    %v2488 = vcombine.low %v1984, %v1991
    %v2490 = vunpack.c.l.s4 1983009808
    %v2491 = vunpack.c.0.s8 %v2490
    %v2492 = vlaneseq
    %v2493 = vshrl.u32 %v2492, 7
    %v2494 = vsub.s32 %v2491, %v2493
    %v2495 = vrot.slane %v2488, %v2494
    %v2496 = vcombine.low %v2008, %v2009
    %v2498 = vunpack.c.l.s4 1983009808
    %v2499 = vunpack.c.0.s8 %v2498
    %v2500 = vlaneseq
    %v2501 = vshrl.u32 %v2500, 7
    %v2502 = vsub.s32 %v2499, %v2501
    %v2503 = vrot.slane %v2496, %v2502
    %v2504 = vcombine.low %v2000, %v2007
    %v2506 = vunpack.c.l.s4 1983009808
    %v2507 = vunpack.c.0.s8 %v2506
    %v2508 = vlaneseq
    %v2509 = vshrl.u32 %v2508, 7
    %v2510 = vsub.s32 %v2507, %v2509
    %v2511 = vrot.slane %v2504, %v2510
    %v2512 = vcombine.low %v2010, %v2011
    %v2514 = vunpack.c.l.s4 1983009808
    %v2515 = vunpack.c.0.s8 %v2514
    %v2516 = vlaneseq
    %v2517 = vshrl.u32 %v2516, 7
    %v2518 = vsub.s32 %v2515, %v2517
    %v2519 = vrot.slane %v2512, %v2518
    %v2520 = vcombine.low %v2495, %v2503
    %v2521 = vcombine.high %v2495, %v2503
    %v2523 = vunpack.c.l.s4 1934713408
    %v2524 = vunpack.c.0.s8 %v2523
    %v2525 = vlaneseq
    %v2526 = vshrl.u32 %v2525, 7
    %v2527 = vsub.s32 %v2524, %v2526
    %v2528 = vrot.slane %v2520, %v2527
    %v2530 = vunpack.c.l.s4 1934713408
    %v2531 = vunpack.c.0.s8 %v2530
    %v2532 = vlaneseq
    %v2533 = vshrl.u32 %v2532, 7
    %v2534 = vsub.s32 %v2531, %v2533
    %v2535 = vrot.slane %v2521, %v2534
    %v2536 = vcombine.low %v2511, %v2519
    %v2537 = vcombine.high %v2511, %v2519
    %v2539 = vunpack.c.l.s4 1934713408
    %v2540 = vunpack.c.0.s8 %v2539
    %v2541 = vlaneseq
    %v2542 = vshrl.u32 %v2541, 7
    %v2543 = vsub.s32 %v2540, %v2542
    %v2544 = vrot.slane %v2536, %v2543
    %v2546 = vunpack.c.l.s4 1934713408
    %v2547 = vunpack.c.0.s8 %v2546
    %v2548 = vlaneseq
    %v2549 = vshrl.u32 %v2548, 7
    %v2550 = vsub.s32 %v2547, %v2549
    %v2551 = vrot.slane %v2537, %v2550
    %v2552 = vcombine.low %v2528, %v2544
    %v2553 = vcombine.high %v2528, %v2544
    %v2554 = vcombine.low %v2535, %v2551
    %v2555 = vcombine.high %v2535, %v2551
    %v2556 = vcombine.low %v2052, %v2059
    %v2558 = vunpack.c.l.s4 1983009808
    %v2559 = vunpack.c.0.s8 %v2558
    %v2560 = vlaneseq
    %v2561 = vshrl.u32 %v2560, 7
    %v2562 = vsub.s32 %v2559, %v2561
    %v2563 = vrot.slane %v2556, %v2562
    %v2564 = vcombine.low %v2076, %v2077
    %v2566 = vunpack.c.l.s4 1983009808
    %v2567 = vunpack.c.0.s8 %v2566
    %v2568 = vlaneseq
    %v2569 = vshrl.u32 %v2568, 7
    %v2570 = vsub.s32 %v2567, %v2569
    %v2571 = vrot.slane %v2564, %v2570
    %v2572 = vcombine.low %v2068, %v2075
    %v2574 = vunpack.c.l.s4 1983009808
    %v2575 = vunpack.c.0.s8 %v2574
    %v2576 = vlaneseq
    %v2577 = vshrl.u32 %v2576, 7
    %v2578 = vsub.s32 %v2575, %v2577
    %v2579 = vrot.slane %v2572, %v2578
    %v2580 = vcombine.low %v2078, %v2079
    %v2582 = vunpack.c.l.s4 1983009808
    %v2583 = vunpack.c.0.s8 %v2582
    %v2584 = vlaneseq
    %v2585 = vshrl.u32 %v2584, 7
    %v2586 = vsub.s32 %v2583, %v2585
    %v2587 = vrot.slane %v2580, %v2586
    %v2588 = vcombine.low %v2563, %v2571
    %v2589 = vcombine.high %v2563, %v2571
    %v2591 = vunpack.c.l.s4 1934713408
    %v2592 = vunpack.c.0.s8 %v2591
    %v2593 = vlaneseq
    %v2594 = vshrl.u32 %v2593, 7
    %v2595 = vsub.s32 %v2592, %v2594
    %v2596 = vrot.slane %v2588, %v2595
    %v2598 = vunpack.c.l.s4 1934713408
    %v2599 = vunpack.c.0.s8 %v2598
    %v2600 = vlaneseq
    %v2601 = vshrl.u32 %v2600, 7
    %v2602 = vsub.s32 %v2599, %v2601
    %v2603 = vrot.slane %v2589, %v2602
    %v2604 = vcombine.low %v2579, %v2587
    %v2605 = vcombine.high %v2579, %v2587
    %v2607 = vunpack.c.l.s4 1934713408
    %v2608 = vunpack.c.0.s8 %v2607
    %v2609 = vlaneseq
    %v2610 = vshrl.u32 %v2609, 7
    %v2611 = vsub.s32 %v2608, %v2610
    %v2612 = vrot.slane %v2604, %v2611
    %v2614 = vunpack.c.l.s4 1934713408
    %v2615 = vunpack.c.0.s8 %v2614
    %v2616 = vlaneseq
    %v2617 = vshrl.u32 %v2616, 7
    %v2618 = vsub.s32 %v2615, %v2617
    %v2619 = vrot.slane %v2605, %v2618
    %v2620 = vcombine.low %v2596, %v2612
    %v2621 = vcombine.high %v2596, %v2612
    %v2622 = vcombine.low %v2603, %v2619
    %v2623 = vcombine.high %v2603, %v2619
    %v2624 = vcombine.low %v2120, %v2127
    %v2626 = vunpack.c.l.s4 1983009808
    %v2627 = vunpack.c.0.s8 %v2626
    %v2628 = vlaneseq
    %v2629 = vshrl.u32 %v2628, 7
    %v2630 = vsub.s32 %v2627, %v2629
    %v2631 = vrot.slane %v2624, %v2630
    %v2632 = vcombine.low %v2144, %v2145
    %v2634 = vunpack.c.l.s4 1983009808
    %v2635 = vunpack.c.0.s8 %v2634
    %v2636 = vlaneseq
    %v2637 = vshrl.u32 %v2636, 7
    %v2638 = vsub.s32 %v2635, %v2637
    %v2639 = vrot.slane %v2632, %v2638
    %v2640 = vcombine.low %v2136, %v2143
    %v2642 = vunpack.c.l.s4 1983009808
    %v2643 = vunpack.c.0.s8 %v2642
    %v2644 = vlaneseq
    %v2645 = vshrl.u32 %v2644, 7
    %v2646 = vsub.s32 %v2643, %v2645
    %v2647 = vrot.slane %v2640, %v2646
    %v2648 = vcombine.low %v2146, %v2147
    %v2650 = vunpack.c.l.s4 1983009808
    %v2651 = vunpack.c.0.s8 %v2650
    %v2652 = vlaneseq
    %v2653 = vshrl.u32 %v2652, 7
    %v2654 = vsub.s32 %v2651, %v2653
    %v2655 = vrot.slane %v2648, %v2654
    %v2656 = vcombine.low %v2631, %v2639
    %v2657 = vcombine.high %v2631, %v2639
    %v2659 = vunpack.c.l.s4 1934713408
    %v2660 = vunpack.c.0.s8 %v2659
    %v2661 = vlaneseq
    %v2662 = vshrl.u32 %v2661, 7
    %v2663 = vsub.s32 %v2660, %v2662
    %v2664 = vrot.slane %v2656, %v2663
    %v2666 = vunpack.c.l.s4 1934713408
    %v2667 = vunpack.c.0.s8 %v2666
    %v2668 = vlaneseq
    %v2669 = vshrl.u32 %v2668, 7
    %v2670 = vsub.s32 %v2667, %v2669
    %v2671 = vrot.slane %v2657, %v2670
    %v2672 = vcombine.low %v2647, %v2655
    %v2673 = vcombine.high %v2647, %v2655
    %v2675 = vunpack.c.l.s4 1934713408
    %v2676 = vunpack.c.0.s8 %v2675
    %v2677 = vlaneseq
    %v2678 = vshrl.u32 %v2677, 7
    %v2679 = vsub.s32 %v2676, %v2678
    %v2680 = vrot.slane %v2672, %v2679
    %v2682 = vunpack.c.l.s4 1934713408
    %v2683 = vunpack.c.0.s8 %v2682
    %v2684 = vlaneseq
    %v2685 = vshrl.u32 %v2684, 7
    %v2686 = vsub.s32 %v2683, %v2685
    %v2687 = vrot.slane %v2673, %v2686
    %v2688 = vcombine.low %v2664, %v2680
    %v2689 = vcombine.high %v2664, %v2680
    %v2690 = vcombine.low %v2671, %v2687
    %v2691 = vcombine.high %v2671, %v2687
    %v2692 = vcombine.low %v2188, %v2195
    %v2694 = vunpack.c.l.s4 1983009808
    %v2695 = vunpack.c.0.s8 %v2694
    %v2696 = vlaneseq
    %v2697 = vshrl.u32 %v2696, 7
    %v2698 = vsub.s32 %v2695, %v2697
    %v2699 = vrot.slane %v2692, %v2698
    %v2700 = vcombine.low %v2212, %v2213
    %v2702 = vunpack.c.l.s4 1983009808
    %v2703 = vunpack.c.0.s8 %v2702
    %v2704 = vlaneseq
    %v2705 = vshrl.u32 %v2704, 7
    %v2706 = vsub.s32 %v2703, %v2705
    %v2707 = vrot.slane %v2700, %v2706
    %v2708 = vcombine.low %v2204, %v2211
    %v2710 = vunpack.c.l.s4 1983009808
    %v2711 = vunpack.c.0.s8 %v2710
    %v2712 = vlaneseq
    %v2713 = vshrl.u32 %v2712, 7
    %v2714 = vsub.s32 %v2711, %v2713
    %v2715 = vrot.slane %v2708, %v2714
    %v2716 = vcombine.low %v2214, %v2215
    %v2718 = vunpack.c.l.s4 1983009808
    %v2719 = vunpack.c.0.s8 %v2718
    %v2720 = vlaneseq
    %v2721 = vshrl.u32 %v2720, 7
    %v2722 = vsub.s32 %v2719, %v2721
    %v2723 = vrot.slane %v2716, %v2722
    %v2724 = vcombine.low %v2699, %v2707
    %v2725 = vcombine.high %v2699, %v2707
    %v2727 = vunpack.c.l.s4 1934713408
    %v2728 = vunpack.c.0.s8 %v2727
    %v2729 = vlaneseq
    %v2730 = vshrl.u32 %v2729, 7
    %v2731 = vsub.s32 %v2728, %v2730
    %v2732 = vrot.slane %v2724, %v2731
    %v2734 = vunpack.c.l.s4 1934713408
    %v2735 = vunpack.c.0.s8 %v2734
    %v2736 = vlaneseq
    %v2737 = vshrl.u32 %v2736, 7
    %v2738 = vsub.s32 %v2735, %v2737
    %v2739 = vrot.slane %v2725, %v2738
    %v2740 = vcombine.low %v2715, %v2723
    %v2741 = vcombine.high %v2715, %v2723
    %v2743 = vunpack.c.l.s4 1934713408
    %v2744 = vunpack.c.0.s8 %v2743
    %v2745 = vlaneseq
    %v2746 = vshrl.u32 %v2745, 7
    %v2747 = vsub.s32 %v2744, %v2746
    %v2748 = vrot.slane %v2740, %v2747
    %v2750 = vunpack.c.l.s4 1934713408
    %v2751 = vunpack.c.0.s8 %v2750
    %v2752 = vlaneseq
    %v2753 = vshrl.u32 %v2752, 7
    %v2754 = vsub.s32 %v2751, %v2753
    %v2755 = vrot.slane %v2741, %v2754
    %v2756 = vcombine.low %v2732, %v2748
    %v2757 = vcombine.high %v2732, %v2748
    %v2758 = vcombine.low %v2739, %v2755
    %v2759 = vcombine.high %v2739, %v2755
    %v2760 = vcombine.low %v2256, %v2263
    %v2762 = vunpack.c.l.s4 1983009808
    %v2763 = vunpack.c.0.s8 %v2762
    %v2764 = vlaneseq
    %v2765 = vshrl.u32 %v2764, 7
    %v2766 = vsub.s32 %v2763, %v2765
    %v2767 = vrot.slane %v2760, %v2766
    %v2768 = vcombine.low %v2280, %v2281
    %v2770 = vunpack.c.l.s4 1983009808
    %v2771 = vunpack.c.0.s8 %v2770
    %v2772 = vlaneseq
    %v2773 = vshrl.u32 %v2772, 7
    %v2774 = vsub.s32 %v2771, %v2773
    %v2775 = vrot.slane %v2768, %v2774
    %v2776 = vcombine.low %v2272, %v2279
    %v2778 = vunpack.c.l.s4 1983009808
    %v2779 = vunpack.c.0.s8 %v2778
    %v2780 = vlaneseq
    %v2781 = vshrl.u32 %v2780, 7
    %v2782 = vsub.s32 %v2779, %v2781
    %v2783 = vrot.slane %v2776, %v2782
    %v2784 = vcombine.low %v2282, %v2283
    %v2786 = vunpack.c.l.s4 1983009808
    %v2787 = vunpack.c.0.s8 %v2786
    %v2788 = vlaneseq
    %v2789 = vshrl.u32 %v2788, 7
    %v2790 = vsub.s32 %v2787, %v2789
    %v2791 = vrot.slane %v2784, %v2790
    %v2792 = vcombine.low %v2767, %v2775
    %v2793 = vcombine.high %v2767, %v2775
    %v2795 = vunpack.c.l.s4 1934713408
    %v2796 = vunpack.c.0.s8 %v2795
    %v2797 = vlaneseq
    %v2798 = vshrl.u32 %v2797, 7
    %v2799 = vsub.s32 %v2796, %v2798
    %v2800 = vrot.slane %v2792, %v2799
    %v2802 = vunpack.c.l.s4 1934713408
    %v2803 = vunpack.c.0.s8 %v2802
    %v2804 = vlaneseq
    %v2805 = vshrl.u32 %v2804, 7
    %v2806 = vsub.s32 %v2803, %v2805
    %v2807 = vrot.slane %v2793, %v2806
    %v2808 = vcombine.low %v2783, %v2791
    %v2809 = vcombine.high %v2783, %v2791
    %v2811 = vunpack.c.l.s4 1934713408
    %v2812 = vunpack.c.0.s8 %v2811
    %v2813 = vlaneseq
    %v2814 = vshrl.u32 %v2813, 7
    %v2815 = vsub.s32 %v2812, %v2814
    %v2816 = vrot.slane %v2808, %v2815
    %v2818 = vunpack.c.l.s4 1934713408
    %v2819 = vunpack.c.0.s8 %v2818
    %v2820 = vlaneseq
    %v2821 = vshrl.u32 %v2820, 7
    %v2822 = vsub.s32 %v2819, %v2821
    %v2823 = vrot.slane %v2809, %v2822
    %v2824 = vcombine.low %v2800, %v2816
    %v2825 = vcombine.high %v2800, %v2816
    %v2826 = vcombine.low %v2807, %v2823
    %v2827 = vcombine.high %v2807, %v2823
    %v2828 = vcombine.low %v2324, %v2331
    %v2830 = vunpack.c.l.s4 1983009808
    %v2831 = vunpack.c.0.s8 %v2830
    %v2832 = vlaneseq
    %v2833 = vshrl.u32 %v2832, 7
    %v2834 = vsub.s32 %v2831, %v2833
    %v2835 = vrot.slane %v2828, %v2834
    %v2836 = vcombine.low %v2348, %v2349
    %v2838 = vunpack.c.l.s4 1983009808
    %v2839 = vunpack.c.0.s8 %v2838
    %v2840 = vlaneseq
    %v2841 = vshrl.u32 %v2840, 7
    %v2842 = vsub.s32 %v2839, %v2841
    %v2843 = vrot.slane %v2836, %v2842
    %v2844 = vcombine.low %v2340, %v2347
    %v2846 = vunpack.c.l.s4 1983009808
    %v2847 = vunpack.c.0.s8 %v2846
    %v2848 = vlaneseq
    %v2849 = vshrl.u32 %v2848, 7
    %v2850 = vsub.s32 %v2847, %v2849
    %v2851 = vrot.slane %v2844, %v2850
    %v2852 = vcombine.low %v2350, %v2351
    %v2854 = vunpack.c.l.s4 1983009808
    %v2855 = vunpack.c.0.s8 %v2854
    %v2856 = vlaneseq
    %v2857 = vshrl.u32 %v2856, 7
    %v2858 = vsub.s32 %v2855, %v2857
    %v2859 = vrot.slane %v2852, %v2858
    %v2860 = vcombine.low %v2835, %v2843
    %v2861 = vcombine.high %v2835, %v2843
    %v2863 = vunpack.c.l.s4 1934713408
    %v2864 = vunpack.c.0.s8 %v2863
    %v2865 = vlaneseq
    %v2866 = vshrl.u32 %v2865, 7
    %v2867 = vsub.s32 %v2864, %v2866
    %v2868 = vrot.slane %v2860, %v2867
    %v2870 = vunpack.c.l.s4 1934713408
    %v2871 = vunpack.c.0.s8 %v2870
    %v2872 = vlaneseq
    %v2873 = vshrl.u32 %v2872, 7
    %v2874 = vsub.s32 %v2871, %v2873
    %v2875 = vrot.slane %v2861, %v2874
    %v2876 = vcombine.low %v2851, %v2859
    %v2877 = vcombine.high %v2851, %v2859
    %v2879 = vunpack.c.l.s4 1934713408
    %v2880 = vunpack.c.0.s8 %v2879
    %v2881 = vlaneseq
    %v2882 = vshrl.u32 %v2881, 7
    %v2883 = vsub.s32 %v2880, %v2882
    %v2884 = vrot.slane %v2876, %v2883
    %v2886 = vunpack.c.l.s4 1934713408
    %v2887 = vunpack.c.0.s8 %v2886
    %v2888 = vlaneseq
    %v2889 = vshrl.u32 %v2888, 7
    %v2890 = vsub.s32 %v2887, %v2889
    %v2891 = vrot.slane %v2877, %v2890
    %v2892 = vcombine.low %v2868, %v2884
    %v2893 = vcombine.high %v2868, %v2884
    %v2894 = vcombine.low %v2875, %v2891
    %v2895 = vcombine.high %v2875, %v2891
    %v2896 = vcombine.low %v2392, %v2399
    %v2898 = vunpack.c.l.s4 1983009808
    %v2899 = vunpack.c.0.s8 %v2898
    %v2900 = vlaneseq
    %v2901 = vshrl.u32 %v2900, 7
    %v2902 = vsub.s32 %v2899, %v2901
    %v2903 = vrot.slane %v2896, %v2902
    %v2904 = vcombine.low %v2416, %v2417
    %v2906 = vunpack.c.l.s4 1983009808
    %v2907 = vunpack.c.0.s8 %v2906
    %v2908 = vlaneseq
    %v2909 = vshrl.u32 %v2908, 7
    %v2910 = vsub.s32 %v2907, %v2909
    %v2911 = vrot.slane %v2904, %v2910
    %v2912 = vcombine.low %v2408, %v2415
    %v2914 = vunpack.c.l.s4 1983009808
    %v2915 = vunpack.c.0.s8 %v2914
    %v2916 = vlaneseq
    %v2917 = vshrl.u32 %v2916, 7
    %v2918 = vsub.s32 %v2915, %v2917
    %v2919 = vrot.slane %v2912, %v2918
    %v2920 = vcombine.low %v2418, %v2419
    %v2922 = vunpack.c.l.s4 1983009808
    %v2923 = vunpack.c.0.s8 %v2922
    %v2924 = vlaneseq
    %v2925 = vshrl.u32 %v2924, 7
    %v2926 = vsub.s32 %v2923, %v2925
    %v2927 = vrot.slane %v2920, %v2926
    %v2928 = vcombine.low %v2903, %v2911
    %v2929 = vcombine.high %v2903, %v2911
    %v2931 = vunpack.c.l.s4 1934713408
    %v2932 = vunpack.c.0.s8 %v2931
    %v2933 = vlaneseq
    %v2934 = vshrl.u32 %v2933, 7
    %v2935 = vsub.s32 %v2932, %v2934
    %v2936 = vrot.slane %v2928, %v2935
    %v2938 = vunpack.c.l.s4 1934713408
    %v2939 = vunpack.c.0.s8 %v2938
    %v2940 = vlaneseq
    %v2941 = vshrl.u32 %v2940, 7
    %v2942 = vsub.s32 %v2939, %v2941
    %v2943 = vrot.slane %v2929, %v2942
    %v2944 = vcombine.low %v2919, %v2927
    %v2945 = vcombine.high %v2919, %v2927
    %v2947 = vunpack.c.l.s4 1934713408
    %v2948 = vunpack.c.0.s8 %v2947
    %v2949 = vlaneseq
    %v2950 = vshrl.u32 %v2949, 7
    %v2951 = vsub.s32 %v2948, %v2950
    %v2952 = vrot.slane %v2944, %v2951
    %v2954 = vunpack.c.l.s4 1934713408
    %v2955 = vunpack.c.0.s8 %v2954
    %v2956 = vlaneseq
    %v2957 = vshrl.u32 %v2956, 7
    %v2958 = vsub.s32 %v2955, %v2957
    %v2959 = vrot.slane %v2945, %v2958
    %v2960 = vcombine.low %v2936, %v2952
    %v2961 = vcombine.high %v2936, %v2952
    %v2962 = vcombine.low %v2943, %v2959
    %v2963 = vcombine.high %v2943, %v2959
    %v2964 = vcombine.low %v2460, %v2467
    %v2966 = vunpack.c.l.s4 1983009808
    %v2967 = vunpack.c.0.s8 %v2966
    %v2968 = vlaneseq
    %v2969 = vshrl.u32 %v2968, 7
    %v2970 = vsub.s32 %v2967, %v2969
    %v2971 = vrot.slane %v2964, %v2970
    %v2972 = vcombine.low %v2484, %v2485
    %v2974 = vunpack.c.l.s4 1983009808
    %v2975 = vunpack.c.0.s8 %v2974
    %v2976 = vlaneseq
    %v2977 = vshrl.u32 %v2976, 7
    %v2978 = vsub.s32 %v2975, %v2977
    %v2979 = vrot.slane %v2972, %v2978
    %v2980 = vcombine.low %v2476, %v2483
    %v2982 = vunpack.c.l.s4 1983009808
    %v2983 = vunpack.c.0.s8 %v2982
    %v2984 = vlaneseq
    %v2985 = vshrl.u32 %v2984, 7
    %v2986 = vsub.s32 %v2983, %v2985
    %v2987 = vrot.slane %v2980, %v2986
    %v2988 = vcombine.low %v2486, %v2487
    %v2990 = vunpack.c.l.s4 1983009808
    %v2991 = vunpack.c.0.s8 %v2990
    %v2992 = vlaneseq
    %v2993 = vshrl.u32 %v2992, 7
    %v2994 = vsub.s32 %v2991, %v2993
    %v2995 = vrot.slane %v2988, %v2994
    %v2996 = vcombine.low %v2971, %v2979
    %v2997 = vcombine.high %v2971, %v2979
    %v2999 = vunpack.c.l.s4 1934713408
    %v3000 = vunpack.c.0.s8 %v2999
    %v3001 = vlaneseq
    %v3002 = vshrl.u32 %v3001, 7
    %v3003 = vsub.s32 %v3000, %v3002
    %v3004 = vrot.slane %v2996, %v3003
    %v3006 = vunpack.c.l.s4 1934713408
    %v3007 = vunpack.c.0.s8 %v3006
    %v3008 = vlaneseq
    %v3009 = vshrl.u32 %v3008, 7
    %v3010 = vsub.s32 %v3007, %v3009
    %v3011 = vrot.slane %v2997, %v3010
    %v3012 = vcombine.low %v2987, %v2995
    %v3013 = vcombine.high %v2987, %v2995
    %v3015 = vunpack.c.l.s4 1934713408
    %v3016 = vunpack.c.0.s8 %v3015
    %v3017 = vlaneseq
    %v3018 = vshrl.u32 %v3017, 7
    %v3019 = vsub.s32 %v3016, %v3018
    %v3020 = vrot.slane %v3012, %v3019
    %v3022 = vunpack.c.l.s4 1934713408
    %v3023 = vunpack.c.0.s8 %v3022
    %v3024 = vlaneseq
    %v3025 = vshrl.u32 %v3024, 7
    %v3026 = vsub.s32 %v3023, %v3025
    %v3027 = vrot.slane %v3013, %v3026
    %v3028 = vcombine.low %v3004, %v3020
    %v3029 = vcombine.high %v3004, %v3020
    %v3030 = vcombine.low %v3011, %v3027
    %v3031 = vcombine.high %v3011, %v3027
    %3048 = vrot.lane.b32.xlu0 %v1786, 96
    %v3049 = vpop.permute.xlu0 %3048
    %3050 = vrot.lane.b32.xlu0 %v1790, 96
    %v3051 = vpop.permute.xlu0 %3050
    %3052 = vrot.lane.b32.xlu0 %v1796, 96
    %v3053 = vpop.permute.xlu0 %3052
    %3054 = vrot.lane.b32.xlu0 %v1800, 96
    %v3055 = vpop.permute.xlu0 %3054
    %3056 = vrot.lane.b32.xlu0 %v1806, 96
    %v3057 = vpop.permute.xlu0 %3056
    %3058 = vrot.lane.b32.xlu0 %v1810, 96
    %v3059 = vpop.permute.xlu0 %3058
    %3060 = vrot.lane.b32.xlu0 %v1816, 96
    %v3061 = vpop.permute.xlu0 %3060
    %3062 = vrot.lane.b32.xlu0 %v1820, 96
    %v3063 = vpop.permute.xlu0 %3062
    %3064 = vrot.lane.b32.xlu0 %v1826, 96
    %v3065 = vpop.permute.xlu0 %3064
    %3066 = vrot.lane.b32.xlu0 %v1830, 96
    %v3067 = vpop.permute.xlu0 %3066
    %3068 = vrot.lane.b32.xlu0 %v1836, 96
    %v3069 = vpop.permute.xlu0 %3068
    %3070 = vrot.lane.b32.xlu0 %v1840, 96
    %v3071 = vpop.permute.xlu0 %3070
    %3072 = vrot.lane.b32.xlu0 %v1846, 96
    %v3073 = vpop.permute.xlu0 %3072
    %3074 = vrot.lane.b32.xlu0 %v1850, 96
    %v3075 = vpop.permute.xlu0 %3074
    %3076 = vrot.lane.b32.xlu0 %v1856, 96
    %v3077 = vpop.permute.xlu0 %3076
    %3078 = vrot.lane.b32.xlu0 %v1860, 96
    %v3079 = vpop.permute.xlu0 %3078
    %3096 = vrot.lane.b32.xlu0 %v1786, 64
    %v3097 = vpop.permute.xlu0 %3096
    %3098 = vrot.lane.b32.xlu0 %v1790, 64
    %v3099 = vpop.permute.xlu0 %3098
    %3100 = vrot.lane.b32.xlu0 %v1796, 64
    %v3101 = vpop.permute.xlu0 %3100
    %3102 = vrot.lane.b32.xlu0 %v1800, 64
    %v3103 = vpop.permute.xlu0 %3102
    %3104 = vrot.lane.b32.xlu0 %v1806, 64
    %v3105 = vpop.permute.xlu0 %3104
    %3106 = vrot.lane.b32.xlu0 %v1810, 64
    %v3107 = vpop.permute.xlu0 %3106
    %3108 = vrot.lane.b32.xlu0 %v1816, 64
    %v3109 = vpop.permute.xlu0 %3108
    %3110 = vrot.lane.b32.xlu0 %v1820, 64
    %v3111 = vpop.permute.xlu0 %3110
    %3112 = vrot.lane.b32.xlu0 %v1826, 64
    %v3113 = vpop.permute.xlu0 %3112
    %3114 = vrot.lane.b32.xlu0 %v1830, 64
    %v3115 = vpop.permute.xlu0 %3114
    %3116 = vrot.lane.b32.xlu0 %v1836, 64
    %v3117 = vpop.permute.xlu0 %3116
    %3118 = vrot.lane.b32.xlu0 %v1840, 64
    %v3119 = vpop.permute.xlu0 %3118
    %3120 = vrot.lane.b32.xlu0 %v1846, 64
    %v3121 = vpop.permute.xlu0 %3120
    %3122 = vrot.lane.b32.xlu0 %v1850, 64
    %v3123 = vpop.permute.xlu0 %3122
    %3124 = vrot.lane.b32.xlu0 %v1856, 64
    %v3125 = vpop.permute.xlu0 %3124
    %3126 = vrot.lane.b32.xlu0 %v1860, 64
    %v3127 = vpop.permute.xlu0 %3126
    %3144 = vrot.lane.b32.xlu0 %v1786, 32
    %v3145 = vpop.permute.xlu0 %3144
    %3146 = vrot.lane.b32.xlu0 %v1790, 32
    %v3147 = vpop.permute.xlu0 %3146
    %3148 = vrot.lane.b32.xlu0 %v1796, 32
    %v3149 = vpop.permute.xlu0 %3148
    %3150 = vrot.lane.b32.xlu0 %v1800, 32
    %v3151 = vpop.permute.xlu0 %3150
    %3152 = vrot.lane.b32.xlu0 %v1806, 32
    %v3153 = vpop.permute.xlu0 %3152
    %3154 = vrot.lane.b32.xlu0 %v1810, 32
    %v3155 = vpop.permute.xlu0 %3154
    %3156 = vrot.lane.b32.xlu0 %v1816, 32
    %v3157 = vpop.permute.xlu0 %3156
    %3158 = vrot.lane.b32.xlu0 %v1820, 32
    %v3159 = vpop.permute.xlu0 %3158
    %3160 = vrot.lane.b32.xlu0 %v1826, 32
    %v3161 = vpop.permute.xlu0 %3160
    %3162 = vrot.lane.b32.xlu0 %v1830, 32
    %v3163 = vpop.permute.xlu0 %3162
    %3164 = vrot.lane.b32.xlu0 %v1836, 32
    %v3165 = vpop.permute.xlu0 %3164
    %3166 = vrot.lane.b32.xlu0 %v1840, 32
    %v3167 = vpop.permute.xlu0 %3166
    %3168 = vrot.lane.b32.xlu0 %v1846, 32
    %v3169 = vpop.permute.xlu0 %3168
    %3170 = vrot.lane.b32.xlu0 %v1850, 32
    %v3171 = vpop.permute.xlu0 %3170
    %3172 = vrot.lane.b32.xlu0 %v1856, 32
    %v3173 = vpop.permute.xlu0 %3172
    %3174 = vrot.lane.b32.xlu0 %v1860, 32
    %v3175 = vpop.permute.xlu0 %3174
    %v3192 = vcombine.low %v1786, %v3097
    %v3193 = vcombine.high %v1786, %v3097
    %v3195 = vunpack.c.l.s4 1983009808
    %v3196 = vunpack.c.0.s8 %v3195
    %v3197 = vlaneseq
    %v3198 = vshrl.u32 %v3197, 7
    %v3199 = vsub.s32 %v3196, %v3198
    %v3200 = vrot.slane %v3192, %v3199
    %v3202 = vunpack.c.l.s4 1983009808
    %v3203 = vunpack.c.0.s8 %v3202
    %v3204 = vlaneseq
    %v3205 = vshrl.u32 %v3204, 7
    %v3206 = vsub.s32 %v3203, %v3205
    %v3207 = vrot.slane %v3193, %v3206
    %v3208 = vcombine.low %v3049, %v3145
    %v3209 = vcombine.high %v3049, %v3145
    %v3211 = vunpack.c.l.s4 1983009808
    %v3212 = vunpack.c.0.s8 %v3211
    %v3213 = vlaneseq
    %v3214 = vshrl.u32 %v3213, 7
    %v3215 = vsub.s32 %v3212, %v3214
    %v3216 = vrot.slane %v3208, %v3215
    %v3218 = vunpack.c.l.s4 1983009808
    %v3219 = vunpack.c.0.s8 %v3218
    %v3220 = vlaneseq
    %v3221 = vshrl.u32 %v3220, 7
    %v3222 = vsub.s32 %v3219, %v3221
    %v3223 = vrot.slane %v3209, %v3222
    %v3224 = vcombine.low %v3200, %v3216
    %v3225 = vcombine.high %v3200, %v3216
    %v3227 = vunpack.c.l.s4 1934713408
    %v3228 = vunpack.c.0.s8 %v3227
    %v3229 = vlaneseq
    %v3230 = vshrl.u32 %v3229, 7
    %v3231 = vsub.s32 %v3228, %v3230
    %v3232 = vrot.slane %v3224, %v3231
    %v3234 = vunpack.c.l.s4 1934713408
    %v3235 = vunpack.c.0.s8 %v3234
    %v3236 = vlaneseq
    %v3237 = vshrl.u32 %v3236, 7
    %v3238 = vsub.s32 %v3235, %v3237
    %v3239 = vrot.slane %v3225, %v3238
    %v3240 = vcombine.low %v3207, %v3223
    %v3241 = vcombine.high %v3207, %v3223
    %v3243 = vunpack.c.l.s4 1934713408
    %v3244 = vunpack.c.0.s8 %v3243
    %v3245 = vlaneseq
    %v3246 = vshrl.u32 %v3245, 7
    %v3247 = vsub.s32 %v3244, %v3246
    %v3248 = vrot.slane %v3240, %v3247
    %v3250 = vunpack.c.l.s4 1934713408
    %v3251 = vunpack.c.0.s8 %v3250
    %v3252 = vlaneseq
    %v3253 = vshrl.u32 %v3252, 7
    %v3254 = vsub.s32 %v3251, %v3253
    %v3255 = vrot.slane %v3241, %v3254
    %v3256 = vcombine.high %v3232, 0.0
    %v3257 = vcombine.high %v3239, 0.0
    %v3258 = vcombine.high %v3248, 0.0
    %v3259 = vcombine.high %v3255, 0.0
    %v3260 = vcombine.low %v1790, %v3099
    %v3261 = vcombine.high %v1790, %v3099
    %v3263 = vunpack.c.l.s4 1983009808
    %v3264 = vunpack.c.0.s8 %v3263
    %v3265 = vlaneseq
    %v3266 = vshrl.u32 %v3265, 7
    %v3267 = vsub.s32 %v3264, %v3266
    %v3268 = vrot.slane %v3260, %v3267
    %v3270 = vunpack.c.l.s4 1983009808
    %v3271 = vunpack.c.0.s8 %v3270
    %v3272 = vlaneseq
    %v3273 = vshrl.u32 %v3272, 7
    %v3274 = vsub.s32 %v3271, %v3273
    %v3275 = vrot.slane %v3261, %v3274
    %v3276 = vcombine.low %v3051, %v3147
    %v3277 = vcombine.high %v3051, %v3147
    %v3279 = vunpack.c.l.s4 1983009808
    %v3280 = vunpack.c.0.s8 %v3279
    %v3281 = vlaneseq
    %v3282 = vshrl.u32 %v3281, 7
    %v3283 = vsub.s32 %v3280, %v3282
    %v3284 = vrot.slane %v3276, %v3283
    %v3286 = vunpack.c.l.s4 1983009808
    %v3287 = vunpack.c.0.s8 %v3286
    %v3288 = vlaneseq
    %v3289 = vshrl.u32 %v3288, 7
    %v3290 = vsub.s32 %v3287, %v3289
    %v3291 = vrot.slane %v3277, %v3290
    %v3292 = vcombine.low %v3268, %v3284
    %v3293 = vcombine.high %v3268, %v3284
    %v3295 = vunpack.c.l.s4 1934713408
    %v3296 = vunpack.c.0.s8 %v3295
    %v3297 = vlaneseq
    %v3298 = vshrl.u32 %v3297, 7
    %v3299 = vsub.s32 %v3296, %v3298
    %v3300 = vrot.slane %v3292, %v3299
    %v3302 = vunpack.c.l.s4 1934713408
    %v3303 = vunpack.c.0.s8 %v3302
    %v3304 = vlaneseq
    %v3305 = vshrl.u32 %v3304, 7
    %v3306 = vsub.s32 %v3303, %v3305
    %v3307 = vrot.slane %v3293, %v3306
    %v3308 = vcombine.low %v3275, %v3291
    %v3309 = vcombine.high %v3275, %v3291
    %v3311 = vunpack.c.l.s4 1934713408
    %v3312 = vunpack.c.0.s8 %v3311
    %v3313 = vlaneseq
    %v3314 = vshrl.u32 %v3313, 7
    %v3315 = vsub.s32 %v3312, %v3314
    %v3316 = vrot.slane %v3308, %v3315
    %v3318 = vunpack.c.l.s4 1934713408
    %v3319 = vunpack.c.0.s8 %v3318
    %v3320 = vlaneseq
    %v3321 = vshrl.u32 %v3320, 7
    %v3322 = vsub.s32 %v3319, %v3321
    %v3323 = vrot.slane %v3309, %v3322
    %v3324 = vcombine.high %v3300, 0.0
    %v3325 = vcombine.high %v3307, 0.0
    %v3326 = vcombine.high %v3316, 0.0
    %v3327 = vcombine.high %v3323, 0.0
    %v3328 = vcombine.low %v1796, %v3101
    %v3329 = vcombine.high %v1796, %v3101
    %v3331 = vunpack.c.l.s4 1983009808
    %v3332 = vunpack.c.0.s8 %v3331
    %v3333 = vlaneseq
    %v3334 = vshrl.u32 %v3333, 7
    %v3335 = vsub.s32 %v3332, %v3334
    %v3336 = vrot.slane %v3328, %v3335
    %v3338 = vunpack.c.l.s4 1983009808
    %v3339 = vunpack.c.0.s8 %v3338
    %v3340 = vlaneseq
    %v3341 = vshrl.u32 %v3340, 7
    %v3342 = vsub.s32 %v3339, %v3341
    %v3343 = vrot.slane %v3329, %v3342
    %v3344 = vcombine.low %v3053, %v3149
    %v3345 = vcombine.high %v3053, %v3149
    %v3347 = vunpack.c.l.s4 1983009808
    %v3348 = vunpack.c.0.s8 %v3347
    %v3349 = vlaneseq
    %v3350 = vshrl.u32 %v3349, 7
    %v3351 = vsub.s32 %v3348, %v3350
    %v3352 = vrot.slane %v3344, %v3351
    %v3354 = vunpack.c.l.s4 1983009808
    %v3355 = vunpack.c.0.s8 %v3354
    %v3356 = vlaneseq
    %v3357 = vshrl.u32 %v3356, 7
    %v3358 = vsub.s32 %v3355, %v3357
    %v3359 = vrot.slane %v3345, %v3358
    %v3360 = vcombine.low %v3336, %v3352
    %v3361 = vcombine.high %v3336, %v3352
    %v3363 = vunpack.c.l.s4 1934713408
    %v3364 = vunpack.c.0.s8 %v3363
    %v3365 = vlaneseq
    %v3366 = vshrl.u32 %v3365, 7
    %v3367 = vsub.s32 %v3364, %v3366
    %v3368 = vrot.slane %v3360, %v3367
    %v3370 = vunpack.c.l.s4 1934713408
    %v3371 = vunpack.c.0.s8 %v3370
    %v3372 = vlaneseq
    %v3373 = vshrl.u32 %v3372, 7
    %v3374 = vsub.s32 %v3371, %v3373
    %v3375 = vrot.slane %v3361, %v3374
    %v3376 = vcombine.low %v3343, %v3359
    %v3377 = vcombine.high %v3343, %v3359
    %v3379 = vunpack.c.l.s4 1934713408
    %v3380 = vunpack.c.0.s8 %v3379
    %v3381 = vlaneseq
    %v3382 = vshrl.u32 %v3381, 7
    %v3383 = vsub.s32 %v3380, %v3382
    %v3384 = vrot.slane %v3376, %v3383
    %v3386 = vunpack.c.l.s4 1934713408
    %v3387 = vunpack.c.0.s8 %v3386
    %v3388 = vlaneseq
    %v3389 = vshrl.u32 %v3388, 7
    %v3390 = vsub.s32 %v3387, %v3389
    %v3391 = vrot.slane %v3377, %v3390
    %v3392 = vcombine.high %v3368, 0.0
    %v3393 = vcombine.high %v3375, 0.0
    %v3394 = vcombine.high %v3384, 0.0
    %v3395 = vcombine.high %v3391, 0.0
    %v3396 = vcombine.low %v1800, %v3103
    %v3397 = vcombine.high %v1800, %v3103
    %v3399 = vunpack.c.l.s4 1983009808
    %v3400 = vunpack.c.0.s8 %v3399
    %v3401 = vlaneseq
    %v3402 = vshrl.u32 %v3401, 7
    %v3403 = vsub.s32 %v3400, %v3402
    %v3404 = vrot.slane %v3396, %v3403
    %v3406 = vunpack.c.l.s4 1983009808
    %v3407 = vunpack.c.0.s8 %v3406
    %v3408 = vlaneseq
    %v3409 = vshrl.u32 %v3408, 7
    %v3410 = vsub.s32 %v3407, %v3409
    %v3411 = vrot.slane %v3397, %v3410
    %v3412 = vcombine.low %v3055, %v3151
    %v3413 = vcombine.high %v3055, %v3151
    %v3415 = vunpack.c.l.s4 1983009808
    %v3416 = vunpack.c.0.s8 %v3415
    %v3417 = vlaneseq
    %v3418 = vshrl.u32 %v3417, 7
    %v3419 = vsub.s32 %v3416, %v3418
    %v3420 = vrot.slane %v3412, %v3419
    %v3422 = vunpack.c.l.s4 1983009808
    %v3423 = vunpack.c.0.s8 %v3422
    %v3424 = vlaneseq
    %v3425 = vshrl.u32 %v3424, 7
    %v3426 = vsub.s32 %v3423, %v3425
    %v3427 = vrot.slane %v3413, %v3426
    %v3428 = vcombine.low %v3404, %v3420
    %v3429 = vcombine.high %v3404, %v3420
    %v3431 = vunpack.c.l.s4 1934713408
    %v3432 = vunpack.c.0.s8 %v3431
    %v3433 = vlaneseq
    %v3434 = vshrl.u32 %v3433, 7
    %v3435 = vsub.s32 %v3432, %v3434
    %v3436 = vrot.slane %v3428, %v3435
    %v3438 = vunpack.c.l.s4 1934713408
    %v3439 = vunpack.c.0.s8 %v3438
    %v3440 = vlaneseq
    %v3441 = vshrl.u32 %v3440, 7
    %v3442 = vsub.s32 %v3439, %v3441
    %v3443 = vrot.slane %v3429, %v3442
    %v3444 = vcombine.low %v3411, %v3427
    %v3445 = vcombine.high %v3411, %v3427
    %v3447 = vunpack.c.l.s4 1934713408
    %v3448 = vunpack.c.0.s8 %v3447
    %v3449 = vlaneseq
    %v3450 = vshrl.u32 %v3449, 7
    %v3451 = vsub.s32 %v3448, %v3450
    %v3452 = vrot.slane %v3444, %v3451
    %v3454 = vunpack.c.l.s4 1934713408
    %v3455 = vunpack.c.0.s8 %v3454
    %v3456 = vlaneseq
    %v3457 = vshrl.u32 %v3456, 7
    %v3458 = vsub.s32 %v3455, %v3457
    %v3459 = vrot.slane %v3445, %v3458
    %v3460 = vcombine.high %v3436, 0.0
    %v3461 = vcombine.high %v3443, 0.0
    %v3462 = vcombine.high %v3452, 0.0
    %v3463 = vcombine.high %v3459, 0.0
    %v3464 = vcombine.low %v1806, %v3105
    %v3465 = vcombine.high %v1806, %v3105
    %v3467 = vunpack.c.l.s4 1983009808
    %v3468 = vunpack.c.0.s8 %v3467
    %v3469 = vlaneseq
    %v3470 = vshrl.u32 %v3469, 7
    %v3471 = vsub.s32 %v3468, %v3470
    %v3472 = vrot.slane %v3464, %v3471
    %v3474 = vunpack.c.l.s4 1983009808
    %v3475 = vunpack.c.0.s8 %v3474
    %v3476 = vlaneseq
    %v3477 = vshrl.u32 %v3476, 7
    %v3478 = vsub.s32 %v3475, %v3477
    %v3479 = vrot.slane %v3465, %v3478
    %v3480 = vcombine.low %v3057, %v3153
    %v3481 = vcombine.high %v3057, %v3153
    %v3483 = vunpack.c.l.s4 1983009808
    %v3484 = vunpack.c.0.s8 %v3483
    %v3485 = vlaneseq
    %v3486 = vshrl.u32 %v3485, 7
    %v3487 = vsub.s32 %v3484, %v3486
    %v3488 = vrot.slane %v3480, %v3487
    %v3490 = vunpack.c.l.s4 1983009808
    %v3491 = vunpack.c.0.s8 %v3490
    %v3492 = vlaneseq
    %v3493 = vshrl.u32 %v3492, 7
    %v3494 = vsub.s32 %v3491, %v3493
    %v3495 = vrot.slane %v3481, %v3494
    %v3496 = vcombine.low %v3472, %v3488
    %v3497 = vcombine.high %v3472, %v3488
    %v3499 = vunpack.c.l.s4 1934713408
    %v3500 = vunpack.c.0.s8 %v3499
    %v3501 = vlaneseq
    %v3502 = vshrl.u32 %v3501, 7
    %v3503 = vsub.s32 %v3500, %v3502
    %v3504 = vrot.slane %v3496, %v3503
    %v3506 = vunpack.c.l.s4 1934713408
    %v3507 = vunpack.c.0.s8 %v3506
    %v3508 = vlaneseq
    %v3509 = vshrl.u32 %v3508, 7
    %v3510 = vsub.s32 %v3507, %v3509
    %v3511 = vrot.slane %v3497, %v3510
    %v3512 = vcombine.low %v3479, %v3495
    %v3513 = vcombine.high %v3479, %v3495
    %v3515 = vunpack.c.l.s4 1934713408
    %v3516 = vunpack.c.0.s8 %v3515
    %v3517 = vlaneseq
    %v3518 = vshrl.u32 %v3517, 7
    %v3519 = vsub.s32 %v3516, %v3518
    %v3520 = vrot.slane %v3512, %v3519
    %v3522 = vunpack.c.l.s4 1934713408
    %v3523 = vunpack.c.0.s8 %v3522
    %v3524 = vlaneseq
    %v3525 = vshrl.u32 %v3524, 7
    %v3526 = vsub.s32 %v3523, %v3525
    %v3527 = vrot.slane %v3513, %v3526
    %v3528 = vcombine.high %v3504, 0.0
    %v3529 = vcombine.high %v3511, 0.0
    %v3530 = vcombine.high %v3520, 0.0
    %v3531 = vcombine.high %v3527, 0.0
    %v3532 = vcombine.low %v1810, %v3107
    %v3533 = vcombine.high %v1810, %v3107
    %v3535 = vunpack.c.l.s4 1983009808
    %v3536 = vunpack.c.0.s8 %v3535
    %v3537 = vlaneseq
    %v3538 = vshrl.u32 %v3537, 7
    %v3539 = vsub.s32 %v3536, %v3538
    %v3540 = vrot.slane %v3532, %v3539
    %v3542 = vunpack.c.l.s4 1983009808
    %v3543 = vunpack.c.0.s8 %v3542
    %v3544 = vlaneseq
    %v3545 = vshrl.u32 %v3544, 7
    %v3546 = vsub.s32 %v3543, %v3545
    %v3547 = vrot.slane %v3533, %v3546
    %v3548 = vcombine.low %v3059, %v3155
    %v3549 = vcombine.high %v3059, %v3155
    %v3551 = vunpack.c.l.s4 1983009808
    %v3552 = vunpack.c.0.s8 %v3551
    %v3553 = vlaneseq
    %v3554 = vshrl.u32 %v3553, 7
    %v3555 = vsub.s32 %v3552, %v3554
    %v3556 = vrot.slane %v3548, %v3555
    %v3558 = vunpack.c.l.s4 1983009808
    %v3559 = vunpack.c.0.s8 %v3558
    %v3560 = vlaneseq
    %v3561 = vshrl.u32 %v3560, 7
    %v3562 = vsub.s32 %v3559, %v3561
    %v3563 = vrot.slane %v3549, %v3562
    %v3564 = vcombine.low %v3540, %v3556
    %v3565 = vcombine.high %v3540, %v3556
    %v3567 = vunpack.c.l.s4 1934713408
    %v3568 = vunpack.c.0.s8 %v3567
    %v3569 = vlaneseq
    %v3570 = vshrl.u32 %v3569, 7
    %v3571 = vsub.s32 %v3568, %v3570
    %v3572 = vrot.slane %v3564, %v3571
    %v3574 = vunpack.c.l.s4 1934713408
    %v3575 = vunpack.c.0.s8 %v3574
    %v3576 = vlaneseq
    %v3577 = vshrl.u32 %v3576, 7
    %v3578 = vsub.s32 %v3575, %v3577
    %v3579 = vrot.slane %v3565, %v3578
    %v3580 = vcombine.low %v3547, %v3563
    %v3581 = vcombine.high %v3547, %v3563
    %v3583 = vunpack.c.l.s4 1934713408
    %v3584 = vunpack.c.0.s8 %v3583
    %v3585 = vlaneseq
    %v3586 = vshrl.u32 %v3585, 7
    %v3587 = vsub.s32 %v3584, %v3586
    %v3588 = vrot.slane %v3580, %v3587
    %v3590 = vunpack.c.l.s4 1934713408
    %v3591 = vunpack.c.0.s8 %v3590
    %v3592 = vlaneseq
    %v3593 = vshrl.u32 %v3592, 7
    %v3594 = vsub.s32 %v3591, %v3593
    %v3595 = vrot.slane %v3581, %v3594
    %v3596 = vcombine.high %v3572, 0.0
    %v3597 = vcombine.high %v3579, 0.0
    %v3598 = vcombine.high %v3588, 0.0
    %v3599 = vcombine.high %v3595, 0.0
    %v3600 = vcombine.low %v1816, %v3109
    %v3601 = vcombine.high %v1816, %v3109
    %v3603 = vunpack.c.l.s4 1983009808
    %v3604 = vunpack.c.0.s8 %v3603
    %v3605 = vlaneseq
    %v3606 = vshrl.u32 %v3605, 7
    %v3607 = vsub.s32 %v3604, %v3606
    %v3608 = vrot.slane %v3600, %v3607
    %v3610 = vunpack.c.l.s4 1983009808
    %v3611 = vunpack.c.0.s8 %v3610
    %v3612 = vlaneseq
    %v3613 = vshrl.u32 %v3612, 7
    %v3614 = vsub.s32 %v3611, %v3613
    %v3615 = vrot.slane %v3601, %v3614
    %v3616 = vcombine.low %v3061, %v3157
    %v3617 = vcombine.high %v3061, %v3157
    %v3619 = vunpack.c.l.s4 1983009808
    %v3620 = vunpack.c.0.s8 %v3619
    %v3621 = vlaneseq
    %v3622 = vshrl.u32 %v3621, 7
    %v3623 = vsub.s32 %v3620, %v3622
    %v3624 = vrot.slane %v3616, %v3623
    %v3626 = vunpack.c.l.s4 1983009808
    %v3627 = vunpack.c.0.s8 %v3626
    %v3628 = vlaneseq
    %v3629 = vshrl.u32 %v3628, 7
    %v3630 = vsub.s32 %v3627, %v3629
    %v3631 = vrot.slane %v3617, %v3630
    %v3632 = vcombine.low %v3608, %v3624
    %v3633 = vcombine.high %v3608, %v3624
    %v3635 = vunpack.c.l.s4 1934713408
    %v3636 = vunpack.c.0.s8 %v3635
    %v3637 = vlaneseq
    %v3638 = vshrl.u32 %v3637, 7
    %v3639 = vsub.s32 %v3636, %v3638
    %v3640 = vrot.slane %v3632, %v3639
    %v3642 = vunpack.c.l.s4 1934713408
    %v3643 = vunpack.c.0.s8 %v3642
    %v3644 = vlaneseq
    %v3645 = vshrl.u32 %v3644, 7
    %v3646 = vsub.s32 %v3643, %v3645
    %v3647 = vrot.slane %v3633, %v3646
    %v3648 = vcombine.low %v3615, %v3631
    %v3649 = vcombine.high %v3615, %v3631
    %v3651 = vunpack.c.l.s4 1934713408
    %v3652 = vunpack.c.0.s8 %v3651
    %v3653 = vlaneseq
    %v3654 = vshrl.u32 %v3653, 7
    %v3655 = vsub.s32 %v3652, %v3654
    %v3656 = vrot.slane %v3648, %v3655
    %v3658 = vunpack.c.l.s4 1934713408
    %v3659 = vunpack.c.0.s8 %v3658
    %v3660 = vlaneseq
    %v3661 = vshrl.u32 %v3660, 7
    %v3662 = vsub.s32 %v3659, %v3661
    %v3663 = vrot.slane %v3649, %v3662
    %v3664 = vcombine.high %v3640, 0.0
    %v3665 = vcombine.high %v3647, 0.0
    %v3666 = vcombine.high %v3656, 0.0
    %v3667 = vcombine.high %v3663, 0.0
    %v3668 = vcombine.low %v1820, %v3111
    %v3669 = vcombine.high %v1820, %v3111
    %v3671 = vunpack.c.l.s4 1983009808
    %v3672 = vunpack.c.0.s8 %v3671
    %v3673 = vlaneseq
    %v3674 = vshrl.u32 %v3673, 7
    %v3675 = vsub.s32 %v3672, %v3674
    %v3676 = vrot.slane %v3668, %v3675
    %v3678 = vunpack.c.l.s4 1983009808
    %v3679 = vunpack.c.0.s8 %v3678
    %v3680 = vlaneseq
    %v3681 = vshrl.u32 %v3680, 7
    %v3682 = vsub.s32 %v3679, %v3681
    %v3683 = vrot.slane %v3669, %v3682
    %v3684 = vcombine.low %v3063, %v3159
    %v3685 = vcombine.high %v3063, %v3159
    %v3687 = vunpack.c.l.s4 1983009808
    %v3688 = vunpack.c.0.s8 %v3687
    %v3689 = vlaneseq
    %v3690 = vshrl.u32 %v3689, 7
    %v3691 = vsub.s32 %v3688, %v3690
    %v3692 = vrot.slane %v3684, %v3691
    %v3694 = vunpack.c.l.s4 1983009808
    %v3695 = vunpack.c.0.s8 %v3694
    %v3696 = vlaneseq
    %v3697 = vshrl.u32 %v3696, 7
    %v3698 = vsub.s32 %v3695, %v3697
    %v3699 = vrot.slane %v3685, %v3698
    %v3700 = vcombine.low %v3676, %v3692
    %v3701 = vcombine.high %v3676, %v3692
    %v3703 = vunpack.c.l.s4 1934713408
    %v3704 = vunpack.c.0.s8 %v3703
    %v3705 = vlaneseq
    %v3706 = vshrl.u32 %v3705, 7
    %v3707 = vsub.s32 %v3704, %v3706
    %v3708 = vrot.slane %v3700, %v3707
    %v3710 = vunpack.c.l.s4 1934713408
    %v3711 = vunpack.c.0.s8 %v3710
    %v3712 = vlaneseq
    %v3713 = vshrl.u32 %v3712, 7
    %v3714 = vsub.s32 %v3711, %v3713
    %v3715 = vrot.slane %v3701, %v3714
    %v3716 = vcombine.low %v3683, %v3699
    %v3717 = vcombine.high %v3683, %v3699
    %v3719 = vunpack.c.l.s4 1934713408
    %v3720 = vunpack.c.0.s8 %v3719
    %v3721 = vlaneseq
    %v3722 = vshrl.u32 %v3721, 7
    %v3723 = vsub.s32 %v3720, %v3722
    %v3724 = vrot.slane %v3716, %v3723
    %v3726 = vunpack.c.l.s4 1934713408
    %v3727 = vunpack.c.0.s8 %v3726
    %v3728 = vlaneseq
    %v3729 = vshrl.u32 %v3728, 7
    %v3730 = vsub.s32 %v3727, %v3729
    %v3731 = vrot.slane %v3717, %v3730
    %v3732 = vcombine.high %v3708, 0.0
    %v3733 = vcombine.high %v3715, 0.0
    %v3734 = vcombine.high %v3724, 0.0
    %v3735 = vcombine.high %v3731, 0.0
    %v3736 = vcombine.low %v1826, %v3113
    %v3737 = vcombine.high %v1826, %v3113
    %v3739 = vunpack.c.l.s4 1983009808
    %v3740 = vunpack.c.0.s8 %v3739
    %v3741 = vlaneseq
    %v3742 = vshrl.u32 %v3741, 7
    %v3743 = vsub.s32 %v3740, %v3742
    %v3744 = vrot.slane %v3736, %v3743
    %v3746 = vunpack.c.l.s4 1983009808
    %v3747 = vunpack.c.0.s8 %v3746
    %v3748 = vlaneseq
    %v3749 = vshrl.u32 %v3748, 7
    %v3750 = vsub.s32 %v3747, %v3749
    %v3751 = vrot.slane %v3737, %v3750
    %v3752 = vcombine.low %v3065, %v3161
    %v3753 = vcombine.high %v3065, %v3161
    %v3755 = vunpack.c.l.s4 1983009808
    %v3756 = vunpack.c.0.s8 %v3755
    %v3757 = vlaneseq
    %v3758 = vshrl.u32 %v3757, 7
    %v3759 = vsub.s32 %v3756, %v3758
    %v3760 = vrot.slane %v3752, %v3759
    %v3762 = vunpack.c.l.s4 1983009808
    %v3763 = vunpack.c.0.s8 %v3762
    %v3764 = vlaneseq
    %v3765 = vshrl.u32 %v3764, 7
    %v3766 = vsub.s32 %v3763, %v3765
    %v3767 = vrot.slane %v3753, %v3766
    %v3768 = vcombine.low %v3744, %v3760
    %v3769 = vcombine.high %v3744, %v3760
    %v3771 = vunpack.c.l.s4 1934713408
    %v3772 = vunpack.c.0.s8 %v3771
    %v3773 = vlaneseq
    %v3774 = vshrl.u32 %v3773, 7
    %v3775 = vsub.s32 %v3772, %v3774
    %v3776 = vrot.slane %v3768, %v3775
    %v3778 = vunpack.c.l.s4 1934713408
    %v3779 = vunpack.c.0.s8 %v3778
    %v3780 = vlaneseq
    %v3781 = vshrl.u32 %v3780, 7
    %v3782 = vsub.s32 %v3779, %v3781
    %v3783 = vrot.slane %v3769, %v3782
    %v3784 = vcombine.low %v3751, %v3767
    %v3785 = vcombine.high %v3751, %v3767
    %v3787 = vunpack.c.l.s4 1934713408
    %v3788 = vunpack.c.0.s8 %v3787
    %v3789 = vlaneseq
    %v3790 = vshrl.u32 %v3789, 7
    %v3791 = vsub.s32 %v3788, %v3790
    %v3792 = vrot.slane %v3784, %v3791
    %v3794 = vunpack.c.l.s4 1934713408
    %v3795 = vunpack.c.0.s8 %v3794
    %v3796 = vlaneseq
    %v3797 = vshrl.u32 %v3796, 7
    %v3798 = vsub.s32 %v3795, %v3797
    %v3799 = vrot.slane %v3785, %v3798
    %v3800 = vcombine.high %v3776, 0.0
    %v3801 = vcombine.high %v3783, 0.0
    %v3802 = vcombine.high %v3792, 0.0
    %v3803 = vcombine.high %v3799, 0.0
    %v3804 = vcombine.low %v1830, %v3115
    %v3805 = vcombine.high %v1830, %v3115
    %v3807 = vunpack.c.l.s4 1983009808
    %v3808 = vunpack.c.0.s8 %v3807
    %v3809 = vlaneseq
    %v3810 = vshrl.u32 %v3809, 7
    %v3811 = vsub.s32 %v3808, %v3810
    %v3812 = vrot.slane %v3804, %v3811
    %v3814 = vunpack.c.l.s4 1983009808
    %v3815 = vunpack.c.0.s8 %v3814
    %v3816 = vlaneseq
    %v3817 = vshrl.u32 %v3816, 7
    %v3818 = vsub.s32 %v3815, %v3817
    %v3819 = vrot.slane %v3805, %v3818
    %v3820 = vcombine.low %v3067, %v3163
    %v3821 = vcombine.high %v3067, %v3163
    %v3823 = vunpack.c.l.s4 1983009808
    %v3824 = vunpack.c.0.s8 %v3823
    %v3825 = vlaneseq
    %v3826 = vshrl.u32 %v3825, 7
    %v3827 = vsub.s32 %v3824, %v3826
    %v3828 = vrot.slane %v3820, %v3827
    %v3830 = vunpack.c.l.s4 1983009808
    %v3831 = vunpack.c.0.s8 %v3830
    %v3832 = vlaneseq
    %v3833 = vshrl.u32 %v3832, 7
    %v3834 = vsub.s32 %v3831, %v3833
    %v3835 = vrot.slane %v3821, %v3834
    %v3836 = vcombine.low %v3812, %v3828
    %v3837 = vcombine.high %v3812, %v3828
    %v3839 = vunpack.c.l.s4 1934713408
    %v3840 = vunpack.c.0.s8 %v3839
    %v3841 = vlaneseq
    %v3842 = vshrl.u32 %v3841, 7
    %v3843 = vsub.s32 %v3840, %v3842
    %v3844 = vrot.slane %v3836, %v3843
    %v3846 = vunpack.c.l.s4 1934713408
    %v3847 = vunpack.c.0.s8 %v3846
    %v3848 = vlaneseq
    %v3849 = vshrl.u32 %v3848, 7
    %v3850 = vsub.s32 %v3847, %v3849
    %v3851 = vrot.slane %v3837, %v3850
    %v3852 = vcombine.low %v3819, %v3835
    %v3853 = vcombine.high %v3819, %v3835
    %v3855 = vunpack.c.l.s4 1934713408
    %v3856 = vunpack.c.0.s8 %v3855
    %v3857 = vlaneseq
    %v3858 = vshrl.u32 %v3857, 7
    %v3859 = vsub.s32 %v3856, %v3858
    %v3860 = vrot.slane %v3852, %v3859
    %v3862 = vunpack.c.l.s4 1934713408
    %v3863 = vunpack.c.0.s8 %v3862
    %v3864 = vlaneseq
    %v3865 = vshrl.u32 %v3864, 7
    %v3866 = vsub.s32 %v3863, %v3865
    %v3867 = vrot.slane %v3853, %v3866
    %v3868 = vcombine.high %v3844, 0.0
    %v3869 = vcombine.high %v3851, 0.0
    %v3870 = vcombine.high %v3860, 0.0
    %v3871 = vcombine.high %v3867, 0.0
    %v3872 = vcombine.low %v1836, %v3117
    %v3873 = vcombine.high %v1836, %v3117
    %v3875 = vunpack.c.l.s4 1983009808
    %v3876 = vunpack.c.0.s8 %v3875
    %v3877 = vlaneseq
    %v3878 = vshrl.u32 %v3877, 7
    %v3879 = vsub.s32 %v3876, %v3878
    %v3880 = vrot.slane %v3872, %v3879
    %v3882 = vunpack.c.l.s4 1983009808
    %v3883 = vunpack.c.0.s8 %v3882
    %v3884 = vlaneseq
    %v3885 = vshrl.u32 %v3884, 7
    %v3886 = vsub.s32 %v3883, %v3885
    %v3887 = vrot.slane %v3873, %v3886
    %v3888 = vcombine.low %v3069, %v3165
    %v3889 = vcombine.high %v3069, %v3165
    %v3891 = vunpack.c.l.s4 1983009808
    %v3892 = vunpack.c.0.s8 %v3891
    %v3893 = vlaneseq
    %v3894 = vshrl.u32 %v3893, 7
    %v3895 = vsub.s32 %v3892, %v3894
    %v3896 = vrot.slane %v3888, %v3895
    %v3898 = vunpack.c.l.s4 1983009808
    %v3899 = vunpack.c.0.s8 %v3898
    %v3900 = vlaneseq
    %v3901 = vshrl.u32 %v3900, 7
    %v3902 = vsub.s32 %v3899, %v3901
    %v3903 = vrot.slane %v3889, %v3902
    %v3904 = vcombine.low %v3880, %v3896
    %v3905 = vcombine.high %v3880, %v3896
    %v3907 = vunpack.c.l.s4 1934713408
    %v3908 = vunpack.c.0.s8 %v3907
    %v3909 = vlaneseq
    %v3910 = vshrl.u32 %v3909, 7
    %v3911 = vsub.s32 %v3908, %v3910
    %v3912 = vrot.slane %v3904, %v3911
    %v3914 = vunpack.c.l.s4 1934713408
    %v3915 = vunpack.c.0.s8 %v3914
    %v3916 = vlaneseq
    %v3917 = vshrl.u32 %v3916, 7
    %v3918 = vsub.s32 %v3915, %v3917
    %v3919 = vrot.slane %v3905, %v3918
    %v3920 = vcombine.low %v3887, %v3903
    %v3921 = vcombine.high %v3887, %v3903
    %v3923 = vunpack.c.l.s4 1934713408
    %v3924 = vunpack.c.0.s8 %v3923
    %v3925 = vlaneseq
    %v3926 = vshrl.u32 %v3925, 7
    %v3927 = vsub.s32 %v3924, %v3926
    %v3928 = vrot.slane %v3920, %v3927
    %v3930 = vunpack.c.l.s4 1934713408
    %v3931 = vunpack.c.0.s8 %v3930
    %v3932 = vlaneseq
    %v3933 = vshrl.u32 %v3932, 7
    %v3934 = vsub.s32 %v3931, %v3933
    %v3935 = vrot.slane %v3921, %v3934
    %v3936 = vcombine.high %v3912, 0.0
    %v3937 = vcombine.high %v3919, 0.0
    %v3938 = vcombine.high %v3928, 0.0
    %v3939 = vcombine.high %v3935, 0.0
    %v3940 = vcombine.low %v1840, %v3119
    %v3941 = vcombine.high %v1840, %v3119
    %v3943 = vunpack.c.l.s4 1983009808
    %v3944 = vunpack.c.0.s8 %v3943
    %v3945 = vlaneseq
    %v3946 = vshrl.u32 %v3945, 7
    %v3947 = vsub.s32 %v3944, %v3946
    %v3948 = vrot.slane %v3940, %v3947
    %v3950 = vunpack.c.l.s4 1983009808
    %v3951 = vunpack.c.0.s8 %v3950
    %v3952 = vlaneseq
    %v3953 = vshrl.u32 %v3952, 7
    %v3954 = vsub.s32 %v3951, %v3953
    %v3955 = vrot.slane %v3941, %v3954
    %v3956 = vcombine.low %v3071, %v3167
    %v3957 = vcombine.high %v3071, %v3167
    %v3959 = vunpack.c.l.s4 1983009808
    %v3960 = vunpack.c.0.s8 %v3959
    %v3961 = vlaneseq
    %v3962 = vshrl.u32 %v3961, 7
    %v3963 = vsub.s32 %v3960, %v3962
    %v3964 = vrot.slane %v3956, %v3963
    %v3966 = vunpack.c.l.s4 1983009808
    %v3967 = vunpack.c.0.s8 %v3966
    %v3968 = vlaneseq
    %v3969 = vshrl.u32 %v3968, 7
    %v3970 = vsub.s32 %v3967, %v3969
    %v3971 = vrot.slane %v3957, %v3970
    %v3972 = vcombine.low %v3948, %v3964
    %v3973 = vcombine.high %v3948, %v3964
    %v3975 = vunpack.c.l.s4 1934713408
    %v3976 = vunpack.c.0.s8 %v3975
    %v3977 = vlaneseq
    %v3978 = vshrl.u32 %v3977, 7
    %v3979 = vsub.s32 %v3976, %v3978
    %v3980 = vrot.slane %v3972, %v3979
    %v3982 = vunpack.c.l.s4 1934713408
    %v3983 = vunpack.c.0.s8 %v3982
    %v3984 = vlaneseq
    %v3985 = vshrl.u32 %v3984, 7
    %v3986 = vsub.s32 %v3983, %v3985
    %v3987 = vrot.slane %v3973, %v3986
    %v3988 = vcombine.low %v3955, %v3971
    %v3989 = vcombine.high %v3955, %v3971
    %v3991 = vunpack.c.l.s4 1934713408
    %v3992 = vunpack.c.0.s8 %v3991
    %v3993 = vlaneseq
    %v3994 = vshrl.u32 %v3993, 7
    %v3995 = vsub.s32 %v3992, %v3994
    %v3996 = vrot.slane %v3988, %v3995
    %v3998 = vunpack.c.l.s4 1934713408
    %v3999 = vunpack.c.0.s8 %v3998
    %v4000 = vlaneseq
    %v4001 = vshrl.u32 %v4000, 7
    %v4002 = vsub.s32 %v3999, %v4001
    %v4003 = vrot.slane %v3989, %v4002
    %v4004 = vcombine.high %v3980, 0.0
    %v4005 = vcombine.high %v3987, 0.0
    %v4006 = vcombine.high %v3996, 0.0
    %v4007 = vcombine.high %v4003, 0.0
    %v4008 = vcombine.low %v1846, %v3121
    %v4009 = vcombine.high %v1846, %v3121
    %v4011 = vunpack.c.l.s4 1983009808
    %v4012 = vunpack.c.0.s8 %v4011
    %v4013 = vlaneseq
    %v4014 = vshrl.u32 %v4013, 7
    %v4015 = vsub.s32 %v4012, %v4014
    %v4016 = vrot.slane %v4008, %v4015
    %v4018 = vunpack.c.l.s4 1983009808
    %v4019 = vunpack.c.0.s8 %v4018
    %v4020 = vlaneseq
    %v4021 = vshrl.u32 %v4020, 7
    %v4022 = vsub.s32 %v4019, %v4021
    %v4023 = vrot.slane %v4009, %v4022
    %v4024 = vcombine.low %v3073, %v3169
    %v4025 = vcombine.high %v3073, %v3169
    %v4027 = vunpack.c.l.s4 1983009808
    %v4028 = vunpack.c.0.s8 %v4027
    %v4029 = vlaneseq
    %v4030 = vshrl.u32 %v4029, 7
    %v4031 = vsub.s32 %v4028, %v4030
    %v4032 = vrot.slane %v4024, %v4031
    %v4034 = vunpack.c.l.s4 1983009808
    %v4035 = vunpack.c.0.s8 %v4034
    %v4036 = vlaneseq
    %v4037 = vshrl.u32 %v4036, 7
    %v4038 = vsub.s32 %v4035, %v4037
    %v4039 = vrot.slane %v4025, %v4038
    %v4040 = vcombine.low %v4016, %v4032
    %v4041 = vcombine.high %v4016, %v4032
    %v4043 = vunpack.c.l.s4 1934713408
    %v4044 = vunpack.c.0.s8 %v4043
    %v4045 = vlaneseq
    %v4046 = vshrl.u32 %v4045, 7
    %v4047 = vsub.s32 %v4044, %v4046
    %v4048 = vrot.slane %v4040, %v4047
    %v4050 = vunpack.c.l.s4 1934713408
    %v4051 = vunpack.c.0.s8 %v4050
    %v4052 = vlaneseq
    %v4053 = vshrl.u32 %v4052, 7
    %v4054 = vsub.s32 %v4051, %v4053
    %v4055 = vrot.slane %v4041, %v4054
    %v4056 = vcombine.low %v4023, %v4039
    %v4057 = vcombine.high %v4023, %v4039
    %v4059 = vunpack.c.l.s4 1934713408
    %v4060 = vunpack.c.0.s8 %v4059
    %v4061 = vlaneseq
    %v4062 = vshrl.u32 %v4061, 7
    %v4063 = vsub.s32 %v4060, %v4062
    %v4064 = vrot.slane %v4056, %v4063
    %v4066 = vunpack.c.l.s4 1934713408
    %v4067 = vunpack.c.0.s8 %v4066
    %v4068 = vlaneseq
    %v4069 = vshrl.u32 %v4068, 7
    %v4070 = vsub.s32 %v4067, %v4069
    %v4071 = vrot.slane %v4057, %v4070
    %v4072 = vcombine.high %v4048, 0.0
    %v4073 = vcombine.high %v4055, 0.0
    %v4074 = vcombine.high %v4064, 0.0
    %v4075 = vcombine.high %v4071, 0.0
    %v4076 = vcombine.low %v1850, %v3123
    %v4077 = vcombine.high %v1850, %v3123
    %v4079 = vunpack.c.l.s4 1983009808
    %v4080 = vunpack.c.0.s8 %v4079
    %v4081 = vlaneseq
    %v4082 = vshrl.u32 %v4081, 7
    %v4083 = vsub.s32 %v4080, %v4082
    %v4084 = vrot.slane %v4076, %v4083
    %v4086 = vunpack.c.l.s4 1983009808
    %v4087 = vunpack.c.0.s8 %v4086
    %v4088 = vlaneseq
    %v4089 = vshrl.u32 %v4088, 7
    %v4090 = vsub.s32 %v4087, %v4089
    %v4091 = vrot.slane %v4077, %v4090
    %v4092 = vcombine.low %v3075, %v3171
    %v4093 = vcombine.high %v3075, %v3171
    %v4095 = vunpack.c.l.s4 1983009808
    %v4096 = vunpack.c.0.s8 %v4095
    %v4097 = vlaneseq
    %v4098 = vshrl.u32 %v4097, 7
    %v4099 = vsub.s32 %v4096, %v4098
    %v4100 = vrot.slane %v4092, %v4099
    %v4102 = vunpack.c.l.s4 1983009808
    %v4103 = vunpack.c.0.s8 %v4102
    %v4104 = vlaneseq
    %v4105 = vshrl.u32 %v4104, 7
    %v4106 = vsub.s32 %v4103, %v4105
    %v4107 = vrot.slane %v4093, %v4106
    %v4108 = vcombine.low %v4084, %v4100
    %v4109 = vcombine.high %v4084, %v4100
    %v4111 = vunpack.c.l.s4 1934713408
    %v4112 = vunpack.c.0.s8 %v4111
    %v4113 = vlaneseq
    %v4114 = vshrl.u32 %v4113, 7
    %v4115 = vsub.s32 %v4112, %v4114
    %v4116 = vrot.slane %v4108, %v4115
    %v4118 = vunpack.c.l.s4 1934713408
    %v4119 = vunpack.c.0.s8 %v4118
    %v4120 = vlaneseq
    %v4121 = vshrl.u32 %v4120, 7
    %v4122 = vsub.s32 %v4119, %v4121
    %v4123 = vrot.slane %v4109, %v4122
    %v4124 = vcombine.low %v4091, %v4107
    %v4125 = vcombine.high %v4091, %v4107
    %v4127 = vunpack.c.l.s4 1934713408
    %v4128 = vunpack.c.0.s8 %v4127
    %v4129 = vlaneseq
    %v4130 = vshrl.u32 %v4129, 7
    %v4131 = vsub.s32 %v4128, %v4130
    %v4132 = vrot.slane %v4124, %v4131
    %v4134 = vunpack.c.l.s4 1934713408
    %v4135 = vunpack.c.0.s8 %v4134
    %v4136 = vlaneseq
    %v4137 = vshrl.u32 %v4136, 7
    %v4138 = vsub.s32 %v4135, %v4137
    %v4139 = vrot.slane %v4125, %v4138
    %v4140 = vcombine.high %v4116, 0.0
    %v4141 = vcombine.high %v4123, 0.0
    %v4142 = vcombine.high %v4132, 0.0
    %v4143 = vcombine.high %v4139, 0.0
    %v4144 = vcombine.low %v1856, %v3125
    %v4145 = vcombine.high %v1856, %v3125
    %v4147 = vunpack.c.l.s4 1983009808
    %v4148 = vunpack.c.0.s8 %v4147
    %v4149 = vlaneseq
    %v4150 = vshrl.u32 %v4149, 7
    %v4151 = vsub.s32 %v4148, %v4150
    %v4152 = vrot.slane %v4144, %v4151
    %v4154 = vunpack.c.l.s4 1983009808
    %v4155 = vunpack.c.0.s8 %v4154
    %v4156 = vlaneseq
    %v4157 = vshrl.u32 %v4156, 7
    %v4158 = vsub.s32 %v4155, %v4157
    %v4159 = vrot.slane %v4145, %v4158
    %v4160 = vcombine.low %v3077, %v3173
    %v4161 = vcombine.high %v3077, %v3173
    %v4163 = vunpack.c.l.s4 1983009808
    %v4164 = vunpack.c.0.s8 %v4163
    %v4165 = vlaneseq
    %v4166 = vshrl.u32 %v4165, 7
    %v4167 = vsub.s32 %v4164, %v4166
    %v4168 = vrot.slane %v4160, %v4167
    %v4170 = vunpack.c.l.s4 1983009808
    %v4171 = vunpack.c.0.s8 %v4170
    %v4172 = vlaneseq
    %v4173 = vshrl.u32 %v4172, 7
    %v4174 = vsub.s32 %v4171, %v4173
    %v4175 = vrot.slane %v4161, %v4174
    %v4176 = vcombine.low %v4152, %v4168
    %v4177 = vcombine.high %v4152, %v4168
    %v4179 = vunpack.c.l.s4 1934713408
    %v4180 = vunpack.c.0.s8 %v4179
    %v4181 = vlaneseq
    %v4182 = vshrl.u32 %v4181, 7
    %v4183 = vsub.s32 %v4180, %v4182
    %v4184 = vrot.slane %v4176, %v4183
    %v4186 = vunpack.c.l.s4 1934713408
    %v4187 = vunpack.c.0.s8 %v4186
    %v4188 = vlaneseq
    %v4189 = vshrl.u32 %v4188, 7
    %v4190 = vsub.s32 %v4187, %v4189
    %v4191 = vrot.slane %v4177, %v4190
    %v4192 = vcombine.low %v4159, %v4175
    %v4193 = vcombine.high %v4159, %v4175
    %v4195 = vunpack.c.l.s4 1934713408
    %v4196 = vunpack.c.0.s8 %v4195
    %v4197 = vlaneseq
    %v4198 = vshrl.u32 %v4197, 7
    %v4199 = vsub.s32 %v4196, %v4198
    %v4200 = vrot.slane %v4192, %v4199
    %v4202 = vunpack.c.l.s4 1934713408
    %v4203 = vunpack.c.0.s8 %v4202
    %v4204 = vlaneseq
    %v4205 = vshrl.u32 %v4204, 7
    %v4206 = vsub.s32 %v4203, %v4205
    %v4207 = vrot.slane %v4193, %v4206
    %v4208 = vcombine.high %v4184, 0.0
    %v4209 = vcombine.high %v4191, 0.0
    %v4210 = vcombine.high %v4200, 0.0
    %v4211 = vcombine.high %v4207, 0.0
    %v4212 = vcombine.low %v1860, %v3127
    %v4213 = vcombine.high %v1860, %v3127
    %v4215 = vunpack.c.l.s4 1983009808
    %v4216 = vunpack.c.0.s8 %v4215
    %v4217 = vlaneseq
    %v4218 = vshrl.u32 %v4217, 7
    %v4219 = vsub.s32 %v4216, %v4218
    %v4220 = vrot.slane %v4212, %v4219
    %v4222 = vunpack.c.l.s4 1983009808
    %v4223 = vunpack.c.0.s8 %v4222
    %v4224 = vlaneseq
    %v4225 = vshrl.u32 %v4224, 7
    %v4226 = vsub.s32 %v4223, %v4225
    %v4227 = vrot.slane %v4213, %v4226
    %v4228 = vcombine.low %v3079, %v3175
    %v4229 = vcombine.high %v3079, %v3175
    %v4231 = vunpack.c.l.s4 1983009808
    %v4232 = vunpack.c.0.s8 %v4231
    %v4233 = vlaneseq
    %v4234 = vshrl.u32 %v4233, 7
    %v4235 = vsub.s32 %v4232, %v4234
    %v4236 = vrot.slane %v4228, %v4235
    %v4238 = vunpack.c.l.s4 1983009808
    %v4239 = vunpack.c.0.s8 %v4238
    %v4240 = vlaneseq
    %v4241 = vshrl.u32 %v4240, 7
    %v4242 = vsub.s32 %v4239, %v4241
    %v4243 = vrot.slane %v4229, %v4242
    %v4244 = vcombine.low %v4220, %v4236
    %v4245 = vcombine.high %v4220, %v4236
    %v4247 = vunpack.c.l.s4 1934713408
    %v4248 = vunpack.c.0.s8 %v4247
    %v4249 = vlaneseq
    %v4250 = vshrl.u32 %v4249, 7
    %v4251 = vsub.s32 %v4248, %v4250
    %v4252 = vrot.slane %v4244, %v4251
    %v4254 = vunpack.c.l.s4 1934713408
    %v4255 = vunpack.c.0.s8 %v4254
    %v4256 = vlaneseq
    %v4257 = vshrl.u32 %v4256, 7
    %v4258 = vsub.s32 %v4255, %v4257
    %v4259 = vrot.slane %v4245, %v4258
    %v4260 = vcombine.low %v4227, %v4243
    %v4261 = vcombine.high %v4227, %v4243
    %v4263 = vunpack.c.l.s4 1934713408
    %v4264 = vunpack.c.0.s8 %v4263
    %v4265 = vlaneseq
    %v4266 = vshrl.u32 %v4265, 7
    %v4267 = vsub.s32 %v4264, %v4266
    %v4268 = vrot.slane %v4260, %v4267
    %v4270 = vunpack.c.l.s4 1934713408
    %v4271 = vunpack.c.0.s8 %v4270
    %v4272 = vlaneseq
    %v4273 = vshrl.u32 %v4272, 7
    %v4274 = vsub.s32 %v4271, %v4273
    %v4275 = vrot.slane %v4261, %v4274
    %v4276 = vcombine.high %v4252, 0.0
    %v4277 = vcombine.high %v4259, 0.0
    %v4278 = vcombine.high %v4268, 0.0
    %v4279 = vcombine.high %v4275, 0.0
    %v4280 = vcombine.low %v3232, %v3239
    %v4282 = vunpack.c.l.s4 1983009808
    %v4283 = vunpack.c.0.s8 %v4282
    %v4284 = vlaneseq
    %v4285 = vshrl.u32 %v4284, 7
    %v4286 = vsub.s32 %v4283, %v4285
    %v4287 = vrot.slane %v4280, %v4286
    %v4288 = vcombine.low %v3256, %v3257
    %v4290 = vunpack.c.l.s4 1983009808
    %v4291 = vunpack.c.0.s8 %v4290
    %v4292 = vlaneseq
    %v4293 = vshrl.u32 %v4292, 7
    %v4294 = vsub.s32 %v4291, %v4293
    %v4295 = vrot.slane %v4288, %v4294
    %v4296 = vcombine.low %v3248, %v3255
    %v4298 = vunpack.c.l.s4 1983009808
    %v4299 = vunpack.c.0.s8 %v4298
    %v4300 = vlaneseq
    %v4301 = vshrl.u32 %v4300, 7
    %v4302 = vsub.s32 %v4299, %v4301
    %v4303 = vrot.slane %v4296, %v4302
    %v4304 = vcombine.low %v3258, %v3259
    %v4306 = vunpack.c.l.s4 1983009808
    %v4307 = vunpack.c.0.s8 %v4306
    %v4308 = vlaneseq
    %v4309 = vshrl.u32 %v4308, 7
    %v4310 = vsub.s32 %v4307, %v4309
    %v4311 = vrot.slane %v4304, %v4310
    %v4312 = vcombine.low %v4287, %v4295
    %v4313 = vcombine.high %v4287, %v4295
    %v4315 = vunpack.c.l.s4 1934713408
    %v4316 = vunpack.c.0.s8 %v4315
    %v4317 = vlaneseq
    %v4318 = vshrl.u32 %v4317, 7
    %v4319 = vsub.s32 %v4316, %v4318
    %v4320 = vrot.slane %v4312, %v4319
    %v4322 = vunpack.c.l.s4 1934713408
    %v4323 = vunpack.c.0.s8 %v4322
    %v4324 = vlaneseq
    %v4325 = vshrl.u32 %v4324, 7
    %v4326 = vsub.s32 %v4323, %v4325
    %v4327 = vrot.slane %v4313, %v4326
    %v4328 = vcombine.low %v4303, %v4311
    %v4329 = vcombine.high %v4303, %v4311
    %v4331 = vunpack.c.l.s4 1934713408
    %v4332 = vunpack.c.0.s8 %v4331
    %v4333 = vlaneseq
    %v4334 = vshrl.u32 %v4333, 7
    %v4335 = vsub.s32 %v4332, %v4334
    %v4336 = vrot.slane %v4328, %v4335
    %v4338 = vunpack.c.l.s4 1934713408
    %v4339 = vunpack.c.0.s8 %v4338
    %v4340 = vlaneseq
    %v4341 = vshrl.u32 %v4340, 7
    %v4342 = vsub.s32 %v4339, %v4341
    %v4343 = vrot.slane %v4329, %v4342
    %v4344 = vcombine.low %v4320, %v4336
    %v4345 = vcombine.high %v4320, %v4336
    %v4346 = vcombine.low %v4327, %v4343
    %v4347 = vcombine.high %v4327, %v4343
    %v4348 = vcombine.low %v3300, %v3307
    %v4350 = vunpack.c.l.s4 1983009808
    %v4351 = vunpack.c.0.s8 %v4350
    %v4352 = vlaneseq
    %v4353 = vshrl.u32 %v4352, 7
    %v4354 = vsub.s32 %v4351, %v4353
    %v4355 = vrot.slane %v4348, %v4354
    %v4356 = vcombine.low %v3324, %v3325
    %v4358 = vunpack.c.l.s4 1983009808
    %v4359 = vunpack.c.0.s8 %v4358
    %v4360 = vlaneseq
    %v4361 = vshrl.u32 %v4360, 7
    %v4362 = vsub.s32 %v4359, %v4361
    %v4363 = vrot.slane %v4356, %v4362
    %v4364 = vcombine.low %v3316, %v3323
    %v4366 = vunpack.c.l.s4 1983009808
    %v4367 = vunpack.c.0.s8 %v4366
    %v4368 = vlaneseq
    %v4369 = vshrl.u32 %v4368, 7
    %v4370 = vsub.s32 %v4367, %v4369
    %v4371 = vrot.slane %v4364, %v4370
    %v4372 = vcombine.low %v3326, %v3327
    %v4374 = vunpack.c.l.s4 1983009808
    %v4375 = vunpack.c.0.s8 %v4374
    %v4376 = vlaneseq
    %v4377 = vshrl.u32 %v4376, 7
    %v4378 = vsub.s32 %v4375, %v4377
    %v4379 = vrot.slane %v4372, %v4378
    %v4380 = vcombine.low %v4355, %v4363
    %v4381 = vcombine.high %v4355, %v4363
    %v4383 = vunpack.c.l.s4 1934713408
    %v4384 = vunpack.c.0.s8 %v4383
    %v4385 = vlaneseq
    %v4386 = vshrl.u32 %v4385, 7
    %v4387 = vsub.s32 %v4384, %v4386
    %v4388 = vrot.slane %v4380, %v4387
    %v4390 = vunpack.c.l.s4 1934713408
    %v4391 = vunpack.c.0.s8 %v4390
    %v4392 = vlaneseq
    %v4393 = vshrl.u32 %v4392, 7
    %v4394 = vsub.s32 %v4391, %v4393
    %v4395 = vrot.slane %v4381, %v4394
    %v4396 = vcombine.low %v4371, %v4379
    %v4397 = vcombine.high %v4371, %v4379
    %v4399 = vunpack.c.l.s4 1934713408
    %v4400 = vunpack.c.0.s8 %v4399
    %v4401 = vlaneseq
    %v4402 = vshrl.u32 %v4401, 7
    %v4403 = vsub.s32 %v4400, %v4402
    %v4404 = vrot.slane %v4396, %v4403
    %v4406 = vunpack.c.l.s4 1934713408
    %v4407 = vunpack.c.0.s8 %v4406
    %v4408 = vlaneseq
    %v4409 = vshrl.u32 %v4408, 7
    %v4410 = vsub.s32 %v4407, %v4409
    %v4411 = vrot.slane %v4397, %v4410
    %v4412 = vcombine.low %v4388, %v4404
    %v4413 = vcombine.high %v4388, %v4404
    %v4414 = vcombine.low %v4395, %v4411
    %v4415 = vcombine.high %v4395, %v4411
    %v4416 = vcombine.low %v3368, %v3375
    %v4418 = vunpack.c.l.s4 1983009808
    %v4419 = vunpack.c.0.s8 %v4418
    %v4420 = vlaneseq
    %v4421 = vshrl.u32 %v4420, 7
    %v4422 = vsub.s32 %v4419, %v4421
    %v4423 = vrot.slane %v4416, %v4422
    %v4424 = vcombine.low %v3392, %v3393
    %v4426 = vunpack.c.l.s4 1983009808
    %v4427 = vunpack.c.0.s8 %v4426
    %v4428 = vlaneseq
    %v4429 = vshrl.u32 %v4428, 7
    %v4430 = vsub.s32 %v4427, %v4429
    %v4431 = vrot.slane %v4424, %v4430
    %v4432 = vcombine.low %v3384, %v3391
    %v4434 = vunpack.c.l.s4 1983009808
    %v4435 = vunpack.c.0.s8 %v4434
    %v4436 = vlaneseq
    %v4437 = vshrl.u32 %v4436, 7
    %v4438 = vsub.s32 %v4435, %v4437
    %v4439 = vrot.slane %v4432, %v4438
    %v4440 = vcombine.low %v3394, %v3395
    %v4442 = vunpack.c.l.s4 1983009808
    %v4443 = vunpack.c.0.s8 %v4442
    %v4444 = vlaneseq
    %v4445 = vshrl.u32 %v4444, 7
    %v4446 = vsub.s32 %v4443, %v4445
    %v4447 = vrot.slane %v4440, %v4446
    %v4448 = vcombine.low %v4423, %v4431
    %v4449 = vcombine.high %v4423, %v4431
    %v4451 = vunpack.c.l.s4 1934713408
    %v4452 = vunpack.c.0.s8 %v4451
    %v4453 = vlaneseq
    %v4454 = vshrl.u32 %v4453, 7
    %v4455 = vsub.s32 %v4452, %v4454
    %v4456 = vrot.slane %v4448, %v4455
    %v4458 = vunpack.c.l.s4 1934713408
    %v4459 = vunpack.c.0.s8 %v4458
    %v4460 = vlaneseq
    %v4461 = vshrl.u32 %v4460, 7
    %v4462 = vsub.s32 %v4459, %v4461
    %v4463 = vrot.slane %v4449, %v4462
    %v4464 = vcombine.low %v4439, %v4447
    %v4465 = vcombine.high %v4439, %v4447
    %v4467 = vunpack.c.l.s4 1934713408
    %v4468 = vunpack.c.0.s8 %v4467
    %v4469 = vlaneseq
    %v4470 = vshrl.u32 %v4469, 7
    %v4471 = vsub.s32 %v4468, %v4470
    %v4472 = vrot.slane %v4464, %v4471
    %v4474 = vunpack.c.l.s4 1934713408
    %v4475 = vunpack.c.0.s8 %v4474
    %v4476 = vlaneseq
    %v4477 = vshrl.u32 %v4476, 7
    %v4478 = vsub.s32 %v4475, %v4477
    %v4479 = vrot.slane %v4465, %v4478
    %v4480 = vcombine.low %v4456, %v4472
    %v4481 = vcombine.high %v4456, %v4472
    %v4482 = vcombine.low %v4463, %v4479
    %v4483 = vcombine.high %v4463, %v4479
    %v4484 = vcombine.low %v3436, %v3443
    %v4486 = vunpack.c.l.s4 1983009808
    %v4487 = vunpack.c.0.s8 %v4486
    %v4488 = vlaneseq
    %v4489 = vshrl.u32 %v4488, 7
    %v4490 = vsub.s32 %v4487, %v4489
    %v4491 = vrot.slane %v4484, %v4490
    %v4492 = vcombine.low %v3460, %v3461
    %v4494 = vunpack.c.l.s4 1983009808
    %v4495 = vunpack.c.0.s8 %v4494
    %v4496 = vlaneseq
    %v4497 = vshrl.u32 %v4496, 7
    %v4498 = vsub.s32 %v4495, %v4497
    %v4499 = vrot.slane %v4492, %v4498
    %v4500 = vcombine.low %v3452, %v3459
    %v4502 = vunpack.c.l.s4 1983009808
    %v4503 = vunpack.c.0.s8 %v4502
    %v4504 = vlaneseq
    %v4505 = vshrl.u32 %v4504, 7
    %v4506 = vsub.s32 %v4503, %v4505
    %v4507 = vrot.slane %v4500, %v4506
    %v4508 = vcombine.low %v3462, %v3463
    %v4510 = vunpack.c.l.s4 1983009808
    %v4511 = vunpack.c.0.s8 %v4510
    %v4512 = vlaneseq
    %v4513 = vshrl.u32 %v4512, 7
    %v4514 = vsub.s32 %v4511, %v4513
    %v4515 = vrot.slane %v4508, %v4514
    %v4516 = vcombine.low %v4491, %v4499
    %v4517 = vcombine.high %v4491, %v4499
    %v4519 = vunpack.c.l.s4 1934713408
    %v4520 = vunpack.c.0.s8 %v4519
    %v4521 = vlaneseq
    %v4522 = vshrl.u32 %v4521, 7
    %v4523 = vsub.s32 %v4520, %v4522
    %v4524 = vrot.slane %v4516, %v4523
    %v4526 = vunpack.c.l.s4 1934713408
    %v4527 = vunpack.c.0.s8 %v4526
    %v4528 = vlaneseq
    %v4529 = vshrl.u32 %v4528, 7
    %v4530 = vsub.s32 %v4527, %v4529
    %v4531 = vrot.slane %v4517, %v4530
    %v4532 = vcombine.low %v4507, %v4515
    %v4533 = vcombine.high %v4507, %v4515
    %v4535 = vunpack.c.l.s4 1934713408
    %v4536 = vunpack.c.0.s8 %v4535
    %v4537 = vlaneseq
    %v4538 = vshrl.u32 %v4537, 7
    %v4539 = vsub.s32 %v4536, %v4538
    %v4540 = vrot.slane %v4532, %v4539
    %v4542 = vunpack.c.l.s4 1934713408
    %v4543 = vunpack.c.0.s8 %v4542
    %v4544 = vlaneseq
    %v4545 = vshrl.u32 %v4544, 7
    %v4546 = vsub.s32 %v4543, %v4545
    %v4547 = vrot.slane %v4533, %v4546
    %v4548 = vcombine.low %v4524, %v4540
    %v4549 = vcombine.high %v4524, %v4540
    %v4550 = vcombine.low %v4531, %v4547
    %v4551 = vcombine.high %v4531, %v4547
    %v4552 = vcombine.low %v3504, %v3511
    %v4554 = vunpack.c.l.s4 1983009808
    %v4555 = vunpack.c.0.s8 %v4554
    %v4556 = vlaneseq
    %v4557 = vshrl.u32 %v4556, 7
    %v4558 = vsub.s32 %v4555, %v4557
    %v4559 = vrot.slane %v4552, %v4558
    %v4560 = vcombine.low %v3528, %v3529
    %v4562 = vunpack.c.l.s4 1983009808
    %v4563 = vunpack.c.0.s8 %v4562
    %v4564 = vlaneseq
    %v4565 = vshrl.u32 %v4564, 7
    %v4566 = vsub.s32 %v4563, %v4565
    %v4567 = vrot.slane %v4560, %v4566
    %v4568 = vcombine.low %v3520, %v3527
    %v4570 = vunpack.c.l.s4 1983009808
    %v4571 = vunpack.c.0.s8 %v4570
    %v4572 = vlaneseq
    %v4573 = vshrl.u32 %v4572, 7
    %v4574 = vsub.s32 %v4571, %v4573
    %v4575 = vrot.slane %v4568, %v4574
    %v4576 = vcombine.low %v3530, %v3531
    %v4578 = vunpack.c.l.s4 1983009808
    %v4579 = vunpack.c.0.s8 %v4578
    %v4580 = vlaneseq
    %v4581 = vshrl.u32 %v4580, 7
    %v4582 = vsub.s32 %v4579, %v4581
    %v4583 = vrot.slane %v4576, %v4582
    %v4584 = vcombine.low %v4559, %v4567
    %v4585 = vcombine.high %v4559, %v4567
    %v4587 = vunpack.c.l.s4 1934713408
    %v4588 = vunpack.c.0.s8 %v4587
    %v4589 = vlaneseq
    %v4590 = vshrl.u32 %v4589, 7
    %v4591 = vsub.s32 %v4588, %v4590
    %v4592 = vrot.slane %v4584, %v4591
    %v4594 = vunpack.c.l.s4 1934713408
    %v4595 = vunpack.c.0.s8 %v4594
    %v4596 = vlaneseq
    %v4597 = vshrl.u32 %v4596, 7
    %v4598 = vsub.s32 %v4595, %v4597
    %v4599 = vrot.slane %v4585, %v4598
    %v4600 = vcombine.low %v4575, %v4583
    %v4601 = vcombine.high %v4575, %v4583
    %v4603 = vunpack.c.l.s4 1934713408
    %v4604 = vunpack.c.0.s8 %v4603
    %v4605 = vlaneseq
    %v4606 = vshrl.u32 %v4605, 7
    %v4607 = vsub.s32 %v4604, %v4606
    %v4608 = vrot.slane %v4600, %v4607
    %v4610 = vunpack.c.l.s4 1934713408
    %v4611 = vunpack.c.0.s8 %v4610
    %v4612 = vlaneseq
    %v4613 = vshrl.u32 %v4612, 7
    %v4614 = vsub.s32 %v4611, %v4613
    %v4615 = vrot.slane %v4601, %v4614
    %v4616 = vcombine.low %v4592, %v4608
    %v4617 = vcombine.high %v4592, %v4608
    %v4618 = vcombine.low %v4599, %v4615
    %v4619 = vcombine.high %v4599, %v4615
    %v4620 = vcombine.low %v3572, %v3579
    %v4622 = vunpack.c.l.s4 1983009808
    %v4623 = vunpack.c.0.s8 %v4622
    %v4624 = vlaneseq
    %v4625 = vshrl.u32 %v4624, 7
    %v4626 = vsub.s32 %v4623, %v4625
    %v4627 = vrot.slane %v4620, %v4626
    %v4628 = vcombine.low %v3596, %v3597
    %v4630 = vunpack.c.l.s4 1983009808
    %v4631 = vunpack.c.0.s8 %v4630
    %v4632 = vlaneseq
    %v4633 = vshrl.u32 %v4632, 7
    %v4634 = vsub.s32 %v4631, %v4633
    %v4635 = vrot.slane %v4628, %v4634
    %v4636 = vcombine.low %v3588, %v3595
    %v4638 = vunpack.c.l.s4 1983009808
    %v4639 = vunpack.c.0.s8 %v4638
    %v4640 = vlaneseq
    %v4641 = vshrl.u32 %v4640, 7
    %v4642 = vsub.s32 %v4639, %v4641
    %v4643 = vrot.slane %v4636, %v4642
    %v4644 = vcombine.low %v3598, %v3599
    %v4646 = vunpack.c.l.s4 1983009808
    %v4647 = vunpack.c.0.s8 %v4646
    %v4648 = vlaneseq
    %v4649 = vshrl.u32 %v4648, 7
    %v4650 = vsub.s32 %v4647, %v4649
    %v4651 = vrot.slane %v4644, %v4650
    %v4652 = vcombine.low %v4627, %v4635
    %v4653 = vcombine.high %v4627, %v4635
    %v4655 = vunpack.c.l.s4 1934713408
    %v4656 = vunpack.c.0.s8 %v4655
    %v4657 = vlaneseq
    %v4658 = vshrl.u32 %v4657, 7
    %v4659 = vsub.s32 %v4656, %v4658
    %v4660 = vrot.slane %v4652, %v4659
    %v4662 = vunpack.c.l.s4 1934713408
    %v4663 = vunpack.c.0.s8 %v4662
    %v4664 = vlaneseq
    %v4665 = vshrl.u32 %v4664, 7
    %v4666 = vsub.s32 %v4663, %v4665
    %v4667 = vrot.slane %v4653, %v4666
    %v4668 = vcombine.low %v4643, %v4651
    %v4669 = vcombine.high %v4643, %v4651
    %v4671 = vunpack.c.l.s4 1934713408
    %v4672 = vunpack.c.0.s8 %v4671
    %v4673 = vlaneseq
    %v4674 = vshrl.u32 %v4673, 7
    %v4675 = vsub.s32 %v4672, %v4674
    %v4676 = vrot.slane %v4668, %v4675
    %v4678 = vunpack.c.l.s4 1934713408
    %v4679 = vunpack.c.0.s8 %v4678
    %v4680 = vlaneseq
    %v4681 = vshrl.u32 %v4680, 7
    %v4682 = vsub.s32 %v4679, %v4681
    %v4683 = vrot.slane %v4669, %v4682
    %v4684 = vcombine.low %v4660, %v4676
    %v4685 = vcombine.high %v4660, %v4676
    %v4686 = vcombine.low %v4667, %v4683
    %v4687 = vcombine.high %v4667, %v4683
    %v4688 = vcombine.low %v3640, %v3647
    %v4690 = vunpack.c.l.s4 1983009808
    %v4691 = vunpack.c.0.s8 %v4690
    %v4692 = vlaneseq
    %v4693 = vshrl.u32 %v4692, 7
    %v4694 = vsub.s32 %v4691, %v4693
    %v4695 = vrot.slane %v4688, %v4694
    %v4696 = vcombine.low %v3664, %v3665
    %v4698 = vunpack.c.l.s4 1983009808
    %v4699 = vunpack.c.0.s8 %v4698
    %v4700 = vlaneseq
    %v4701 = vshrl.u32 %v4700, 7
    %v4702 = vsub.s32 %v4699, %v4701
    %v4703 = vrot.slane %v4696, %v4702
    %v4704 = vcombine.low %v3656, %v3663
    %v4706 = vunpack.c.l.s4 1983009808
    %v4707 = vunpack.c.0.s8 %v4706
    %v4708 = vlaneseq
    %v4709 = vshrl.u32 %v4708, 7
    %v4710 = vsub.s32 %v4707, %v4709
    %v4711 = vrot.slane %v4704, %v4710
    %v4712 = vcombine.low %v3666, %v3667
    %v4714 = vunpack.c.l.s4 1983009808
    %v4715 = vunpack.c.0.s8 %v4714
    %v4716 = vlaneseq
    %v4717 = vshrl.u32 %v4716, 7
    %v4718 = vsub.s32 %v4715, %v4717
    %v4719 = vrot.slane %v4712, %v4718
    %v4720 = vcombine.low %v4695, %v4703
    %v4721 = vcombine.high %v4695, %v4703
    %v4723 = vunpack.c.l.s4 1934713408
    %v4724 = vunpack.c.0.s8 %v4723
    %v4725 = vlaneseq
    %v4726 = vshrl.u32 %v4725, 7
    %v4727 = vsub.s32 %v4724, %v4726
    %v4728 = vrot.slane %v4720, %v4727
    %v4730 = vunpack.c.l.s4 1934713408
    %v4731 = vunpack.c.0.s8 %v4730
    %v4732 = vlaneseq
    %v4733 = vshrl.u32 %v4732, 7
    %v4734 = vsub.s32 %v4731, %v4733
    %v4735 = vrot.slane %v4721, %v4734
    %v4736 = vcombine.low %v4711, %v4719
    %v4737 = vcombine.high %v4711, %v4719
    %v4739 = vunpack.c.l.s4 1934713408
    %v4740 = vunpack.c.0.s8 %v4739
    %v4741 = vlaneseq
    %v4742 = vshrl.u32 %v4741, 7
    %v4743 = vsub.s32 %v4740, %v4742
    %v4744 = vrot.slane %v4736, %v4743
    %v4746 = vunpack.c.l.s4 1934713408
    %v4747 = vunpack.c.0.s8 %v4746
    %v4748 = vlaneseq
    %v4749 = vshrl.u32 %v4748, 7
    %v4750 = vsub.s32 %v4747, %v4749
    %v4751 = vrot.slane %v4737, %v4750
    %v4752 = vcombine.low %v4728, %v4744
    %v4753 = vcombine.high %v4728, %v4744
    %v4754 = vcombine.low %v4735, %v4751
    %v4755 = vcombine.high %v4735, %v4751
    %v4756 = vcombine.low %v3708, %v3715
    %v4758 = vunpack.c.l.s4 1983009808
    %v4759 = vunpack.c.0.s8 %v4758
    %v4760 = vlaneseq
    %v4761 = vshrl.u32 %v4760, 7
    %v4762 = vsub.s32 %v4759, %v4761
    %v4763 = vrot.slane %v4756, %v4762
    %v4764 = vcombine.low %v3732, %v3733
    %v4766 = vunpack.c.l.s4 1983009808
    %v4767 = vunpack.c.0.s8 %v4766
    %v4768 = vlaneseq
    %v4769 = vshrl.u32 %v4768, 7
    %v4770 = vsub.s32 %v4767, %v4769
    %v4771 = vrot.slane %v4764, %v4770
    %v4772 = vcombine.low %v3724, %v3731
    %v4774 = vunpack.c.l.s4 1983009808
    %v4775 = vunpack.c.0.s8 %v4774
    %v4776 = vlaneseq
    %v4777 = vshrl.u32 %v4776, 7
    %v4778 = vsub.s32 %v4775, %v4777
    %v4779 = vrot.slane %v4772, %v4778
    %v4780 = vcombine.low %v3734, %v3735
    %v4782 = vunpack.c.l.s4 1983009808
    %v4783 = vunpack.c.0.s8 %v4782
    %v4784 = vlaneseq
    %v4785 = vshrl.u32 %v4784, 7
    %v4786 = vsub.s32 %v4783, %v4785
    %v4787 = vrot.slane %v4780, %v4786
    %v4788 = vcombine.low %v4763, %v4771
    %v4789 = vcombine.high %v4763, %v4771
    %v4791 = vunpack.c.l.s4 1934713408
    %v4792 = vunpack.c.0.s8 %v4791
    %v4793 = vlaneseq
    %v4794 = vshrl.u32 %v4793, 7
    %v4795 = vsub.s32 %v4792, %v4794
    %v4796 = vrot.slane %v4788, %v4795
    %v4798 = vunpack.c.l.s4 1934713408
    %v4799 = vunpack.c.0.s8 %v4798
    %v4800 = vlaneseq
    %v4801 = vshrl.u32 %v4800, 7
    %v4802 = vsub.s32 %v4799, %v4801
    %v4803 = vrot.slane %v4789, %v4802
    %v4804 = vcombine.low %v4779, %v4787
    %v4805 = vcombine.high %v4779, %v4787
    %v4807 = vunpack.c.l.s4 1934713408
    %v4808 = vunpack.c.0.s8 %v4807
    %v4809 = vlaneseq
    %v4810 = vshrl.u32 %v4809, 7
    %v4811 = vsub.s32 %v4808, %v4810
    %v4812 = vrot.slane %v4804, %v4811
    %v4814 = vunpack.c.l.s4 1934713408
    %v4815 = vunpack.c.0.s8 %v4814
    %v4816 = vlaneseq
    %v4817 = vshrl.u32 %v4816, 7
    %v4818 = vsub.s32 %v4815, %v4817
    %v4819 = vrot.slane %v4805, %v4818
    %v4820 = vcombine.low %v4796, %v4812
    %v4821 = vcombine.high %v4796, %v4812
    %v4822 = vcombine.low %v4803, %v4819
    %v4823 = vcombine.high %v4803, %v4819
    %v4824 = vcombine.low %v3776, %v3783
    %v4826 = vunpack.c.l.s4 1983009808
    %v4827 = vunpack.c.0.s8 %v4826
    %v4828 = vlaneseq
    %v4829 = vshrl.u32 %v4828, 7
    %v4830 = vsub.s32 %v4827, %v4829
    %v4831 = vrot.slane %v4824, %v4830
    %v4832 = vcombine.low %v3800, %v3801
    %v4834 = vunpack.c.l.s4 1983009808
    %v4835 = vunpack.c.0.s8 %v4834
    %v4836 = vlaneseq
    %v4837 = vshrl.u32 %v4836, 7
    %v4838 = vsub.s32 %v4835, %v4837
    %v4839 = vrot.slane %v4832, %v4838
    %v4840 = vcombine.low %v3792, %v3799
    %v4842 = vunpack.c.l.s4 1983009808
    %v4843 = vunpack.c.0.s8 %v4842
    %v4844 = vlaneseq
    %v4845 = vshrl.u32 %v4844, 7
    %v4846 = vsub.s32 %v4843, %v4845
    %v4847 = vrot.slane %v4840, %v4846
    %v4848 = vcombine.low %v3802, %v3803
    %v4850 = vunpack.c.l.s4 1983009808
    %v4851 = vunpack.c.0.s8 %v4850
    %v4852 = vlaneseq
    %v4853 = vshrl.u32 %v4852, 7
    %v4854 = vsub.s32 %v4851, %v4853
    %v4855 = vrot.slane %v4848, %v4854
    %v4856 = vcombine.low %v4831, %v4839
    %v4857 = vcombine.high %v4831, %v4839
    %v4859 = vunpack.c.l.s4 1934713408
    %v4860 = vunpack.c.0.s8 %v4859
    %v4861 = vlaneseq
    %v4862 = vshrl.u32 %v4861, 7
    %v4863 = vsub.s32 %v4860, %v4862
    %v4864 = vrot.slane %v4856, %v4863
    %v4866 = vunpack.c.l.s4 1934713408
    %v4867 = vunpack.c.0.s8 %v4866
    %v4868 = vlaneseq
    %v4869 = vshrl.u32 %v4868, 7
    %v4870 = vsub.s32 %v4867, %v4869
    %v4871 = vrot.slane %v4857, %v4870
    %v4872 = vcombine.low %v4847, %v4855
    %v4873 = vcombine.high %v4847, %v4855
    %v4875 = vunpack.c.l.s4 1934713408
    %v4876 = vunpack.c.0.s8 %v4875
    %v4877 = vlaneseq
    %v4878 = vshrl.u32 %v4877, 7
    %v4879 = vsub.s32 %v4876, %v4878
    %v4880 = vrot.slane %v4872, %v4879
    %v4882 = vunpack.c.l.s4 1934713408
    %v4883 = vunpack.c.0.s8 %v4882
    %v4884 = vlaneseq
    %v4885 = vshrl.u32 %v4884, 7
    %v4886 = vsub.s32 %v4883, %v4885
    %v4887 = vrot.slane %v4873, %v4886
    %v4888 = vcombine.low %v4864, %v4880
    %v4889 = vcombine.high %v4864, %v4880
    %v4890 = vcombine.low %v4871, %v4887
    %v4891 = vcombine.high %v4871, %v4887
    %v4892 = vcombine.low %v3844, %v3851
    %v4894 = vunpack.c.l.s4 1983009808
    %v4895 = vunpack.c.0.s8 %v4894
    %v4896 = vlaneseq
    %v4897 = vshrl.u32 %v4896, 7
    %v4898 = vsub.s32 %v4895, %v4897
    %v4899 = vrot.slane %v4892, %v4898
    %v4900 = vcombine.low %v3868, %v3869
    %v4902 = vunpack.c.l.s4 1983009808
    %v4903 = vunpack.c.0.s8 %v4902
    %v4904 = vlaneseq
    %v4905 = vshrl.u32 %v4904, 7
    %v4906 = vsub.s32 %v4903, %v4905
    %v4907 = vrot.slane %v4900, %v4906
    %v4908 = vcombine.low %v3860, %v3867
    %v4910 = vunpack.c.l.s4 1983009808
    %v4911 = vunpack.c.0.s8 %v4910
    %v4912 = vlaneseq
    %v4913 = vshrl.u32 %v4912, 7
    %v4914 = vsub.s32 %v4911, %v4913
    %v4915 = vrot.slane %v4908, %v4914
    %v4916 = vcombine.low %v3870, %v3871
    %v4918 = vunpack.c.l.s4 1983009808
    %v4919 = vunpack.c.0.s8 %v4918
    %v4920 = vlaneseq
    %v4921 = vshrl.u32 %v4920, 7
    %v4922 = vsub.s32 %v4919, %v4921
    %v4923 = vrot.slane %v4916, %v4922
    %v4924 = vcombine.low %v4899, %v4907
    %v4925 = vcombine.high %v4899, %v4907
    %v4927 = vunpack.c.l.s4 1934713408
    %v4928 = vunpack.c.0.s8 %v4927
    %v4929 = vlaneseq
    %v4930 = vshrl.u32 %v4929, 7
    %v4931 = vsub.s32 %v4928, %v4930
    %v4932 = vrot.slane %v4924, %v4931
    %v4934 = vunpack.c.l.s4 1934713408
    %v4935 = vunpack.c.0.s8 %v4934
    %v4936 = vlaneseq
    %v4937 = vshrl.u32 %v4936, 7
    %v4938 = vsub.s32 %v4935, %v4937
    %v4939 = vrot.slane %v4925, %v4938
    %v4940 = vcombine.low %v4915, %v4923
    %v4941 = vcombine.high %v4915, %v4923
    %v4943 = vunpack.c.l.s4 1934713408
    %v4944 = vunpack.c.0.s8 %v4943
    %v4945 = vlaneseq
    %v4946 = vshrl.u32 %v4945, 7
    %v4947 = vsub.s32 %v4944, %v4946
    %v4948 = vrot.slane %v4940, %v4947
    %v4950 = vunpack.c.l.s4 1934713408
    %v4951 = vunpack.c.0.s8 %v4950
    %v4952 = vlaneseq
    %v4953 = vshrl.u32 %v4952, 7
    %v4954 = vsub.s32 %v4951, %v4953
    %v4955 = vrot.slane %v4941, %v4954
    %v4956 = vcombine.low %v4932, %v4948
    %v4957 = vcombine.high %v4932, %v4948
    %v4958 = vcombine.low %v4939, %v4955
    %v4959 = vcombine.high %v4939, %v4955
    %v4960 = vcombine.low %v3912, %v3919
    %v4962 = vunpack.c.l.s4 1983009808
    %v4963 = vunpack.c.0.s8 %v4962
    %v4964 = vlaneseq
    %v4965 = vshrl.u32 %v4964, 7
    %v4966 = vsub.s32 %v4963, %v4965
    %v4967 = vrot.slane %v4960, %v4966
    %v4968 = vcombine.low %v3936, %v3937
    %v4970 = vunpack.c.l.s4 1983009808
    %v4971 = vunpack.c.0.s8 %v4970
    %v4972 = vlaneseq
    %v4973 = vshrl.u32 %v4972, 7
    %v4974 = vsub.s32 %v4971, %v4973
    %v4975 = vrot.slane %v4968, %v4974
    %v4976 = vcombine.low %v3928, %v3935
    %v4978 = vunpack.c.l.s4 1983009808
    %v4979 = vunpack.c.0.s8 %v4978
    %v4980 = vlaneseq
    %v4981 = vshrl.u32 %v4980, 7
    %v4982 = vsub.s32 %v4979, %v4981
    %v4983 = vrot.slane %v4976, %v4982
    %v4984 = vcombine.low %v3938, %v3939
    %v4986 = vunpack.c.l.s4 1983009808
    %v4987 = vunpack.c.0.s8 %v4986
    %v4988 = vlaneseq
    %v4989 = vshrl.u32 %v4988, 7
    %v4990 = vsub.s32 %v4987, %v4989
    %v4991 = vrot.slane %v4984, %v4990
    %v4992 = vcombine.low %v4967, %v4975
    %v4993 = vcombine.high %v4967, %v4975
    %v4995 = vunpack.c.l.s4 1934713408
    %v4996 = vunpack.c.0.s8 %v4995
    %v4997 = vlaneseq
    %v4998 = vshrl.u32 %v4997, 7
    %v4999 = vsub.s32 %v4996, %v4998
    %v5000 = vrot.slane %v4992, %v4999
    %v5002 = vunpack.c.l.s4 1934713408
    %v5003 = vunpack.c.0.s8 %v5002
    %v5004 = vlaneseq
    %v5005 = vshrl.u32 %v5004, 7
    %v5006 = vsub.s32 %v5003, %v5005
    %v5007 = vrot.slane %v4993, %v5006
    %v5008 = vcombine.low %v4983, %v4991
    %v5009 = vcombine.high %v4983, %v4991
    %v5011 = vunpack.c.l.s4 1934713408
    %v5012 = vunpack.c.0.s8 %v5011
    %v5013 = vlaneseq
    %v5014 = vshrl.u32 %v5013, 7
    %v5015 = vsub.s32 %v5012, %v5014
    %v5016 = vrot.slane %v5008, %v5015
    %v5018 = vunpack.c.l.s4 1934713408
    %v5019 = vunpack.c.0.s8 %v5018
    %v5020 = vlaneseq
    %v5021 = vshrl.u32 %v5020, 7
    %v5022 = vsub.s32 %v5019, %v5021
    %v5023 = vrot.slane %v5009, %v5022
    %v5024 = vcombine.low %v5000, %v5016
    %v5025 = vcombine.high %v5000, %v5016
    %v5026 = vcombine.low %v5007, %v5023
    %v5027 = vcombine.high %v5007, %v5023
    %v5028 = vcombine.low %v3980, %v3987
    %v5030 = vunpack.c.l.s4 1983009808
    %v5031 = vunpack.c.0.s8 %v5030
    %v5032 = vlaneseq
    %v5033 = vshrl.u32 %v5032, 7
    %v5034 = vsub.s32 %v5031, %v5033
    %v5035 = vrot.slane %v5028, %v5034
    %v5036 = vcombine.low %v4004, %v4005
    %v5038 = vunpack.c.l.s4 1983009808
    %v5039 = vunpack.c.0.s8 %v5038
    %v5040 = vlaneseq
    %v5041 = vshrl.u32 %v5040, 7
    %v5042 = vsub.s32 %v5039, %v5041
    %v5043 = vrot.slane %v5036, %v5042
    %v5044 = vcombine.low %v3996, %v4003
    %v5046 = vunpack.c.l.s4 1983009808
    %v5047 = vunpack.c.0.s8 %v5046
    %v5048 = vlaneseq
    %v5049 = vshrl.u32 %v5048, 7
    %v5050 = vsub.s32 %v5047, %v5049
    %v5051 = vrot.slane %v5044, %v5050
    %v5052 = vcombine.low %v4006, %v4007
    %v5054 = vunpack.c.l.s4 1983009808
    %v5055 = vunpack.c.0.s8 %v5054
    %v5056 = vlaneseq
    %v5057 = vshrl.u32 %v5056, 7
    %v5058 = vsub.s32 %v5055, %v5057
    %v5059 = vrot.slane %v5052, %v5058
    %v5060 = vcombine.low %v5035, %v5043
    %v5061 = vcombine.high %v5035, %v5043
    %v5063 = vunpack.c.l.s4 1934713408
    %v5064 = vunpack.c.0.s8 %v5063
    %v5065 = vlaneseq
    %v5066 = vshrl.u32 %v5065, 7
    %v5067 = vsub.s32 %v5064, %v5066
    %v5068 = vrot.slane %v5060, %v5067
    %v5070 = vunpack.c.l.s4 1934713408
    %v5071 = vunpack.c.0.s8 %v5070
    %v5072 = vlaneseq
    %v5073 = vshrl.u32 %v5072, 7
    %v5074 = vsub.s32 %v5071, %v5073
    %v5075 = vrot.slane %v5061, %v5074
    %v5076 = vcombine.low %v5051, %v5059
    %v5077 = vcombine.high %v5051, %v5059
    %v5079 = vunpack.c.l.s4 1934713408
    %v5080 = vunpack.c.0.s8 %v5079
    %v5081 = vlaneseq
    %v5082 = vshrl.u32 %v5081, 7
    %v5083 = vsub.s32 %v5080, %v5082
    %v5084 = vrot.slane %v5076, %v5083
    %v5086 = vunpack.c.l.s4 1934713408
    %v5087 = vunpack.c.0.s8 %v5086
    %v5088 = vlaneseq
    %v5089 = vshrl.u32 %v5088, 7
    %v5090 = vsub.s32 %v5087, %v5089
    %v5091 = vrot.slane %v5077, %v5090
    %v5092 = vcombine.low %v5068, %v5084
    %v5093 = vcombine.high %v5068, %v5084
    %v5094 = vcombine.low %v5075, %v5091
    %v5095 = vcombine.high %v5075, %v5091
    %v5096 = vcombine.low %v4048, %v4055
    %v5098 = vunpack.c.l.s4 1983009808
    %v5099 = vunpack.c.0.s8 %v5098
    %v5100 = vlaneseq
    %v5101 = vshrl.u32 %v5100, 7
    %v5102 = vsub.s32 %v5099, %v5101
    %v5103 = vrot.slane %v5096, %v5102
    %v5104 = vcombine.low %v4072, %v4073
    %v5106 = vunpack.c.l.s4 1983009808
    %v5107 = vunpack.c.0.s8 %v5106
    %v5108 = vlaneseq
    %v5109 = vshrl.u32 %v5108, 7
    %v5110 = vsub.s32 %v5107, %v5109
    %v5111 = vrot.slane %v5104, %v5110
    %v5112 = vcombine.low %v4064, %v4071
    %v5114 = vunpack.c.l.s4 1983009808
    %v5115 = vunpack.c.0.s8 %v5114
    %v5116 = vlaneseq
    %v5117 = vshrl.u32 %v5116, 7
    %v5118 = vsub.s32 %v5115, %v5117
    %v5119 = vrot.slane %v5112, %v5118
    %v5120 = vcombine.low %v4074, %v4075
    %v5122 = vunpack.c.l.s4 1983009808
    %v5123 = vunpack.c.0.s8 %v5122
    %v5124 = vlaneseq
    %v5125 = vshrl.u32 %v5124, 7
    %v5126 = vsub.s32 %v5123, %v5125
    %v5127 = vrot.slane %v5120, %v5126
    %v5128 = vcombine.low %v5103, %v5111
    %v5129 = vcombine.high %v5103, %v5111
    %v5131 = vunpack.c.l.s4 1934713408
    %v5132 = vunpack.c.0.s8 %v5131
    %v5133 = vlaneseq
    %v5134 = vshrl.u32 %v5133, 7
    %v5135 = vsub.s32 %v5132, %v5134
    %v5136 = vrot.slane %v5128, %v5135
    %v5138 = vunpack.c.l.s4 1934713408
    %v5139 = vunpack.c.0.s8 %v5138
    %v5140 = vlaneseq
    %v5141 = vshrl.u32 %v5140, 7
    %v5142 = vsub.s32 %v5139, %v5141
    %v5143 = vrot.slane %v5129, %v5142
    %v5144 = vcombine.low %v5119, %v5127
    %v5145 = vcombine.high %v5119, %v5127
    %v5147 = vunpack.c.l.s4 1934713408
    %v5148 = vunpack.c.0.s8 %v5147
    %v5149 = vlaneseq
    %v5150 = vshrl.u32 %v5149, 7
    %v5151 = vsub.s32 %v5148, %v5150
    %v5152 = vrot.slane %v5144, %v5151
    %v5154 = vunpack.c.l.s4 1934713408
    %v5155 = vunpack.c.0.s8 %v5154
    %v5156 = vlaneseq
    %v5157 = vshrl.u32 %v5156, 7
    %v5158 = vsub.s32 %v5155, %v5157
    %v5159 = vrot.slane %v5145, %v5158
    %v5160 = vcombine.low %v5136, %v5152
    %v5161 = vcombine.high %v5136, %v5152
    %v5162 = vcombine.low %v5143, %v5159
    %v5163 = vcombine.high %v5143, %v5159
    %v5164 = vcombine.low %v4116, %v4123
    %v5166 = vunpack.c.l.s4 1983009808
    %v5167 = vunpack.c.0.s8 %v5166
    %v5168 = vlaneseq
    %v5169 = vshrl.u32 %v5168, 7
    %v5170 = vsub.s32 %v5167, %v5169
    %v5171 = vrot.slane %v5164, %v5170
    %v5172 = vcombine.low %v4140, %v4141
    %v5174 = vunpack.c.l.s4 1983009808
    %v5175 = vunpack.c.0.s8 %v5174
    %v5176 = vlaneseq
    %v5177 = vshrl.u32 %v5176, 7
    %v5178 = vsub.s32 %v5175, %v5177
    %v5179 = vrot.slane %v5172, %v5178
    %v5180 = vcombine.low %v4132, %v4139
    %v5182 = vunpack.c.l.s4 1983009808
    %v5183 = vunpack.c.0.s8 %v5182
    %v5184 = vlaneseq
    %v5185 = vshrl.u32 %v5184, 7
    %v5186 = vsub.s32 %v5183, %v5185
    %v5187 = vrot.slane %v5180, %v5186
    %v5188 = vcombine.low %v4142, %v4143
    %v5190 = vunpack.c.l.s4 1983009808
    %v5191 = vunpack.c.0.s8 %v5190
    %v5192 = vlaneseq
    %v5193 = vshrl.u32 %v5192, 7
    %v5194 = vsub.s32 %v5191, %v5193
    %v5195 = vrot.slane %v5188, %v5194
    %v5196 = vcombine.low %v5171, %v5179
    %v5197 = vcombine.high %v5171, %v5179
    %v5199 = vunpack.c.l.s4 1934713408
    %v5200 = vunpack.c.0.s8 %v5199
    %v5201 = vlaneseq
    %v5202 = vshrl.u32 %v5201, 7
    %v5203 = vsub.s32 %v5200, %v5202
    %v5204 = vrot.slane %v5196, %v5203
    %v5206 = vunpack.c.l.s4 1934713408
    %v5207 = vunpack.c.0.s8 %v5206
    %v5208 = vlaneseq
    %v5209 = vshrl.u32 %v5208, 7
    %v5210 = vsub.s32 %v5207, %v5209
    %v5211 = vrot.slane %v5197, %v5210
    %v5212 = vcombine.low %v5187, %v5195
    %v5213 = vcombine.high %v5187, %v5195
    %v5215 = vunpack.c.l.s4 1934713408
    %v5216 = vunpack.c.0.s8 %v5215
    %v5217 = vlaneseq
    %v5218 = vshrl.u32 %v5217, 7
    %v5219 = vsub.s32 %v5216, %v5218
    %v5220 = vrot.slane %v5212, %v5219
    %v5222 = vunpack.c.l.s4 1934713408
    %v5223 = vunpack.c.0.s8 %v5222
    %v5224 = vlaneseq
    %v5225 = vshrl.u32 %v5224, 7
    %v5226 = vsub.s32 %v5223, %v5225
    %v5227 = vrot.slane %v5213, %v5226
    %v5228 = vcombine.low %v5204, %v5220
    %v5229 = vcombine.high %v5204, %v5220
    %v5230 = vcombine.low %v5211, %v5227
    %v5231 = vcombine.high %v5211, %v5227
    %v5232 = vcombine.low %v4184, %v4191
    %v5234 = vunpack.c.l.s4 1983009808
    %v5235 = vunpack.c.0.s8 %v5234
    %v5236 = vlaneseq
    %v5237 = vshrl.u32 %v5236, 7
    %v5238 = vsub.s32 %v5235, %v5237
    %v5239 = vrot.slane %v5232, %v5238
    %v5240 = vcombine.low %v4208, %v4209
    %v5242 = vunpack.c.l.s4 1983009808
    %v5243 = vunpack.c.0.s8 %v5242
    %v5244 = vlaneseq
    %v5245 = vshrl.u32 %v5244, 7
    %v5246 = vsub.s32 %v5243, %v5245
    %v5247 = vrot.slane %v5240, %v5246
    %v5248 = vcombine.low %v4200, %v4207
    %v5250 = vunpack.c.l.s4 1983009808
    %v5251 = vunpack.c.0.s8 %v5250
    %v5252 = vlaneseq
    %v5253 = vshrl.u32 %v5252, 7
    %v5254 = vsub.s32 %v5251, %v5253
    %v5255 = vrot.slane %v5248, %v5254
    %v5256 = vcombine.low %v4210, %v4211
    %v5258 = vunpack.c.l.s4 1983009808
    %v5259 = vunpack.c.0.s8 %v5258
    %v5260 = vlaneseq
    %v5261 = vshrl.u32 %v5260, 7
    %v5262 = vsub.s32 %v5259, %v5261
    %v5263 = vrot.slane %v5256, %v5262
    %v5264 = vcombine.low %v5239, %v5247
    %v5265 = vcombine.high %v5239, %v5247
    %v5267 = vunpack.c.l.s4 1934713408
    %v5268 = vunpack.c.0.s8 %v5267
    %v5269 = vlaneseq
    %v5270 = vshrl.u32 %v5269, 7
    %v5271 = vsub.s32 %v5268, %v5270
    %v5272 = vrot.slane %v5264, %v5271
    %v5274 = vunpack.c.l.s4 1934713408
    %v5275 = vunpack.c.0.s8 %v5274
    %v5276 = vlaneseq
    %v5277 = vshrl.u32 %v5276, 7
    %v5278 = vsub.s32 %v5275, %v5277
    %v5279 = vrot.slane %v5265, %v5278
    %v5280 = vcombine.low %v5255, %v5263
    %v5281 = vcombine.high %v5255, %v5263
    %v5283 = vunpack.c.l.s4 1934713408
    %v5284 = vunpack.c.0.s8 %v5283
    %v5285 = vlaneseq
    %v5286 = vshrl.u32 %v5285, 7
    %v5287 = vsub.s32 %v5284, %v5286
    %v5288 = vrot.slane %v5280, %v5287
    %v5290 = vunpack.c.l.s4 1934713408
    %v5291 = vunpack.c.0.s8 %v5290
    %v5292 = vlaneseq
    %v5293 = vshrl.u32 %v5292, 7
    %v5294 = vsub.s32 %v5291, %v5293
    %v5295 = vrot.slane %v5281, %v5294
    %v5296 = vcombine.low %v5272, %v5288
    %v5297 = vcombine.high %v5272, %v5288
    %v5298 = vcombine.low %v5279, %v5295
    %v5299 = vcombine.high %v5279, %v5295
    %v5300 = vcombine.low %v4252, %v4259
    %v5302 = vunpack.c.l.s4 1983009808
    %v5303 = vunpack.c.0.s8 %v5302
    %v5304 = vlaneseq
    %v5305 = vshrl.u32 %v5304, 7
    %v5306 = vsub.s32 %v5303, %v5305
    %v5307 = vrot.slane %v5300, %v5306
    %v5308 = vcombine.low %v4276, %v4277
    %v5310 = vunpack.c.l.s4 1983009808
    %v5311 = vunpack.c.0.s8 %v5310
    %v5312 = vlaneseq
    %v5313 = vshrl.u32 %v5312, 7
    %v5314 = vsub.s32 %v5311, %v5313
    %v5315 = vrot.slane %v5308, %v5314
    %v5316 = vcombine.low %v4268, %v4275
    %v5318 = vunpack.c.l.s4 1983009808
    %v5319 = vunpack.c.0.s8 %v5318
    %v5320 = vlaneseq
    %v5321 = vshrl.u32 %v5320, 7
    %v5322 = vsub.s32 %v5319, %v5321
    %v5323 = vrot.slane %v5316, %v5322
    %v5324 = vcombine.low %v4278, %v4279
    %v5326 = vunpack.c.l.s4 1983009808
    %v5327 = vunpack.c.0.s8 %v5326
    %v5328 = vlaneseq
    %v5329 = vshrl.u32 %v5328, 7
    %v5330 = vsub.s32 %v5327, %v5329
    %v5331 = vrot.slane %v5324, %v5330
    %v5332 = vcombine.low %v5307, %v5315
    %v5333 = vcombine.high %v5307, %v5315
    %v5335 = vunpack.c.l.s4 1934713408
    %v5336 = vunpack.c.0.s8 %v5335
    %v5337 = vlaneseq
    %v5338 = vshrl.u32 %v5337, 7
    %v5339 = vsub.s32 %v5336, %v5338
    %v5340 = vrot.slane %v5332, %v5339
    %v5342 = vunpack.c.l.s4 1934713408
    %v5343 = vunpack.c.0.s8 %v5342
    %v5344 = vlaneseq
    %v5345 = vshrl.u32 %v5344, 7
    %v5346 = vsub.s32 %v5343, %v5345
    %v5347 = vrot.slane %v5333, %v5346
    %v5348 = vcombine.low %v5323, %v5331
    %v5349 = vcombine.high %v5323, %v5331
    %v5351 = vunpack.c.l.s4 1934713408
    %v5352 = vunpack.c.0.s8 %v5351
    %v5353 = vlaneseq
    %v5354 = vshrl.u32 %v5353, 7
    %v5355 = vsub.s32 %v5352, %v5354
    %v5356 = vrot.slane %v5348, %v5355
    %v5358 = vunpack.c.l.s4 1934713408
    %v5359 = vunpack.c.0.s8 %v5358
    %v5360 = vlaneseq
    %v5361 = vshrl.u32 %v5360, 7
    %v5362 = vsub.s32 %v5359, %v5361
    %v5363 = vrot.slane %v5349, %v5362
    %v5364 = vcombine.low %v5340, %v5356
    %v5365 = vcombine.high %v5340, %v5356
    %v5366 = vcombine.low %v5347, %v5363
    %v5367 = vcombine.high %v5347, %v5363
    %5384 = vrot.lane.b32.xlu0 %v1788, 96
    %v5385 = vpop.permute.xlu0 %5384
    %5386 = vrot.lane.b32.xlu0 %v1792, 96
    %v5387 = vpop.permute.xlu0 %5386
    %5388 = vrot.lane.b32.xlu0 %v1798, 96
    %v5389 = vpop.permute.xlu0 %5388
    %5390 = vrot.lane.b32.xlu0 %v1802, 96
    %v5391 = vpop.permute.xlu0 %5390
    %5392 = vrot.lane.b32.xlu0 %v1808, 96
    %v5393 = vpop.permute.xlu0 %5392
    %5394 = vrot.lane.b32.xlu0 %v1812, 96
    %v5395 = vpop.permute.xlu0 %5394
    %5396 = vrot.lane.b32.xlu0 %v1818, 96
    %v5397 = vpop.permute.xlu0 %5396
    %5398 = vrot.lane.b32.xlu0 %v1822, 96
    %v5399 = vpop.permute.xlu0 %5398
    %5400 = vrot.lane.b32.xlu0 %v1828, 96
    %v5401 = vpop.permute.xlu0 %5400
    %5402 = vrot.lane.b32.xlu0 %v1832, 96
    %v5403 = vpop.permute.xlu0 %5402
    %5404 = vrot.lane.b32.xlu0 %v1838, 96
    %v5405 = vpop.permute.xlu0 %5404
    %5406 = vrot.lane.b32.xlu0 %v1842, 96
    %v5407 = vpop.permute.xlu0 %5406
    %5408 = vrot.lane.b32.xlu0 %v1848, 96
    %v5409 = vpop.permute.xlu0 %5408
    %5410 = vrot.lane.b32.xlu0 %v1852, 96
    %v5411 = vpop.permute.xlu0 %5410
    %5412 = vrot.lane.b32.xlu0 %v1858, 96
    %v5413 = vpop.permute.xlu0 %5412
    %5414 = vrot.lane.b32.xlu0 %v1862, 96
    %v5415 = vpop.permute.xlu0 %5414
    %5432 = vrot.lane.b32.xlu0 %v1788, 64
    %v5433 = vpop.permute.xlu0 %5432
    %5434 = vrot.lane.b32.xlu0 %v1792, 64
    %v5435 = vpop.permute.xlu0 %5434
    %5436 = vrot.lane.b32.xlu0 %v1798, 64
    %v5437 = vpop.permute.xlu0 %5436
    %5438 = vrot.lane.b32.xlu0 %v1802, 64
    %v5439 = vpop.permute.xlu0 %5438
    %5440 = vrot.lane.b32.xlu0 %v1808, 64
    %v5441 = vpop.permute.xlu0 %5440
    %5442 = vrot.lane.b32.xlu0 %v1812, 64
    %v5443 = vpop.permute.xlu0 %5442
    %5444 = vrot.lane.b32.xlu0 %v1818, 64
    %v5445 = vpop.permute.xlu0 %5444
    %5446 = vrot.lane.b32.xlu0 %v1822, 64
    %v5447 = vpop.permute.xlu0 %5446
    %5448 = vrot.lane.b32.xlu0 %v1828, 64
    %v5449 = vpop.permute.xlu0 %5448
    %5450 = vrot.lane.b32.xlu0 %v1832, 64
    %v5451 = vpop.permute.xlu0 %5450
    %5452 = vrot.lane.b32.xlu0 %v1838, 64
    %v5453 = vpop.permute.xlu0 %5452
    %5454 = vrot.lane.b32.xlu0 %v1842, 64
    %v5455 = vpop.permute.xlu0 %5454
    %5456 = vrot.lane.b32.xlu0 %v1848, 64
    %v5457 = vpop.permute.xlu0 %5456
    %5458 = vrot.lane.b32.xlu0 %v1852, 64
    %v5459 = vpop.permute.xlu0 %5458
    %5460 = vrot.lane.b32.xlu0 %v1858, 64
    %v5461 = vpop.permute.xlu0 %5460
    %5462 = vrot.lane.b32.xlu0 %v1862, 64
    %v5463 = vpop.permute.xlu0 %5462
    %5480 = vrot.lane.b32.xlu0 %v1788, 32
    %v5481 = vpop.permute.xlu0 %5480
    %5482 = vrot.lane.b32.xlu0 %v1792, 32
    %v5483 = vpop.permute.xlu0 %5482
    %5484 = vrot.lane.b32.xlu0 %v1798, 32
    %v5485 = vpop.permute.xlu0 %5484
    %5486 = vrot.lane.b32.xlu0 %v1802, 32
    %v5487 = vpop.permute.xlu0 %5486
    %5488 = vrot.lane.b32.xlu0 %v1808, 32
    %v5489 = vpop.permute.xlu0 %5488
    %5490 = vrot.lane.b32.xlu0 %v1812, 32
    %v5491 = vpop.permute.xlu0 %5490
    %5492 = vrot.lane.b32.xlu0 %v1818, 32
    %v5493 = vpop.permute.xlu0 %5492
    %5494 = vrot.lane.b32.xlu0 %v1822, 32
    %v5495 = vpop.permute.xlu0 %5494
    %5496 = vrot.lane.b32.xlu0 %v1828, 32
    %v5497 = vpop.permute.xlu0 %5496
    %5498 = vrot.lane.b32.xlu0 %v1832, 32
    %v5499 = vpop.permute.xlu0 %5498
    %5500 = vrot.lane.b32.xlu0 %v1838, 32
    %v5501 = vpop.permute.xlu0 %5500
    %5502 = vrot.lane.b32.xlu0 %v1842, 32
    %v5503 = vpop.permute.xlu0 %5502
    %5504 = vrot.lane.b32.xlu0 %v1848, 32
    %v5505 = vpop.permute.xlu0 %5504
    %5506 = vrot.lane.b32.xlu0 %v1852, 32
    %v5507 = vpop.permute.xlu0 %5506
    %5508 = vrot.lane.b32.xlu0 %v1858, 32
    %v5509 = vpop.permute.xlu0 %5508
    %5510 = vrot.lane.b32.xlu0 %v1862, 32
    %v5511 = vpop.permute.xlu0 %5510
    %v5528 = vcombine.low %v1788, %v5433
    %v5529 = vcombine.high %v1788, %v5433
    %v5531 = vunpack.c.l.s4 1983009808
    %v5532 = vunpack.c.0.s8 %v5531
    %v5533 = vlaneseq
    %v5534 = vshrl.u32 %v5533, 7
    %v5535 = vsub.s32 %v5532, %v5534
    %v5536 = vrot.slane %v5528, %v5535
    %v5538 = vunpack.c.l.s4 1983009808
    %v5539 = vunpack.c.0.s8 %v5538
    %v5540 = vlaneseq
    %v5541 = vshrl.u32 %v5540, 7
    %v5542 = vsub.s32 %v5539, %v5541
    %v5543 = vrot.slane %v5529, %v5542
    %v5544 = vcombine.low %v5385, %v5481
    %v5545 = vcombine.high %v5385, %v5481
    %v5547 = vunpack.c.l.s4 1983009808
    %v5548 = vunpack.c.0.s8 %v5547
    %v5549 = vlaneseq
    %v5550 = vshrl.u32 %v5549, 7
    %v5551 = vsub.s32 %v5548, %v5550
    %v5552 = vrot.slane %v5544, %v5551
    %v5554 = vunpack.c.l.s4 1983009808
    %v5555 = vunpack.c.0.s8 %v5554
    %v5556 = vlaneseq
    %v5557 = vshrl.u32 %v5556, 7
    %v5558 = vsub.s32 %v5555, %v5557
    %v5559 = vrot.slane %v5545, %v5558
    %v5560 = vcombine.low %v5536, %v5552
    %v5561 = vcombine.high %v5536, %v5552
    %v5563 = vunpack.c.l.s4 1934713408
    %v5564 = vunpack.c.0.s8 %v5563
    %v5565 = vlaneseq
    %v5566 = vshrl.u32 %v5565, 7
    %v5567 = vsub.s32 %v5564, %v5566
    %v5568 = vrot.slane %v5560, %v5567
    %v5570 = vunpack.c.l.s4 1934713408
    %v5571 = vunpack.c.0.s8 %v5570
    %v5572 = vlaneseq
    %v5573 = vshrl.u32 %v5572, 7
    %v5574 = vsub.s32 %v5571, %v5573
    %v5575 = vrot.slane %v5561, %v5574
    %v5576 = vcombine.low %v5543, %v5559
    %v5577 = vcombine.high %v5543, %v5559
    %v5579 = vunpack.c.l.s4 1934713408
    %v5580 = vunpack.c.0.s8 %v5579
    %v5581 = vlaneseq
    %v5582 = vshrl.u32 %v5581, 7
    %v5583 = vsub.s32 %v5580, %v5582
    %v5584 = vrot.slane %v5576, %v5583
    %v5586 = vunpack.c.l.s4 1934713408
    %v5587 = vunpack.c.0.s8 %v5586
    %v5588 = vlaneseq
    %v5589 = vshrl.u32 %v5588, 7
    %v5590 = vsub.s32 %v5587, %v5589
    %v5591 = vrot.slane %v5577, %v5590
    %v5592 = vcombine.high %v5568, 0.0
    %v5593 = vcombine.high %v5575, 0.0
    %v5594 = vcombine.high %v5584, 0.0
    %v5595 = vcombine.high %v5591, 0.0
    %v5596 = vcombine.low %v1792, %v5435
    %v5597 = vcombine.high %v1792, %v5435
    %v5599 = vunpack.c.l.s4 1983009808
    %v5600 = vunpack.c.0.s8 %v5599
    %v5601 = vlaneseq
    %v5602 = vshrl.u32 %v5601, 7
    %v5603 = vsub.s32 %v5600, %v5602
    %v5604 = vrot.slane %v5596, %v5603
    %v5606 = vunpack.c.l.s4 1983009808
    %v5607 = vunpack.c.0.s8 %v5606
    %v5608 = vlaneseq
    %v5609 = vshrl.u32 %v5608, 7
    %v5610 = vsub.s32 %v5607, %v5609
    %v5611 = vrot.slane %v5597, %v5610
    %v5612 = vcombine.low %v5387, %v5483
    %v5613 = vcombine.high %v5387, %v5483
    %v5615 = vunpack.c.l.s4 1983009808
    %v5616 = vunpack.c.0.s8 %v5615
    %v5617 = vlaneseq
    %v5618 = vshrl.u32 %v5617, 7
    %v5619 = vsub.s32 %v5616, %v5618
    %v5620 = vrot.slane %v5612, %v5619
    %v5622 = vunpack.c.l.s4 1983009808
    %v5623 = vunpack.c.0.s8 %v5622
    %v5624 = vlaneseq
    %v5625 = vshrl.u32 %v5624, 7
    %v5626 = vsub.s32 %v5623, %v5625
    %v5627 = vrot.slane %v5613, %v5626
    %v5628 = vcombine.low %v5604, %v5620
    %v5629 = vcombine.high %v5604, %v5620
    %v5631 = vunpack.c.l.s4 1934713408
    %v5632 = vunpack.c.0.s8 %v5631
    %v5633 = vlaneseq
    %v5634 = vshrl.u32 %v5633, 7
    %v5635 = vsub.s32 %v5632, %v5634
    %v5636 = vrot.slane %v5628, %v5635
    %v5638 = vunpack.c.l.s4 1934713408
    %v5639 = vunpack.c.0.s8 %v5638
    %v5640 = vlaneseq
    %v5641 = vshrl.u32 %v5640, 7
    %v5642 = vsub.s32 %v5639, %v5641
    %v5643 = vrot.slane %v5629, %v5642
    %v5644 = vcombine.low %v5611, %v5627
    %v5645 = vcombine.high %v5611, %v5627
    %v5647 = vunpack.c.l.s4 1934713408
    %v5648 = vunpack.c.0.s8 %v5647
    %v5649 = vlaneseq
    %v5650 = vshrl.u32 %v5649, 7
    %v5651 = vsub.s32 %v5648, %v5650
    %v5652 = vrot.slane %v5644, %v5651
    %v5654 = vunpack.c.l.s4 1934713408
    %v5655 = vunpack.c.0.s8 %v5654
    %v5656 = vlaneseq
    %v5657 = vshrl.u32 %v5656, 7
    %v5658 = vsub.s32 %v5655, %v5657
    %v5659 = vrot.slane %v5645, %v5658
    %v5660 = vcombine.high %v5636, 0.0
    %v5661 = vcombine.high %v5643, 0.0
    %v5662 = vcombine.high %v5652, 0.0
    %v5663 = vcombine.high %v5659, 0.0
    %v5664 = vcombine.low %v1798, %v5437
    %v5665 = vcombine.high %v1798, %v5437
    %v5667 = vunpack.c.l.s4 1983009808
    %v5668 = vunpack.c.0.s8 %v5667
    %v5669 = vlaneseq
    %v5670 = vshrl.u32 %v5669, 7
    %v5671 = vsub.s32 %v5668, %v5670
    %v5672 = vrot.slane %v5664, %v5671
    %v5674 = vunpack.c.l.s4 1983009808
    %v5675 = vunpack.c.0.s8 %v5674
    %v5676 = vlaneseq
    %v5677 = vshrl.u32 %v5676, 7
    %v5678 = vsub.s32 %v5675, %v5677
    %v5679 = vrot.slane %v5665, %v5678
    %v5680 = vcombine.low %v5389, %v5485
    %v5681 = vcombine.high %v5389, %v5485
    %v5683 = vunpack.c.l.s4 1983009808
    %v5684 = vunpack.c.0.s8 %v5683
    %v5685 = vlaneseq
    %v5686 = vshrl.u32 %v5685, 7
    %v5687 = vsub.s32 %v5684, %v5686
    %v5688 = vrot.slane %v5680, %v5687
    %v5690 = vunpack.c.l.s4 1983009808
    %v5691 = vunpack.c.0.s8 %v5690
    %v5692 = vlaneseq
    %v5693 = vshrl.u32 %v5692, 7
    %v5694 = vsub.s32 %v5691, %v5693
    %v5695 = vrot.slane %v5681, %v5694
    %v5696 = vcombine.low %v5672, %v5688
    %v5697 = vcombine.high %v5672, %v5688
    %v5699 = vunpack.c.l.s4 1934713408
    %v5700 = vunpack.c.0.s8 %v5699
    %v5701 = vlaneseq
    %v5702 = vshrl.u32 %v5701, 7
    %v5703 = vsub.s32 %v5700, %v5702
    %v5704 = vrot.slane %v5696, %v5703
    %v5706 = vunpack.c.l.s4 1934713408
    %v5707 = vunpack.c.0.s8 %v5706
    %v5708 = vlaneseq
    %v5709 = vshrl.u32 %v5708, 7
    %v5710 = vsub.s32 %v5707, %v5709
    %v5711 = vrot.slane %v5697, %v5710
    %v5712 = vcombine.low %v5679, %v5695
    %v5713 = vcombine.high %v5679, %v5695
    %v5715 = vunpack.c.l.s4 1934713408
    %v5716 = vunpack.c.0.s8 %v5715
    %v5717 = vlaneseq
    %v5718 = vshrl.u32 %v5717, 7
    %v5719 = vsub.s32 %v5716, %v5718
    %v5720 = vrot.slane %v5712, %v5719
    %v5722 = vunpack.c.l.s4 1934713408
    %v5723 = vunpack.c.0.s8 %v5722
    %v5724 = vlaneseq
    %v5725 = vshrl.u32 %v5724, 7
    %v5726 = vsub.s32 %v5723, %v5725
    %v5727 = vrot.slane %v5713, %v5726
    %v5728 = vcombine.high %v5704, 0.0
    %v5729 = vcombine.high %v5711, 0.0
    %v5730 = vcombine.high %v5720, 0.0
    %v5731 = vcombine.high %v5727, 0.0
    %v5732 = vcombine.low %v1802, %v5439
    %v5733 = vcombine.high %v1802, %v5439
    %v5735 = vunpack.c.l.s4 1983009808
    %v5736 = vunpack.c.0.s8 %v5735
    %v5737 = vlaneseq
    %v5738 = vshrl.u32 %v5737, 7
    %v5739 = vsub.s32 %v5736, %v5738
    %v5740 = vrot.slane %v5732, %v5739
    %v5742 = vunpack.c.l.s4 1983009808
    %v5743 = vunpack.c.0.s8 %v5742
    %v5744 = vlaneseq
    %v5745 = vshrl.u32 %v5744, 7
    %v5746 = vsub.s32 %v5743, %v5745
    %v5747 = vrot.slane %v5733, %v5746
    %v5748 = vcombine.low %v5391, %v5487
    %v5749 = vcombine.high %v5391, %v5487
    %v5751 = vunpack.c.l.s4 1983009808
    %v5752 = vunpack.c.0.s8 %v5751
    %v5753 = vlaneseq
    %v5754 = vshrl.u32 %v5753, 7
    %v5755 = vsub.s32 %v5752, %v5754
    %v5756 = vrot.slane %v5748, %v5755
    %v5758 = vunpack.c.l.s4 1983009808
    %v5759 = vunpack.c.0.s8 %v5758
    %v5760 = vlaneseq
    %v5761 = vshrl.u32 %v5760, 7
    %v5762 = vsub.s32 %v5759, %v5761
    %v5763 = vrot.slane %v5749, %v5762
    %v5764 = vcombine.low %v5740, %v5756
    %v5765 = vcombine.high %v5740, %v5756
    %v5767 = vunpack.c.l.s4 1934713408
    %v5768 = vunpack.c.0.s8 %v5767
    %v5769 = vlaneseq
    %v5770 = vshrl.u32 %v5769, 7
    %v5771 = vsub.s32 %v5768, %v5770
    %v5772 = vrot.slane %v5764, %v5771
    %v5774 = vunpack.c.l.s4 1934713408
    %v5775 = vunpack.c.0.s8 %v5774
    %v5776 = vlaneseq
    %v5777 = vshrl.u32 %v5776, 7
    %v5778 = vsub.s32 %v5775, %v5777
    %v5779 = vrot.slane %v5765, %v5778
    %v5780 = vcombine.low %v5747, %v5763
    %v5781 = vcombine.high %v5747, %v5763
    %v5783 = vunpack.c.l.s4 1934713408
    %v5784 = vunpack.c.0.s8 %v5783
    %v5785 = vlaneseq
    %v5786 = vshrl.u32 %v5785, 7
    %v5787 = vsub.s32 %v5784, %v5786
    %v5788 = vrot.slane %v5780, %v5787
    %v5790 = vunpack.c.l.s4 1934713408
    %v5791 = vunpack.c.0.s8 %v5790
    %v5792 = vlaneseq
    %v5793 = vshrl.u32 %v5792, 7
    %v5794 = vsub.s32 %v5791, %v5793
    %v5795 = vrot.slane %v5781, %v5794
    %v5796 = vcombine.high %v5772, 0.0
    %v5797 = vcombine.high %v5779, 0.0
    %v5798 = vcombine.high %v5788, 0.0
    %v5799 = vcombine.high %v5795, 0.0
    %v5800 = vcombine.low %v1808, %v5441
    %v5801 = vcombine.high %v1808, %v5441
    %v5803 = vunpack.c.l.s4 1983009808
    %v5804 = vunpack.c.0.s8 %v5803
    %v5805 = vlaneseq
    %v5806 = vshrl.u32 %v5805, 7
    %v5807 = vsub.s32 %v5804, %v5806
    %v5808 = vrot.slane %v5800, %v5807
    %v5810 = vunpack.c.l.s4 1983009808
    %v5811 = vunpack.c.0.s8 %v5810
    %v5812 = vlaneseq
    %v5813 = vshrl.u32 %v5812, 7
    %v5814 = vsub.s32 %v5811, %v5813
    %v5815 = vrot.slane %v5801, %v5814
    %v5816 = vcombine.low %v5393, %v5489
    %v5817 = vcombine.high %v5393, %v5489
    %v5819 = vunpack.c.l.s4 1983009808
    %v5820 = vunpack.c.0.s8 %v5819
    %v5821 = vlaneseq
    %v5822 = vshrl.u32 %v5821, 7
    %v5823 = vsub.s32 %v5820, %v5822
    %v5824 = vrot.slane %v5816, %v5823
    %v5826 = vunpack.c.l.s4 1983009808
    %v5827 = vunpack.c.0.s8 %v5826
    %v5828 = vlaneseq
    %v5829 = vshrl.u32 %v5828, 7
    %v5830 = vsub.s32 %v5827, %v5829
    %v5831 = vrot.slane %v5817, %v5830
    %v5832 = vcombine.low %v5808, %v5824
    %v5833 = vcombine.high %v5808, %v5824
    %v5835 = vunpack.c.l.s4 1934713408
    %v5836 = vunpack.c.0.s8 %v5835
    %v5837 = vlaneseq
    %v5838 = vshrl.u32 %v5837, 7
    %v5839 = vsub.s32 %v5836, %v5838
    %v5840 = vrot.slane %v5832, %v5839
    %v5842 = vunpack.c.l.s4 1934713408
    %v5843 = vunpack.c.0.s8 %v5842
    %v5844 = vlaneseq
    %v5845 = vshrl.u32 %v5844, 7
    %v5846 = vsub.s32 %v5843, %v5845
    %v5847 = vrot.slane %v5833, %v5846
    %v5848 = vcombine.low %v5815, %v5831
    %v5849 = vcombine.high %v5815, %v5831
    %v5851 = vunpack.c.l.s4 1934713408
    %v5852 = vunpack.c.0.s8 %v5851
    %v5853 = vlaneseq
    %v5854 = vshrl.u32 %v5853, 7
    %v5855 = vsub.s32 %v5852, %v5854
    %v5856 = vrot.slane %v5848, %v5855
    %v5858 = vunpack.c.l.s4 1934713408
    %v5859 = vunpack.c.0.s8 %v5858
    %v5860 = vlaneseq
    %v5861 = vshrl.u32 %v5860, 7
    %v5862 = vsub.s32 %v5859, %v5861
    %v5863 = vrot.slane %v5849, %v5862
    %v5864 = vcombine.high %v5840, 0.0
    %v5865 = vcombine.high %v5847, 0.0
    %v5866 = vcombine.high %v5856, 0.0
    %v5867 = vcombine.high %v5863, 0.0
    %v5868 = vcombine.low %v1812, %v5443
    %v5869 = vcombine.high %v1812, %v5443
    %v5871 = vunpack.c.l.s4 1983009808
    %v5872 = vunpack.c.0.s8 %v5871
    %v5873 = vlaneseq
    %v5874 = vshrl.u32 %v5873, 7
    %v5875 = vsub.s32 %v5872, %v5874
    %v5876 = vrot.slane %v5868, %v5875
    %v5878 = vunpack.c.l.s4 1983009808
    %v5879 = vunpack.c.0.s8 %v5878
    %v5880 = vlaneseq
    %v5881 = vshrl.u32 %v5880, 7
    %v5882 = vsub.s32 %v5879, %v5881
    %v5883 = vrot.slane %v5869, %v5882
    %v5884 = vcombine.low %v5395, %v5491
    %v5885 = vcombine.high %v5395, %v5491
    %v5887 = vunpack.c.l.s4 1983009808
    %v5888 = vunpack.c.0.s8 %v5887
    %v5889 = vlaneseq
    %v5890 = vshrl.u32 %v5889, 7
    %v5891 = vsub.s32 %v5888, %v5890
    %v5892 = vrot.slane %v5884, %v5891
    %v5894 = vunpack.c.l.s4 1983009808
    %v5895 = vunpack.c.0.s8 %v5894
    %v5896 = vlaneseq
    %v5897 = vshrl.u32 %v5896, 7
    %v5898 = vsub.s32 %v5895, %v5897
    %v5899 = vrot.slane %v5885, %v5898
    %v5900 = vcombine.low %v5876, %v5892
    %v5901 = vcombine.high %v5876, %v5892
    %v5903 = vunpack.c.l.s4 1934713408
    %v5904 = vunpack.c.0.s8 %v5903
    %v5905 = vlaneseq
    %v5906 = vshrl.u32 %v5905, 7
    %v5907 = vsub.s32 %v5904, %v5906
    %v5908 = vrot.slane %v5900, %v5907
    %v5910 = vunpack.c.l.s4 1934713408
    %v5911 = vunpack.c.0.s8 %v5910
    %v5912 = vlaneseq
    %v5913 = vshrl.u32 %v5912, 7
    %v5914 = vsub.s32 %v5911, %v5913
    %v5915 = vrot.slane %v5901, %v5914
    %v5916 = vcombine.low %v5883, %v5899
    %v5917 = vcombine.high %v5883, %v5899
    %v5919 = vunpack.c.l.s4 1934713408
    %v5920 = vunpack.c.0.s8 %v5919
    %v5921 = vlaneseq
    %v5922 = vshrl.u32 %v5921, 7
    %v5923 = vsub.s32 %v5920, %v5922
    %v5924 = vrot.slane %v5916, %v5923
    %v5926 = vunpack.c.l.s4 1934713408
    %v5927 = vunpack.c.0.s8 %v5926
    %v5928 = vlaneseq
    %v5929 = vshrl.u32 %v5928, 7
    %v5930 = vsub.s32 %v5927, %v5929
    %v5931 = vrot.slane %v5917, %v5930
    %v5932 = vcombine.high %v5908, 0.0
    %v5933 = vcombine.high %v5915, 0.0
    %v5934 = vcombine.high %v5924, 0.0
    %v5935 = vcombine.high %v5931, 0.0
    %v5936 = vcombine.low %v1818, %v5445
    %v5937 = vcombine.high %v1818, %v5445
    %v5939 = vunpack.c.l.s4 1983009808
    %v5940 = vunpack.c.0.s8 %v5939
    %v5941 = vlaneseq
    %v5942 = vshrl.u32 %v5941, 7
    %v5943 = vsub.s32 %v5940, %v5942
    %v5944 = vrot.slane %v5936, %v5943
    %v5946 = vunpack.c.l.s4 1983009808
    %v5947 = vunpack.c.0.s8 %v5946
    %v5948 = vlaneseq
    %v5949 = vshrl.u32 %v5948, 7
    %v5950 = vsub.s32 %v5947, %v5949
    %v5951 = vrot.slane %v5937, %v5950
    %v5952 = vcombine.low %v5397, %v5493
    %v5953 = vcombine.high %v5397, %v5493
    %v5955 = vunpack.c.l.s4 1983009808
    %v5956 = vunpack.c.0.s8 %v5955
    %v5957 = vlaneseq
    %v5958 = vshrl.u32 %v5957, 7
    %v5959 = vsub.s32 %v5956, %v5958
    %v5960 = vrot.slane %v5952, %v5959
    %v5962 = vunpack.c.l.s4 1983009808
    %v5963 = vunpack.c.0.s8 %v5962
    %v5964 = vlaneseq
    %v5965 = vshrl.u32 %v5964, 7
    %v5966 = vsub.s32 %v5963, %v5965
    %v5967 = vrot.slane %v5953, %v5966
    %v5968 = vcombine.low %v5944, %v5960
    %v5969 = vcombine.high %v5944, %v5960
    %v5971 = vunpack.c.l.s4 1934713408
    %v5972 = vunpack.c.0.s8 %v5971
    %v5973 = vlaneseq
    %v5974 = vshrl.u32 %v5973, 7
    %v5975 = vsub.s32 %v5972, %v5974
    %v5976 = vrot.slane %v5968, %v5975
    %v5978 = vunpack.c.l.s4 1934713408
    %v5979 = vunpack.c.0.s8 %v5978
    %v5980 = vlaneseq
    %v5981 = vshrl.u32 %v5980, 7
    %v5982 = vsub.s32 %v5979, %v5981
    %v5983 = vrot.slane %v5969, %v5982
    %v5984 = vcombine.low %v5951, %v5967
    %v5985 = vcombine.high %v5951, %v5967
    %v5987 = vunpack.c.l.s4 1934713408
    %v5988 = vunpack.c.0.s8 %v5987
    %v5989 = vlaneseq
    %v5990 = vshrl.u32 %v5989, 7
    %v5991 = vsub.s32 %v5988, %v5990
    %v5992 = vrot.slane %v5984, %v5991
    %v5994 = vunpack.c.l.s4 1934713408
    %v5995 = vunpack.c.0.s8 %v5994
    %v5996 = vlaneseq
    %v5997 = vshrl.u32 %v5996, 7
    %v5998 = vsub.s32 %v5995, %v5997
    %v5999 = vrot.slane %v5985, %v5998
    %v6000 = vcombine.high %v5976, 0.0
    %v6001 = vcombine.high %v5983, 0.0
    %v6002 = vcombine.high %v5992, 0.0
    %v6003 = vcombine.high %v5999, 0.0
    %v6004 = vcombine.low %v1822, %v5447
    %v6005 = vcombine.high %v1822, %v5447
    %v6007 = vunpack.c.l.s4 1983009808
    %v6008 = vunpack.c.0.s8 %v6007
    %v6009 = vlaneseq
    %v6010 = vshrl.u32 %v6009, 7
    %v6011 = vsub.s32 %v6008, %v6010
    %v6012 = vrot.slane %v6004, %v6011
    %v6014 = vunpack.c.l.s4 1983009808
    %v6015 = vunpack.c.0.s8 %v6014
    %v6016 = vlaneseq
    %v6017 = vshrl.u32 %v6016, 7
    %v6018 = vsub.s32 %v6015, %v6017
    %v6019 = vrot.slane %v6005, %v6018
    %v6020 = vcombine.low %v5399, %v5495
    %v6021 = vcombine.high %v5399, %v5495
    %v6023 = vunpack.c.l.s4 1983009808
    %v6024 = vunpack.c.0.s8 %v6023
    %v6025 = vlaneseq
    %v6026 = vshrl.u32 %v6025, 7
    %v6027 = vsub.s32 %v6024, %v6026
    %v6028 = vrot.slane %v6020, %v6027
    %v6030 = vunpack.c.l.s4 1983009808
    %v6031 = vunpack.c.0.s8 %v6030
    %v6032 = vlaneseq
    %v6033 = vshrl.u32 %v6032, 7
    %v6034 = vsub.s32 %v6031, %v6033
    %v6035 = vrot.slane %v6021, %v6034
    %v6036 = vcombine.low %v6012, %v6028
    %v6037 = vcombine.high %v6012, %v6028
    %v6039 = vunpack.c.l.s4 1934713408
    %v6040 = vunpack.c.0.s8 %v6039
    %v6041 = vlaneseq
    %v6042 = vshrl.u32 %v6041, 7
    %v6043 = vsub.s32 %v6040, %v6042
    %v6044 = vrot.slane %v6036, %v6043
    %v6046 = vunpack.c.l.s4 1934713408
    %v6047 = vunpack.c.0.s8 %v6046
    %v6048 = vlaneseq
    %v6049 = vshrl.u32 %v6048, 7
    %v6050 = vsub.s32 %v6047, %v6049
    %v6051 = vrot.slane %v6037, %v6050
    %v6052 = vcombine.low %v6019, %v6035
    %v6053 = vcombine.high %v6019, %v6035
    %v6055 = vunpack.c.l.s4 1934713408
    %v6056 = vunpack.c.0.s8 %v6055
    %v6057 = vlaneseq
    %v6058 = vshrl.u32 %v6057, 7
    %v6059 = vsub.s32 %v6056, %v6058
    %v6060 = vrot.slane %v6052, %v6059
    %v6062 = vunpack.c.l.s4 1934713408
    %v6063 = vunpack.c.0.s8 %v6062
    %v6064 = vlaneseq
    %v6065 = vshrl.u32 %v6064, 7
    %v6066 = vsub.s32 %v6063, %v6065
    %v6067 = vrot.slane %v6053, %v6066
    %v6068 = vcombine.high %v6044, 0.0
    %v6069 = vcombine.high %v6051, 0.0
    %v6070 = vcombine.high %v6060, 0.0
    %v6071 = vcombine.high %v6067, 0.0
    %v6072 = vcombine.low %v1828, %v5449
    %v6073 = vcombine.high %v1828, %v5449
    %v6075 = vunpack.c.l.s4 1983009808
    %v6076 = vunpack.c.0.s8 %v6075
    %v6077 = vlaneseq
    %v6078 = vshrl.u32 %v6077, 7
    %v6079 = vsub.s32 %v6076, %v6078
    %v6080 = vrot.slane %v6072, %v6079
    %v6082 = vunpack.c.l.s4 1983009808
    %v6083 = vunpack.c.0.s8 %v6082
    %v6084 = vlaneseq
    %v6085 = vshrl.u32 %v6084, 7
    %v6086 = vsub.s32 %v6083, %v6085
    %v6087 = vrot.slane %v6073, %v6086
    %v6088 = vcombine.low %v5401, %v5497
    %v6089 = vcombine.high %v5401, %v5497
    %v6091 = vunpack.c.l.s4 1983009808
    %v6092 = vunpack.c.0.s8 %v6091
    %v6093 = vlaneseq
    %v6094 = vshrl.u32 %v6093, 7
    %v6095 = vsub.s32 %v6092, %v6094
    %v6096 = vrot.slane %v6088, %v6095
    %v6098 = vunpack.c.l.s4 1983009808
    %v6099 = vunpack.c.0.s8 %v6098
    %v6100 = vlaneseq
    %v6101 = vshrl.u32 %v6100, 7
    %v6102 = vsub.s32 %v6099, %v6101
    %v6103 = vrot.slane %v6089, %v6102
    %v6104 = vcombine.low %v6080, %v6096
    %v6105 = vcombine.high %v6080, %v6096
    %v6107 = vunpack.c.l.s4 1934713408
    %v6108 = vunpack.c.0.s8 %v6107
    %v6109 = vlaneseq
    %v6110 = vshrl.u32 %v6109, 7
    %v6111 = vsub.s32 %v6108, %v6110
    %v6112 = vrot.slane %v6104, %v6111
    %v6114 = vunpack.c.l.s4 1934713408
    %v6115 = vunpack.c.0.s8 %v6114
    %v6116 = vlaneseq
    %v6117 = vshrl.u32 %v6116, 7
    %v6118 = vsub.s32 %v6115, %v6117
    %v6119 = vrot.slane %v6105, %v6118
    %v6120 = vcombine.low %v6087, %v6103
    %v6121 = vcombine.high %v6087, %v6103
    %v6123 = vunpack.c.l.s4 1934713408
    %v6124 = vunpack.c.0.s8 %v6123
    %v6125 = vlaneseq
    %v6126 = vshrl.u32 %v6125, 7
    %v6127 = vsub.s32 %v6124, %v6126
    %v6128 = vrot.slane %v6120, %v6127
    %v6130 = vunpack.c.l.s4 1934713408
    %v6131 = vunpack.c.0.s8 %v6130
    %v6132 = vlaneseq
    %v6133 = vshrl.u32 %v6132, 7
    %v6134 = vsub.s32 %v6131, %v6133
    %v6135 = vrot.slane %v6121, %v6134
    %v6136 = vcombine.high %v6112, 0.0
    %v6137 = vcombine.high %v6119, 0.0
    %v6138 = vcombine.high %v6128, 0.0
    %v6139 = vcombine.high %v6135, 0.0
    %v6140 = vcombine.low %v1832, %v5451
    %v6141 = vcombine.high %v1832, %v5451
    %v6143 = vunpack.c.l.s4 1983009808
    %v6144 = vunpack.c.0.s8 %v6143
    %v6145 = vlaneseq
    %v6146 = vshrl.u32 %v6145, 7
    %v6147 = vsub.s32 %v6144, %v6146
    %v6148 = vrot.slane %v6140, %v6147
    %v6150 = vunpack.c.l.s4 1983009808
    %v6151 = vunpack.c.0.s8 %v6150
    %v6152 = vlaneseq
    %v6153 = vshrl.u32 %v6152, 7
    %v6154 = vsub.s32 %v6151, %v6153
    %v6155 = vrot.slane %v6141, %v6154
    %v6156 = vcombine.low %v5403, %v5499
    %v6157 = vcombine.high %v5403, %v5499
    %v6159 = vunpack.c.l.s4 1983009808
    %v6160 = vunpack.c.0.s8 %v6159
    %v6161 = vlaneseq
    %v6162 = vshrl.u32 %v6161, 7
    %v6163 = vsub.s32 %v6160, %v6162
    %v6164 = vrot.slane %v6156, %v6163
    %v6166 = vunpack.c.l.s4 1983009808
    %v6167 = vunpack.c.0.s8 %v6166
    %v6168 = vlaneseq
    %v6169 = vshrl.u32 %v6168, 7
    %v6170 = vsub.s32 %v6167, %v6169
    %v6171 = vrot.slane %v6157, %v6170
    %v6172 = vcombine.low %v6148, %v6164
    %v6173 = vcombine.high %v6148, %v6164
    %v6175 = vunpack.c.l.s4 1934713408
    %v6176 = vunpack.c.0.s8 %v6175
    %v6177 = vlaneseq
    %v6178 = vshrl.u32 %v6177, 7
    %v6179 = vsub.s32 %v6176, %v6178
    %v6180 = vrot.slane %v6172, %v6179
    %v6182 = vunpack.c.l.s4 1934713408
    %v6183 = vunpack.c.0.s8 %v6182
    %v6184 = vlaneseq
    %v6185 = vshrl.u32 %v6184, 7
    %v6186 = vsub.s32 %v6183, %v6185
    %v6187 = vrot.slane %v6173, %v6186
    %v6188 = vcombine.low %v6155, %v6171
    %v6189 = vcombine.high %v6155, %v6171
    %v6191 = vunpack.c.l.s4 1934713408
    %v6192 = vunpack.c.0.s8 %v6191
    %v6193 = vlaneseq
    %v6194 = vshrl.u32 %v6193, 7
    %v6195 = vsub.s32 %v6192, %v6194
    %v6196 = vrot.slane %v6188, %v6195
    %v6198 = vunpack.c.l.s4 1934713408
    %v6199 = vunpack.c.0.s8 %v6198
    %v6200 = vlaneseq
    %v6201 = vshrl.u32 %v6200, 7
    %v6202 = vsub.s32 %v6199, %v6201
    %v6203 = vrot.slane %v6189, %v6202
    %v6204 = vcombine.high %v6180, 0.0
    %v6205 = vcombine.high %v6187, 0.0
    %v6206 = vcombine.high %v6196, 0.0
    %v6207 = vcombine.high %v6203, 0.0
    %v6208 = vcombine.low %v1838, %v5453
    %v6209 = vcombine.high %v1838, %v5453
    %v6211 = vunpack.c.l.s4 1983009808
    %v6212 = vunpack.c.0.s8 %v6211
    %v6213 = vlaneseq
    %v6214 = vshrl.u32 %v6213, 7
    %v6215 = vsub.s32 %v6212, %v6214
    %v6216 = vrot.slane %v6208, %v6215
    %v6218 = vunpack.c.l.s4 1983009808
    %v6219 = vunpack.c.0.s8 %v6218
    %v6220 = vlaneseq
    %v6221 = vshrl.u32 %v6220, 7
    %v6222 = vsub.s32 %v6219, %v6221
    %v6223 = vrot.slane %v6209, %v6222
    %v6224 = vcombine.low %v5405, %v5501
    %v6225 = vcombine.high %v5405, %v5501
    %v6227 = vunpack.c.l.s4 1983009808
    %v6228 = vunpack.c.0.s8 %v6227
    %v6229 = vlaneseq
    %v6230 = vshrl.u32 %v6229, 7
    %v6231 = vsub.s32 %v6228, %v6230
    %v6232 = vrot.slane %v6224, %v6231
    %v6234 = vunpack.c.l.s4 1983009808
    %v6235 = vunpack.c.0.s8 %v6234
    %v6236 = vlaneseq
    %v6237 = vshrl.u32 %v6236, 7
    %v6238 = vsub.s32 %v6235, %v6237
    %v6239 = vrot.slane %v6225, %v6238
    %v6240 = vcombine.low %v6216, %v6232
    %v6241 = vcombine.high %v6216, %v6232
    %v6243 = vunpack.c.l.s4 1934713408
    %v6244 = vunpack.c.0.s8 %v6243
    %v6245 = vlaneseq
    %v6246 = vshrl.u32 %v6245, 7
    %v6247 = vsub.s32 %v6244, %v6246
    %v6248 = vrot.slane %v6240, %v6247
    %v6250 = vunpack.c.l.s4 1934713408
    %v6251 = vunpack.c.0.s8 %v6250
    %v6252 = vlaneseq
    %v6253 = vshrl.u32 %v6252, 7
    %v6254 = vsub.s32 %v6251, %v6253
    %v6255 = vrot.slane %v6241, %v6254
    %v6256 = vcombine.low %v6223, %v6239
    %v6257 = vcombine.high %v6223, %v6239
    %v6259 = vunpack.c.l.s4 1934713408
    %v6260 = vunpack.c.0.s8 %v6259
    %v6261 = vlaneseq
    %v6262 = vshrl.u32 %v6261, 7
    %v6263 = vsub.s32 %v6260, %v6262
    %v6264 = vrot.slane %v6256, %v6263
    %v6266 = vunpack.c.l.s4 1934713408
    %v6267 = vunpack.c.0.s8 %v6266
    %v6268 = vlaneseq
    %v6269 = vshrl.u32 %v6268, 7
    %v6270 = vsub.s32 %v6267, %v6269
    %v6271 = vrot.slane %v6257, %v6270
    %v6272 = vcombine.high %v6248, 0.0
    %v6273 = vcombine.high %v6255, 0.0
    %v6274 = vcombine.high %v6264, 0.0
    %v6275 = vcombine.high %v6271, 0.0
    %v6276 = vcombine.low %v1842, %v5455
    %v6277 = vcombine.high %v1842, %v5455
    %v6279 = vunpack.c.l.s4 1983009808
    %v6280 = vunpack.c.0.s8 %v6279
    %v6281 = vlaneseq
    %v6282 = vshrl.u32 %v6281, 7
    %v6283 = vsub.s32 %v6280, %v6282
    %v6284 = vrot.slane %v6276, %v6283
    %v6286 = vunpack.c.l.s4 1983009808
    %v6287 = vunpack.c.0.s8 %v6286
    %v6288 = vlaneseq
    %v6289 = vshrl.u32 %v6288, 7
    %v6290 = vsub.s32 %v6287, %v6289
    %v6291 = vrot.slane %v6277, %v6290
    %v6292 = vcombine.low %v5407, %v5503
    %v6293 = vcombine.high %v5407, %v5503
    %v6295 = vunpack.c.l.s4 1983009808
    %v6296 = vunpack.c.0.s8 %v6295
    %v6297 = vlaneseq
    %v6298 = vshrl.u32 %v6297, 7
    %v6299 = vsub.s32 %v6296, %v6298
    %v6300 = vrot.slane %v6292, %v6299
    %v6302 = vunpack.c.l.s4 1983009808
    %v6303 = vunpack.c.0.s8 %v6302
    %v6304 = vlaneseq
    %v6305 = vshrl.u32 %v6304, 7
    %v6306 = vsub.s32 %v6303, %v6305
    %v6307 = vrot.slane %v6293, %v6306
    %v6308 = vcombine.low %v6284, %v6300
    %v6309 = vcombine.high %v6284, %v6300
    %v6311 = vunpack.c.l.s4 1934713408
    %v6312 = vunpack.c.0.s8 %v6311
    %v6313 = vlaneseq
    %v6314 = vshrl.u32 %v6313, 7
    %v6315 = vsub.s32 %v6312, %v6314
    %v6316 = vrot.slane %v6308, %v6315
    %v6318 = vunpack.c.l.s4 1934713408
    %v6319 = vunpack.c.0.s8 %v6318
    %v6320 = vlaneseq
    %v6321 = vshrl.u32 %v6320, 7
    %v6322 = vsub.s32 %v6319, %v6321
    %v6323 = vrot.slane %v6309, %v6322
    %v6324 = vcombine.low %v6291, %v6307
    %v6325 = vcombine.high %v6291, %v6307
    %v6327 = vunpack.c.l.s4 1934713408
    %v6328 = vunpack.c.0.s8 %v6327
    %v6329 = vlaneseq
    %v6330 = vshrl.u32 %v6329, 7
    %v6331 = vsub.s32 %v6328, %v6330
    %v6332 = vrot.slane %v6324, %v6331
    %v6334 = vunpack.c.l.s4 1934713408
    %v6335 = vunpack.c.0.s8 %v6334
    %v6336 = vlaneseq
    %v6337 = vshrl.u32 %v6336, 7
    %v6338 = vsub.s32 %v6335, %v6337
    %v6339 = vrot.slane %v6325, %v6338
    %v6340 = vcombine.high %v6316, 0.0
    %v6341 = vcombine.high %v6323, 0.0
    %v6342 = vcombine.high %v6332, 0.0
    %v6343 = vcombine.high %v6339, 0.0
    %v6344 = vcombine.low %v1848, %v5457
    %v6345 = vcombine.high %v1848, %v5457
    %v6347 = vunpack.c.l.s4 1983009808
    %v6348 = vunpack.c.0.s8 %v6347
    %v6349 = vlaneseq
    %v6350 = vshrl.u32 %v6349, 7
    %v6351 = vsub.s32 %v6348, %v6350
    %v6352 = vrot.slane %v6344, %v6351
    %v6354 = vunpack.c.l.s4 1983009808
    %v6355 = vunpack.c.0.s8 %v6354
    %v6356 = vlaneseq
    %v6357 = vshrl.u32 %v6356, 7
    %v6358 = vsub.s32 %v6355, %v6357
    %v6359 = vrot.slane %v6345, %v6358
    %v6360 = vcombine.low %v5409, %v5505
    %v6361 = vcombine.high %v5409, %v5505
    %v6363 = vunpack.c.l.s4 1983009808
    %v6364 = vunpack.c.0.s8 %v6363
    %v6365 = vlaneseq
    %v6366 = vshrl.u32 %v6365, 7
    %v6367 = vsub.s32 %v6364, %v6366
    %v6368 = vrot.slane %v6360, %v6367
    %v6370 = vunpack.c.l.s4 1983009808
    %v6371 = vunpack.c.0.s8 %v6370
    %v6372 = vlaneseq
    %v6373 = vshrl.u32 %v6372, 7
    %v6374 = vsub.s32 %v6371, %v6373
    %v6375 = vrot.slane %v6361, %v6374
    %v6376 = vcombine.low %v6352, %v6368
    %v6377 = vcombine.high %v6352, %v6368
    %v6379 = vunpack.c.l.s4 1934713408
    %v6380 = vunpack.c.0.s8 %v6379
    %v6381 = vlaneseq
    %v6382 = vshrl.u32 %v6381, 7
    %v6383 = vsub.s32 %v6380, %v6382
    %v6384 = vrot.slane %v6376, %v6383
    %v6386 = vunpack.c.l.s4 1934713408
    %v6387 = vunpack.c.0.s8 %v6386
    %v6388 = vlaneseq
    %v6389 = vshrl.u32 %v6388, 7
    %v6390 = vsub.s32 %v6387, %v6389
    %v6391 = vrot.slane %v6377, %v6390
    %v6392 = vcombine.low %v6359, %v6375
    %v6393 = vcombine.high %v6359, %v6375
    %v6395 = vunpack.c.l.s4 1934713408
    %v6396 = vunpack.c.0.s8 %v6395
    %v6397 = vlaneseq
    %v6398 = vshrl.u32 %v6397, 7
    %v6399 = vsub.s32 %v6396, %v6398
    %v6400 = vrot.slane %v6392, %v6399
    %v6402 = vunpack.c.l.s4 1934713408
    %v6403 = vunpack.c.0.s8 %v6402
    %v6404 = vlaneseq
    %v6405 = vshrl.u32 %v6404, 7
    %v6406 = vsub.s32 %v6403, %v6405
    %v6407 = vrot.slane %v6393, %v6406
    %v6408 = vcombine.high %v6384, 0.0
    %v6409 = vcombine.high %v6391, 0.0
    %v6410 = vcombine.high %v6400, 0.0
    %v6411 = vcombine.high %v6407, 0.0
    %v6412 = vcombine.low %v1852, %v5459
    %v6413 = vcombine.high %v1852, %v5459
    %v6415 = vunpack.c.l.s4 1983009808
    %v6416 = vunpack.c.0.s8 %v6415
    %v6417 = vlaneseq
    %v6418 = vshrl.u32 %v6417, 7
    %v6419 = vsub.s32 %v6416, %v6418
    %v6420 = vrot.slane %v6412, %v6419
    %v6422 = vunpack.c.l.s4 1983009808
    %v6423 = vunpack.c.0.s8 %v6422
    %v6424 = vlaneseq
    %v6425 = vshrl.u32 %v6424, 7
    %v6426 = vsub.s32 %v6423, %v6425
    %v6427 = vrot.slane %v6413, %v6426
    %v6428 = vcombine.low %v5411, %v5507
    %v6429 = vcombine.high %v5411, %v5507
    %v6431 = vunpack.c.l.s4 1983009808
    %v6432 = vunpack.c.0.s8 %v6431
    %v6433 = vlaneseq
    %v6434 = vshrl.u32 %v6433, 7
    %v6435 = vsub.s32 %v6432, %v6434
    %v6436 = vrot.slane %v6428, %v6435
    %v6438 = vunpack.c.l.s4 1983009808
    %v6439 = vunpack.c.0.s8 %v6438
    %v6440 = vlaneseq
    %v6441 = vshrl.u32 %v6440, 7
    %v6442 = vsub.s32 %v6439, %v6441
    %v6443 = vrot.slane %v6429, %v6442
    %v6444 = vcombine.low %v6420, %v6436
    %v6445 = vcombine.high %v6420, %v6436
    %v6447 = vunpack.c.l.s4 1934713408
    %v6448 = vunpack.c.0.s8 %v6447
    %v6449 = vlaneseq
    %v6450 = vshrl.u32 %v6449, 7
    %v6451 = vsub.s32 %v6448, %v6450
    %v6452 = vrot.slane %v6444, %v6451
    %v6454 = vunpack.c.l.s4 1934713408
    %v6455 = vunpack.c.0.s8 %v6454
    %v6456 = vlaneseq
    %v6457 = vshrl.u32 %v6456, 7
    %v6458 = vsub.s32 %v6455, %v6457
    %v6459 = vrot.slane %v6445, %v6458
    %v6460 = vcombine.low %v6427, %v6443
    %v6461 = vcombine.high %v6427, %v6443
    %v6463 = vunpack.c.l.s4 1934713408
    %v6464 = vunpack.c.0.s8 %v6463
    %v6465 = vlaneseq
    %v6466 = vshrl.u32 %v6465, 7
    %v6467 = vsub.s32 %v6464, %v6466
    %v6468 = vrot.slane %v6460, %v6467
    %v6470 = vunpack.c.l.s4 1934713408
    %v6471 = vunpack.c.0.s8 %v6470
    %v6472 = vlaneseq
    %v6473 = vshrl.u32 %v6472, 7
    %v6474 = vsub.s32 %v6471, %v6473
    %v6475 = vrot.slane %v6461, %v6474
    %v6476 = vcombine.high %v6452, 0.0
    %v6477 = vcombine.high %v6459, 0.0
    %v6478 = vcombine.high %v6468, 0.0
    %v6479 = vcombine.high %v6475, 0.0
    %v6480 = vcombine.low %v1858, %v5461
    %v6481 = vcombine.high %v1858, %v5461
    %v6483 = vunpack.c.l.s4 1983009808
    %v6484 = vunpack.c.0.s8 %v6483
    %v6485 = vlaneseq
    %v6486 = vshrl.u32 %v6485, 7
    %v6487 = vsub.s32 %v6484, %v6486
    %v6488 = vrot.slane %v6480, %v6487
    %v6490 = vunpack.c.l.s4 1983009808
    %v6491 = vunpack.c.0.s8 %v6490
    %v6492 = vlaneseq
    %v6493 = vshrl.u32 %v6492, 7
    %v6494 = vsub.s32 %v6491, %v6493
    %v6495 = vrot.slane %v6481, %v6494
    %v6496 = vcombine.low %v5413, %v5509
    %v6497 = vcombine.high %v5413, %v5509
    %v6499 = vunpack.c.l.s4 1983009808
    %v6500 = vunpack.c.0.s8 %v6499
    %v6501 = vlaneseq
    %v6502 = vshrl.u32 %v6501, 7
    %v6503 = vsub.s32 %v6500, %v6502
    %v6504 = vrot.slane %v6496, %v6503
    %v6506 = vunpack.c.l.s4 1983009808
    %v6507 = vunpack.c.0.s8 %v6506
    %v6508 = vlaneseq
    %v6509 = vshrl.u32 %v6508, 7
    %v6510 = vsub.s32 %v6507, %v6509
    %v6511 = vrot.slane %v6497, %v6510
    %v6512 = vcombine.low %v6488, %v6504
    %v6513 = vcombine.high %v6488, %v6504
    %v6515 = vunpack.c.l.s4 1934713408
    %v6516 = vunpack.c.0.s8 %v6515
    %v6517 = vlaneseq
    %v6518 = vshrl.u32 %v6517, 7
    %v6519 = vsub.s32 %v6516, %v6518
    %v6520 = vrot.slane %v6512, %v6519
    %v6522 = vunpack.c.l.s4 1934713408
    %v6523 = vunpack.c.0.s8 %v6522
    %v6524 = vlaneseq
    %v6525 = vshrl.u32 %v6524, 7
    %v6526 = vsub.s32 %v6523, %v6525
    %v6527 = vrot.slane %v6513, %v6526
    %v6528 = vcombine.low %v6495, %v6511
    %v6529 = vcombine.high %v6495, %v6511
    %v6531 = vunpack.c.l.s4 1934713408
    %v6532 = vunpack.c.0.s8 %v6531
    %v6533 = vlaneseq
    %v6534 = vshrl.u32 %v6533, 7
    %v6535 = vsub.s32 %v6532, %v6534
    %v6536 = vrot.slane %v6528, %v6535
    %v6538 = vunpack.c.l.s4 1934713408
    %v6539 = vunpack.c.0.s8 %v6538
    %v6540 = vlaneseq
    %v6541 = vshrl.u32 %v6540, 7
    %v6542 = vsub.s32 %v6539, %v6541
    %v6543 = vrot.slane %v6529, %v6542
    %v6544 = vcombine.high %v6520, 0.0
    %v6545 = vcombine.high %v6527, 0.0
    %v6546 = vcombine.high %v6536, 0.0
    %v6547 = vcombine.high %v6543, 0.0
    %v6548 = vcombine.low %v1862, %v5463
    %v6549 = vcombine.high %v1862, %v5463
    %v6551 = vunpack.c.l.s4 1983009808
    %v6552 = vunpack.c.0.s8 %v6551
    %v6553 = vlaneseq
    %v6554 = vshrl.u32 %v6553, 7
    %v6555 = vsub.s32 %v6552, %v6554
    %v6556 = vrot.slane %v6548, %v6555
    %v6558 = vunpack.c.l.s4 1983009808
    %v6559 = vunpack.c.0.s8 %v6558
    %v6560 = vlaneseq
    %v6561 = vshrl.u32 %v6560, 7
    %v6562 = vsub.s32 %v6559, %v6561
    %v6563 = vrot.slane %v6549, %v6562
    %v6564 = vcombine.low %v5415, %v5511
    %v6565 = vcombine.high %v5415, %v5511
    %v6567 = vunpack.c.l.s4 1983009808
    %v6568 = vunpack.c.0.s8 %v6567
    %v6569 = vlaneseq
    %v6570 = vshrl.u32 %v6569, 7
    %v6571 = vsub.s32 %v6568, %v6570
    %v6572 = vrot.slane %v6564, %v6571
    %v6574 = vunpack.c.l.s4 1983009808
    %v6575 = vunpack.c.0.s8 %v6574
    %v6576 = vlaneseq
    %v6577 = vshrl.u32 %v6576, 7
    %v6578 = vsub.s32 %v6575, %v6577
    %v6579 = vrot.slane %v6565, %v6578
    %v6580 = vcombine.low %v6556, %v6572
    %v6581 = vcombine.high %v6556, %v6572
    %v6583 = vunpack.c.l.s4 1934713408
    %v6584 = vunpack.c.0.s8 %v6583
    %v6585 = vlaneseq
    %v6586 = vshrl.u32 %v6585, 7
    %v6587 = vsub.s32 %v6584, %v6586
    %v6588 = vrot.slane %v6580, %v6587
    %v6590 = vunpack.c.l.s4 1934713408
    %v6591 = vunpack.c.0.s8 %v6590
    %v6592 = vlaneseq
    %v6593 = vshrl.u32 %v6592, 7
    %v6594 = vsub.s32 %v6591, %v6593
    %v6595 = vrot.slane %v6581, %v6594
    %v6596 = vcombine.low %v6563, %v6579
    %v6597 = vcombine.high %v6563, %v6579
    %v6599 = vunpack.c.l.s4 1934713408
    %v6600 = vunpack.c.0.s8 %v6599
    %v6601 = vlaneseq
    %v6602 = vshrl.u32 %v6601, 7
    %v6603 = vsub.s32 %v6600, %v6602
    %v6604 = vrot.slane %v6596, %v6603
    %v6606 = vunpack.c.l.s4 1934713408
    %v6607 = vunpack.c.0.s8 %v6606
    %v6608 = vlaneseq
    %v6609 = vshrl.u32 %v6608, 7
    %v6610 = vsub.s32 %v6607, %v6609
    %v6611 = vrot.slane %v6597, %v6610
    %v6612 = vcombine.high %v6588, 0.0
    %v6613 = vcombine.high %v6595, 0.0
    %v6614 = vcombine.high %v6604, 0.0
    %v6615 = vcombine.high %v6611, 0.0
    %v6616 = vcombine.low %v5568, %v5575
    %v6618 = vunpack.c.l.s4 1983009808
    %v6619 = vunpack.c.0.s8 %v6618
    %v6620 = vlaneseq
    %v6621 = vshrl.u32 %v6620, 7
    %v6622 = vsub.s32 %v6619, %v6621
    %v6623 = vrot.slane %v6616, %v6622
    %v6624 = vcombine.low %v5592, %v5593
    %v6626 = vunpack.c.l.s4 1983009808
    %v6627 = vunpack.c.0.s8 %v6626
    %v6628 = vlaneseq
    %v6629 = vshrl.u32 %v6628, 7
    %v6630 = vsub.s32 %v6627, %v6629
    %v6631 = vrot.slane %v6624, %v6630
    %v6632 = vcombine.low %v5584, %v5591
    %v6634 = vunpack.c.l.s4 1983009808
    %v6635 = vunpack.c.0.s8 %v6634
    %v6636 = vlaneseq
    %v6637 = vshrl.u32 %v6636, 7
    %v6638 = vsub.s32 %v6635, %v6637
    %v6639 = vrot.slane %v6632, %v6638
    %v6640 = vcombine.low %v5594, %v5595
    %v6642 = vunpack.c.l.s4 1983009808
    %v6643 = vunpack.c.0.s8 %v6642
    %v6644 = vlaneseq
    %v6645 = vshrl.u32 %v6644, 7
    %v6646 = vsub.s32 %v6643, %v6645
    %v6647 = vrot.slane %v6640, %v6646
    %v6648 = vcombine.low %v6623, %v6631
    %v6649 = vcombine.high %v6623, %v6631
    %v6651 = vunpack.c.l.s4 1934713408
    %v6652 = vunpack.c.0.s8 %v6651
    %v6653 = vlaneseq
    %v6654 = vshrl.u32 %v6653, 7
    %v6655 = vsub.s32 %v6652, %v6654
    %v6656 = vrot.slane %v6648, %v6655
    %v6658 = vunpack.c.l.s4 1934713408
    %v6659 = vunpack.c.0.s8 %v6658
    %v6660 = vlaneseq
    %v6661 = vshrl.u32 %v6660, 7
    %v6662 = vsub.s32 %v6659, %v6661
    %v6663 = vrot.slane %v6649, %v6662
    %v6664 = vcombine.low %v6639, %v6647
    %v6665 = vcombine.high %v6639, %v6647
    %v6667 = vunpack.c.l.s4 1934713408
    %v6668 = vunpack.c.0.s8 %v6667
    %v6669 = vlaneseq
    %v6670 = vshrl.u32 %v6669, 7
    %v6671 = vsub.s32 %v6668, %v6670
    %v6672 = vrot.slane %v6664, %v6671
    %v6674 = vunpack.c.l.s4 1934713408
    %v6675 = vunpack.c.0.s8 %v6674
    %v6676 = vlaneseq
    %v6677 = vshrl.u32 %v6676, 7
    %v6678 = vsub.s32 %v6675, %v6677
    %v6679 = vrot.slane %v6665, %v6678
    %v6680 = vcombine.low %v6656, %v6672
    %v6681 = vcombine.high %v6656, %v6672
    %v6682 = vcombine.low %v6663, %v6679
    %v6683 = vcombine.high %v6663, %v6679
    %v6684 = vcombine.low %v5636, %v5643
    %v6686 = vunpack.c.l.s4 1983009808
    %v6687 = vunpack.c.0.s8 %v6686
    %v6688 = vlaneseq
    %v6689 = vshrl.u32 %v6688, 7
    %v6690 = vsub.s32 %v6687, %v6689
    %v6691 = vrot.slane %v6684, %v6690
    %v6692 = vcombine.low %v5660, %v5661
    %v6694 = vunpack.c.l.s4 1983009808
    %v6695 = vunpack.c.0.s8 %v6694
    %v6696 = vlaneseq
    %v6697 = vshrl.u32 %v6696, 7
    %v6698 = vsub.s32 %v6695, %v6697
    %v6699 = vrot.slane %v6692, %v6698
    %v6700 = vcombine.low %v5652, %v5659
    %v6702 = vunpack.c.l.s4 1983009808
    %v6703 = vunpack.c.0.s8 %v6702
    %v6704 = vlaneseq
    %v6705 = vshrl.u32 %v6704, 7
    %v6706 = vsub.s32 %v6703, %v6705
    %v6707 = vrot.slane %v6700, %v6706
    %v6708 = vcombine.low %v5662, %v5663
    %v6710 = vunpack.c.l.s4 1983009808
    %v6711 = vunpack.c.0.s8 %v6710
    %v6712 = vlaneseq
    %v6713 = vshrl.u32 %v6712, 7
    %v6714 = vsub.s32 %v6711, %v6713
    %v6715 = vrot.slane %v6708, %v6714
    %v6716 = vcombine.low %v6691, %v6699
    %v6717 = vcombine.high %v6691, %v6699
    %v6719 = vunpack.c.l.s4 1934713408
    %v6720 = vunpack.c.0.s8 %v6719
    %v6721 = vlaneseq
    %v6722 = vshrl.u32 %v6721, 7
    %v6723 = vsub.s32 %v6720, %v6722
    %v6724 = vrot.slane %v6716, %v6723
    %v6726 = vunpack.c.l.s4 1934713408
    %v6727 = vunpack.c.0.s8 %v6726
    %v6728 = vlaneseq
    %v6729 = vshrl.u32 %v6728, 7
    %v6730 = vsub.s32 %v6727, %v6729
    %v6731 = vrot.slane %v6717, %v6730
    %v6732 = vcombine.low %v6707, %v6715
    %v6733 = vcombine.high %v6707, %v6715
    %v6735 = vunpack.c.l.s4 1934713408
    %v6736 = vunpack.c.0.s8 %v6735
    %v6737 = vlaneseq
    %v6738 = vshrl.u32 %v6737, 7
    %v6739 = vsub.s32 %v6736, %v6738
    %v6740 = vrot.slane %v6732, %v6739
    %v6742 = vunpack.c.l.s4 1934713408
    %v6743 = vunpack.c.0.s8 %v6742
    %v6744 = vlaneseq
    %v6745 = vshrl.u32 %v6744, 7
    %v6746 = vsub.s32 %v6743, %v6745
    %v6747 = vrot.slane %v6733, %v6746
    %v6748 = vcombine.low %v6724, %v6740
    %v6749 = vcombine.high %v6724, %v6740
    %v6750 = vcombine.low %v6731, %v6747
    %v6751 = vcombine.high %v6731, %v6747
    %v6752 = vcombine.low %v5704, %v5711
    %v6754 = vunpack.c.l.s4 1983009808
    %v6755 = vunpack.c.0.s8 %v6754
    %v6756 = vlaneseq
    %v6757 = vshrl.u32 %v6756, 7
    %v6758 = vsub.s32 %v6755, %v6757
    %v6759 = vrot.slane %v6752, %v6758
    %v6760 = vcombine.low %v5728, %v5729
    %v6762 = vunpack.c.l.s4 1983009808
    %v6763 = vunpack.c.0.s8 %v6762
    %v6764 = vlaneseq
    %v6765 = vshrl.u32 %v6764, 7
    %v6766 = vsub.s32 %v6763, %v6765
    %v6767 = vrot.slane %v6760, %v6766
    %v6768 = vcombine.low %v5720, %v5727
    %v6770 = vunpack.c.l.s4 1983009808
    %v6771 = vunpack.c.0.s8 %v6770
    %v6772 = vlaneseq
    %v6773 = vshrl.u32 %v6772, 7
    %v6774 = vsub.s32 %v6771, %v6773
    %v6775 = vrot.slane %v6768, %v6774
    %v6776 = vcombine.low %v5730, %v5731
    %v6778 = vunpack.c.l.s4 1983009808
    %v6779 = vunpack.c.0.s8 %v6778
    %v6780 = vlaneseq
    %v6781 = vshrl.u32 %v6780, 7
    %v6782 = vsub.s32 %v6779, %v6781
    %v6783 = vrot.slane %v6776, %v6782
    %v6784 = vcombine.low %v6759, %v6767
    %v6785 = vcombine.high %v6759, %v6767
    %v6787 = vunpack.c.l.s4 1934713408
    %v6788 = vunpack.c.0.s8 %v6787
    %v6789 = vlaneseq
    %v6790 = vshrl.u32 %v6789, 7
    %v6791 = vsub.s32 %v6788, %v6790
    %v6792 = vrot.slane %v6784, %v6791
    %v6794 = vunpack.c.l.s4 1934713408
    %v6795 = vunpack.c.0.s8 %v6794
    %v6796 = vlaneseq
    %v6797 = vshrl.u32 %v6796, 7
    %v6798 = vsub.s32 %v6795, %v6797
    %v6799 = vrot.slane %v6785, %v6798
    %v6800 = vcombine.low %v6775, %v6783
    %v6801 = vcombine.high %v6775, %v6783
    %v6803 = vunpack.c.l.s4 1934713408
    %v6804 = vunpack.c.0.s8 %v6803
    %v6805 = vlaneseq
    %v6806 = vshrl.u32 %v6805, 7
    %v6807 = vsub.s32 %v6804, %v6806
    %v6808 = vrot.slane %v6800, %v6807
    %v6810 = vunpack.c.l.s4 1934713408
    %v6811 = vunpack.c.0.s8 %v6810
    %v6812 = vlaneseq
    %v6813 = vshrl.u32 %v6812, 7
    %v6814 = vsub.s32 %v6811, %v6813
    %v6815 = vrot.slane %v6801, %v6814
    %v6816 = vcombine.low %v6792, %v6808
    %v6817 = vcombine.high %v6792, %v6808
    %v6818 = vcombine.low %v6799, %v6815
    %v6819 = vcombine.high %v6799, %v6815
    %v6820 = vcombine.low %v5772, %v5779
    %v6822 = vunpack.c.l.s4 1983009808
    %v6823 = vunpack.c.0.s8 %v6822
    %v6824 = vlaneseq
    %v6825 = vshrl.u32 %v6824, 7
    %v6826 = vsub.s32 %v6823, %v6825
    %v6827 = vrot.slane %v6820, %v6826
    %v6828 = vcombine.low %v5796, %v5797
    %v6830 = vunpack.c.l.s4 1983009808
    %v6831 = vunpack.c.0.s8 %v6830
    %v6832 = vlaneseq
    %v6833 = vshrl.u32 %v6832, 7
    %v6834 = vsub.s32 %v6831, %v6833
    %v6835 = vrot.slane %v6828, %v6834
    %v6836 = vcombine.low %v5788, %v5795
    %v6838 = vunpack.c.l.s4 1983009808
    %v6839 = vunpack.c.0.s8 %v6838
    %v6840 = vlaneseq
    %v6841 = vshrl.u32 %v6840, 7
    %v6842 = vsub.s32 %v6839, %v6841
    %v6843 = vrot.slane %v6836, %v6842
    %v6844 = vcombine.low %v5798, %v5799
    %v6846 = vunpack.c.l.s4 1983009808
    %v6847 = vunpack.c.0.s8 %v6846
    %v6848 = vlaneseq
    %v6849 = vshrl.u32 %v6848, 7
    %v6850 = vsub.s32 %v6847, %v6849
    %v6851 = vrot.slane %v6844, %v6850
    %v6852 = vcombine.low %v6827, %v6835
    %v6853 = vcombine.high %v6827, %v6835
    %v6855 = vunpack.c.l.s4 1934713408
    %v6856 = vunpack.c.0.s8 %v6855
    %v6857 = vlaneseq
    %v6858 = vshrl.u32 %v6857, 7
    %v6859 = vsub.s32 %v6856, %v6858
    %v6860 = vrot.slane %v6852, %v6859
    %v6862 = vunpack.c.l.s4 1934713408
    %v6863 = vunpack.c.0.s8 %v6862
    %v6864 = vlaneseq
    %v6865 = vshrl.u32 %v6864, 7
    %v6866 = vsub.s32 %v6863, %v6865
    %v6867 = vrot.slane %v6853, %v6866
    %v6868 = vcombine.low %v6843, %v6851
    %v6869 = vcombine.high %v6843, %v6851
    %v6871 = vunpack.c.l.s4 1934713408
    %v6872 = vunpack.c.0.s8 %v6871
    %v6873 = vlaneseq
    %v6874 = vshrl.u32 %v6873, 7
    %v6875 = vsub.s32 %v6872, %v6874
    %v6876 = vrot.slane %v6868, %v6875
    %v6878 = vunpack.c.l.s4 1934713408
    %v6879 = vunpack.c.0.s8 %v6878
    %v6880 = vlaneseq
    %v6881 = vshrl.u32 %v6880, 7
    %v6882 = vsub.s32 %v6879, %v6881
    %v6883 = vrot.slane %v6869, %v6882
    %v6884 = vcombine.low %v6860, %v6876
    %v6885 = vcombine.high %v6860, %v6876
    %v6886 = vcombine.low %v6867, %v6883
    %v6887 = vcombine.high %v6867, %v6883
    %v6888 = vcombine.low %v5840, %v5847
    %v6890 = vunpack.c.l.s4 1983009808
    %v6891 = vunpack.c.0.s8 %v6890
    %v6892 = vlaneseq
    %v6893 = vshrl.u32 %v6892, 7
    %v6894 = vsub.s32 %v6891, %v6893
    %v6895 = vrot.slane %v6888, %v6894
    %v6896 = vcombine.low %v5864, %v5865
    %v6898 = vunpack.c.l.s4 1983009808
    %v6899 = vunpack.c.0.s8 %v6898
    %v6900 = vlaneseq
    %v6901 = vshrl.u32 %v6900, 7
    %v6902 = vsub.s32 %v6899, %v6901
    %v6903 = vrot.slane %v6896, %v6902
    %v6904 = vcombine.low %v5856, %v5863
    %v6906 = vunpack.c.l.s4 1983009808
    %v6907 = vunpack.c.0.s8 %v6906
    %v6908 = vlaneseq
    %v6909 = vshrl.u32 %v6908, 7
    %v6910 = vsub.s32 %v6907, %v6909
    %v6911 = vrot.slane %v6904, %v6910
    %v6912 = vcombine.low %v5866, %v5867
    %v6914 = vunpack.c.l.s4 1983009808
    %v6915 = vunpack.c.0.s8 %v6914
    %v6916 = vlaneseq
    %v6917 = vshrl.u32 %v6916, 7
    %v6918 = vsub.s32 %v6915, %v6917
    %v6919 = vrot.slane %v6912, %v6918
    %v6920 = vcombine.low %v6895, %v6903
    %v6921 = vcombine.high %v6895, %v6903
    %v6923 = vunpack.c.l.s4 1934713408
    %v6924 = vunpack.c.0.s8 %v6923
    %v6925 = vlaneseq
    %v6926 = vshrl.u32 %v6925, 7
    %v6927 = vsub.s32 %v6924, %v6926
    %v6928 = vrot.slane %v6920, %v6927
    %v6930 = vunpack.c.l.s4 1934713408
    %v6931 = vunpack.c.0.s8 %v6930
    %v6932 = vlaneseq
    %v6933 = vshrl.u32 %v6932, 7
    %v6934 = vsub.s32 %v6931, %v6933
    %v6935 = vrot.slane %v6921, %v6934
    %v6936 = vcombine.low %v6911, %v6919
    %v6937 = vcombine.high %v6911, %v6919
    %v6939 = vunpack.c.l.s4 1934713408
    %v6940 = vunpack.c.0.s8 %v6939
    %v6941 = vlaneseq
    %v6942 = vshrl.u32 %v6941, 7
    %v6943 = vsub.s32 %v6940, %v6942
    %v6944 = vrot.slane %v6936, %v6943
    %v6946 = vunpack.c.l.s4 1934713408
    %v6947 = vunpack.c.0.s8 %v6946
    %v6948 = vlaneseq
    %v6949 = vshrl.u32 %v6948, 7
    %v6950 = vsub.s32 %v6947, %v6949
    %v6951 = vrot.slane %v6937, %v6950
    %v6952 = vcombine.low %v6928, %v6944
    %v6953 = vcombine.high %v6928, %v6944
    %v6954 = vcombine.low %v6935, %v6951
    %v6955 = vcombine.high %v6935, %v6951
    %v6956 = vcombine.low %v5908, %v5915
    %v6958 = vunpack.c.l.s4 1983009808
    %v6959 = vunpack.c.0.s8 %v6958
    %v6960 = vlaneseq
    %v6961 = vshrl.u32 %v6960, 7
    %v6962 = vsub.s32 %v6959, %v6961
    %v6963 = vrot.slane %v6956, %v6962
    %v6964 = vcombine.low %v5932, %v5933
    %v6966 = vunpack.c.l.s4 1983009808
    %v6967 = vunpack.c.0.s8 %v6966
    %v6968 = vlaneseq
    %v6969 = vshrl.u32 %v6968, 7
    %v6970 = vsub.s32 %v6967, %v6969
    %v6971 = vrot.slane %v6964, %v6970
    %v6972 = vcombine.low %v5924, %v5931
    %v6974 = vunpack.c.l.s4 1983009808
    %v6975 = vunpack.c.0.s8 %v6974
    %v6976 = vlaneseq
    %v6977 = vshrl.u32 %v6976, 7
    %v6978 = vsub.s32 %v6975, %v6977
    %v6979 = vrot.slane %v6972, %v6978
    %v6980 = vcombine.low %v5934, %v5935
    %v6982 = vunpack.c.l.s4 1983009808
    %v6983 = vunpack.c.0.s8 %v6982
    %v6984 = vlaneseq
    %v6985 = vshrl.u32 %v6984, 7
    %v6986 = vsub.s32 %v6983, %v6985
    %v6987 = vrot.slane %v6980, %v6986
    %v6988 = vcombine.low %v6963, %v6971
    %v6989 = vcombine.high %v6963, %v6971
    %v6991 = vunpack.c.l.s4 1934713408
    %v6992 = vunpack.c.0.s8 %v6991
    %v6993 = vlaneseq
    %v6994 = vshrl.u32 %v6993, 7
    %v6995 = vsub.s32 %v6992, %v6994
    %v6996 = vrot.slane %v6988, %v6995
    %v6998 = vunpack.c.l.s4 1934713408
    %v6999 = vunpack.c.0.s8 %v6998
    %v7000 = vlaneseq
    %v7001 = vshrl.u32 %v7000, 7
    %v7002 = vsub.s32 %v6999, %v7001
    %v7003 = vrot.slane %v6989, %v7002
    %v7004 = vcombine.low %v6979, %v6987
    %v7005 = vcombine.high %v6979, %v6987
    %v7007 = vunpack.c.l.s4 1934713408
    %v7008 = vunpack.c.0.s8 %v7007
    %v7009 = vlaneseq
    %v7010 = vshrl.u32 %v7009, 7
    %v7011 = vsub.s32 %v7008, %v7010
    %v7012 = vrot.slane %v7004, %v7011
    %v7014 = vunpack.c.l.s4 1934713408
    %v7015 = vunpack.c.0.s8 %v7014
    %v7016 = vlaneseq
    %v7017 = vshrl.u32 %v7016, 7
    %v7018 = vsub.s32 %v7015, %v7017
    %v7019 = vrot.slane %v7005, %v7018
    %v7020 = vcombine.low %v6996, %v7012
    %v7021 = vcombine.high %v6996, %v7012
    %v7022 = vcombine.low %v7003, %v7019
    %v7023 = vcombine.high %v7003, %v7019
    %v7024 = vcombine.low %v5976, %v5983
    %v7026 = vunpack.c.l.s4 1983009808
    %v7027 = vunpack.c.0.s8 %v7026
    %v7028 = vlaneseq
    %v7029 = vshrl.u32 %v7028, 7
    %v7030 = vsub.s32 %v7027, %v7029
    %v7031 = vrot.slane %v7024, %v7030
    %v7032 = vcombine.low %v6000, %v6001
    %v7034 = vunpack.c.l.s4 1983009808
    %v7035 = vunpack.c.0.s8 %v7034
    %v7036 = vlaneseq
    %v7037 = vshrl.u32 %v7036, 7
    %v7038 = vsub.s32 %v7035, %v7037
    %v7039 = vrot.slane %v7032, %v7038
    %v7040 = vcombine.low %v5992, %v5999
    %v7042 = vunpack.c.l.s4 1983009808
    %v7043 = vunpack.c.0.s8 %v7042
    %v7044 = vlaneseq
    %v7045 = vshrl.u32 %v7044, 7
    %v7046 = vsub.s32 %v7043, %v7045
    %v7047 = vrot.slane %v7040, %v7046
    %v7048 = vcombine.low %v6002, %v6003
    %v7050 = vunpack.c.l.s4 1983009808
    %v7051 = vunpack.c.0.s8 %v7050
    %v7052 = vlaneseq
    %v7053 = vshrl.u32 %v7052, 7
    %v7054 = vsub.s32 %v7051, %v7053
    %v7055 = vrot.slane %v7048, %v7054
    %v7056 = vcombine.low %v7031, %v7039
    %v7057 = vcombine.high %v7031, %v7039
    %v7059 = vunpack.c.l.s4 1934713408
    %v7060 = vunpack.c.0.s8 %v7059
    %v7061 = vlaneseq
    %v7062 = vshrl.u32 %v7061, 7
    %v7063 = vsub.s32 %v7060, %v7062
    %v7064 = vrot.slane %v7056, %v7063
    %v7066 = vunpack.c.l.s4 1934713408
    %v7067 = vunpack.c.0.s8 %v7066
    %v7068 = vlaneseq
    %v7069 = vshrl.u32 %v7068, 7
    %v7070 = vsub.s32 %v7067, %v7069
    %v7071 = vrot.slane %v7057, %v7070
    %v7072 = vcombine.low %v7047, %v7055
    %v7073 = vcombine.high %v7047, %v7055
    %v7075 = vunpack.c.l.s4 1934713408
    %v7076 = vunpack.c.0.s8 %v7075
    %v7077 = vlaneseq
    %v7078 = vshrl.u32 %v7077, 7
    %v7079 = vsub.s32 %v7076, %v7078
    %v7080 = vrot.slane %v7072, %v7079
    %v7082 = vunpack.c.l.s4 1934713408
    %v7083 = vunpack.c.0.s8 %v7082
    %v7084 = vlaneseq
    %v7085 = vshrl.u32 %v7084, 7
    %v7086 = vsub.s32 %v7083, %v7085
    %v7087 = vrot.slane %v7073, %v7086
    %v7088 = vcombine.low %v7064, %v7080
    %v7089 = vcombine.high %v7064, %v7080
    %v7090 = vcombine.low %v7071, %v7087
    %v7091 = vcombine.high %v7071, %v7087
    %v7092 = vcombine.low %v6044, %v6051
    %v7094 = vunpack.c.l.s4 1983009808
    %v7095 = vunpack.c.0.s8 %v7094
    %v7096 = vlaneseq
    %v7097 = vshrl.u32 %v7096, 7
    %v7098 = vsub.s32 %v7095, %v7097
    %v7099 = vrot.slane %v7092, %v7098
    %v7100 = vcombine.low %v6068, %v6069
    %v7102 = vunpack.c.l.s4 1983009808
    %v7103 = vunpack.c.0.s8 %v7102
    %v7104 = vlaneseq
    %v7105 = vshrl.u32 %v7104, 7
    %v7106 = vsub.s32 %v7103, %v7105
    %v7107 = vrot.slane %v7100, %v7106
    %v7108 = vcombine.low %v6060, %v6067
    %v7110 = vunpack.c.l.s4 1983009808
    %v7111 = vunpack.c.0.s8 %v7110
    %v7112 = vlaneseq
    %v7113 = vshrl.u32 %v7112, 7
    %v7114 = vsub.s32 %v7111, %v7113
    %v7115 = vrot.slane %v7108, %v7114
    %v7116 = vcombine.low %v6070, %v6071
    %v7118 = vunpack.c.l.s4 1983009808
    %v7119 = vunpack.c.0.s8 %v7118
    %v7120 = vlaneseq
    %v7121 = vshrl.u32 %v7120, 7
    %v7122 = vsub.s32 %v7119, %v7121
    %v7123 = vrot.slane %v7116, %v7122
    %v7124 = vcombine.low %v7099, %v7107
    %v7125 = vcombine.high %v7099, %v7107
    %v7127 = vunpack.c.l.s4 1934713408
    %v7128 = vunpack.c.0.s8 %v7127
    %v7129 = vlaneseq
    %v7130 = vshrl.u32 %v7129, 7
    %v7131 = vsub.s32 %v7128, %v7130
    %v7132 = vrot.slane %v7124, %v7131
    %v7134 = vunpack.c.l.s4 1934713408
    %v7135 = vunpack.c.0.s8 %v7134
    %v7136 = vlaneseq
    %v7137 = vshrl.u32 %v7136, 7
    %v7138 = vsub.s32 %v7135, %v7137
    %v7139 = vrot.slane %v7125, %v7138
    %v7140 = vcombine.low %v7115, %v7123
    %v7141 = vcombine.high %v7115, %v7123
    %v7143 = vunpack.c.l.s4 1934713408
    %v7144 = vunpack.c.0.s8 %v7143
    %v7145 = vlaneseq
    %v7146 = vshrl.u32 %v7145, 7
    %v7147 = vsub.s32 %v7144, %v7146
    %v7148 = vrot.slane %v7140, %v7147
    %v7150 = vunpack.c.l.s4 1934713408
    %v7151 = vunpack.c.0.s8 %v7150
    %v7152 = vlaneseq
    %v7153 = vshrl.u32 %v7152, 7
    %v7154 = vsub.s32 %v7151, %v7153
    %v7155 = vrot.slane %v7141, %v7154
    %v7156 = vcombine.low %v7132, %v7148
    %v7157 = vcombine.high %v7132, %v7148
    %v7158 = vcombine.low %v7139, %v7155
    %v7159 = vcombine.high %v7139, %v7155
    %v7160 = vcombine.low %v6112, %v6119
    %v7162 = vunpack.c.l.s4 1983009808
    %v7163 = vunpack.c.0.s8 %v7162
    %v7164 = vlaneseq
    %v7165 = vshrl.u32 %v7164, 7
    %v7166 = vsub.s32 %v7163, %v7165
    %v7167 = vrot.slane %v7160, %v7166
    %v7168 = vcombine.low %v6136, %v6137
    %v7170 = vunpack.c.l.s4 1983009808
    %v7171 = vunpack.c.0.s8 %v7170
    %v7172 = vlaneseq
    %v7173 = vshrl.u32 %v7172, 7
    %v7174 = vsub.s32 %v7171, %v7173
    %v7175 = vrot.slane %v7168, %v7174
    %v7176 = vcombine.low %v6128, %v6135
    %v7178 = vunpack.c.l.s4 1983009808
    %v7179 = vunpack.c.0.s8 %v7178
    %v7180 = vlaneseq
    %v7181 = vshrl.u32 %v7180, 7
    %v7182 = vsub.s32 %v7179, %v7181
    %v7183 = vrot.slane %v7176, %v7182
    %v7184 = vcombine.low %v6138, %v6139
    %v7186 = vunpack.c.l.s4 1983009808
    %v7187 = vunpack.c.0.s8 %v7186
    %v7188 = vlaneseq
    %v7189 = vshrl.u32 %v7188, 7
    %v7190 = vsub.s32 %v7187, %v7189
    %v7191 = vrot.slane %v7184, %v7190
    %v7192 = vcombine.low %v7167, %v7175
    %v7193 = vcombine.high %v7167, %v7175
    %v7195 = vunpack.c.l.s4 1934713408
    %v7196 = vunpack.c.0.s8 %v7195
    %v7197 = vlaneseq
    %v7198 = vshrl.u32 %v7197, 7
    %v7199 = vsub.s32 %v7196, %v7198
    %v7200 = vrot.slane %v7192, %v7199
    %v7202 = vunpack.c.l.s4 1934713408
    %v7203 = vunpack.c.0.s8 %v7202
    %v7204 = vlaneseq
    %v7205 = vshrl.u32 %v7204, 7
    %v7206 = vsub.s32 %v7203, %v7205
    %v7207 = vrot.slane %v7193, %v7206
    %v7208 = vcombine.low %v7183, %v7191
    %v7209 = vcombine.high %v7183, %v7191
    %v7211 = vunpack.c.l.s4 1934713408
    %v7212 = vunpack.c.0.s8 %v7211
    %v7213 = vlaneseq
    %v7214 = vshrl.u32 %v7213, 7
    %v7215 = vsub.s32 %v7212, %v7214
    %v7216 = vrot.slane %v7208, %v7215
    %v7218 = vunpack.c.l.s4 1934713408
    %v7219 = vunpack.c.0.s8 %v7218
    %v7220 = vlaneseq
    %v7221 = vshrl.u32 %v7220, 7
    %v7222 = vsub.s32 %v7219, %v7221
    %v7223 = vrot.slane %v7209, %v7222
    %v7224 = vcombine.low %v7200, %v7216
    %v7225 = vcombine.high %v7200, %v7216
    %v7226 = vcombine.low %v7207, %v7223
    %v7227 = vcombine.high %v7207, %v7223
    %v7228 = vcombine.low %v6180, %v6187
    %v7230 = vunpack.c.l.s4 1983009808
    %v7231 = vunpack.c.0.s8 %v7230
    %v7232 = vlaneseq
    %v7233 = vshrl.u32 %v7232, 7
    %v7234 = vsub.s32 %v7231, %v7233
    %v7235 = vrot.slane %v7228, %v7234
    %v7236 = vcombine.low %v6204, %v6205
    %v7238 = vunpack.c.l.s4 1983009808
    %v7239 = vunpack.c.0.s8 %v7238
    %v7240 = vlaneseq
    %v7241 = vshrl.u32 %v7240, 7
    %v7242 = vsub.s32 %v7239, %v7241
    %v7243 = vrot.slane %v7236, %v7242
    %v7244 = vcombine.low %v6196, %v6203
    %v7246 = vunpack.c.l.s4 1983009808
    %v7247 = vunpack.c.0.s8 %v7246
    %v7248 = vlaneseq
    %v7249 = vshrl.u32 %v7248, 7
    %v7250 = vsub.s32 %v7247, %v7249
    %v7251 = vrot.slane %v7244, %v7250
    %v7252 = vcombine.low %v6206, %v6207
    %v7254 = vunpack.c.l.s4 1983009808
    %v7255 = vunpack.c.0.s8 %v7254
    %v7256 = vlaneseq
    %v7257 = vshrl.u32 %v7256, 7
    %v7258 = vsub.s32 %v7255, %v7257
    %v7259 = vrot.slane %v7252, %v7258
    %v7260 = vcombine.low %v7235, %v7243
    %v7261 = vcombine.high %v7235, %v7243
    %v7263 = vunpack.c.l.s4 1934713408
    %v7264 = vunpack.c.0.s8 %v7263
    %v7265 = vlaneseq
    %v7266 = vshrl.u32 %v7265, 7
    %v7267 = vsub.s32 %v7264, %v7266
    %v7268 = vrot.slane %v7260, %v7267
    %v7270 = vunpack.c.l.s4 1934713408
    %v7271 = vunpack.c.0.s8 %v7270
    %v7272 = vlaneseq
    %v7273 = vshrl.u32 %v7272, 7
    %v7274 = vsub.s32 %v7271, %v7273
    %v7275 = vrot.slane %v7261, %v7274
    %v7276 = vcombine.low %v7251, %v7259
    %v7277 = vcombine.high %v7251, %v7259
    %v7279 = vunpack.c.l.s4 1934713408
    %v7280 = vunpack.c.0.s8 %v7279
    %v7281 = vlaneseq
    %v7282 = vshrl.u32 %v7281, 7
    %v7283 = vsub.s32 %v7280, %v7282
    %v7284 = vrot.slane %v7276, %v7283
    %v7286 = vunpack.c.l.s4 1934713408
    %v7287 = vunpack.c.0.s8 %v7286
    %v7288 = vlaneseq
    %v7289 = vshrl.u32 %v7288, 7
    %v7290 = vsub.s32 %v7287, %v7289
    %v7291 = vrot.slane %v7277, %v7290
    %v7292 = vcombine.low %v7268, %v7284
    %v7293 = vcombine.high %v7268, %v7284
    %v7294 = vcombine.low %v7275, %v7291
    %v7295 = vcombine.high %v7275, %v7291
    %v7296 = vcombine.low %v6248, %v6255
    %v7298 = vunpack.c.l.s4 1983009808
    %v7299 = vunpack.c.0.s8 %v7298
    %v7300 = vlaneseq
    %v7301 = vshrl.u32 %v7300, 7
    %v7302 = vsub.s32 %v7299, %v7301
    %v7303 = vrot.slane %v7296, %v7302
    %v7304 = vcombine.low %v6272, %v6273
    %v7306 = vunpack.c.l.s4 1983009808
    %v7307 = vunpack.c.0.s8 %v7306
    %v7308 = vlaneseq
    %v7309 = vshrl.u32 %v7308, 7
    %v7310 = vsub.s32 %v7307, %v7309
    %v7311 = vrot.slane %v7304, %v7310
    %v7312 = vcombine.low %v6264, %v6271
    %v7314 = vunpack.c.l.s4 1983009808
    %v7315 = vunpack.c.0.s8 %v7314
    %v7316 = vlaneseq
    %v7317 = vshrl.u32 %v7316, 7
    %v7318 = vsub.s32 %v7315, %v7317
    %v7319 = vrot.slane %v7312, %v7318
    %v7320 = vcombine.low %v6274, %v6275
    %v7322 = vunpack.c.l.s4 1983009808
    %v7323 = vunpack.c.0.s8 %v7322
    %v7324 = vlaneseq
    %v7325 = vshrl.u32 %v7324, 7
    %v7326 = vsub.s32 %v7323, %v7325
    %v7327 = vrot.slane %v7320, %v7326
    %v7328 = vcombine.low %v7303, %v7311
    %v7329 = vcombine.high %v7303, %v7311
    %v7331 = vunpack.c.l.s4 1934713408
    %v7332 = vunpack.c.0.s8 %v7331
    %v7333 = vlaneseq
    %v7334 = vshrl.u32 %v7333, 7
    %v7335 = vsub.s32 %v7332, %v7334
    %v7336 = vrot.slane %v7328, %v7335
    %v7338 = vunpack.c.l.s4 1934713408
    %v7339 = vunpack.c.0.s8 %v7338
    %v7340 = vlaneseq
    %v7341 = vshrl.u32 %v7340, 7
    %v7342 = vsub.s32 %v7339, %v7341
    %v7343 = vrot.slane %v7329, %v7342
    %v7344 = vcombine.low %v7319, %v7327
    %v7345 = vcombine.high %v7319, %v7327
    %v7347 = vunpack.c.l.s4 1934713408
    %v7348 = vunpack.c.0.s8 %v7347
    %v7349 = vlaneseq
    %v7350 = vshrl.u32 %v7349, 7
    %v7351 = vsub.s32 %v7348, %v7350
    %v7352 = vrot.slane %v7344, %v7351
    %v7354 = vunpack.c.l.s4 1934713408
    %v7355 = vunpack.c.0.s8 %v7354
    %v7356 = vlaneseq
    %v7357 = vshrl.u32 %v7356, 7
    %v7358 = vsub.s32 %v7355, %v7357
    %v7359 = vrot.slane %v7345, %v7358
    %v7360 = vcombine.low %v7336, %v7352
    %v7361 = vcombine.high %v7336, %v7352
    %v7362 = vcombine.low %v7343, %v7359
    %v7363 = vcombine.high %v7343, %v7359
    %v7364 = vcombine.low %v6316, %v6323
    %v7366 = vunpack.c.l.s4 1983009808
    %v7367 = vunpack.c.0.s8 %v7366
    %v7368 = vlaneseq
    %v7369 = vshrl.u32 %v7368, 7
    %v7370 = vsub.s32 %v7367, %v7369
    %v7371 = vrot.slane %v7364, %v7370
    %v7372 = vcombine.low %v6340, %v6341
    %v7374 = vunpack.c.l.s4 1983009808
    %v7375 = vunpack.c.0.s8 %v7374
    %v7376 = vlaneseq
    %v7377 = vshrl.u32 %v7376, 7
    %v7378 = vsub.s32 %v7375, %v7377
    %v7379 = vrot.slane %v7372, %v7378
    %v7380 = vcombine.low %v6332, %v6339
    %v7382 = vunpack.c.l.s4 1983009808
    %v7383 = vunpack.c.0.s8 %v7382
    %v7384 = vlaneseq
    %v7385 = vshrl.u32 %v7384, 7
    %v7386 = vsub.s32 %v7383, %v7385
    %v7387 = vrot.slane %v7380, %v7386
    %v7388 = vcombine.low %v6342, %v6343
    %v7390 = vunpack.c.l.s4 1983009808
    %v7391 = vunpack.c.0.s8 %v7390
    %v7392 = vlaneseq
    %v7393 = vshrl.u32 %v7392, 7
    %v7394 = vsub.s32 %v7391, %v7393
    %v7395 = vrot.slane %v7388, %v7394
    %v7396 = vcombine.low %v7371, %v7379
    %v7397 = vcombine.high %v7371, %v7379
    %v7399 = vunpack.c.l.s4 1934713408
    %v7400 = vunpack.c.0.s8 %v7399
    %v7401 = vlaneseq
    %v7402 = vshrl.u32 %v7401, 7
    %v7403 = vsub.s32 %v7400, %v7402
    %v7404 = vrot.slane %v7396, %v7403
    %v7406 = vunpack.c.l.s4 1934713408
    %v7407 = vunpack.c.0.s8 %v7406
    %v7408 = vlaneseq
    %v7409 = vshrl.u32 %v7408, 7
    %v7410 = vsub.s32 %v7407, %v7409
    %v7411 = vrot.slane %v7397, %v7410
    %v7412 = vcombine.low %v7387, %v7395
    %v7413 = vcombine.high %v7387, %v7395
    %v7415 = vunpack.c.l.s4 1934713408
    %v7416 = vunpack.c.0.s8 %v7415
    %v7417 = vlaneseq
    %v7418 = vshrl.u32 %v7417, 7
    %v7419 = vsub.s32 %v7416, %v7418
    %v7420 = vrot.slane %v7412, %v7419
    %v7422 = vunpack.c.l.s4 1934713408
    %v7423 = vunpack.c.0.s8 %v7422
    %v7424 = vlaneseq
    %v7425 = vshrl.u32 %v7424, 7
    %v7426 = vsub.s32 %v7423, %v7425
    %v7427 = vrot.slane %v7413, %v7426
    %v7428 = vcombine.low %v7404, %v7420
    %v7429 = vcombine.high %v7404, %v7420
    %v7430 = vcombine.low %v7411, %v7427
    %v7431 = vcombine.high %v7411, %v7427
    %v7432 = vcombine.low %v6384, %v6391
    %v7434 = vunpack.c.l.s4 1983009808
    %v7435 = vunpack.c.0.s8 %v7434
    %v7436 = vlaneseq
    %v7437 = vshrl.u32 %v7436, 7
    %v7438 = vsub.s32 %v7435, %v7437
    %v7439 = vrot.slane %v7432, %v7438
    %v7440 = vcombine.low %v6408, %v6409
    %v7442 = vunpack.c.l.s4 1983009808
    %v7443 = vunpack.c.0.s8 %v7442
    %v7444 = vlaneseq
    %v7445 = vshrl.u32 %v7444, 7
    %v7446 = vsub.s32 %v7443, %v7445
    %v7447 = vrot.slane %v7440, %v7446
    %v7448 = vcombine.low %v6400, %v6407
    %v7450 = vunpack.c.l.s4 1983009808
    %v7451 = vunpack.c.0.s8 %v7450
    %v7452 = vlaneseq
    %v7453 = vshrl.u32 %v7452, 7
    %v7454 = vsub.s32 %v7451, %v7453
    %v7455 = vrot.slane %v7448, %v7454
    %v7456 = vcombine.low %v6410, %v6411
    %v7458 = vunpack.c.l.s4 1983009808
    %v7459 = vunpack.c.0.s8 %v7458
    %v7460 = vlaneseq
    %v7461 = vshrl.u32 %v7460, 7
    %v7462 = vsub.s32 %v7459, %v7461
    %v7463 = vrot.slane %v7456, %v7462
    %v7464 = vcombine.low %v7439, %v7447
    %v7465 = vcombine.high %v7439, %v7447
    %v7467 = vunpack.c.l.s4 1934713408
    %v7468 = vunpack.c.0.s8 %v7467
    %v7469 = vlaneseq
    %v7470 = vshrl.u32 %v7469, 7
    %v7471 = vsub.s32 %v7468, %v7470
    %v7472 = vrot.slane %v7464, %v7471
    %v7474 = vunpack.c.l.s4 1934713408
    %v7475 = vunpack.c.0.s8 %v7474
    %v7476 = vlaneseq
    %v7477 = vshrl.u32 %v7476, 7
    %v7478 = vsub.s32 %v7475, %v7477
    %v7479 = vrot.slane %v7465, %v7478
    %v7480 = vcombine.low %v7455, %v7463
    %v7481 = vcombine.high %v7455, %v7463
    %v7483 = vunpack.c.l.s4 1934713408
    %v7484 = vunpack.c.0.s8 %v7483
    %v7485 = vlaneseq
    %v7486 = vshrl.u32 %v7485, 7
    %v7487 = vsub.s32 %v7484, %v7486
    %v7488 = vrot.slane %v7480, %v7487
    %v7490 = vunpack.c.l.s4 1934713408
    %v7491 = vunpack.c.0.s8 %v7490
    %v7492 = vlaneseq
    %v7493 = vshrl.u32 %v7492, 7
    %v7494 = vsub.s32 %v7491, %v7493
    %v7495 = vrot.slane %v7481, %v7494
    %v7496 = vcombine.low %v7472, %v7488
    %v7497 = vcombine.high %v7472, %v7488
    %v7498 = vcombine.low %v7479, %v7495
    %v7499 = vcombine.high %v7479, %v7495
    %v7500 = vcombine.low %v6452, %v6459
    %v7502 = vunpack.c.l.s4 1983009808
    %v7503 = vunpack.c.0.s8 %v7502
    %v7504 = vlaneseq
    %v7505 = vshrl.u32 %v7504, 7
    %v7506 = vsub.s32 %v7503, %v7505
    %v7507 = vrot.slane %v7500, %v7506
    %v7508 = vcombine.low %v6476, %v6477
    %v7510 = vunpack.c.l.s4 1983009808
    %v7511 = vunpack.c.0.s8 %v7510
    %v7512 = vlaneseq
    %v7513 = vshrl.u32 %v7512, 7
    %v7514 = vsub.s32 %v7511, %v7513
    %v7515 = vrot.slane %v7508, %v7514
    %v7516 = vcombine.low %v6468, %v6475
    %v7518 = vunpack.c.l.s4 1983009808
    %v7519 = vunpack.c.0.s8 %v7518
    %v7520 = vlaneseq
    %v7521 = vshrl.u32 %v7520, 7
    %v7522 = vsub.s32 %v7519, %v7521
    %v7523 = vrot.slane %v7516, %v7522
    %v7524 = vcombine.low %v6478, %v6479
    %v7526 = vunpack.c.l.s4 1983009808
    %v7527 = vunpack.c.0.s8 %v7526
    %v7528 = vlaneseq
    %v7529 = vshrl.u32 %v7528, 7
    %v7530 = vsub.s32 %v7527, %v7529
    %v7531 = vrot.slane %v7524, %v7530
    %v7532 = vcombine.low %v7507, %v7515
    %v7533 = vcombine.high %v7507, %v7515
    %v7535 = vunpack.c.l.s4 1934713408
    %v7536 = vunpack.c.0.s8 %v7535
    %v7537 = vlaneseq
    %v7538 = vshrl.u32 %v7537, 7
    %v7539 = vsub.s32 %v7536, %v7538
    %v7540 = vrot.slane %v7532, %v7539
    %v7542 = vunpack.c.l.s4 1934713408
    %v7543 = vunpack.c.0.s8 %v7542
    %v7544 = vlaneseq
    %v7545 = vshrl.u32 %v7544, 7
    %v7546 = vsub.s32 %v7543, %v7545
    %v7547 = vrot.slane %v7533, %v7546
    %v7548 = vcombine.low %v7523, %v7531
    %v7549 = vcombine.high %v7523, %v7531
    %v7551 = vunpack.c.l.s4 1934713408
    %v7552 = vunpack.c.0.s8 %v7551
    %v7553 = vlaneseq
    %v7554 = vshrl.u32 %v7553, 7
    %v7555 = vsub.s32 %v7552, %v7554
    %v7556 = vrot.slane %v7548, %v7555
    %v7558 = vunpack.c.l.s4 1934713408
    %v7559 = vunpack.c.0.s8 %v7558
    %v7560 = vlaneseq
    %v7561 = vshrl.u32 %v7560, 7
    %v7562 = vsub.s32 %v7559, %v7561
    %v7563 = vrot.slane %v7549, %v7562
    %v7564 = vcombine.low %v7540, %v7556
    %v7565 = vcombine.high %v7540, %v7556
    %v7566 = vcombine.low %v7547, %v7563
    %v7567 = vcombine.high %v7547, %v7563
    %v7568 = vcombine.low %v6520, %v6527
    %v7570 = vunpack.c.l.s4 1983009808
    %v7571 = vunpack.c.0.s8 %v7570
    %v7572 = vlaneseq
    %v7573 = vshrl.u32 %v7572, 7
    %v7574 = vsub.s32 %v7571, %v7573
    %v7575 = vrot.slane %v7568, %v7574
    %v7576 = vcombine.low %v6544, %v6545
    %v7578 = vunpack.c.l.s4 1983009808
    %v7579 = vunpack.c.0.s8 %v7578
    %v7580 = vlaneseq
    %v7581 = vshrl.u32 %v7580, 7
    %v7582 = vsub.s32 %v7579, %v7581
    %v7583 = vrot.slane %v7576, %v7582
    %v7584 = vcombine.low %v6536, %v6543
    %v7586 = vunpack.c.l.s4 1983009808
    %v7587 = vunpack.c.0.s8 %v7586
    %v7588 = vlaneseq
    %v7589 = vshrl.u32 %v7588, 7
    %v7590 = vsub.s32 %v7587, %v7589
    %v7591 = vrot.slane %v7584, %v7590
    %v7592 = vcombine.low %v6546, %v6547
    %v7594 = vunpack.c.l.s4 1983009808
    %v7595 = vunpack.c.0.s8 %v7594
    %v7596 = vlaneseq
    %v7597 = vshrl.u32 %v7596, 7
    %v7598 = vsub.s32 %v7595, %v7597
    %v7599 = vrot.slane %v7592, %v7598
    %v7600 = vcombine.low %v7575, %v7583
    %v7601 = vcombine.high %v7575, %v7583
    %v7603 = vunpack.c.l.s4 1934713408
    %v7604 = vunpack.c.0.s8 %v7603
    %v7605 = vlaneseq
    %v7606 = vshrl.u32 %v7605, 7
    %v7607 = vsub.s32 %v7604, %v7606
    %v7608 = vrot.slane %v7600, %v7607
    %v7610 = vunpack.c.l.s4 1934713408
    %v7611 = vunpack.c.0.s8 %v7610
    %v7612 = vlaneseq
    %v7613 = vshrl.u32 %v7612, 7
    %v7614 = vsub.s32 %v7611, %v7613
    %v7615 = vrot.slane %v7601, %v7614
    %v7616 = vcombine.low %v7591, %v7599
    %v7617 = vcombine.high %v7591, %v7599
    %v7619 = vunpack.c.l.s4 1934713408
    %v7620 = vunpack.c.0.s8 %v7619
    %v7621 = vlaneseq
    %v7622 = vshrl.u32 %v7621, 7
    %v7623 = vsub.s32 %v7620, %v7622
    %v7624 = vrot.slane %v7616, %v7623
    %v7626 = vunpack.c.l.s4 1934713408
    %v7627 = vunpack.c.0.s8 %v7626
    %v7628 = vlaneseq
    %v7629 = vshrl.u32 %v7628, 7
    %v7630 = vsub.s32 %v7627, %v7629
    %v7631 = vrot.slane %v7617, %v7630
    %v7632 = vcombine.low %v7608, %v7624
    %v7633 = vcombine.high %v7608, %v7624
    %v7634 = vcombine.low %v7615, %v7631
    %v7635 = vcombine.high %v7615, %v7631
    %v7636 = vcombine.low %v6588, %v6595
    %v7638 = vunpack.c.l.s4 1983009808
    %v7639 = vunpack.c.0.s8 %v7638
    %v7640 = vlaneseq
    %v7641 = vshrl.u32 %v7640, 7
    %v7642 = vsub.s32 %v7639, %v7641
    %v7643 = vrot.slane %v7636, %v7642
    %v7644 = vcombine.low %v6612, %v6613
    %v7646 = vunpack.c.l.s4 1983009808
    %v7647 = vunpack.c.0.s8 %v7646
    %v7648 = vlaneseq
    %v7649 = vshrl.u32 %v7648, 7
    %v7650 = vsub.s32 %v7647, %v7649
    %v7651 = vrot.slane %v7644, %v7650
    %v7652 = vcombine.low %v6604, %v6611
    %v7654 = vunpack.c.l.s4 1983009808
    %v7655 = vunpack.c.0.s8 %v7654
    %v7656 = vlaneseq
    %v7657 = vshrl.u32 %v7656, 7
    %v7658 = vsub.s32 %v7655, %v7657
    %v7659 = vrot.slane %v7652, %v7658
    %v7660 = vcombine.low %v6614, %v6615
    %v7662 = vunpack.c.l.s4 1983009808
    %v7663 = vunpack.c.0.s8 %v7662
    %v7664 = vlaneseq
    %v7665 = vshrl.u32 %v7664, 7
    %v7666 = vsub.s32 %v7663, %v7665
    %v7667 = vrot.slane %v7660, %v7666
    %v7668 = vcombine.low %v7643, %v7651
    %v7669 = vcombine.high %v7643, %v7651
    %v7671 = vunpack.c.l.s4 1934713408
    %v7672 = vunpack.c.0.s8 %v7671
    %v7673 = vlaneseq
    %v7674 = vshrl.u32 %v7673, 7
    %v7675 = vsub.s32 %v7672, %v7674
    %v7676 = vrot.slane %v7668, %v7675
    %v7678 = vunpack.c.l.s4 1934713408
    %v7679 = vunpack.c.0.s8 %v7678
    %v7680 = vlaneseq
    %v7681 = vshrl.u32 %v7680, 7
    %v7682 = vsub.s32 %v7679, %v7681
    %v7683 = vrot.slane %v7669, %v7682
    %v7684 = vcombine.low %v7659, %v7667
    %v7685 = vcombine.high %v7659, %v7667
    %v7687 = vunpack.c.l.s4 1934713408
    %v7688 = vunpack.c.0.s8 %v7687
    %v7689 = vlaneseq
    %v7690 = vshrl.u32 %v7689, 7
    %v7691 = vsub.s32 %v7688, %v7690
    %v7692 = vrot.slane %v7684, %v7691
    %v7694 = vunpack.c.l.s4 1934713408
    %v7695 = vunpack.c.0.s8 %v7694
    %v7696 = vlaneseq
    %v7697 = vshrl.u32 %v7696, 7
    %v7698 = vsub.s32 %v7695, %v7697
    %v7699 = vrot.slane %v7685, %v7698
    %v7700 = vcombine.low %v7676, %v7692
    %v7701 = vcombine.high %v7676, %v7692
    %v7702 = vcombine.low %v7683, %v7699
    %v7703 = vcombine.high %v7683, %v7699
    %v7704 = vmul.f32 %v2552, 0.17677669
    %v7705 = vmul.f32 %v2620, 0.17677669
    %v7706 = vmul.f32 %v2553, 0.17677669
    %v7707 = vmul.f32 %v2621, 0.17677669
    %v7708 = vmul.f32 %v2554, 0.17677669
    %v7709 = vmul.f32 %v2622, 0.17677669
    %v7710 = vmul.f32 %v2555, 0.17677669
    %v7711 = vmul.f32 %v2623, 0.17677669
    %v7712 = vmul.f32 %v2688, 0.17677669
    %v7713 = vmul.f32 %v2756, 0.17677669
    %v7714 = vmul.f32 %v2689, 0.17677669
    %v7715 = vmul.f32 %v2757, 0.17677669
    %v7716 = vmul.f32 %v2690, 0.17677669
    %v7717 = vmul.f32 %v2758, 0.17677669
    %v7718 = vmul.f32 %v2691, 0.17677669
    %v7719 = vmul.f32 %v2759, 0.17677669
    %v7720 = vmul.f32 %v2824, 0.17677669
    %v7721 = vmul.f32 %v2892, 0.17677669
    %v7722 = vmul.f32 %v2825, 0.17677669
    %v7723 = vmul.f32 %v2893, 0.17677669
    %v7724 = vmul.f32 %v2826, 0.17677669
    %v7725 = vmul.f32 %v2894, 0.17677669
    %v7726 = vmul.f32 %v2827, 0.17677669
    %v7727 = vmul.f32 %v2895, 0.17677669
    %v7728 = vmul.f32 %v2960, 0.17677669
    %v7729 = vmul.f32 %v3028, 0.17677669
    %v7730 = vmul.f32 %v2961, 0.17677669
    %v7731 = vmul.f32 %v3029, 0.17677669
    %v7732 = vmul.f32 %v2962, 0.17677669
    %v7733 = vmul.f32 %v3030, 0.17677669
    %v7734 = vmul.f32 %v2963, 0.17677669
    %v7735 = vmul.f32 %v3031, 0.17677669
    %v7736 = vpack.c.bf16 %v7705, %v7704
    %v7737 = vpack.c.bf16 %v7707, %v7706
    %v7738 = vpack.c.bf16 %v7709, %v7708
    %v7739 = vpack.c.bf16 %v7711, %v7710
    %v7740 = vpack.c.bf16 %v7713, %v7712
    %v7741 = vpack.c.bf16 %v7715, %v7714
    %v7742 = vpack.c.bf16 %v7717, %v7716
    %v7743 = vpack.c.bf16 %v7719, %v7718
    %v7744 = vpack.c.bf16 %v7721, %v7720
    %v7745 = vpack.c.bf16 %v7723, %v7722
    %v7746 = vpack.c.bf16 %v7725, %v7724
    %v7747 = vpack.c.bf16 %v7727, %v7726
    %v7748 = vpack.c.bf16 %v7729, %v7728
    %v7749 = vpack.c.bf16 %v7731, %v7730
    %v7750 = vpack.c.bf16 %v7733, %v7732
    %v7751 = vpack.c.bf16 %v7735, %v7734
    %v7752 = vpack.c.bf16 %v4412, %v4344
    %v7753 = vpack.c.bf16 %v4548, %v4480
    %v7754 = vpack.c.bf16 %v4413, %v4345
    %v7755 = vpack.c.bf16 %v4549, %v4481
    %v7756 = vpack.c.bf16 %v4414, %v4346
    %v7757 = vpack.c.bf16 %v4550, %v4482
    %v7758 = vpack.c.bf16 %v4415, %v4347
    %v7759 = vpack.c.bf16 %v4551, %v4483
    %v7760 = vpack.c.bf16 %v4684, %v4616
    %v7761 = vpack.c.bf16 %v4820, %v4752
    %v7762 = vpack.c.bf16 %v4685, %v4617
    %v7763 = vpack.c.bf16 %v4821, %v4753
    %v7764 = vpack.c.bf16 %v4686, %v4618
    %v7765 = vpack.c.bf16 %v4822, %v4754
    %v7766 = vpack.c.bf16 %v4687, %v4619
    %v7767 = vpack.c.bf16 %v4823, %v4755
    %v7768 = vpack.c.bf16 %v4956, %v4888
    %v7769 = vpack.c.bf16 %v5092, %v5024
    %v7770 = vpack.c.bf16 %v4957, %v4889
    %v7771 = vpack.c.bf16 %v5093, %v5025
    %v7772 = vpack.c.bf16 %v4958, %v4890
    %v7773 = vpack.c.bf16 %v5094, %v5026
    %v7774 = vpack.c.bf16 %v4959, %v4891
    %v7775 = vpack.c.bf16 %v5095, %v5027
    %v7776 = vpack.c.bf16 %v5228, %v5160
    %v7777 = vpack.c.bf16 %v5364, %v5296
    %v7778 = vpack.c.bf16 %v5229, %v5161
    %v7779 = vpack.c.bf16 %v5365, %v5297
    %v7780 = vpack.c.bf16 %v5230, %v5162
    %v7781 = vpack.c.bf16 %v5366, %v5298
    %v7782 = vpack.c.bf16 %v5231, %v5163
    %v7783 = vpack.c.bf16 %v5367, %v5299
    %vm7784 = vcmask 261120
    %v7786 = vsel %vm7784, %v7736, 0
    %v7789 = vsel %vm7784, %v7752, 0
    %v7792 = vsel %vm7784, %v7753, 0
    %7794 = vmatprep.subr.bf16.mxu0 0
    %7795 = vmatpush1.bf16.xpose.msra.mxu0 0
    %7796 = vmatprep.subr.bf16.mxu0 0
    %7797 = vmatpush1.bf16.xpose.msra.mxu0 0
    %7798 = vmatprep.subr.bf16.mxu0 0
    %7799 = vmatpush1.bf16.xpose.msra.mxu0 0
    %7800 = vmatprep.subr.bf16.mxu0 0
    %7801 = vmatpush1.bf16.xpose.msra.mxu0 0
    %7802 = vmatprep.subr.bf16.mxu0 0
    %7803 = vmatpush1.bf16.xpose.msra.mxu0 0
    %7804 = vmatprep.subr.bf16.mxu0 0
    %7805 = vmatpush1.bf16.xpose.msra.mxu0 0
    %7806 = vmatprep.subr.bf16.mxu0 0
    %7807 = vmatpush1.bf16.xpose.msra.mxu0 %v7792
    %7808 = vmatprep.subr.bf16.mxu0 0
    %7809 = vmatpush1.bf16.xpose.msra.mxu0 %v7789
    %7810 = vmatprep.subr.bf16.mxu0 0
    %7811 = vmatpush2.bf16.xpose.msra.mxu0 0
    %7812 = vmatprep.subr.bf16.mxu0 0
    %7813 = vmatpush2.bf16.xpose.msra.mxu0 0
    %7814 = vmatprep.subr.bf16.mxu0 0
    %7815 = vmatpush2.bf16.xpose.msra.mxu0 0
    %7816 = vmatprep.subr.bf16.mxu0 0
    %7817 = vmatpush2.bf16.xpose.msra.mxu0 0
    %7818 = vmatprep.subr.bf16.mxu0 0
    %7819 = vmatpush2.bf16.xpose.msra.mxu0 0
    %7820 = vmatprep.subr.bf16.mxu0 0
    %7821 = vmatpush2.bf16.xpose.msra.mxu0 0
    %7822 = vmatprep.subr.bf16.mxu0 0
    %7823 = vmatpush2.bf16.xpose.msra.mxu0 0
    %7824 = vmatprep.subr.bf16.mxu0 0
    %7825 = vmatpush2.bf16.xpose.msra.mxu0 0
    %7826 = vmatprep.mubr.bf16.mxu0 0
    %7827 = vmatmul.mubr.bf16.gmra.mxu0 %v7786
    %v7828 = vpop.f32.mrf.mxu0
    %v7829 = vadd.f32 0.0, %v7828
    %v7830 = vpop.f32.mrf.mxu0
    %v7831 = vpop.f32.mrf.mxu0
    %v7832 = vadd.f32 0.0, %v7831
    %v7833 = vpop.f32.mrf.mxu0
    %7834 = vdwg.mxu0
    %v7836 = vsel %vm7784, %v7737, 0
    %v7839 = vsel %vm7784, %v7754, 0
    %v7842 = vsel %vm7784, %v7755, 0
    %7844 = vmatprep.subr.bf16.mxu0 0
    %7845 = vmatpush1.bf16.xpose.msra.mxu0 0
    %7846 = vmatprep.subr.bf16.mxu0 0
    %7847 = vmatpush1.bf16.xpose.msra.mxu0 0
    %7848 = vmatprep.subr.bf16.mxu0 0
    %7849 = vmatpush1.bf16.xpose.msra.mxu0 0
    %7850 = vmatprep.subr.bf16.mxu0 0
    %7851 = vmatpush1.bf16.xpose.msra.mxu0 0
    %7852 = vmatprep.subr.bf16.mxu0 0
    %7853 = vmatpush1.bf16.xpose.msra.mxu0 0
    %7854 = vmatprep.subr.bf16.mxu0 0
    %7855 = vmatpush1.bf16.xpose.msra.mxu0 0
    %7856 = vmatprep.subr.bf16.mxu0 0
    %7857 = vmatpush1.bf16.xpose.msra.mxu0 %v7842
    %7858 = vmatprep.subr.bf16.mxu0 0
    %7859 = vmatpush1.bf16.xpose.msra.mxu0 %v7839
    %7860 = vmatprep.subr.bf16.mxu0 0
    %7861 = vmatpush2.bf16.xpose.msra.mxu0 0
    %7862 = vmatprep.subr.bf16.mxu0 0
    %7863 = vmatpush2.bf16.xpose.msra.mxu0 0
    %7864 = vmatprep.subr.bf16.mxu0 0
    %7865 = vmatpush2.bf16.xpose.msra.mxu0 0
    %7866 = vmatprep.subr.bf16.mxu0 0
    %7867 = vmatpush2.bf16.xpose.msra.mxu0 0
    %7868 = vmatprep.subr.bf16.mxu0 0
    %7869 = vmatpush2.bf16.xpose.msra.mxu0 0
    %7870 = vmatprep.subr.bf16.mxu0 0
    %7871 = vmatpush2.bf16.xpose.msra.mxu0 0
    %7872 = vmatprep.subr.bf16.mxu0 0
    %7873 = vmatpush2.bf16.xpose.msra.mxu0 0
    %7874 = vmatprep.subr.bf16.mxu0 0
    %7875 = vmatpush2.bf16.xpose.msra.mxu0 0
    %7876 = vmatprep.mubr.bf16.mxu0 0
    %7877 = vmatmul.mubr.bf16.gmra.mxu0 %v7836
    %v7878 = vpop.f32.mrf.mxu0
    %v7879 = vadd.f32 0.0, %v7878
    %v7880 = vpop.f32.mrf.mxu0
    %v7881 = vpop.f32.mrf.mxu0
    %v7882 = vadd.f32 0.0, %v7881
    %v7883 = vpop.f32.mrf.mxu0
    %7884 = vdwg.mxu0
    %v7886 = vsel %vm7784, %v7738, 0
    %v7889 = vsel %vm7784, %v7756, 0
    %v7892 = vsel %vm7784, %v7757, 0
    %7894 = vmatprep.subr.bf16.mxu0 0
    %7895 = vmatpush1.bf16.xpose.msra.mxu0 0
    %7896 = vmatprep.subr.bf16.mxu0 0
    %7897 = vmatpush1.bf16.xpose.msra.mxu0 0
    %7898 = vmatprep.subr.bf16.mxu0 0
    %7899 = vmatpush1.bf16.xpose.msra.mxu0 0
    %7900 = vmatprep.subr.bf16.mxu0 0
    %7901 = vmatpush1.bf16.xpose.msra.mxu0 0
    %7902 = vmatprep.subr.bf16.mxu0 0
    %7903 = vmatpush1.bf16.xpose.msra.mxu0 0
    %7904 = vmatprep.subr.bf16.mxu0 0
    %7905 = vmatpush1.bf16.xpose.msra.mxu0 0
    %7906 = vmatprep.subr.bf16.mxu0 0
    %7907 = vmatpush1.bf16.xpose.msra.mxu0 %v7892
    %7908 = vmatprep.subr.bf16.mxu0 0
    %7909 = vmatpush1.bf16.xpose.msra.mxu0 %v7889
    %7910 = vmatprep.subr.bf16.mxu0 0
    %7911 = vmatpush2.bf16.xpose.msra.mxu0 0
    %7912 = vmatprep.subr.bf16.mxu0 0
    %7913 = vmatpush2.bf16.xpose.msra.mxu0 0
    %7914 = vmatprep.subr.bf16.mxu0 0
    %7915 = vmatpush2.bf16.xpose.msra.mxu0 0
    %7916 = vmatprep.subr.bf16.mxu0 0
    %7917 = vmatpush2.bf16.xpose.msra.mxu0 0
    %7918 = vmatprep.subr.bf16.mxu0 0
    %7919 = vmatpush2.bf16.xpose.msra.mxu0 0
    %7920 = vmatprep.subr.bf16.mxu0 0
    %7921 = vmatpush2.bf16.xpose.msra.mxu0 0
    %7922 = vmatprep.subr.bf16.mxu0 0
    %7923 = vmatpush2.bf16.xpose.msra.mxu0 0
    %7924 = vmatprep.subr.bf16.mxu0 0
    %7925 = vmatpush2.bf16.xpose.msra.mxu0 0
    %7926 = vmatprep.mubr.bf16.mxu0 0
    %7927 = vmatmul.mubr.bf16.gmra.mxu0 %v7886
    %v7928 = vpop.f32.mrf.mxu0
    %v7929 = vadd.f32 0.0, %v7928
    %v7930 = vpop.f32.mrf.mxu0
    %v7931 = vpop.f32.mrf.mxu0
    %v7932 = vadd.f32 0.0, %v7931
    %v7933 = vpop.f32.mrf.mxu0
    %7934 = vdwg.mxu0
    %v7936 = vsel %vm7784, %v7739, 0
    %v7939 = vsel %vm7784, %v7758, 0
    %v7942 = vsel %vm7784, %v7759, 0
    %7944 = vmatprep.subr.bf16.mxu0 0
    %7945 = vmatpush1.bf16.xpose.msra.mxu0 0
    %7946 = vmatprep.subr.bf16.mxu0 0
    %7947 = vmatpush1.bf16.xpose.msra.mxu0 0
    %7948 = vmatprep.subr.bf16.mxu0 0
    %7949 = vmatpush1.bf16.xpose.msra.mxu0 0
    %7950 = vmatprep.subr.bf16.mxu0 0
    %7951 = vmatpush1.bf16.xpose.msra.mxu0 0
    %7952 = vmatprep.subr.bf16.mxu0 0
    %7953 = vmatpush1.bf16.xpose.msra.mxu0 0
    %7954 = vmatprep.subr.bf16.mxu0 0
    %7955 = vmatpush1.bf16.xpose.msra.mxu0 0
    %7956 = vmatprep.subr.bf16.mxu0 0
    %7957 = vmatpush1.bf16.xpose.msra.mxu0 %v7942
    %7958 = vmatprep.subr.bf16.mxu0 0
    %7959 = vmatpush1.bf16.xpose.msra.mxu0 %v7939
    %7960 = vmatprep.subr.bf16.mxu0 0
    %7961 = vmatpush2.bf16.xpose.msra.mxu0 0
    %7962 = vmatprep.subr.bf16.mxu0 0
    %7963 = vmatpush2.bf16.xpose.msra.mxu0 0
    %7964 = vmatprep.subr.bf16.mxu0 0
    %7965 = vmatpush2.bf16.xpose.msra.mxu0 0
    %7966 = vmatprep.subr.bf16.mxu0 0
    %7967 = vmatpush2.bf16.xpose.msra.mxu0 0
    %7968 = vmatprep.subr.bf16.mxu0 0
    %7969 = vmatpush2.bf16.xpose.msra.mxu0 0
    %7970 = vmatprep.subr.bf16.mxu0 0
    %7971 = vmatpush2.bf16.xpose.msra.mxu0 0
    %7972 = vmatprep.subr.bf16.mxu0 0
    %7973 = vmatpush2.bf16.xpose.msra.mxu0 0
    %7974 = vmatprep.subr.bf16.mxu0 0
    %7975 = vmatpush2.bf16.xpose.msra.mxu0 0
    %7976 = vmatprep.mubr.bf16.mxu0 0
    %7977 = vmatmul.mubr.bf16.gmra.mxu0 %v7936
    %v7978 = vpop.f32.mrf.mxu0
    %v7979 = vadd.f32 0.0, %v7978
    %v7980 = vpop.f32.mrf.mxu0
    %v7981 = vpop.f32.mrf.mxu0
    %v7982 = vadd.f32 0.0, %v7981
    %v7983 = vpop.f32.mrf.mxu0
    %7984 = vdwg.mxu0
    %v7986 = vsel %vm7784, %v7740, 0
    %v7989 = vsel %vm7784, %v7760, 0
    %v7992 = vsel %vm7784, %v7761, 0
    %7994 = vmatprep.subr.bf16.mxu0 0
    %7995 = vmatpush1.bf16.xpose.msra.mxu0 0
    %7996 = vmatprep.subr.bf16.mxu0 0
    %7997 = vmatpush1.bf16.xpose.msra.mxu0 0
    %7998 = vmatprep.subr.bf16.mxu0 0
    %7999 = vmatpush1.bf16.xpose.msra.mxu0 0
    %8000 = vmatprep.subr.bf16.mxu0 0
    %8001 = vmatpush1.bf16.xpose.msra.mxu0 0
    %8002 = vmatprep.subr.bf16.mxu0 0
    %8003 = vmatpush1.bf16.xpose.msra.mxu0 0
    %8004 = vmatprep.subr.bf16.mxu0 0
    %8005 = vmatpush1.bf16.xpose.msra.mxu0 0
    %8006 = vmatprep.subr.bf16.mxu0 0
    %8007 = vmatpush1.bf16.xpose.msra.mxu0 %v7992
    %8008 = vmatprep.subr.bf16.mxu0 0
    %8009 = vmatpush1.bf16.xpose.msra.mxu0 %v7989
    %8010 = vmatprep.subr.bf16.mxu0 0
    %8011 = vmatpush2.bf16.xpose.msra.mxu0 0
    %8012 = vmatprep.subr.bf16.mxu0 0
    %8013 = vmatpush2.bf16.xpose.msra.mxu0 0
    %8014 = vmatprep.subr.bf16.mxu0 0
    %8015 = vmatpush2.bf16.xpose.msra.mxu0 0
    %8016 = vmatprep.subr.bf16.mxu0 0
    %8017 = vmatpush2.bf16.xpose.msra.mxu0 0
    %8018 = vmatprep.subr.bf16.mxu0 0
    %8019 = vmatpush2.bf16.xpose.msra.mxu0 0
    %8020 = vmatprep.subr.bf16.mxu0 0
    %8021 = vmatpush2.bf16.xpose.msra.mxu0 0
    %8022 = vmatprep.subr.bf16.mxu0 0
    %8023 = vmatpush2.bf16.xpose.msra.mxu0 0
    %8024 = vmatprep.subr.bf16.mxu0 0
    %8025 = vmatpush2.bf16.xpose.msra.mxu0 0
    %8026 = vmatprep.mubr.bf16.mxu0 0
    %8027 = vmatmul.mubr.bf16.gmra.mxu0 %v7986
    %v8028 = vpop.f32.mrf.mxu0
    %v8029 = vadd.f32 0.0, %v8028
    %v8030 = vpop.f32.mrf.mxu0
    %v8031 = vpop.f32.mrf.mxu0
    %v8032 = vadd.f32 0.0, %v8031
    %v8033 = vpop.f32.mrf.mxu0
    %8034 = vdwg.mxu0
    %v8036 = vsel %vm7784, %v7741, 0
    %v8039 = vsel %vm7784, %v7762, 0
    %v8042 = vsel %vm7784, %v7763, 0
    %8044 = vmatprep.subr.bf16.mxu0 0
    %8045 = vmatpush1.bf16.xpose.msra.mxu0 0
    %8046 = vmatprep.subr.bf16.mxu0 0
    %8047 = vmatpush1.bf16.xpose.msra.mxu0 0
    %8048 = vmatprep.subr.bf16.mxu0 0
    %8049 = vmatpush1.bf16.xpose.msra.mxu0 0
    %8050 = vmatprep.subr.bf16.mxu0 0
    %8051 = vmatpush1.bf16.xpose.msra.mxu0 0
    %8052 = vmatprep.subr.bf16.mxu0 0
    %8053 = vmatpush1.bf16.xpose.msra.mxu0 0
    %8054 = vmatprep.subr.bf16.mxu0 0
    %8055 = vmatpush1.bf16.xpose.msra.mxu0 0
    %8056 = vmatprep.subr.bf16.mxu0 0
    %8057 = vmatpush1.bf16.xpose.msra.mxu0 %v8042
    %8058 = vmatprep.subr.bf16.mxu0 0
    %8059 = vmatpush1.bf16.xpose.msra.mxu0 %v8039
    %8060 = vmatprep.subr.bf16.mxu0 0
    %8061 = vmatpush2.bf16.xpose.msra.mxu0 0
    %8062 = vmatprep.subr.bf16.mxu0 0
    %8063 = vmatpush2.bf16.xpose.msra.mxu0 0
    %8064 = vmatprep.subr.bf16.mxu0 0
    %8065 = vmatpush2.bf16.xpose.msra.mxu0 0
    %8066 = vmatprep.subr.bf16.mxu0 0
    %8067 = vmatpush2.bf16.xpose.msra.mxu0 0
    %8068 = vmatprep.subr.bf16.mxu0 0
    %8069 = vmatpush2.bf16.xpose.msra.mxu0 0
    %8070 = vmatprep.subr.bf16.mxu0 0
    %8071 = vmatpush2.bf16.xpose.msra.mxu0 0
    %8072 = vmatprep.subr.bf16.mxu0 0
    %8073 = vmatpush2.bf16.xpose.msra.mxu0 0
    %8074 = vmatprep.subr.bf16.mxu0 0
    %8075 = vmatpush2.bf16.xpose.msra.mxu0 0
    %8076 = vmatprep.mubr.bf16.mxu0 0
    %8077 = vmatmul.mubr.bf16.gmra.mxu0 %v8036
    %v8078 = vpop.f32.mrf.mxu0
    %v8079 = vadd.f32 0.0, %v8078
    %v8080 = vpop.f32.mrf.mxu0
    %v8081 = vpop.f32.mrf.mxu0
    %v8082 = vadd.f32 0.0, %v8081
    %v8083 = vpop.f32.mrf.mxu0
    %8084 = vdwg.mxu0
    %v8086 = vsel %vm7784, %v7742, 0
    %v8089 = vsel %vm7784, %v7764, 0
    %v8092 = vsel %vm7784, %v7765, 0
    %8094 = vmatprep.subr.bf16.mxu0 0
    %8095 = vmatpush1.bf16.xpose.msra.mxu0 0
    %8096 = vmatprep.subr.bf16.mxu0 0
    %8097 = vmatpush1.bf16.xpose.msra.mxu0 0
    %8098 = vmatprep.subr.bf16.mxu0 0
    %8099 = vmatpush1.bf16.xpose.msra.mxu0 0
    %8100 = vmatprep.subr.bf16.mxu0 0
    %8101 = vmatpush1.bf16.xpose.msra.mxu0 0
    %8102 = vmatprep.subr.bf16.mxu0 0
    %8103 = vmatpush1.bf16.xpose.msra.mxu0 0
    %8104 = vmatprep.subr.bf16.mxu0 0
    %8105 = vmatpush1.bf16.xpose.msra.mxu0 0
    %8106 = vmatprep.subr.bf16.mxu0 0
    %8107 = vmatpush1.bf16.xpose.msra.mxu0 %v8092
    %8108 = vmatprep.subr.bf16.mxu0 0
    %8109 = vmatpush1.bf16.xpose.msra.mxu0 %v8089
    %8110 = vmatprep.subr.bf16.mxu0 0
    %8111 = vmatpush2.bf16.xpose.msra.mxu0 0
    %8112 = vmatprep.subr.bf16.mxu0 0
    %8113 = vmatpush2.bf16.xpose.msra.mxu0 0
    %8114 = vmatprep.subr.bf16.mxu0 0
    %8115 = vmatpush2.bf16.xpose.msra.mxu0 0
    %8116 = vmatprep.subr.bf16.mxu0 0
    %8117 = vmatpush2.bf16.xpose.msra.mxu0 0
    %8118 = vmatprep.subr.bf16.mxu0 0
    %8119 = vmatpush2.bf16.xpose.msra.mxu0 0
    %8120 = vmatprep.subr.bf16.mxu0 0
    %8121 = vmatpush2.bf16.xpose.msra.mxu0 0
    %8122 = vmatprep.subr.bf16.mxu0 0
    %8123 = vmatpush2.bf16.xpose.msra.mxu0 0
    %8124 = vmatprep.subr.bf16.mxu0 0
    %8125 = vmatpush2.bf16.xpose.msra.mxu0 0
    %8126 = vmatprep.mubr.bf16.mxu0 0
    %8127 = vmatmul.mubr.bf16.gmra.mxu0 %v8086
    %v8128 = vpop.f32.mrf.mxu0
    %v8129 = vadd.f32 0.0, %v8128
    %v8130 = vpop.f32.mrf.mxu0
    %v8131 = vpop.f32.mrf.mxu0
    %v8132 = vadd.f32 0.0, %v8131
    %v8133 = vpop.f32.mrf.mxu0
    %8134 = vdwg.mxu0
    %v8136 = vsel %vm7784, %v7743, 0
    %v8139 = vsel %vm7784, %v7766, 0
    %v8142 = vsel %vm7784, %v7767, 0
    %8144 = vmatprep.subr.bf16.mxu0 0
    %8145 = vmatpush1.bf16.xpose.msra.mxu0 0
    %8146 = vmatprep.subr.bf16.mxu0 0
    %8147 = vmatpush1.bf16.xpose.msra.mxu0 0
    %8148 = vmatprep.subr.bf16.mxu0 0
    %8149 = vmatpush1.bf16.xpose.msra.mxu0 0
    %8150 = vmatprep.subr.bf16.mxu0 0
    %8151 = vmatpush1.bf16.xpose.msra.mxu0 0
    %8152 = vmatprep.subr.bf16.mxu0 0
    %8153 = vmatpush1.bf16.xpose.msra.mxu0 0
    %8154 = vmatprep.subr.bf16.mxu0 0
    %8155 = vmatpush1.bf16.xpose.msra.mxu0 0
    %8156 = vmatprep.subr.bf16.mxu0 0
    %8157 = vmatpush1.bf16.xpose.msra.mxu0 %v8142
    %8158 = vmatprep.subr.bf16.mxu0 0
    %8159 = vmatpush1.bf16.xpose.msra.mxu0 %v8139
    %8160 = vmatprep.subr.bf16.mxu0 0
    %8161 = vmatpush2.bf16.xpose.msra.mxu0 0
    %8162 = vmatprep.subr.bf16.mxu0 0
    %8163 = vmatpush2.bf16.xpose.msra.mxu0 0
    %8164 = vmatprep.subr.bf16.mxu0 0
    %8165 = vmatpush2.bf16.xpose.msra.mxu0 0
    %8166 = vmatprep.subr.bf16.mxu0 0
    %8167 = vmatpush2.bf16.xpose.msra.mxu0 0
    %8168 = vmatprep.subr.bf16.mxu0 0
    %8169 = vmatpush2.bf16.xpose.msra.mxu0 0
    %8170 = vmatprep.subr.bf16.mxu0 0
    %8171 = vmatpush2.bf16.xpose.msra.mxu0 0
    %8172 = vmatprep.subr.bf16.mxu0 0
    %8173 = vmatpush2.bf16.xpose.msra.mxu0 0
    %8174 = vmatprep.subr.bf16.mxu0 0
    %8175 = vmatpush2.bf16.xpose.msra.mxu0 0
    %8176 = vmatprep.mubr.bf16.mxu0 0
    %8177 = vmatmul.mubr.bf16.gmra.mxu0 %v8136
    %v8178 = vpop.f32.mrf.mxu0
    %v8179 = vadd.f32 0.0, %v8178
    %v8180 = vpop.f32.mrf.mxu0
    %v8181 = vpop.f32.mrf.mxu0
    %v8182 = vadd.f32 0.0, %v8181
    %v8183 = vpop.f32.mrf.mxu0
    %8184 = vdwg.mxu0
    %v8186 = vsel %vm7784, %v7744, 0
    %v8189 = vsel %vm7784, %v7768, 0
    %v8192 = vsel %vm7784, %v7769, 0
    %8194 = vmatprep.subr.bf16.mxu0 0
    %8195 = vmatpush1.bf16.xpose.msra.mxu0 0
    %8196 = vmatprep.subr.bf16.mxu0 0
    %8197 = vmatpush1.bf16.xpose.msra.mxu0 0
    %8198 = vmatprep.subr.bf16.mxu0 0
    %8199 = vmatpush1.bf16.xpose.msra.mxu0 0
    %8200 = vmatprep.subr.bf16.mxu0 0
    %8201 = vmatpush1.bf16.xpose.msra.mxu0 0
    %8202 = vmatprep.subr.bf16.mxu0 0
    %8203 = vmatpush1.bf16.xpose.msra.mxu0 0
    %8204 = vmatprep.subr.bf16.mxu0 0
    %8205 = vmatpush1.bf16.xpose.msra.mxu0 0
    %8206 = vmatprep.subr.bf16.mxu0 0
    %8207 = vmatpush1.bf16.xpose.msra.mxu0 %v8192
    %8208 = vmatprep.subr.bf16.mxu0 0
    %8209 = vmatpush1.bf16.xpose.msra.mxu0 %v8189
    %8210 = vmatprep.subr.bf16.mxu0 0
    %8211 = vmatpush2.bf16.xpose.msra.mxu0 0
    %8212 = vmatprep.subr.bf16.mxu0 0
    %8213 = vmatpush2.bf16.xpose.msra.mxu0 0
    %8214 = vmatprep.subr.bf16.mxu0 0
    %8215 = vmatpush2.bf16.xpose.msra.mxu0 0
    %8216 = vmatprep.subr.bf16.mxu0 0
    %8217 = vmatpush2.bf16.xpose.msra.mxu0 0
    %8218 = vmatprep.subr.bf16.mxu0 0
    %8219 = vmatpush2.bf16.xpose.msra.mxu0 0
    %8220 = vmatprep.subr.bf16.mxu0 0
    %8221 = vmatpush2.bf16.xpose.msra.mxu0 0
    %8222 = vmatprep.subr.bf16.mxu0 0
    %8223 = vmatpush2.bf16.xpose.msra.mxu0 0
    %8224 = vmatprep.subr.bf16.mxu0 0
    %8225 = vmatpush2.bf16.xpose.msra.mxu0 0
    %8226 = vmatprep.mubr.bf16.mxu0 0
    %8227 = vmatmul.mubr.bf16.gmra.mxu0 %v8186
    %v8228 = vpop.f32.mrf.mxu0
    %v8229 = vadd.f32 0.0, %v8228
    %v8230 = vpop.f32.mrf.mxu0
    %v8231 = vpop.f32.mrf.mxu0
    %v8232 = vadd.f32 0.0, %v8231
    %v8233 = vpop.f32.mrf.mxu0
    %8234 = vdwg.mxu0
    %v8236 = vsel %vm7784, %v7745, 0
    %v8239 = vsel %vm7784, %v7770, 0
    %v8242 = vsel %vm7784, %v7771, 0
    %8244 = vmatprep.subr.bf16.mxu0 0
    %8245 = vmatpush1.bf16.xpose.msra.mxu0 0
    %8246 = vmatprep.subr.bf16.mxu0 0
    %8247 = vmatpush1.bf16.xpose.msra.mxu0 0
    %8248 = vmatprep.subr.bf16.mxu0 0
    %8249 = vmatpush1.bf16.xpose.msra.mxu0 0
    %8250 = vmatprep.subr.bf16.mxu0 0
    %8251 = vmatpush1.bf16.xpose.msra.mxu0 0
    %8252 = vmatprep.subr.bf16.mxu0 0
    %8253 = vmatpush1.bf16.xpose.msra.mxu0 0
    %8254 = vmatprep.subr.bf16.mxu0 0
    %8255 = vmatpush1.bf16.xpose.msra.mxu0 0
    %8256 = vmatprep.subr.bf16.mxu0 0
    %8257 = vmatpush1.bf16.xpose.msra.mxu0 %v8242
    %8258 = vmatprep.subr.bf16.mxu0 0
    %8259 = vmatpush1.bf16.xpose.msra.mxu0 %v8239
    %8260 = vmatprep.subr.bf16.mxu0 0
    %8261 = vmatpush2.bf16.xpose.msra.mxu0 0
    %8262 = vmatprep.subr.bf16.mxu0 0
    %8263 = vmatpush2.bf16.xpose.msra.mxu0 0
    %8264 = vmatprep.subr.bf16.mxu0 0
    %8265 = vmatpush2.bf16.xpose.msra.mxu0 0
    %8266 = vmatprep.subr.bf16.mxu0 0
    %8267 = vmatpush2.bf16.xpose.msra.mxu0 0
    %8268 = vmatprep.subr.bf16.mxu0 0
    %8269 = vmatpush2.bf16.xpose.msra.mxu0 0
    %8270 = vmatprep.subr.bf16.mxu0 0
    %8271 = vmatpush2.bf16.xpose.msra.mxu0 0
    %8272 = vmatprep.subr.bf16.mxu0 0
    %8273 = vmatpush2.bf16.xpose.msra.mxu0 0
    %8274 = vmatprep.subr.bf16.mxu0 0
    %8275 = vmatpush2.bf16.xpose.msra.mxu0 0
    %8276 = vmatprep.mubr.bf16.mxu0 0
    %8277 = vmatmul.mubr.bf16.gmra.mxu0 %v8236
    %v8278 = vpop.f32.mrf.mxu0
    %v8279 = vadd.f32 0.0, %v8278
    %v8280 = vpop.f32.mrf.mxu0
    %v8281 = vpop.f32.mrf.mxu0
    %v8282 = vadd.f32 0.0, %v8281
    %v8283 = vpop.f32.mrf.mxu0
    %8284 = vdwg.mxu0
    %v8286 = vsel %vm7784, %v7746, 0
    %v8289 = vsel %vm7784, %v7772, 0
    %v8292 = vsel %vm7784, %v7773, 0
    %8294 = vmatprep.subr.bf16.mxu0 0
    %8295 = vmatpush1.bf16.xpose.msra.mxu0 0
    %8296 = vmatprep.subr.bf16.mxu0 0
    %8297 = vmatpush1.bf16.xpose.msra.mxu0 0
    %8298 = vmatprep.subr.bf16.mxu0 0
    %8299 = vmatpush1.bf16.xpose.msra.mxu0 0
    %8300 = vmatprep.subr.bf16.mxu0 0
    %8301 = vmatpush1.bf16.xpose.msra.mxu0 0
    %8302 = vmatprep.subr.bf16.mxu0 0
    %8303 = vmatpush1.bf16.xpose.msra.mxu0 0
    %8304 = vmatprep.subr.bf16.mxu0 0
    %8305 = vmatpush1.bf16.xpose.msra.mxu0 0
    %8306 = vmatprep.subr.bf16.mxu0 0
    %8307 = vmatpush1.bf16.xpose.msra.mxu0 %v8292
    %8308 = vmatprep.subr.bf16.mxu0 0
    %8309 = vmatpush1.bf16.xpose.msra.mxu0 %v8289
    %8310 = vmatprep.subr.bf16.mxu0 0
    %8311 = vmatpush2.bf16.xpose.msra.mxu0 0
    %8312 = vmatprep.subr.bf16.mxu0 0
    %8313 = vmatpush2.bf16.xpose.msra.mxu0 0
    %8314 = vmatprep.subr.bf16.mxu0 0
    %8315 = vmatpush2.bf16.xpose.msra.mxu0 0
    %8316 = vmatprep.subr.bf16.mxu0 0
    %8317 = vmatpush2.bf16.xpose.msra.mxu0 0
    %8318 = vmatprep.subr.bf16.mxu0 0
    %8319 = vmatpush2.bf16.xpose.msra.mxu0 0
    %8320 = vmatprep.subr.bf16.mxu0 0
    %8321 = vmatpush2.bf16.xpose.msra.mxu0 0
    %8322 = vmatprep.subr.bf16.mxu0 0
    %8323 = vmatpush2.bf16.xpose.msra.mxu0 0
    %8324 = vmatprep.subr.bf16.mxu0 0
    %8325 = vmatpush2.bf16.xpose.msra.mxu0 0
    %8326 = vmatprep.mubr.bf16.mxu0 0
    %8327 = vmatmul.mubr.bf16.gmra.mxu0 %v8286
    %v8328 = vpop.f32.mrf.mxu0
    %v8329 = vadd.f32 0.0, %v8328
    %v8330 = vpop.f32.mrf.mxu0
    %v8331 = vpop.f32.mrf.mxu0
    %v8332 = vadd.f32 0.0, %v8331
    %v8333 = vpop.f32.mrf.mxu0
    %8334 = vdwg.mxu0
    %v8336 = vsel %vm7784, %v7747, 0
    %v8339 = vsel %vm7784, %v7774, 0
    %v8342 = vsel %vm7784, %v7775, 0
    %8344 = vmatprep.subr.bf16.mxu0 0
    %8345 = vmatpush1.bf16.xpose.msra.mxu0 0
    %8346 = vmatprep.subr.bf16.mxu0 0
    %8347 = vmatpush1.bf16.xpose.msra.mxu0 0
    %8348 = vmatprep.subr.bf16.mxu0 0
    %8349 = vmatpush1.bf16.xpose.msra.mxu0 0
    %8350 = vmatprep.subr.bf16.mxu0 0
    %8351 = vmatpush1.bf16.xpose.msra.mxu0 0
    %8352 = vmatprep.subr.bf16.mxu0 0
    %8353 = vmatpush1.bf16.xpose.msra.mxu0 0
    %8354 = vmatprep.subr.bf16.mxu0 0
    %8355 = vmatpush1.bf16.xpose.msra.mxu0 0
    %8356 = vmatprep.subr.bf16.mxu0 0
    %8357 = vmatpush1.bf16.xpose.msra.mxu0 %v8342
    %8358 = vmatprep.subr.bf16.mxu0 0
    %8359 = vmatpush1.bf16.xpose.msra.mxu0 %v8339
    %8360 = vmatprep.subr.bf16.mxu0 0
    %8361 = vmatpush2.bf16.xpose.msra.mxu0 0
    %8362 = vmatprep.subr.bf16.mxu0 0
    %8363 = vmatpush2.bf16.xpose.msra.mxu0 0
    %8364 = vmatprep.subr.bf16.mxu0 0
    %8365 = vmatpush2.bf16.xpose.msra.mxu0 0
    %8366 = vmatprep.subr.bf16.mxu0 0
    %8367 = vmatpush2.bf16.xpose.msra.mxu0 0
    %8368 = vmatprep.subr.bf16.mxu0 0
    %8369 = vmatpush2.bf16.xpose.msra.mxu0 0
    %8370 = vmatprep.subr.bf16.mxu0 0
    %8371 = vmatpush2.bf16.xpose.msra.mxu0 0
    %8372 = vmatprep.subr.bf16.mxu0 0
    %8373 = vmatpush2.bf16.xpose.msra.mxu0 0
    %8374 = vmatprep.subr.bf16.mxu0 0
    %8375 = vmatpush2.bf16.xpose.msra.mxu0 0
    %8376 = vmatprep.mubr.bf16.mxu0 0
    %8377 = vmatmul.mubr.bf16.gmra.mxu0 %v8336
    %v8378 = vpop.f32.mrf.mxu0
    %v8379 = vadd.f32 0.0, %v8378
    %v8380 = vpop.f32.mrf.mxu0
    %v8381 = vpop.f32.mrf.mxu0
    %v8382 = vadd.f32 0.0, %v8381
    %v8383 = vpop.f32.mrf.mxu0
    %8384 = vdwg.mxu0
    %v8386 = vsel %vm7784, %v7748, 0
    %v8389 = vsel %vm7784, %v7776, 0
    %v8392 = vsel %vm7784, %v7777, 0
    %8394 = vmatprep.subr.bf16.mxu0 0
    %8395 = vmatpush1.bf16.xpose.msra.mxu0 0
    %8396 = vmatprep.subr.bf16.mxu0 0
    %8397 = vmatpush1.bf16.xpose.msra.mxu0 0
    %8398 = vmatprep.subr.bf16.mxu0 0
    %8399 = vmatpush1.bf16.xpose.msra.mxu0 0
    %8400 = vmatprep.subr.bf16.mxu0 0
    %8401 = vmatpush1.bf16.xpose.msra.mxu0 0
    %8402 = vmatprep.subr.bf16.mxu0 0
    %8403 = vmatpush1.bf16.xpose.msra.mxu0 0
    %8404 = vmatprep.subr.bf16.mxu0 0
    %8405 = vmatpush1.bf16.xpose.msra.mxu0 0
    %8406 = vmatprep.subr.bf16.mxu0 0
    %8407 = vmatpush1.bf16.xpose.msra.mxu0 %v8392
    %8408 = vmatprep.subr.bf16.mxu0 0
    %8409 = vmatpush1.bf16.xpose.msra.mxu0 %v8389
    %8410 = vmatprep.subr.bf16.mxu0 0
    %8411 = vmatpush2.bf16.xpose.msra.mxu0 0
    %8412 = vmatprep.subr.bf16.mxu0 0
    %8413 = vmatpush2.bf16.xpose.msra.mxu0 0
    %8414 = vmatprep.subr.bf16.mxu0 0
    %8415 = vmatpush2.bf16.xpose.msra.mxu0 0
    %8416 = vmatprep.subr.bf16.mxu0 0
    %8417 = vmatpush2.bf16.xpose.msra.mxu0 0
    %8418 = vmatprep.subr.bf16.mxu0 0
    %8419 = vmatpush2.bf16.xpose.msra.mxu0 0
    %8420 = vmatprep.subr.bf16.mxu0 0
    %8421 = vmatpush2.bf16.xpose.msra.mxu0 0
    %8422 = vmatprep.subr.bf16.mxu0 0
    %8423 = vmatpush2.bf16.xpose.msra.mxu0 0
    %8424 = vmatprep.subr.bf16.mxu0 0
    %8425 = vmatpush2.bf16.xpose.msra.mxu0 0
    %8426 = vmatprep.mubr.bf16.mxu0 0
    %8427 = vmatmul.mubr.bf16.gmra.mxu0 %v8386
    %v8428 = vpop.f32.mrf.mxu0
    %v8429 = vadd.f32 0.0, %v8428
    %v8430 = vpop.f32.mrf.mxu0
    %v8431 = vpop.f32.mrf.mxu0
    %v8432 = vadd.f32 0.0, %v8431
    %v8433 = vpop.f32.mrf.mxu0
    %8434 = vdwg.mxu0
    %v8436 = vsel %vm7784, %v7749, 0
    %v8439 = vsel %vm7784, %v7778, 0
    %v8442 = vsel %vm7784, %v7779, 0
    %8444 = vmatprep.subr.bf16.mxu0 0
    %8445 = vmatpush1.bf16.xpose.msra.mxu0 0
    %8446 = vmatprep.subr.bf16.mxu0 0
    %8447 = vmatpush1.bf16.xpose.msra.mxu0 0
    %8448 = vmatprep.subr.bf16.mxu0 0
    %8449 = vmatpush1.bf16.xpose.msra.mxu0 0
    %8450 = vmatprep.subr.bf16.mxu0 0
    %8451 = vmatpush1.bf16.xpose.msra.mxu0 0
    %8452 = vmatprep.subr.bf16.mxu0 0
    %8453 = vmatpush1.bf16.xpose.msra.mxu0 0
    %8454 = vmatprep.subr.bf16.mxu0 0
    %8455 = vmatpush1.bf16.xpose.msra.mxu0 0
    %8456 = vmatprep.subr.bf16.mxu0 0
    %8457 = vmatpush1.bf16.xpose.msra.mxu0 %v8442
    %8458 = vmatprep.subr.bf16.mxu0 0
    %8459 = vmatpush1.bf16.xpose.msra.mxu0 %v8439
    %8460 = vmatprep.subr.bf16.mxu0 0
    %8461 = vmatpush2.bf16.xpose.msra.mxu0 0
    %8462 = vmatprep.subr.bf16.mxu0 0
    %8463 = vmatpush2.bf16.xpose.msra.mxu0 0
    %8464 = vmatprep.subr.bf16.mxu0 0
    %8465 = vmatpush2.bf16.xpose.msra.mxu0 0
    %8466 = vmatprep.subr.bf16.mxu0 0
    %8467 = vmatpush2.bf16.xpose.msra.mxu0 0
    %8468 = vmatprep.subr.bf16.mxu0 0
    %8469 = vmatpush2.bf16.xpose.msra.mxu0 0
    %8470 = vmatprep.subr.bf16.mxu0 0
    %8471 = vmatpush2.bf16.xpose.msra.mxu0 0
    %8472 = vmatprep.subr.bf16.mxu0 0
    %8473 = vmatpush2.bf16.xpose.msra.mxu0 0
    %8474 = vmatprep.subr.bf16.mxu0 0
    %8475 = vmatpush2.bf16.xpose.msra.mxu0 0
    %8476 = vmatprep.mubr.bf16.mxu0 0
    %8477 = vmatmul.mubr.bf16.gmra.mxu0 %v8436
    %v8478 = vpop.f32.mrf.mxu0
    %v8479 = vadd.f32 0.0, %v8478
    %v8480 = vpop.f32.mrf.mxu0
    %v8481 = vpop.f32.mrf.mxu0
    %v8482 = vadd.f32 0.0, %v8481
    %v8483 = vpop.f32.mrf.mxu0
    %8484 = vdwg.mxu0
    %v8486 = vsel %vm7784, %v7750, 0
    %v8489 = vsel %vm7784, %v7780, 0
    %v8492 = vsel %vm7784, %v7781, 0
    %8494 = vmatprep.subr.bf16.mxu0 0
    %8495 = vmatpush1.bf16.xpose.msra.mxu0 0
    %8496 = vmatprep.subr.bf16.mxu0 0
    %8497 = vmatpush1.bf16.xpose.msra.mxu0 0
    %8498 = vmatprep.subr.bf16.mxu0 0
    %8499 = vmatpush1.bf16.xpose.msra.mxu0 0
    %8500 = vmatprep.subr.bf16.mxu0 0
    %8501 = vmatpush1.bf16.xpose.msra.mxu0 0
    %8502 = vmatprep.subr.bf16.mxu0 0
    %8503 = vmatpush1.bf16.xpose.msra.mxu0 0
    %8504 = vmatprep.subr.bf16.mxu0 0
    %8505 = vmatpush1.bf16.xpose.msra.mxu0 0
    %8506 = vmatprep.subr.bf16.mxu0 0
    %8507 = vmatpush1.bf16.xpose.msra.mxu0 %v8492
    %8508 = vmatprep.subr.bf16.mxu0 0
    %8509 = vmatpush1.bf16.xpose.msra.mxu0 %v8489
    %8510 = vmatprep.subr.bf16.mxu0 0
    %8511 = vmatpush2.bf16.xpose.msra.mxu0 0
    %8512 = vmatprep.subr.bf16.mxu0 0
    %8513 = vmatpush2.bf16.xpose.msra.mxu0 0
    %8514 = vmatprep.subr.bf16.mxu0 0
    %8515 = vmatpush2.bf16.xpose.msra.mxu0 0
    %8516 = vmatprep.subr.bf16.mxu0 0
    %8517 = vmatpush2.bf16.xpose.msra.mxu0 0
    %8518 = vmatprep.subr.bf16.mxu0 0
    %8519 = vmatpush2.bf16.xpose.msra.mxu0 0
    %8520 = vmatprep.subr.bf16.mxu0 0
    %8521 = vmatpush2.bf16.xpose.msra.mxu0 0
    %8522 = vmatprep.subr.bf16.mxu0 0
    %8523 = vmatpush2.bf16.xpose.msra.mxu0 0
    %8524 = vmatprep.subr.bf16.mxu0 0
    %8525 = vmatpush2.bf16.xpose.msra.mxu0 0
    %8526 = vmatprep.mubr.bf16.mxu0 0
    %8527 = vmatmul.mubr.bf16.gmra.mxu0 %v8486
    %v8528 = vpop.f32.mrf.mxu0
    %v8529 = vadd.f32 0.0, %v8528
    %v8530 = vpop.f32.mrf.mxu0
    %v8531 = vpop.f32.mrf.mxu0
    %v8532 = vadd.f32 0.0, %v8531
    %v8533 = vpop.f32.mrf.mxu0
    %8534 = vdwg.mxu0
    %v8536 = vsel %vm7784, %v7751, 0
    %v8539 = vsel %vm7784, %v7782, 0
    %v8542 = vsel %vm7784, %v7783, 0
    %8544 = vmatprep.subr.bf16.mxu0 0
    %8545 = vmatpush1.bf16.xpose.msra.mxu0 0
    %8546 = vmatprep.subr.bf16.mxu0 0
    %8547 = vmatpush1.bf16.xpose.msra.mxu0 0
    %8548 = vmatprep.subr.bf16.mxu0 0
    %8549 = vmatpush1.bf16.xpose.msra.mxu0 0
    %8550 = vmatprep.subr.bf16.mxu0 0
    %8551 = vmatpush1.bf16.xpose.msra.mxu0 0
    %8552 = vmatprep.subr.bf16.mxu0 0
    %8553 = vmatpush1.bf16.xpose.msra.mxu0 0
    %8554 = vmatprep.subr.bf16.mxu0 0
    %8555 = vmatpush1.bf16.xpose.msra.mxu0 0
    %8556 = vmatprep.subr.bf16.mxu0 0
    %8557 = vmatpush1.bf16.xpose.msra.mxu0 %v8542
    %8558 = vmatprep.subr.bf16.mxu0 0
    %8559 = vmatpush1.bf16.xpose.msra.mxu0 %v8539
    %8560 = vmatprep.subr.bf16.mxu0 0
    %8561 = vmatpush2.bf16.xpose.msra.mxu0 0
    %8562 = vmatprep.subr.bf16.mxu0 0
    %8563 = vmatpush2.bf16.xpose.msra.mxu0 0
    %8564 = vmatprep.subr.bf16.mxu0 0
    %8565 = vmatpush2.bf16.xpose.msra.mxu0 0
    %8566 = vmatprep.subr.bf16.mxu0 0
    %8567 = vmatpush2.bf16.xpose.msra.mxu0 0
    %8568 = vmatprep.subr.bf16.mxu0 0
    %8569 = vmatpush2.bf16.xpose.msra.mxu0 0
    %8570 = vmatprep.subr.bf16.mxu0 0
    %8571 = vmatpush2.bf16.xpose.msra.mxu0 0
    %8572 = vmatprep.subr.bf16.mxu0 0
    %8573 = vmatpush2.bf16.xpose.msra.mxu0 0
    %8574 = vmatprep.subr.bf16.mxu0 0
    %8575 = vmatpush2.bf16.xpose.msra.mxu0 0
    %8576 = vmatprep.mubr.bf16.mxu0 0
    %8577 = vmatmul.mubr.bf16.gmra.mxu0 %v8536
    %v8578 = vpop.f32.mrf.mxu0
    %v8579 = vadd.f32 0.0, %v8578
    %v8580 = vpop.f32.mrf.mxu0
    %v8581 = vpop.f32.mrf.mxu0
    %v8582 = vadd.f32 0.0, %v8581
    %v8583 = vpop.f32.mrf.mxu0
    %8584 = vdwg.mxu0
    %v8585 = vld [vmem:[#allocation7] sm:$0x1]
    %v8586 = vld [vmem:[#allocation7 + $0x1] sm:$0x1]
    %v8587 = vld [vmem:[#allocation7 + $0x2] sm:$0x1]
    %v8588 = vld [vmem:[#allocation7 + $0x3] sm:$0x1]
    %v8589 = vld [vmem:[%s3] sm:$0x1]
    %v8590 = vld [vmem:[%s3 + $0x1] sm:$0x1]
    %v8591 = vld [vmem:[%s3 + $0x2] sm:$0x1]
    %v8592 = vld [vmem:[%s3 + $0x3] sm:$0x1]
    %v8593 = vsub.f32 %v8585, 1.0
    %v8594 = vsub.f32 %v8586, 1.0
    %v8595 = vsub.f32 %v8587, 1.0
    %v8596 = vsub.f32 %v8588, 1.0
    %v8597 = vlaneseq
    %v8598 = vshrl.u32 %v8597, 7
    %v8599 = vsub.s32 0, %v8598
    %v8600 = vrot.slane %v8593, %v8599
    %8602 = vbcast.lane.b32.xlu0 %v8600, 256
    %v8603 = vpop.permute.xlu0 %8602
    %s8605 = sor.u32 256, 8
    %8606 = vbcast.lane.b32.xlu0 %v8600, %s8605
    %v8607 = vpop.permute.xlu0 %8606
    %v8608 = vlaneseq
    %v8609 = vshrl.u32 %v8608, 7
    %v8610 = vsub.s32 0, %v8609
    %v8611 = vrot.slane %v8594, %v8610
    %8613 = vbcast.lane.b32.xlu0 %v8611, 256
    %v8614 = vpop.permute.xlu0 %8613
    %s8616 = sor.u32 256, 8
    %8617 = vbcast.lane.b32.xlu0 %v8611, %s8616
    %v8618 = vpop.permute.xlu0 %8617
    %v8619 = vlaneseq
    %v8620 = vshrl.u32 %v8619, 7
    %v8621 = vsub.s32 0, %v8620
    %v8622 = vrot.slane %v8595, %v8621
    %8624 = vbcast.lane.b32.xlu0 %v8622, 256
    %v8625 = vpop.permute.xlu0 %8624
    %s8627 = sor.u32 256, 8
    %8628 = vbcast.lane.b32.xlu0 %v8622, %s8627
    %v8629 = vpop.permute.xlu0 %8628
    %v8630 = vlaneseq
    %v8631 = vshrl.u32 %v8630, 7
    %v8632 = vsub.s32 0, %v8631
    %v8633 = vrot.slane %v8596, %v8632
    %8635 = vbcast.lane.b32.xlu0 %v8633, 256
    %v8636 = vpop.permute.xlu0 %8635
    %s8638 = sor.u32 256, 8
    %8639 = vbcast.lane.b32.xlu0 %v8633, %s8638
    %v8640 = vpop.permute.xlu0 %8639
    %v8641 = vmul.f32 %v8603, 1e+09
    %v8642 = vmul.f32 %v8607, 1e+09
    %v8643 = vmul.f32 %v8614, 1e+09
    %v8644 = vmul.f32 %v8618, 1e+09
    %v8645 = vmul.f32 %v8625, 1e+09
    %v8646 = vmul.f32 %v8629, 1e+09
    %v8647 = vmul.f32 %v8636, 1e+09
    %v8648 = vmul.f32 %v8640, 1e+09
    %v8649 = vsub.f32 %v8589, 1.0
    %v8650 = vsub.f32 %v8590, 1.0
    %v8651 = vsub.f32 %v8591, 1.0
    %v8652 = vsub.f32 %v8592, 1.0
    %v8657 = vlaneseq
    %v8658 = vshrl.u32 %v8657, 7
    %v8659 = vsub.s32 0, %v8658
    %v8660 = vrot.slane %v8649, %v8659
    %v8661 = vlaneseq
    %v8662 = vshrl.u32 %v8661, 7
    %v8663 = vsub.s32 0, %v8662
    %v8664 = vrot.slane %v8650, %v8663
    %v8665 = vlaneseq
    %v8666 = vshrl.u32 %v8665, 7
    %v8667 = vsub.s32 0, %v8666
    %v8668 = vrot.slane %v8651, %v8667
    %v8669 = vlaneseq
    %v8670 = vshrl.u32 %v8669, 7
    %v8671 = vsub.s32 0, %v8670
    %v8672 = vrot.slane %v8652, %v8671
    %v8677 = vmul.f32 %v8641, %v8660
    %v8678 = vmul.f32 %v8642, %v8660
    %v8679 = vmul.f32 %v8643, %v8664
    %v8680 = vmul.f32 %v8644, %v8664
    %v8681 = vmul.f32 %v8645, %v8668
    %v8682 = vmul.f32 %v8646, %v8668
    %v8683 = vmul.f32 %v8647, %v8672
    %v8684 = vmul.f32 %v8648, %v8672
    %v8685 = vadd.f32 %v7829, %v8677
    %v8686 = vadd.f32 %v7832, %v8678
    %v8687 = vadd.f32 %v7879, %v8677
    %v8688 = vadd.f32 %v7882, %v8678
    %v8689 = vadd.f32 %v7929, %v8677
    %v8690 = vadd.f32 %v7932, %v8678
    %v8691 = vadd.f32 %v7979, %v8677
    %v8692 = vadd.f32 %v7982, %v8678
    %v8693 = vadd.f32 %v8029, %v8679
    %v8694 = vadd.f32 %v8032, %v8680
    %v8695 = vadd.f32 %v8079, %v8679
    %v8696 = vadd.f32 %v8082, %v8680
    %v8697 = vadd.f32 %v8129, %v8679
    %v8698 = vadd.f32 %v8132, %v8680
    %v8699 = vadd.f32 %v8179, %v8679
    %v8700 = vadd.f32 %v8182, %v8680
    %v8701 = vadd.f32 %v8229, %v8681
    %v8702 = vadd.f32 %v8232, %v8682
    %v8703 = vadd.f32 %v8279, %v8681
    %v8704 = vadd.f32 %v8282, %v8682
    %v8705 = vadd.f32 %v8329, %v8681
    %v8706 = vadd.f32 %v8332, %v8682
    %v8707 = vadd.f32 %v8379, %v8681
    %v8708 = vadd.f32 %v8382, %v8682
    %v8709 = vadd.f32 %v8429, %v8683
    %v8710 = vadd.f32 %v8432, %v8684
    %v8711 = vadd.f32 %v8479, %v8683
    %v8712 = vadd.f32 %v8482, %v8684
    %v8713 = vadd.f32 %v8529, %v8683
    %v8714 = vadd.f32 %v8532, %v8684
    %v8715 = vadd.f32 %v8579, %v8683
    %v8716 = vadd.f32 %v8582, %v8684
    %v8717 = vld [vmem:[#allocation8] sm:$0xff]
    %v8718 = vld [vmem:[#allocation8 + $0x8] sm:$0xff]
    %v8719 = vld [vmem:[#allocation8 + $0x10] sm:$0xff]
    %v8720 = vld [vmem:[#allocation8 + $0x18] sm:$0xff]
    %v8721 = vld [vmem:[#allocation8 + $0x20] sm:$0xff]
    %v8722 = vld [vmem:[#allocation8 + $0x28] sm:$0xff]
    %v8723 = vld [vmem:[#allocation8 + $0x30] sm:$0xff]
    %v8724 = vld [vmem:[#allocation8 + $0x38] sm:$0xff]
    %v8725 = vld [vmem:[#allocation8 + $0x40] sm:$0xff]
    %v8726 = vld [vmem:[#allocation8 + $0x48] sm:$0xff]
    %v8727 = vld [vmem:[#allocation8 + $0x50] sm:$0xff]
    %v8728 = vld [vmem:[#allocation8 + $0x58] sm:$0xff]
    %v8729 = vld [vmem:[#allocation8 + $0x60] sm:$0xff]
    %v8730 = vld [vmem:[#allocation8 + $0x68] sm:$0xff]
    %v8731 = vld [vmem:[#allocation8 + $0x70] sm:$0xff]
    %v8732 = vld [vmem:[#allocation8 + $0x78] sm:$0xff]
    %v8733 = vld [vmem:[#allocation8 + $0x80] sm:$0xff]
    %v8734 = vld [vmem:[#allocation8 + $0x88] sm:$0xff]
    %v8735 = vld [vmem:[#allocation8 + $0x90] sm:$0xff]
    %v8736 = vld [vmem:[#allocation8 + $0x98] sm:$0xff]
    %v8737 = vld [vmem:[#allocation8 + $0xa0] sm:$0xff]
    %v8738 = vld [vmem:[#allocation8 + $0xa8] sm:$0xff]
    %v8739 = vld [vmem:[#allocation8 + $0xb0] sm:$0xff]
    %v8740 = vld [vmem:[#allocation8 + $0xb8] sm:$0xff]
    %v8741 = vld [vmem:[#allocation8 + $0xc0] sm:$0xff]
    %v8742 = vld [vmem:[#allocation8 + $0xc8] sm:$0xff]
    %v8743 = vld [vmem:[#allocation8 + $0xd0] sm:$0xff]
    %v8744 = vld [vmem:[#allocation8 + $0xd8] sm:$0xff]
    %v8745 = vld [vmem:[#allocation8 + $0xe0] sm:$0xff]
    %v8746 = vld [vmem:[#allocation8 + $0xe8] sm:$0xff]
    %v8747 = vld [vmem:[#allocation8 + $0xf0] sm:$0xff]
    %v8748 = vld [vmem:[#allocation8 + $0xf8] sm:$0xff]
    %v8749 = vadd.f32 %v8685, %v8717
    %v8750 = vadd.f32 %v8686, %v8718
    %v8751 = vadd.f32 %v8687, %v8719
    %v8752 = vadd.f32 %v8688, %v8720
    %v8753 = vadd.f32 %v8689, %v8721
    %v8754 = vadd.f32 %v8690, %v8722
    %v8755 = vadd.f32 %v8691, %v8723
    %v8756 = vadd.f32 %v8692, %v8724
    %v8757 = vadd.f32 %v8693, %v8725
    %v8758 = vadd.f32 %v8694, %v8726
    %v8759 = vadd.f32 %v8695, %v8727
    %v8760 = vadd.f32 %v8696, %v8728
    %v8761 = vadd.f32 %v8697, %v8729
    %v8762 = vadd.f32 %v8698, %v8730
    %v8763 = vadd.f32 %v8699, %v8731
    %v8764 = vadd.f32 %v8700, %v8732
    %v8765 = vadd.f32 %v8701, %v8733
    %v8766 = vadd.f32 %v8702, %v8734
    %v8767 = vadd.f32 %v8703, %v8735
    %v8768 = vadd.f32 %v8704, %v8736
    %v8769 = vadd.f32 %v8705, %v8737
    %v8770 = vadd.f32 %v8706, %v8738
    %v8771 = vadd.f32 %v8707, %v8739
    %v8772 = vadd.f32 %v8708, %v8740
    %v8773 = vadd.f32 %v8709, %v8741
    %v8774 = vadd.f32 %v8710, %v8742
    %v8775 = vadd.f32 %v8711, %v8743
    %v8776 = vadd.f32 %v8712, %v8744
    %v8777 = vadd.f32 %v8713, %v8745
    %v8778 = vadd.f32 %v8714, %v8746
    %v8779 = vadd.f32 %v8715, %v8747
    %v8780 = vadd.f32 %v8716, %v8748
    %v8781 = vsel %vm7784, %v8749, -inf
    %8782 = vmax.xlane.f32.xlu0 %v8781
    %v8783 = vpop.xlane.xlu0 %8782
    %v8784 = vsel %vm7784, %v8750, -inf
    %8785 = vmax.xlane.f32.xlu0 %v8784
    %v8786 = vpop.xlane.xlu0 %8785
    %v8787 = vsel %vm7784, %v8751, -inf
    %8788 = vmax.xlane.f32.xlu0 %v8787
    %v8789 = vpop.xlane.xlu0 %8788
    %v8790 = vsel %vm7784, %v8752, -inf
    %8791 = vmax.xlane.f32.xlu0 %v8790
    %v8792 = vpop.xlane.xlu0 %8791
    %v8793 = vsel %vm7784, %v8753, -inf
    %8794 = vmax.xlane.f32.xlu0 %v8793
    %v8795 = vpop.xlane.xlu0 %8794
    %v8796 = vsel %vm7784, %v8754, -inf
    %8797 = vmax.xlane.f32.xlu0 %v8796
    %v8798 = vpop.xlane.xlu0 %8797
    %v8799 = vsel %vm7784, %v8755, -inf
    %8800 = vmax.xlane.f32.xlu0 %v8799
    %v8801 = vpop.xlane.xlu0 %8800
    %v8802 = vsel %vm7784, %v8756, -inf
    %8803 = vmax.xlane.f32.xlu0 %v8802
    %v8804 = vpop.xlane.xlu0 %8803
    %v8805 = vsel %vm7784, %v8757, -inf
    %8806 = vmax.xlane.f32.xlu0 %v8805
    %v8807 = vpop.xlane.xlu0 %8806
    %v8808 = vsel %vm7784, %v8758, -inf
    %8809 = vmax.xlane.f32.xlu0 %v8808
    %v8810 = vpop.xlane.xlu0 %8809
    %v8811 = vsel %vm7784, %v8759, -inf
    %8812 = vmax.xlane.f32.xlu0 %v8811
    %v8813 = vpop.xlane.xlu0 %8812
    %v8814 = vsel %vm7784, %v8760, -inf
    %8815 = vmax.xlane.f32.xlu0 %v8814
    %v8816 = vpop.xlane.xlu0 %8815
    %v8817 = vsel %vm7784, %v8761, -inf
    %8818 = vmax.xlane.f32.xlu0 %v8817
    %v8819 = vpop.xlane.xlu0 %8818
    %v8820 = vsel %vm7784, %v8762, -inf
    %8821 = vmax.xlane.f32.xlu0 %v8820
    %v8822 = vpop.xlane.xlu0 %8821
    %v8823 = vsel %vm7784, %v8763, -inf
    %8824 = vmax.xlane.f32.xlu0 %v8823
    %v8825 = vpop.xlane.xlu0 %8824
    %v8826 = vsel %vm7784, %v8764, -inf
    %8827 = vmax.xlane.f32.xlu0 %v8826
    %v8828 = vpop.xlane.xlu0 %8827
    %v8829 = vsel %vm7784, %v8765, -inf
    %8830 = vmax.xlane.f32.xlu0 %v8829
    %v8831 = vpop.xlane.xlu0 %8830
    %v8832 = vsel %vm7784, %v8766, -inf
    %8833 = vmax.xlane.f32.xlu0 %v8832
    %v8834 = vpop.xlane.xlu0 %8833
    %v8835 = vsel %vm7784, %v8767, -inf
    %8836 = vmax.xlane.f32.xlu0 %v8835
    %v8837 = vpop.xlane.xlu0 %8836
    %v8838 = vsel %vm7784, %v8768, -inf
    %8839 = vmax.xlane.f32.xlu0 %v8838
    %v8840 = vpop.xlane.xlu0 %8839
    %v8841 = vsel %vm7784, %v8769, -inf
    %8842 = vmax.xlane.f32.xlu0 %v8841
    %v8843 = vpop.xlane.xlu0 %8842
    %v8844 = vsel %vm7784, %v8770, -inf
    %8845 = vmax.xlane.f32.xlu0 %v8844
    %v8846 = vpop.xlane.xlu0 %8845
    %v8847 = vsel %vm7784, %v8771, -inf
    %8848 = vmax.xlane.f32.xlu0 %v8847
    %v8849 = vpop.xlane.xlu0 %8848
    %v8850 = vsel %vm7784, %v8772, -inf
    %8851 = vmax.xlane.f32.xlu0 %v8850
    %v8852 = vpop.xlane.xlu0 %8851
    %v8853 = vsel %vm7784, %v8773, -inf
    %8854 = vmax.xlane.f32.xlu0 %v8853
    %v8855 = vpop.xlane.xlu0 %8854
    %v8856 = vsel %vm7784, %v8774, -inf
    %8857 = vmax.xlane.f32.xlu0 %v8856
    %v8858 = vpop.xlane.xlu0 %8857
    %v8859 = vsel %vm7784, %v8775, -inf
    %8860 = vmax.xlane.f32.xlu0 %v8859
    %v8861 = vpop.xlane.xlu0 %8860
    %v8862 = vsel %vm7784, %v8776, -inf
    %8863 = vmax.xlane.f32.xlu0 %v8862
    %v8864 = vpop.xlane.xlu0 %8863
    %v8865 = vsel %vm7784, %v8777, -inf
    %8866 = vmax.xlane.f32.xlu0 %v8865
    %v8867 = vpop.xlane.xlu0 %8866
    %v8868 = vsel %vm7784, %v8778, -inf
    %8869 = vmax.xlane.f32.xlu0 %v8868
    %v8870 = vpop.xlane.xlu0 %8869
    %v8871 = vsel %vm7784, %v8779, -inf
    %8872 = vmax.xlane.f32.xlu0 %v8871
    %v8873 = vpop.xlane.xlu0 %8872
    %v8874 = vsel %vm7784, %v8780, -inf
    %8875 = vmax.xlane.f32.xlu0 %v8874
    %v8876 = vpop.xlane.xlu0 %8875
    %v8877 = vsub.f32 %v8749, %v8783
    %v8878 = vsub.f32 %v8750, %v8786
    %v8879 = vsub.f32 %v8751, %v8789
    %v8880 = vsub.f32 %v8752, %v8792
    %v8881 = vsub.f32 %v8753, %v8795
    %v8882 = vsub.f32 %v8754, %v8798
    %v8883 = vsub.f32 %v8755, %v8801
    %v8884 = vsub.f32 %v8756, %v8804
    %v8885 = vsub.f32 %v8757, %v8807
    %v8886 = vsub.f32 %v8758, %v8810
    %v8887 = vsub.f32 %v8759, %v8813
    %v8888 = vsub.f32 %v8760, %v8816
    %v8889 = vsub.f32 %v8761, %v8819
    %v8890 = vsub.f32 %v8762, %v8822
    %v8891 = vsub.f32 %v8763, %v8825
    %v8892 = vsub.f32 %v8764, %v8828
    %v8893 = vsub.f32 %v8765, %v8831
    %v8894 = vsub.f32 %v8766, %v8834
    %v8895 = vsub.f32 %v8767, %v8837
    %v8896 = vsub.f32 %v8768, %v8840
    %v8897 = vsub.f32 %v8769, %v8843
    %v8898 = vsub.f32 %v8770, %v8846
    %v8899 = vsub.f32 %v8771, %v8849
    %v8900 = vsub.f32 %v8772, %v8852
    %v8901 = vsub.f32 %v8773, %v8855
    %v8902 = vsub.f32 %v8774, %v8858
    %v8903 = vsub.f32 %v8775, %v8861
    %v8904 = vsub.f32 %v8776, %v8864
    %v8905 = vsub.f32 %v8777, %v8867
    %v8906 = vsub.f32 %v8778, %v8870
    %v8907 = vsub.f32 %v8779, %v8873
    %v8908 = vsub.f32 %v8780, %v8876
    %v8909 = vmul.f32 %v8877, 1.442695
    %v8910 = vpow.pop %v8909
    %v8911 = vmul.f32 %v8878, 1.442695
    %v8912 = vpow.pop %v8911
    %v8913 = vmul.f32 %v8879, 1.442695
    %v8914 = vpow.pop %v8913
    %v8915 = vmul.f32 %v8880, 1.442695
    %v8916 = vpow.pop %v8915
    %v8917 = vmul.f32 %v8881, 1.442695
    %v8918 = vpow.pop %v8917
    %v8919 = vmul.f32 %v8882, 1.442695
    %v8920 = vpow.pop %v8919
    %v8921 = vmul.f32 %v8883, 1.442695
    %v8922 = vpow.pop %v8921
    %v8923 = vmul.f32 %v8884, 1.442695
    %v8924 = vpow.pop %v8923
    %v8925 = vmul.f32 %v8885, 1.442695
    %v8926 = vpow.pop %v8925
    %v8927 = vmul.f32 %v8886, 1.442695
    %v8928 = vpow.pop %v8927
    %v8929 = vmul.f32 %v8887, 1.442695
    %v8930 = vpow.pop %v8929
    %v8931 = vmul.f32 %v8888, 1.442695
    %v8932 = vpow.pop %v8931
    %v8933 = vmul.f32 %v8889, 1.442695
    %v8934 = vpow.pop %v8933
    %v8935 = vmul.f32 %v8890, 1.442695
    %v8936 = vpow.pop %v8935
    %v8937 = vmul.f32 %v8891, 1.442695
    %v8938 = vpow.pop %v8937
    %v8939 = vmul.f32 %v8892, 1.442695
    %v8940 = vpow.pop %v8939
    %v8941 = vmul.f32 %v8893, 1.442695
    %v8942 = vpow.pop %v8941
    %v8943 = vmul.f32 %v8894, 1.442695
    %v8944 = vpow.pop %v8943
    %v8945 = vmul.f32 %v8895, 1.442695
    %v8946 = vpow.pop %v8945
    %v8947 = vmul.f32 %v8896, 1.442695
    %v8948 = vpow.pop %v8947
    %v8949 = vmul.f32 %v8897, 1.442695
    %v8950 = vpow.pop %v8949
    %v8951 = vmul.f32 %v8898, 1.442695
    %v8952 = vpow.pop %v8951
    %v8953 = vmul.f32 %v8899, 1.442695
    %v8954 = vpow.pop %v8953
    %v8955 = vmul.f32 %v8900, 1.442695
    %v8956 = vpow.pop %v8955
    %v8957 = vmul.f32 %v8901, 1.442695
    %v8958 = vpow.pop %v8957
    %v8959 = vmul.f32 %v8902, 1.442695
    %v8960 = vpow.pop %v8959
    %v8961 = vmul.f32 %v8903, 1.442695
    %v8962 = vpow.pop %v8961
    %v8963 = vmul.f32 %v8904, 1.442695
    %v8964 = vpow.pop %v8963
    %v8965 = vmul.f32 %v8905, 1.442695
    %v8966 = vpow.pop %v8965
    %v8967 = vmul.f32 %v8906, 1.442695
    %v8968 = vpow.pop %v8967
    %v8969 = vmul.f32 %v8907, 1.442695
    %v8970 = vpow.pop %v8969
    %v8971 = vmul.f32 %v8908, 1.442695
    %v8972 = vpow.pop %v8971
    %v8973 = vsel %vm7784, %v8910, 0.0
    %8974 = vadd.xlane.f32.xlu0 %v8973
    %v8975 = vpop.xlane.xlu0 %8974
    %v8976 = vsel %vm7784, %v8912, 0.0
    %8977 = vadd.xlane.f32.xlu0 %v8976
    %v8978 = vpop.xlane.xlu0 %8977
    %v8979 = vsel %vm7784, %v8914, 0.0
    %8980 = vadd.xlane.f32.xlu0 %v8979
    %v8981 = vpop.xlane.xlu0 %8980
    %v8982 = vsel %vm7784, %v8916, 0.0
    %8983 = vadd.xlane.f32.xlu0 %v8982
    %v8984 = vpop.xlane.xlu0 %8983
    %v8985 = vsel %vm7784, %v8918, 0.0
    %8986 = vadd.xlane.f32.xlu0 %v8985
    %v8987 = vpop.xlane.xlu0 %8986
    %v8988 = vsel %vm7784, %v8920, 0.0
    %8989 = vadd.xlane.f32.xlu0 %v8988
    %v8990 = vpop.xlane.xlu0 %8989
    %v8991 = vsel %vm7784, %v8922, 0.0
    %8992 = vadd.xlane.f32.xlu0 %v8991
    %v8993 = vpop.xlane.xlu0 %8992
    %v8994 = vsel %vm7784, %v8924, 0.0
    %8995 = vadd.xlane.f32.xlu0 %v8994
    %v8996 = vpop.xlane.xlu0 %8995
    %v8997 = vsel %vm7784, %v8926, 0.0
    %8998 = vadd.xlane.f32.xlu0 %v8997
    %v8999 = vpop.xlane.xlu0 %8998
    %v9000 = vsel %vm7784, %v8928, 0.0
    %9001 = vadd.xlane.f32.xlu0 %v9000
    %v9002 = vpop.xlane.xlu0 %9001
    %v9003 = vsel %vm7784, %v8930, 0.0
    %9004 = vadd.xlane.f32.xlu0 %v9003
    %v9005 = vpop.xlane.xlu0 %9004
    %v9006 = vsel %vm7784, %v8932, 0.0
    %9007 = vadd.xlane.f32.xlu0 %v9006
    %v9008 = vpop.xlane.xlu0 %9007
    %v9009 = vsel %vm7784, %v8934, 0.0
    %9010 = vadd.xlane.f32.xlu0 %v9009
    %v9011 = vpop.xlane.xlu0 %9010
    %v9012 = vsel %vm7784, %v8936, 0.0
    %9013 = vadd.xlane.f32.xlu0 %v9012
    %v9014 = vpop.xlane.xlu0 %9013
    %v9015 = vsel %vm7784, %v8938, 0.0
    %9016 = vadd.xlane.f32.xlu0 %v9015
    %v9017 = vpop.xlane.xlu0 %9016
    %v9018 = vsel %vm7784, %v8940, 0.0
    %9019 = vadd.xlane.f32.xlu0 %v9018
    %v9020 = vpop.xlane.xlu0 %9019
    %v9021 = vsel %vm7784, %v8942, 0.0
    %9022 = vadd.xlane.f32.xlu0 %v9021
    %v9023 = vpop.xlane.xlu0 %9022
    %v9024 = vsel %vm7784, %v8944, 0.0
    %9025 = vadd.xlane.f32.xlu0 %v9024
    %v9026 = vpop.xlane.xlu0 %9025
    %v9027 = vsel %vm7784, %v8946, 0.0
    %9028 = vadd.xlane.f32.xlu0 %v9027
    %v9029 = vpop.xlane.xlu0 %9028
    %v9030 = vsel %vm7784, %v8948, 0.0
    %9031 = vadd.xlane.f32.xlu0 %v9030
    %v9032 = vpop.xlane.xlu0 %9031
    %v9033 = vsel %vm7784, %v8950, 0.0
    %9034 = vadd.xlane.f32.xlu0 %v9033
    %v9035 = vpop.xlane.xlu0 %9034
    %v9036 = vsel %vm7784, %v8952, 0.0
    %9037 = vadd.xlane.f32.xlu0 %v9036
    %v9038 = vpop.xlane.xlu0 %9037
    %v9039 = vsel %vm7784, %v8954, 0.0
    %9040 = vadd.xlane.f32.xlu0 %v9039
    %v9041 = vpop.xlane.xlu0 %9040
    %v9042 = vsel %vm7784, %v8956, 0.0
    %9043 = vadd.xlane.f32.xlu0 %v9042
    %v9044 = vpop.xlane.xlu0 %9043
    %v9045 = vsel %vm7784, %v8958, 0.0
    %9046 = vadd.xlane.f32.xlu0 %v9045
    %v9047 = vpop.xlane.xlu0 %9046
    %v9048 = vsel %vm7784, %v8960, 0.0
    %9049 = vadd.xlane.f32.xlu0 %v9048
    %v9050 = vpop.xlane.xlu0 %9049
    %v9051 = vsel %vm7784, %v8962, 0.0
    %9052 = vadd.xlane.f32.xlu0 %v9051
    %v9053 = vpop.xlane.xlu0 %9052
    %v9054 = vsel %vm7784, %v8964, 0.0
    %9055 = vadd.xlane.f32.xlu0 %v9054
    %v9056 = vpop.xlane.xlu0 %9055
    %v9057 = vsel %vm7784, %v8966, 0.0
    %9058 = vadd.xlane.f32.xlu0 %v9057
    %v9059 = vpop.xlane.xlu0 %9058
    %v9060 = vsel %vm7784, %v8968, 0.0
    %9061 = vadd.xlane.f32.xlu0 %v9060
    %v9062 = vpop.xlane.xlu0 %9061
    %v9063 = vsel %vm7784, %v8970, 0.0
    %9064 = vadd.xlane.f32.xlu0 %v9063
    %v9065 = vpop.xlane.xlu0 %9064
    %v9066 = vsel %vm7784, %v8972, 0.0
    %9067 = vadd.xlane.f32.xlu0 %v9066
    %v9068 = vpop.xlane.xlu0 %9067
    %v9069 = vrcp.pop %v8975
    %v9070 = vrcp.pop %v8978
    %v9071 = vrcp.pop %v8981
    %v9072 = vrcp.pop %v8984
    %v9073 = vrcp.pop %v8987
    %v9074 = vrcp.pop %v8990
    %v9075 = vrcp.pop %v8993
    %v9076 = vrcp.pop %v8996
    %v9077 = vrcp.pop %v8999
    %v9078 = vrcp.pop %v9002
    %v9079 = vrcp.pop %v9005
    %v9080 = vrcp.pop %v9008
    %v9081 = vrcp.pop %v9011
    %v9082 = vrcp.pop %v9014
    %v9083 = vrcp.pop %v9017
    %v9084 = vrcp.pop %v9020
    %v9085 = vrcp.pop %v9023
    %v9086 = vrcp.pop %v9026
    %v9087 = vrcp.pop %v9029
    %v9088 = vrcp.pop %v9032
    %v9089 = vrcp.pop %v9035
    %v9090 = vrcp.pop %v9038
    %v9091 = vrcp.pop %v9041
    %v9092 = vrcp.pop %v9044
    %v9093 = vrcp.pop %v9047
    %v9094 = vrcp.pop %v9050
    %v9095 = vrcp.pop %v9053
    %v9096 = vrcp.pop %v9056
    %v9097 = vrcp.pop %v9059
    %v9098 = vrcp.pop %v9062
    %v9099 = vrcp.pop %v9065
    %v9100 = vrcp.pop %v9068
    %v9101 = vmul.f32 %v8910, %v9069
    %v9102 = vmul.f32 %v8912, %v9070
    %v9103 = vmul.f32 %v8914, %v9071
    %v9104 = vmul.f32 %v8916, %v9072
    %v9105 = vmul.f32 %v8918, %v9073
    %v9106 = vmul.f32 %v8920, %v9074
    %v9107 = vmul.f32 %v8922, %v9075
    %v9108 = vmul.f32 %v8924, %v9076
    %v9109 = vmul.f32 %v8926, %v9077
    %v9110 = vmul.f32 %v8928, %v9078
    %v9111 = vmul.f32 %v8930, %v9079
    %v9112 = vmul.f32 %v8932, %v9080
    %v9113 = vmul.f32 %v8934, %v9081
    %v9114 = vmul.f32 %v8936, %v9082
    %v9115 = vmul.f32 %v8938, %v9083
    %v9116 = vmul.f32 %v8940, %v9084
    %v9117 = vmul.f32 %v8942, %v9085
    %v9118 = vmul.f32 %v8944, %v9086
    %v9119 = vmul.f32 %v8946, %v9087
    %v9120 = vmul.f32 %v8948, %v9088
    %v9121 = vmul.f32 %v8950, %v9089
    %v9122 = vmul.f32 %v8952, %v9090
    %v9123 = vmul.f32 %v8954, %v9091
    %v9124 = vmul.f32 %v8956, %v9092
    %v9125 = vmul.f32 %v8958, %v9093
    %v9126 = vmul.f32 %v8960, %v9094
    %v9127 = vmul.f32 %v8962, %v9095
    %v9128 = vmul.f32 %v8964, %v9096
    %v9129 = vmul.f32 %v8966, %v9097
    %v9130 = vmul.f32 %v8968, %v9098
    %v9131 = vmul.f32 %v8970, %v9099
    %v9132 = vmul.f32 %v8972, %v9100
    %v9133 = vpack.c.bf16 %v9102, %v9101
    %v9134 = vpack.c.bf16 %v9104, %v9103
    %v9135 = vpack.c.bf16 %v9106, %v9105
    %v9136 = vpack.c.bf16 %v9108, %v9107
    %v9137 = vpack.c.bf16 %v9110, %v9109
    %v9138 = vpack.c.bf16 %v9112, %v9111
    %v9139 = vpack.c.bf16 %v9114, %v9113
    %v9140 = vpack.c.bf16 %v9116, %v9115
    %v9141 = vpack.c.bf16 %v9118, %v9117
    %v9142 = vpack.c.bf16 %v9120, %v9119
    %v9143 = vpack.c.bf16 %v9122, %v9121
    %v9144 = vpack.c.bf16 %v9124, %v9123
    %v9145 = vpack.c.bf16 %v9126, %v9125
    %v9146 = vpack.c.bf16 %v9128, %v9127
    %v9147 = vpack.c.bf16 %v9130, %v9129
    %v9148 = vpack.c.bf16 %v9132, %v9131
    %v9149 = vpack.c.bf16 %v6748, %v6680
    %v9150 = vpack.c.bf16 %v6884, %v6816
    %v9151 = vpack.c.bf16 %v6749, %v6681
    %v9152 = vpack.c.bf16 %v6885, %v6817
    %v9153 = vpack.c.bf16 %v6750, %v6682
    %v9154 = vpack.c.bf16 %v6886, %v6818
    %v9155 = vpack.c.bf16 %v6751, %v6683
    %v9156 = vpack.c.bf16 %v6887, %v6819
    %v9157 = vpack.c.bf16 %v7020, %v6952
    %v9158 = vpack.c.bf16 %v7156, %v7088
    %v9159 = vpack.c.bf16 %v7021, %v6953
    %v9160 = vpack.c.bf16 %v7157, %v7089
    %v9161 = vpack.c.bf16 %v7022, %v6954
    %v9162 = vpack.c.bf16 %v7158, %v7090
    %v9163 = vpack.c.bf16 %v7023, %v6955
    %v9164 = vpack.c.bf16 %v7159, %v7091
    %v9165 = vpack.c.bf16 %v7292, %v7224
    %v9166 = vpack.c.bf16 %v7428, %v7360
    %v9167 = vpack.c.bf16 %v7293, %v7225
    %v9168 = vpack.c.bf16 %v7429, %v7361
    %v9169 = vpack.c.bf16 %v7294, %v7226
    %v9170 = vpack.c.bf16 %v7430, %v7362
    %v9171 = vpack.c.bf16 %v7295, %v7227
    %v9172 = vpack.c.bf16 %v7431, %v7363
    %v9173 = vpack.c.bf16 %v7564, %v7496
    %v9174 = vpack.c.bf16 %v7700, %v7632
    %v9175 = vpack.c.bf16 %v7565, %v7497
    %v9176 = vpack.c.bf16 %v7701, %v7633
    %v9177 = vpack.c.bf16 %v7566, %v7498
    %v9178 = vpack.c.bf16 %v7702, %v7634
    %v9179 = vpack.c.bf16 %v7567, %v7499
    %v9180 = vpack.c.bf16 %v7703, %v7635
    %v9182 = vsel %vm7784, %v9133, 0
    %9184 = vmatprep.subr.bf16.mxu0 0
    %9185 = vmatpush1.bf16.msra.mxu0 0
    %9186 = vmatprep.subr.bf16.mxu0 0
    %9187 = vmatpush1.bf16.msra.mxu0 0
    %9188 = vmatprep.subr.bf16.mxu0 0
    %9189 = vmatpush1.bf16.msra.mxu0 0
    %9190 = vmatprep.subr.bf16.mxu0 0
    %9191 = vmatpush1.bf16.msra.mxu0 0
    %9192 = vmatprep.subr.bf16.mxu0 0
    %9193 = vmatpush1.bf16.msra.mxu0 0
    %9194 = vmatprep.subr.bf16.mxu0 0
    %9195 = vmatpush1.bf16.msra.mxu0 0
    %9196 = vmatprep.subr.bf16.mxu0 0
    %9197 = vmatpush1.bf16.msra.mxu0 %v9150
    %9198 = vmatprep.subr.bf16.mxu0 0
    %9199 = vmatpush1.bf16.msra.mxu0 %v9149
    %9200 = vmatprep.subr.bf16.mxu0 0
    %9201 = vmatpush2.bf16.msra.mxu0 0
    %9202 = vmatprep.subr.bf16.mxu0 0
    %9203 = vmatpush2.bf16.msra.mxu0 0
    %9204 = vmatprep.subr.bf16.mxu0 0
    %9205 = vmatpush2.bf16.msra.mxu0 0
    %9206 = vmatprep.subr.bf16.mxu0 0
    %9207 = vmatpush2.bf16.msra.mxu0 0
    %9208 = vmatprep.subr.bf16.mxu0 0
    %9209 = vmatpush2.bf16.msra.mxu0 0
    %9210 = vmatprep.subr.bf16.mxu0 0
    %9211 = vmatpush2.bf16.msra.mxu0 0
    %9212 = vmatprep.subr.bf16.mxu0 0
    %9213 = vmatpush2.bf16.msra.mxu0 0
    %9214 = vmatprep.subr.bf16.mxu0 0
    %9215 = vmatpush2.bf16.msra.mxu0 0
    %9216 = vmatprep.mubr.bf16.mxu0 0
    %9217 = vmatmul.mubr.bf16.gmra.mxu0 %v9182
    %v9218 = vpop.f32.mrf.mxu0
    %v9219 = vadd.f32 0.0, %v9218
    %v9220 = vpop.f32.mrf.mxu0
    %v9221 = vpop.f32.mrf.mxu0
    %v9222 = vadd.f32 0.0, %v9221
    %v9223 = vpop.f32.mrf.mxu0
    %9224 = vdwg.mxu0
    %v9226 = vsel %vm7784, %v9134, 0
    %9228 = vmatprep.subr.bf16.mxu0 0
    %9229 = vmatpush1.bf16.msra.mxu0 0
    %9230 = vmatprep.subr.bf16.mxu0 0
    %9231 = vmatpush1.bf16.msra.mxu0 0
    %9232 = vmatprep.subr.bf16.mxu0 0
    %9233 = vmatpush1.bf16.msra.mxu0 0
    %9234 = vmatprep.subr.bf16.mxu0 0
    %9235 = vmatpush1.bf16.msra.mxu0 0
    %9236 = vmatprep.subr.bf16.mxu0 0
    %9237 = vmatpush1.bf16.msra.mxu0 0
    %9238 = vmatprep.subr.bf16.mxu0 0
    %9239 = vmatpush1.bf16.msra.mxu0 0
    %9240 = vmatprep.subr.bf16.mxu0 0
    %9241 = vmatpush1.bf16.msra.mxu0 %v9152
    %9242 = vmatprep.subr.bf16.mxu0 0
    %9243 = vmatpush1.bf16.msra.mxu0 %v9151
    %9244 = vmatprep.subr.bf16.mxu0 0
    %9245 = vmatpush2.bf16.msra.mxu0 0
    %9246 = vmatprep.subr.bf16.mxu0 0
    %9247 = vmatpush2.bf16.msra.mxu0 0
    %9248 = vmatprep.subr.bf16.mxu0 0
    %9249 = vmatpush2.bf16.msra.mxu0 0
    %9250 = vmatprep.subr.bf16.mxu0 0
    %9251 = vmatpush2.bf16.msra.mxu0 0
    %9252 = vmatprep.subr.bf16.mxu0 0
    %9253 = vmatpush2.bf16.msra.mxu0 0
    %9254 = vmatprep.subr.bf16.mxu0 0
    %9255 = vmatpush2.bf16.msra.mxu0 0
    %9256 = vmatprep.subr.bf16.mxu0 0
    %9257 = vmatpush2.bf16.msra.mxu0 0
    %9258 = vmatprep.subr.bf16.mxu0 0
    %9259 = vmatpush2.bf16.msra.mxu0 0
    %9260 = vmatprep.mubr.bf16.mxu0 0
    %9261 = vmatmul.mubr.bf16.gmra.mxu0 %v9226
    %v9262 = vpop.f32.mrf.mxu0
    %v9263 = vadd.f32 0.0, %v9262
    %v9264 = vpop.f32.mrf.mxu0
    %v9265 = vpop.f32.mrf.mxu0
    %v9266 = vadd.f32 0.0, %v9265
    %v9267 = vpop.f32.mrf.mxu0
    %9268 = vdwg.mxu0
    %v9270 = vsel %vm7784, %v9135, 0
    %9272 = vmatprep.subr.bf16.mxu0 0
    %9273 = vmatpush1.bf16.msra.mxu0 0
    %9274 = vmatprep.subr.bf16.mxu0 0
    %9275 = vmatpush1.bf16.msra.mxu0 0
    %9276 = vmatprep.subr.bf16.mxu0 0
    %9277 = vmatpush1.bf16.msra.mxu0 0
    %9278 = vmatprep.subr.bf16.mxu0 0
    %9279 = vmatpush1.bf16.msra.mxu0 0
    %9280 = vmatprep.subr.bf16.mxu0 0
    %9281 = vmatpush1.bf16.msra.mxu0 0
    %9282 = vmatprep.subr.bf16.mxu0 0
    %9283 = vmatpush1.bf16.msra.mxu0 0
    %9284 = vmatprep.subr.bf16.mxu0 0
    %9285 = vmatpush1.bf16.msra.mxu0 %v9154
    %9286 = vmatprep.subr.bf16.mxu0 0
    %9287 = vmatpush1.bf16.msra.mxu0 %v9153
    %9288 = vmatprep.subr.bf16.mxu0 0
    %9289 = vmatpush2.bf16.msra.mxu0 0
    %9290 = vmatprep.subr.bf16.mxu0 0
    %9291 = vmatpush2.bf16.msra.mxu0 0
    %9292 = vmatprep.subr.bf16.mxu0 0
    %9293 = vmatpush2.bf16.msra.mxu0 0
    %9294 = vmatprep.subr.bf16.mxu0 0
    %9295 = vmatpush2.bf16.msra.mxu0 0
    %9296 = vmatprep.subr.bf16.mxu0 0
    %9297 = vmatpush2.bf16.msra.mxu0 0
    %9298 = vmatprep.subr.bf16.mxu0 0
    %9299 = vmatpush2.bf16.msra.mxu0 0
    %9300 = vmatprep.subr.bf16.mxu0 0
    %9301 = vmatpush2.bf16.msra.mxu0 0
    %9302 = vmatprep.subr.bf16.mxu0 0
    %9303 = vmatpush2.bf16.msra.mxu0 0
    %9304 = vmatprep.mubr.bf16.mxu0 0
    %9305 = vmatmul.mubr.bf16.gmra.mxu0 %v9270
    %v9306 = vpop.f32.mrf.mxu0
    %v9307 = vadd.f32 0.0, %v9306
    %v9308 = vpop.f32.mrf.mxu0
    %v9309 = vpop.f32.mrf.mxu0
    %v9310 = vadd.f32 0.0, %v9309
    %v9311 = vpop.f32.mrf.mxu0
    %9312 = vdwg.mxu0
    %v9314 = vsel %vm7784, %v9136, 0
    %9316 = vmatprep.subr.bf16.mxu0 0
    %9317 = vmatpush1.bf16.msra.mxu0 0
    %9318 = vmatprep.subr.bf16.mxu0 0
    %9319 = vmatpush1.bf16.msra.mxu0 0
    %9320 = vmatprep.subr.bf16.mxu0 0
    %9321 = vmatpush1.bf16.msra.mxu0 0
    %9322 = vmatprep.subr.bf16.mxu0 0
    %9323 = vmatpush1.bf16.msra.mxu0 0
    %9324 = vmatprep.subr.bf16.mxu0 0
    %9325 = vmatpush1.bf16.msra.mxu0 0
    %9326 = vmatprep.subr.bf16.mxu0 0
    %9327 = vmatpush1.bf16.msra.mxu0 0
    %9328 = vmatprep.subr.bf16.mxu0 0
    %9329 = vmatpush1.bf16.msra.mxu0 %v9156
    %9330 = vmatprep.subr.bf16.mxu0 0
    %9331 = vmatpush1.bf16.msra.mxu0 %v9155
    %9332 = vmatprep.subr.bf16.mxu0 0
    %9333 = vmatpush2.bf16.msra.mxu0 0
    %9334 = vmatprep.subr.bf16.mxu0 0
    %9335 = vmatpush2.bf16.msra.mxu0 0
    %9336 = vmatprep.subr.bf16.mxu0 0
    %9337 = vmatpush2.bf16.msra.mxu0 0
    %9338 = vmatprep.subr.bf16.mxu0 0
    %9339 = vmatpush2.bf16.msra.mxu0 0
    %9340 = vmatprep.subr.bf16.mxu0 0
    %9341 = vmatpush2.bf16.msra.mxu0 0
    %9342 = vmatprep.subr.bf16.mxu0 0
    %9343 = vmatpush2.bf16.msra.mxu0 0
    %9344 = vmatprep.subr.bf16.mxu0 0
    %9345 = vmatpush2.bf16.msra.mxu0 0
    %9346 = vmatprep.subr.bf16.mxu0 0
    %9347 = vmatpush2.bf16.msra.mxu0 0
    %9348 = vmatprep.mubr.bf16.mxu0 0
    %9349 = vmatmul.mubr.bf16.gmra.mxu0 %v9314
    %v9350 = vpop.f32.mrf.mxu0
    %v9351 = vadd.f32 0.0, %v9350
    %v9352 = vpop.f32.mrf.mxu0
    %v9353 = vpop.f32.mrf.mxu0
    %v9354 = vadd.f32 0.0, %v9353
    %v9355 = vpop.f32.mrf.mxu0
    %9356 = vdwg.mxu0
    %v9358 = vsel %vm7784, %v9137, 0
    %9360 = vmatprep.subr.bf16.mxu0 0
    %9361 = vmatpush1.bf16.msra.mxu0 0
    %9362 = vmatprep.subr.bf16.mxu0 0
    %9363 = vmatpush1.bf16.msra.mxu0 0
    %9364 = vmatprep.subr.bf16.mxu0 0
    %9365 = vmatpush1.bf16.msra.mxu0 0
    %9366 = vmatprep.subr.bf16.mxu0 0
    %9367 = vmatpush1.bf16.msra.mxu0 0
    %9368 = vmatprep.subr.bf16.mxu0 0
    %9369 = vmatpush1.bf16.msra.mxu0 0
    %9370 = vmatprep.subr.bf16.mxu0 0
    %9371 = vmatpush1.bf16.msra.mxu0 0
    %9372 = vmatprep.subr.bf16.mxu0 0
    %9373 = vmatpush1.bf16.msra.mxu0 %v9158
    %9374 = vmatprep.subr.bf16.mxu0 0
    %9375 = vmatpush1.bf16.msra.mxu0 %v9157
    %9376 = vmatprep.subr.bf16.mxu0 0
    %9377 = vmatpush2.bf16.msra.mxu0 0
    %9378 = vmatprep.subr.bf16.mxu0 0
    %9379 = vmatpush2.bf16.msra.mxu0 0
    %9380 = vmatprep.subr.bf16.mxu0 0
    %9381 = vmatpush2.bf16.msra.mxu0 0
    %9382 = vmatprep.subr.bf16.mxu0 0
    %9383 = vmatpush2.bf16.msra.mxu0 0
    %9384 = vmatprep.subr.bf16.mxu0 0
    %9385 = vmatpush2.bf16.msra.mxu0 0
    %9386 = vmatprep.subr.bf16.mxu0 0
    %9387 = vmatpush2.bf16.msra.mxu0 0
    %9388 = vmatprep.subr.bf16.mxu0 0
    %9389 = vmatpush2.bf16.msra.mxu0 0
    %9390 = vmatprep.subr.bf16.mxu0 0
    %9391 = vmatpush2.bf16.msra.mxu0 0
    %9392 = vmatprep.mubr.bf16.mxu0 0
    %9393 = vmatmul.mubr.bf16.gmra.mxu0 %v9358
    %v9394 = vpop.f32.mrf.mxu0
    %v9395 = vadd.f32 0.0, %v9394
    %v9396 = vpop.f32.mrf.mxu0
    %v9397 = vpop.f32.mrf.mxu0
    %v9398 = vadd.f32 0.0, %v9397
    %v9399 = vpop.f32.mrf.mxu0
    %9400 = vdwg.mxu0
    %v9402 = vsel %vm7784, %v9138, 0
    %9404 = vmatprep.subr.bf16.mxu0 0
    %9405 = vmatpush1.bf16.msra.mxu0 0
    %9406 = vmatprep.subr.bf16.mxu0 0
    %9407 = vmatpush1.bf16.msra.mxu0 0
    %9408 = vmatprep.subr.bf16.mxu0 0
    %9409 = vmatpush1.bf16.msra.mxu0 0
    %9410 = vmatprep.subr.bf16.mxu0 0
    %9411 = vmatpush1.bf16.msra.mxu0 0
    %9412 = vmatprep.subr.bf16.mxu0 0
    %9413 = vmatpush1.bf16.msra.mxu0 0
    %9414 = vmatprep.subr.bf16.mxu0 0
    %9415 = vmatpush1.bf16.msra.mxu0 0
    %9416 = vmatprep.subr.bf16.mxu0 0
    %9417 = vmatpush1.bf16.msra.mxu0 %v9160
    %9418 = vmatprep.subr.bf16.mxu0 0
    %9419 = vmatpush1.bf16.msra.mxu0 %v9159
    %9420 = vmatprep.subr.bf16.mxu0 0
    %9421 = vmatpush2.bf16.msra.mxu0 0
    %9422 = vmatprep.subr.bf16.mxu0 0
    %9423 = vmatpush2.bf16.msra.mxu0 0
    %9424 = vmatprep.subr.bf16.mxu0 0
    %9425 = vmatpush2.bf16.msra.mxu0 0
    %9426 = vmatprep.subr.bf16.mxu0 0
    %9427 = vmatpush2.bf16.msra.mxu0 0
    %9428 = vmatprep.subr.bf16.mxu0 0
    %9429 = vmatpush2.bf16.msra.mxu0 0
    %9430 = vmatprep.subr.bf16.mxu0 0
    %9431 = vmatpush2.bf16.msra.mxu0 0
    %9432 = vmatprep.subr.bf16.mxu0 0
    %9433 = vmatpush2.bf16.msra.mxu0 0
    %9434 = vmatprep.subr.bf16.mxu0 0
    %9435 = vmatpush2.bf16.msra.mxu0 0
    %9436 = vmatprep.mubr.bf16.mxu0 0
    %9437 = vmatmul.mubr.bf16.gmra.mxu0 %v9402
    %v9438 = vpop.f32.mrf.mxu0
    %v9439 = vadd.f32 0.0, %v9438
    %v9440 = vpop.f32.mrf.mxu0
    %v9441 = vpop.f32.mrf.mxu0
    %v9442 = vadd.f32 0.0, %v9441
    %v9443 = vpop.f32.mrf.mxu0
    %9444 = vdwg.mxu0
    %v9446 = vsel %vm7784, %v9139, 0
    %9448 = vmatprep.subr.bf16.mxu0 0
    %9449 = vmatpush1.bf16.msra.mxu0 0
    %9450 = vmatprep.subr.bf16.mxu0 0
    %9451 = vmatpush1.bf16.msra.mxu0 0
    %9452 = vmatprep.subr.bf16.mxu0 0
    %9453 = vmatpush1.bf16.msra.mxu0 0
    %9454 = vmatprep.subr.bf16.mxu0 0
    %9455 = vmatpush1.bf16.msra.mxu0 0
    %9456 = vmatprep.subr.bf16.mxu0 0
    %9457 = vmatpush1.bf16.msra.mxu0 0
    %9458 = vmatprep.subr.bf16.mxu0 0
    %9459 = vmatpush1.bf16.msra.mxu0 0
    %9460 = vmatprep.subr.bf16.mxu0 0
    %9461 = vmatpush1.bf16.msra.mxu0 %v9162
    %9462 = vmatprep.subr.bf16.mxu0 0
    %9463 = vmatpush1.bf16.msra.mxu0 %v9161
    %9464 = vmatprep.subr.bf16.mxu0 0
    %9465 = vmatpush2.bf16.msra.mxu0 0
    %9466 = vmatprep.subr.bf16.mxu0 0
    %9467 = vmatpush2.bf16.msra.mxu0 0
    %9468 = vmatprep.subr.bf16.mxu0 0
    %9469 = vmatpush2.bf16.msra.mxu0 0
    %9470 = vmatprep.subr.bf16.mxu0 0
    %9471 = vmatpush2.bf16.msra.mxu0 0
    %9472 = vmatprep.subr.bf16.mxu0 0
    %9473 = vmatpush2.bf16.msra.mxu0 0
    %9474 = vmatprep.subr.bf16.mxu0 0
    %9475 = vmatpush2.bf16.msra.mxu0 0
    %9476 = vmatprep.subr.bf16.mxu0 0
    %9477 = vmatpush2.bf16.msra.mxu0 0
    %9478 = vmatprep.subr.bf16.mxu0 0
    %9479 = vmatpush2.bf16.msra.mxu0 0
    %9480 = vmatprep.mubr.bf16.mxu0 0
    %9481 = vmatmul.mubr.bf16.gmra.mxu0 %v9446
    %v9482 = vpop.f32.mrf.mxu0
    %v9483 = vadd.f32 0.0, %v9482
    %v9484 = vpop.f32.mrf.mxu0
    %v9485 = vpop.f32.mrf.mxu0
    %v9486 = vadd.f32 0.0, %v9485
    %v9487 = vpop.f32.mrf.mxu0
    %9488 = vdwg.mxu0
    %v9490 = vsel %vm7784, %v9140, 0
    %9492 = vmatprep.subr.bf16.mxu0 0
    %9493 = vmatpush1.bf16.msra.mxu0 0
    %9494 = vmatprep.subr.bf16.mxu0 0
    %9495 = vmatpush1.bf16.msra.mxu0 0
    %9496 = vmatprep.subr.bf16.mxu0 0
    %9497 = vmatpush1.bf16.msra.mxu0 0
    %9498 = vmatprep.subr.bf16.mxu0 0
    %9499 = vmatpush1.bf16.msra.mxu0 0
    %9500 = vmatprep.subr.bf16.mxu0 0
    %9501 = vmatpush1.bf16.msra.mxu0 0
    %9502 = vmatprep.subr.bf16.mxu0 0
    %9503 = vmatpush1.bf16.msra.mxu0 0
    %9504 = vmatprep.subr.bf16.mxu0 0
    %9505 = vmatpush1.bf16.msra.mxu0 %v9164
    %9506 = vmatprep.subr.bf16.mxu0 0
    %9507 = vmatpush1.bf16.msra.mxu0 %v9163
    %9508 = vmatprep.subr.bf16.mxu0 0
    %9509 = vmatpush2.bf16.msra.mxu0 0
    %9510 = vmatprep.subr.bf16.mxu0 0
    %9511 = vmatpush2.bf16.msra.mxu0 0
    %9512 = vmatprep.subr.bf16.mxu0 0
    %9513 = vmatpush2.bf16.msra.mxu0 0
    %9514 = vmatprep.subr.bf16.mxu0 0
    %9515 = vmatpush2.bf16.msra.mxu0 0
    %9516 = vmatprep.subr.bf16.mxu0 0
    %9517 = vmatpush2.bf16.msra.mxu0 0
    %9518 = vmatprep.subr.bf16.mxu0 0
    %9519 = vmatpush2.bf16.msra.mxu0 0
    %9520 = vmatprep.subr.bf16.mxu0 0
    %9521 = vmatpush2.bf16.msra.mxu0 0
    %9522 = vmatprep.subr.bf16.mxu0 0
    %9523 = vmatpush2.bf16.msra.mxu0 0
    %9524 = vmatprep.mubr.bf16.mxu0 0
    %9525 = vmatmul.mubr.bf16.gmra.mxu0 %v9490
    %v9526 = vpop.f32.mrf.mxu0
    %v9527 = vadd.f32 0.0, %v9526
    %v9528 = vpop.f32.mrf.mxu0
    %v9529 = vpop.f32.mrf.mxu0
    %v9530 = vadd.f32 0.0, %v9529
    %v9531 = vpop.f32.mrf.mxu0
    %9532 = vdwg.mxu0
    %v9534 = vsel %vm7784, %v9141, 0
    %9536 = vmatprep.subr.bf16.mxu0 0
    %9537 = vmatpush1.bf16.msra.mxu0 0
    %9538 = vmatprep.subr.bf16.mxu0 0
    %9539 = vmatpush1.bf16.msra.mxu0 0
    %9540 = vmatprep.subr.bf16.mxu0 0
    %9541 = vmatpush1.bf16.msra.mxu0 0
    %9542 = vmatprep.subr.bf16.mxu0 0
    %9543 = vmatpush1.bf16.msra.mxu0 0
    %9544 = vmatprep.subr.bf16.mxu0 0
    %9545 = vmatpush1.bf16.msra.mxu0 0
    %9546 = vmatprep.subr.bf16.mxu0 0
    %9547 = vmatpush1.bf16.msra.mxu0 0
    %9548 = vmatprep.subr.bf16.mxu0 0
    %9549 = vmatpush1.bf16.msra.mxu0 %v9166
    %9550 = vmatprep.subr.bf16.mxu0 0
    %9551 = vmatpush1.bf16.msra.mxu0 %v9165
    %9552 = vmatprep.subr.bf16.mxu0 0
    %9553 = vmatpush2.bf16.msra.mxu0 0
    %9554 = vmatprep.subr.bf16.mxu0 0
    %9555 = vmatpush2.bf16.msra.mxu0 0
    %9556 = vmatprep.subr.bf16.mxu0 0
    %9557 = vmatpush2.bf16.msra.mxu0 0
    %9558 = vmatprep.subr.bf16.mxu0 0
    %9559 = vmatpush2.bf16.msra.mxu0 0
    %9560 = vmatprep.subr.bf16.mxu0 0
    %9561 = vmatpush2.bf16.msra.mxu0 0
    %9562 = vmatprep.subr.bf16.mxu0 0
    %9563 = vmatpush2.bf16.msra.mxu0 0
    %9564 = vmatprep.subr.bf16.mxu0 0
    %9565 = vmatpush2.bf16.msra.mxu0 0
    %9566 = vmatprep.subr.bf16.mxu0 0
    %9567 = vmatpush2.bf16.msra.mxu0 0
    %9568 = vmatprep.mubr.bf16.mxu0 0
    %9569 = vmatmul.mubr.bf16.gmra.mxu0 %v9534
    %v9570 = vpop.f32.mrf.mxu0
    %v9571 = vadd.f32 0.0, %v9570
    %v9572 = vpop.f32.mrf.mxu0
    %v9573 = vpop.f32.mrf.mxu0
    %v9574 = vadd.f32 0.0, %v9573
    %v9575 = vpop.f32.mrf.mxu0
    %9576 = vdwg.mxu0
    %v9578 = vsel %vm7784, %v9142, 0
    %9580 = vmatprep.subr.bf16.mxu0 0
    %9581 = vmatpush1.bf16.msra.mxu0 0
    %9582 = vmatprep.subr.bf16.mxu0 0
    %9583 = vmatpush1.bf16.msra.mxu0 0
    %9584 = vmatprep.subr.bf16.mxu0 0
    %9585 = vmatpush1.bf16.msra.mxu0 0
    %9586 = vmatprep.subr.bf16.mxu0 0
    %9587 = vmatpush1.bf16.msra.mxu0 0
    %9588 = vmatprep.subr.bf16.mxu0 0
    %9589 = vmatpush1.bf16.msra.mxu0 0
    %9590 = vmatprep.subr.bf16.mxu0 0
    %9591 = vmatpush1.bf16.msra.mxu0 0
    %9592 = vmatprep.subr.bf16.mxu0 0
    %9593 = vmatpush1.bf16.msra.mxu0 %v9168
    %9594 = vmatprep.subr.bf16.mxu0 0
    %9595 = vmatpush1.bf16.msra.mxu0 %v9167
    %9596 = vmatprep.subr.bf16.mxu0 0
    %9597 = vmatpush2.bf16.msra.mxu0 0
    %9598 = vmatprep.subr.bf16.mxu0 0
    %9599 = vmatpush2.bf16.msra.mxu0 0
    %9600 = vmatprep.subr.bf16.mxu0 0
    %9601 = vmatpush2.bf16.msra.mxu0 0
    %9602 = vmatprep.subr.bf16.mxu0 0
    %9603 = vmatpush2.bf16.msra.mxu0 0
    %9604 = vmatprep.subr.bf16.mxu0 0
    %9605 = vmatpush2.bf16.msra.mxu0 0
    %9606 = vmatprep.subr.bf16.mxu0 0
    %9607 = vmatpush2.bf16.msra.mxu0 0
    %9608 = vmatprep.subr.bf16.mxu0 0
    %9609 = vmatpush2.bf16.msra.mxu0 0
    %9610 = vmatprep.subr.bf16.mxu0 0
    %9611 = vmatpush2.bf16.msra.mxu0 0
    %9612 = vmatprep.mubr.bf16.mxu0 0
    %9613 = vmatmul.mubr.bf16.gmra.mxu0 %v9578
    %v9614 = vpop.f32.mrf.mxu0
    %v9615 = vadd.f32 0.0, %v9614
    %v9616 = vpop.f32.mrf.mxu0
    %v9617 = vpop.f32.mrf.mxu0
    %v9618 = vadd.f32 0.0, %v9617
    %v9619 = vpop.f32.mrf.mxu0
    %9620 = vdwg.mxu0
    %v9622 = vsel %vm7784, %v9143, 0
    %9624 = vmatprep.subr.bf16.mxu0 0
    %9625 = vmatpush1.bf16.msra.mxu0 0
    %9626 = vmatprep.subr.bf16.mxu0 0
    %9627 = vmatpush1.bf16.msra.mxu0 0
    %9628 = vmatprep.subr.bf16.mxu0 0
    %9629 = vmatpush1.bf16.msra.mxu0 0
    %9630 = vmatprep.subr.bf16.mxu0 0
    %9631 = vmatpush1.bf16.msra.mxu0 0
    %9632 = vmatprep.subr.bf16.mxu0 0
    %9633 = vmatpush1.bf16.msra.mxu0 0
    %9634 = vmatprep.subr.bf16.mxu0 0
    %9635 = vmatpush1.bf16.msra.mxu0 0
    %9636 = vmatprep.subr.bf16.mxu0 0
    %9637 = vmatpush1.bf16.msra.mxu0 %v9170
    %9638 = vmatprep.subr.bf16.mxu0 0
    %9639 = vmatpush1.bf16.msra.mxu0 %v9169
    %9640 = vmatprep.subr.bf16.mxu0 0
    %9641 = vmatpush2.bf16.msra.mxu0 0
    %9642 = vmatprep.subr.bf16.mxu0 0
    %9643 = vmatpush2.bf16.msra.mxu0 0
    %9644 = vmatprep.subr.bf16.mxu0 0
    %9645 = vmatpush2.bf16.msra.mxu0 0
    %9646 = vmatprep.subr.bf16.mxu0 0
    %9647 = vmatpush2.bf16.msra.mxu0 0
    %9648 = vmatprep.subr.bf16.mxu0 0
    %9649 = vmatpush2.bf16.msra.mxu0 0
    %9650 = vmatprep.subr.bf16.mxu0 0
    %9651 = vmatpush2.bf16.msra.mxu0 0
    %9652 = vmatprep.subr.bf16.mxu0 0
    %9653 = vmatpush2.bf16.msra.mxu0 0
    %9654 = vmatprep.subr.bf16.mxu0 0
    %9655 = vmatpush2.bf16.msra.mxu0 0
    %9656 = vmatprep.mubr.bf16.mxu0 0
    %9657 = vmatmul.mubr.bf16.gmra.mxu0 %v9622
    %v9658 = vpop.f32.mrf.mxu0
    %v9659 = vadd.f32 0.0, %v9658
    %v9660 = vpop.f32.mrf.mxu0
    %v9661 = vpop.f32.mrf.mxu0
    %v9662 = vadd.f32 0.0, %v9661
    %v9663 = vpop.f32.mrf.mxu0
    %9664 = vdwg.mxu0
    %v9666 = vsel %vm7784, %v9144, 0
    %9668 = vmatprep.subr.bf16.mxu0 0
    %9669 = vmatpush1.bf16.msra.mxu0 0
    %9670 = vmatprep.subr.bf16.mxu0 0
    %9671 = vmatpush1.bf16.msra.mxu0 0
    %9672 = vmatprep.subr.bf16.mxu0 0
    %9673 = vmatpush1.bf16.msra.mxu0 0
    %9674 = vmatprep.subr.bf16.mxu0 0
    %9675 = vmatpush1.bf16.msra.mxu0 0
    %9676 = vmatprep.subr.bf16.mxu0 0
    %9677 = vmatpush1.bf16.msra.mxu0 0
    %9678 = vmatprep.subr.bf16.mxu0 0
    %9679 = vmatpush1.bf16.msra.mxu0 0
    %9680 = vmatprep.subr.bf16.mxu0 0
    %9681 = vmatpush1.bf16.msra.mxu0 %v9172
    %9682 = vmatprep.subr.bf16.mxu0 0
    %9683 = vmatpush1.bf16.msra.mxu0 %v9171
    %9684 = vmatprep.subr.bf16.mxu0 0
    %9685 = vmatpush2.bf16.msra.mxu0 0
    %9686 = vmatprep.subr.bf16.mxu0 0
    %9687 = vmatpush2.bf16.msra.mxu0 0
    %9688 = vmatprep.subr.bf16.mxu0 0
    %9689 = vmatpush2.bf16.msra.mxu0 0
    %9690 = vmatprep.subr.bf16.mxu0 0
    %9691 = vmatpush2.bf16.msra.mxu0 0
    %9692 = vmatprep.subr.bf16.mxu0 0
    %9693 = vmatpush2.bf16.msra.mxu0 0
    %9694 = vmatprep.subr.bf16.mxu0 0
    %9695 = vmatpush2.bf16.msra.mxu0 0
    %9696 = vmatprep.subr.bf16.mxu0 0
    %9697 = vmatpush2.bf16.msra.mxu0 0
    %9698 = vmatprep.subr.bf16.mxu0 0
    %9699 = vmatpush2.bf16.msra.mxu0 0
    %9700 = vmatprep.mubr.bf16.mxu0 0
    %9701 = vmatmul.mubr.bf16.gmra.mxu0 %v9666
    %v9702 = vpop.f32.mrf.mxu0
    %v9703 = vadd.f32 0.0, %v9702
    %v9704 = vpop.f32.mrf.mxu0
    %v9705 = vpop.f32.mrf.mxu0
    %v9706 = vadd.f32 0.0, %v9705
    %v9707 = vpop.f32.mrf.mxu0
    %9708 = vdwg.mxu0
    %v9710 = vsel %vm7784, %v9145, 0
    %9712 = vmatprep.subr.bf16.mxu0 0
    %9713 = vmatpush1.bf16.msra.mxu0 0
    %9714 = vmatprep.subr.bf16.mxu0 0
    %9715 = vmatpush1.bf16.msra.mxu0 0
    %9716 = vmatprep.subr.bf16.mxu0 0
    %9717 = vmatpush1.bf16.msra.mxu0 0
    %9718 = vmatprep.subr.bf16.mxu0 0
    %9719 = vmatpush1.bf16.msra.mxu0 0
    %9720 = vmatprep.subr.bf16.mxu0 0
    %9721 = vmatpush1.bf16.msra.mxu0 0
    %9722 = vmatprep.subr.bf16.mxu0 0
    %9723 = vmatpush1.bf16.msra.mxu0 0
    %9724 = vmatprep.subr.bf16.mxu0 0
    %9725 = vmatpush1.bf16.msra.mxu0 %v9174
    %9726 = vmatprep.subr.bf16.mxu0 0
    %9727 = vmatpush1.bf16.msra.mxu0 %v9173
    %9728 = vmatprep.subr.bf16.mxu0 0
    %9729 = vmatpush2.bf16.msra.mxu0 0
    %9730 = vmatprep.subr.bf16.mxu0 0
    %9731 = vmatpush2.bf16.msra.mxu0 0
    %9732 = vmatprep.subr.bf16.mxu0 0
    %9733 = vmatpush2.bf16.msra.mxu0 0
    %9734 = vmatprep.subr.bf16.mxu0 0
    %9735 = vmatpush2.bf16.msra.mxu0 0
    %9736 = vmatprep.subr.bf16.mxu0 0
    %9737 = vmatpush2.bf16.msra.mxu0 0
    %9738 = vmatprep.subr.bf16.mxu0 0
    %9739 = vmatpush2.bf16.msra.mxu0 0
    %9740 = vmatprep.subr.bf16.mxu0 0
    %9741 = vmatpush2.bf16.msra.mxu0 0
    %9742 = vmatprep.subr.bf16.mxu0 0
    %9743 = vmatpush2.bf16.msra.mxu0 0
    %9744 = vmatprep.mubr.bf16.mxu0 0
    %9745 = vmatmul.mubr.bf16.gmra.mxu0 %v9710
    %v9746 = vpop.f32.mrf.mxu0
    %v9747 = vadd.f32 0.0, %v9746
    %v9748 = vpop.f32.mrf.mxu0
    %v9749 = vpop.f32.mrf.mxu0
    %v9750 = vadd.f32 0.0, %v9749
    %v9751 = vpop.f32.mrf.mxu0
    %9752 = vdwg.mxu0
    %v9754 = vsel %vm7784, %v9146, 0
    %9756 = vmatprep.subr.bf16.mxu0 0
    %9757 = vmatpush1.bf16.msra.mxu0 0
    %9758 = vmatprep.subr.bf16.mxu0 0
    %9759 = vmatpush1.bf16.msra.mxu0 0
    %9760 = vmatprep.subr.bf16.mxu0 0
    %9761 = vmatpush1.bf16.msra.mxu0 0
    %9762 = vmatprep.subr.bf16.mxu0 0
    %9763 = vmatpush1.bf16.msra.mxu0 0
    %9764 = vmatprep.subr.bf16.mxu0 0
    %9765 = vmatpush1.bf16.msra.mxu0 0
    %9766 = vmatprep.subr.bf16.mxu0 0
    %9767 = vmatpush1.bf16.msra.mxu0 0
    %9768 = vmatprep.subr.bf16.mxu0 0
    %9769 = vmatpush1.bf16.msra.mxu0 %v9176
    %9770 = vmatprep.subr.bf16.mxu0 0
    %9771 = vmatpush1.bf16.msra.mxu0 %v9175
    %9772 = vmatprep.subr.bf16.mxu0 0
    %9773 = vmatpush2.bf16.msra.mxu0 0
    %9774 = vmatprep.subr.bf16.mxu0 0
    %9775 = vmatpush2.bf16.msra.mxu0 0
    %9776 = vmatprep.subr.bf16.mxu0 0
    %9777 = vmatpush2.bf16.msra.mxu0 0
    %9778 = vmatprep.subr.bf16.mxu0 0
    %9779 = vmatpush2.bf16.msra.mxu0 0
    %9780 = vmatprep.subr.bf16.mxu0 0
    %9781 = vmatpush2.bf16.msra.mxu0 0
    %9782 = vmatprep.subr.bf16.mxu0 0
    %9783 = vmatpush2.bf16.msra.mxu0 0
    %9784 = vmatprep.subr.bf16.mxu0 0
    %9785 = vmatpush2.bf16.msra.mxu0 0
    %9786 = vmatprep.subr.bf16.mxu0 0
    %9787 = vmatpush2.bf16.msra.mxu0 0
    %9788 = vmatprep.mubr.bf16.mxu0 0
    %9789 = vmatmul.mubr.bf16.gmra.mxu0 %v9754
    %v9790 = vpop.f32.mrf.mxu0
    %v9791 = vadd.f32 0.0, %v9790
    %v9792 = vpop.f32.mrf.mxu0
    %v9793 = vpop.f32.mrf.mxu0
    %v9794 = vadd.f32 0.0, %v9793
    %v9795 = vpop.f32.mrf.mxu0
    %9796 = vdwg.mxu0
    %v9798 = vsel %vm7784, %v9147, 0
    %9800 = vmatprep.subr.bf16.mxu0 0
    %9801 = vmatpush1.bf16.msra.mxu0 0
    %9802 = vmatprep.subr.bf16.mxu0 0
    %9803 = vmatpush1.bf16.msra.mxu0 0
    %9804 = vmatprep.subr.bf16.mxu0 0
    %9805 = vmatpush1.bf16.msra.mxu0 0
    %9806 = vmatprep.subr.bf16.mxu0 0
    %9807 = vmatpush1.bf16.msra.mxu0 0
    %9808 = vmatprep.subr.bf16.mxu0 0
    %9809 = vmatpush1.bf16.msra.mxu0 0
    %9810 = vmatprep.subr.bf16.mxu0 0
    %9811 = vmatpush1.bf16.msra.mxu0 0
    %9812 = vmatprep.subr.bf16.mxu0 0
    %9813 = vmatpush1.bf16.msra.mxu0 %v9178
    %9814 = vmatprep.subr.bf16.mxu0 0
    %9815 = vmatpush1.bf16.msra.mxu0 %v9177
    %9816 = vmatprep.subr.bf16.mxu0 0
    %9817 = vmatpush2.bf16.msra.mxu0 0
    %9818 = vmatprep.subr.bf16.mxu0 0
    %9819 = vmatpush2.bf16.msra.mxu0 0
    %9820 = vmatprep.subr.bf16.mxu0 0
    %9821 = vmatpush2.bf16.msra.mxu0 0
    %9822 = vmatprep.subr.bf16.mxu0 0
    %9823 = vmatpush2.bf16.msra.mxu0 0
    %9824 = vmatprep.subr.bf16.mxu0 0
    %9825 = vmatpush2.bf16.msra.mxu0 0
    %9826 = vmatprep.subr.bf16.mxu0 0
    %9827 = vmatpush2.bf16.msra.mxu0 0
    %9828 = vmatprep.subr.bf16.mxu0 0
    %9829 = vmatpush2.bf16.msra.mxu0 0
    %9830 = vmatprep.subr.bf16.mxu0 0
    %9831 = vmatpush2.bf16.msra.mxu0 0
    %9832 = vmatprep.mubr.bf16.mxu0 0
    %9833 = vmatmul.mubr.bf16.gmra.mxu0 %v9798
    %v9834 = vpop.f32.mrf.mxu0
    %v9835 = vadd.f32 0.0, %v9834
    %v9836 = vpop.f32.mrf.mxu0
    %v9837 = vpop.f32.mrf.mxu0
    %v9838 = vadd.f32 0.0, %v9837
    %v9839 = vpop.f32.mrf.mxu0
    %9840 = vdwg.mxu0
    %v9842 = vsel %vm7784, %v9148, 0
    %9844 = vmatprep.subr.bf16.mxu0 0
    %9845 = vmatpush1.bf16.msra.mxu0 0
    %9846 = vmatprep.subr.bf16.mxu0 0
    %9847 = vmatpush1.bf16.msra.mxu0 0
    %9848 = vmatprep.subr.bf16.mxu0 0
    %9849 = vmatpush1.bf16.msra.mxu0 0
    %9850 = vmatprep.subr.bf16.mxu0 0
    %9851 = vmatpush1.bf16.msra.mxu0 0
    %9852 = vmatprep.subr.bf16.mxu0 0
    %9853 = vmatpush1.bf16.msra.mxu0 0
    %9854 = vmatprep.subr.bf16.mxu0 0
    %9855 = vmatpush1.bf16.msra.mxu0 0
    %9856 = vmatprep.subr.bf16.mxu0 0
    %9857 = vmatpush1.bf16.msra.mxu0 %v9180
    %9858 = vmatprep.subr.bf16.mxu0 0
    %9859 = vmatpush1.bf16.msra.mxu0 %v9179
    %9860 = vmatprep.subr.bf16.mxu0 0
    %9861 = vmatpush2.bf16.msra.mxu0 0
    %9862 = vmatprep.subr.bf16.mxu0 0
    %9863 = vmatpush2.bf16.msra.mxu0 0
    %9864 = vmatprep.subr.bf16.mxu0 0
    %9865 = vmatpush2.bf16.msra.mxu0 0
    %9866 = vmatprep.subr.bf16.mxu0 0
    %9867 = vmatpush2.bf16.msra.mxu0 0
    %9868 = vmatprep.subr.bf16.mxu0 0
    %9869 = vmatpush2.bf16.msra.mxu0 0
    %9870 = vmatprep.subr.bf16.mxu0 0
    %9871 = vmatpush2.bf16.msra.mxu0 0
    %9872 = vmatprep.subr.bf16.mxu0 0
    %9873 = vmatpush2.bf16.msra.mxu0 0
    %9874 = vmatprep.subr.bf16.mxu0 0
    %9875 = vmatpush2.bf16.msra.mxu0 0
    %9876 = vmatprep.mubr.bf16.mxu0 0
    %9877 = vmatmul.mubr.bf16.gmra.mxu0 %v9842
    %v9878 = vpop.f32.mrf.mxu0
    %v9879 = vadd.f32 0.0, %v9878
    %v9880 = vpop.f32.mrf.mxu0
    %v9881 = vpop.f32.mrf.mxu0
    %v9882 = vadd.f32 0.0, %v9881
    %v9883 = vpop.f32.mrf.mxu0
    %9884 = vdwg.mxu0
    %v9885 = vcombine.low %v9219, %v9307
    %v9886 = vcombine.high %v9219, %v9307
    %v9888 = vunpack.c.l.s4 1983009808
    %v9889 = vunpack.c.0.s8 %v9888
    %v9890 = vlaneseq
    %v9891 = vshrl.u32 %v9890, 7
    %v9892 = vsub.s32 %v9889, %v9891
    %v9893 = vrot.slane %v9885, %v9892
    %v9895 = vunpack.c.l.s4 1983009808
    %v9896 = vunpack.c.0.s8 %v9895
    %v9897 = vlaneseq
    %v9898 = vshrl.u32 %v9897, 7
    %v9899 = vsub.s32 %v9896, %v9898
    %v9900 = vrot.slane %v9886, %v9899
    %v9901 = vcombine.low %v9263, %v9351
    %v9902 = vcombine.high %v9263, %v9351
    %v9904 = vunpack.c.l.s4 1983009808
    %v9905 = vunpack.c.0.s8 %v9904
    %v9906 = vlaneseq
    %v9907 = vshrl.u32 %v9906, 7
    %v9908 = vsub.s32 %v9905, %v9907
    %v9909 = vrot.slane %v9901, %v9908
    %v9911 = vunpack.c.l.s4 1983009808
    %v9912 = vunpack.c.0.s8 %v9911
    %v9913 = vlaneseq
    %v9914 = vshrl.u32 %v9913, 7
    %v9915 = vsub.s32 %v9912, %v9914
    %v9916 = vrot.slane %v9902, %v9915
    %v9917 = vcombine.low %v9893, %v9909
    %v9918 = vcombine.high %v9893, %v9909
    %v9920 = vunpack.c.l.s4 1934713408
    %v9921 = vunpack.c.0.s8 %v9920
    %v9922 = vlaneseq
    %v9923 = vshrl.u32 %v9922, 7
    %v9924 = vsub.s32 %v9921, %v9923
    %v9925 = vrot.slane %v9917, %v9924
    %v9927 = vunpack.c.l.s4 1934713408
    %v9928 = vunpack.c.0.s8 %v9927
    %v9929 = vlaneseq
    %v9930 = vshrl.u32 %v9929, 7
    %v9931 = vsub.s32 %v9928, %v9930
    %v9932 = vrot.slane %v9918, %v9931
    %v9933 = vcombine.low %v9900, %v9916
    %v9934 = vcombine.high %v9900, %v9916
    %v9936 = vunpack.c.l.s4 1934713408
    %v9937 = vunpack.c.0.s8 %v9936
    %v9938 = vlaneseq
    %v9939 = vshrl.u32 %v9938, 7
    %v9940 = vsub.s32 %v9937, %v9939
    %v9941 = vrot.slane %v9933, %v9940
    %v9943 = vunpack.c.l.s4 1934713408
    %v9944 = vunpack.c.0.s8 %v9943
    %v9945 = vlaneseq
    %v9946 = vshrl.u32 %v9945, 7
    %v9947 = vsub.s32 %v9944, %v9946
    %v9948 = vrot.slane %v9934, %v9947
    %v9949 = vcombine.high %v9925, 0.0
    %v9950 = vcombine.high %v9932, 0.0
    %v9951 = vcombine.high %v9941, 0.0
    %v9952 = vcombine.high %v9948, 0.0
    %v9953 = vcombine.low %v9222, %v9310
    %v9954 = vcombine.high %v9222, %v9310
    %v9956 = vunpack.c.l.s4 1983009808
    %v9957 = vunpack.c.0.s8 %v9956
    %v9958 = vlaneseq
    %v9959 = vshrl.u32 %v9958, 7
    %v9960 = vsub.s32 %v9957, %v9959
    %v9961 = vrot.slane %v9953, %v9960
    %v9963 = vunpack.c.l.s4 1983009808
    %v9964 = vunpack.c.0.s8 %v9963
    %v9965 = vlaneseq
    %v9966 = vshrl.u32 %v9965, 7
    %v9967 = vsub.s32 %v9964, %v9966
    %v9968 = vrot.slane %v9954, %v9967
    %v9969 = vcombine.low %v9266, %v9354
    %v9970 = vcombine.high %v9266, %v9354
    %v9972 = vunpack.c.l.s4 1983009808
    %v9973 = vunpack.c.0.s8 %v9972
    %v9974 = vlaneseq
    %v9975 = vshrl.u32 %v9974, 7
    %v9976 = vsub.s32 %v9973, %v9975
    %v9977 = vrot.slane %v9969, %v9976
    %v9979 = vunpack.c.l.s4 1983009808
    %v9980 = vunpack.c.0.s8 %v9979
    %v9981 = vlaneseq
    %v9982 = vshrl.u32 %v9981, 7
    %v9983 = vsub.s32 %v9980, %v9982
    %v9984 = vrot.slane %v9970, %v9983
    %v9985 = vcombine.low %v9961, %v9977
    %v9986 = vcombine.high %v9961, %v9977
    %v9988 = vunpack.c.l.s4 1934713408
    %v9989 = vunpack.c.0.s8 %v9988
    %v9990 = vlaneseq
    %v9991 = vshrl.u32 %v9990, 7
    %v9992 = vsub.s32 %v9989, %v9991
    %v9993 = vrot.slane %v9985, %v9992
    %v9995 = vunpack.c.l.s4 1934713408
    %v9996 = vunpack.c.0.s8 %v9995
    %v9997 = vlaneseq
    %v9998 = vshrl.u32 %v9997, 7
    %v9999 = vsub.s32 %v9996, %v9998
    %v10000 = vrot.slane %v9986, %v9999
    %v10001 = vcombine.low %v9968, %v9984
    %v10002 = vcombine.high %v9968, %v9984
    %v10004 = vunpack.c.l.s4 1934713408
    %v10005 = vunpack.c.0.s8 %v10004
    %v10006 = vlaneseq
    %v10007 = vshrl.u32 %v10006, 7
    %v10008 = vsub.s32 %v10005, %v10007
    %v10009 = vrot.slane %v10001, %v10008
    %v10011 = vunpack.c.l.s4 1934713408
    %v10012 = vunpack.c.0.s8 %v10011
    %v10013 = vlaneseq
    %v10014 = vshrl.u32 %v10013, 7
    %v10015 = vsub.s32 %v10012, %v10014
    %v10016 = vrot.slane %v10002, %v10015
    %v10017 = vcombine.high %v9993, 0.0
    %v10018 = vcombine.high %v10000, 0.0
    %v10019 = vcombine.high %v10009, 0.0
    %v10020 = vcombine.high %v10016, 0.0
    %v10021 = vcombine.low %v9395, %v9483
    %v10022 = vcombine.high %v9395, %v9483
    %v10024 = vunpack.c.l.s4 1983009808
    %v10025 = vunpack.c.0.s8 %v10024
    %v10026 = vlaneseq
    %v10027 = vshrl.u32 %v10026, 7
    %v10028 = vsub.s32 %v10025, %v10027
    %v10029 = vrot.slane %v10021, %v10028
    %v10031 = vunpack.c.l.s4 1983009808
    %v10032 = vunpack.c.0.s8 %v10031
    %v10033 = vlaneseq
    %v10034 = vshrl.u32 %v10033, 7
    %v10035 = vsub.s32 %v10032, %v10034
    %v10036 = vrot.slane %v10022, %v10035
    %v10037 = vcombine.low %v9439, %v9527
    %v10038 = vcombine.high %v9439, %v9527
    %v10040 = vunpack.c.l.s4 1983009808
    %v10041 = vunpack.c.0.s8 %v10040
    %v10042 = vlaneseq
    %v10043 = vshrl.u32 %v10042, 7
    %v10044 = vsub.s32 %v10041, %v10043
    %v10045 = vrot.slane %v10037, %v10044
    %v10047 = vunpack.c.l.s4 1983009808
    %v10048 = vunpack.c.0.s8 %v10047
    %v10049 = vlaneseq
    %v10050 = vshrl.u32 %v10049, 7
    %v10051 = vsub.s32 %v10048, %v10050
    %v10052 = vrot.slane %v10038, %v10051
    %v10053 = vcombine.low %v10029, %v10045
    %v10054 = vcombine.high %v10029, %v10045
    %v10056 = vunpack.c.l.s4 1934713408
    %v10057 = vunpack.c.0.s8 %v10056
    %v10058 = vlaneseq
    %v10059 = vshrl.u32 %v10058, 7
    %v10060 = vsub.s32 %v10057, %v10059
    %v10061 = vrot.slane %v10053, %v10060
    %v10063 = vunpack.c.l.s4 1934713408
    %v10064 = vunpack.c.0.s8 %v10063
    %v10065 = vlaneseq
    %v10066 = vshrl.u32 %v10065, 7
    %v10067 = vsub.s32 %v10064, %v10066
    %v10068 = vrot.slane %v10054, %v10067
    %v10069 = vcombine.low %v10036, %v10052
    %v10070 = vcombine.high %v10036, %v10052
    %v10072 = vunpack.c.l.s4 1934713408
    %v10073 = vunpack.c.0.s8 %v10072
    %v10074 = vlaneseq
    %v10075 = vshrl.u32 %v10074, 7
    %v10076 = vsub.s32 %v10073, %v10075
    %v10077 = vrot.slane %v10069, %v10076
    %v10079 = vunpack.c.l.s4 1934713408
    %v10080 = vunpack.c.0.s8 %v10079
    %v10081 = vlaneseq
    %v10082 = vshrl.u32 %v10081, 7
    %v10083 = vsub.s32 %v10080, %v10082
    %v10084 = vrot.slane %v10070, %v10083
    %v10085 = vcombine.high %v10061, 0.0
    %v10086 = vcombine.high %v10068, 0.0
    %v10087 = vcombine.high %v10077, 0.0
    %v10088 = vcombine.high %v10084, 0.0
    %v10089 = vcombine.low %v9398, %v9486
    %v10090 = vcombine.high %v9398, %v9486
    %v10092 = vunpack.c.l.s4 1983009808
    %v10093 = vunpack.c.0.s8 %v10092
    %v10094 = vlaneseq
    %v10095 = vshrl.u32 %v10094, 7
    %v10096 = vsub.s32 %v10093, %v10095
    %v10097 = vrot.slane %v10089, %v10096
    %v10099 = vunpack.c.l.s4 1983009808
    %v10100 = vunpack.c.0.s8 %v10099
    %v10101 = vlaneseq
    %v10102 = vshrl.u32 %v10101, 7
    %v10103 = vsub.s32 %v10100, %v10102
    %v10104 = vrot.slane %v10090, %v10103
    %v10105 = vcombine.low %v9442, %v9530
    %v10106 = vcombine.high %v9442, %v9530
    %v10108 = vunpack.c.l.s4 1983009808
    %v10109 = vunpack.c.0.s8 %v10108
    %v10110 = vlaneseq
    %v10111 = vshrl.u32 %v10110, 7
    %v10112 = vsub.s32 %v10109, %v10111
    %v10113 = vrot.slane %v10105, %v10112
    %v10115 = vunpack.c.l.s4 1983009808
    %v10116 = vunpack.c.0.s8 %v10115
    %v10117 = vlaneseq
    %v10118 = vshrl.u32 %v10117, 7
    %v10119 = vsub.s32 %v10116, %v10118
    %v10120 = vrot.slane %v10106, %v10119
    %v10121 = vcombine.low %v10097, %v10113
    %v10122 = vcombine.high %v10097, %v10113
    %v10124 = vunpack.c.l.s4 1934713408
    %v10125 = vunpack.c.0.s8 %v10124
    %v10126 = vlaneseq
    %v10127 = vshrl.u32 %v10126, 7
    %v10128 = vsub.s32 %v10125, %v10127
    %v10129 = vrot.slane %v10121, %v10128
    %v10131 = vunpack.c.l.s4 1934713408
    %v10132 = vunpack.c.0.s8 %v10131
    %v10133 = vlaneseq
    %v10134 = vshrl.u32 %v10133, 7
    %v10135 = vsub.s32 %v10132, %v10134
    %v10136 = vrot.slane %v10122, %v10135
    %v10137 = vcombine.low %v10104, %v10120
    %v10138 = vcombine.high %v10104, %v10120
    %v10140 = vunpack.c.l.s4 1934713408
    %v10141 = vunpack.c.0.s8 %v10140
    %v10142 = vlaneseq
    %v10143 = vshrl.u32 %v10142, 7
    %v10144 = vsub.s32 %v10141, %v10143
    %v10145 = vrot.slane %v10137, %v10144
    %v10147 = vunpack.c.l.s4 1934713408
    %v10148 = vunpack.c.0.s8 %v10147
    %v10149 = vlaneseq
    %v10150 = vshrl.u32 %v10149, 7
    %v10151 = vsub.s32 %v10148, %v10150
    %v10152 = vrot.slane %v10138, %v10151
    %v10153 = vcombine.high %v10129, 0.0
    %v10154 = vcombine.high %v10136, 0.0
    %v10155 = vcombine.high %v10145, 0.0
    %v10156 = vcombine.high %v10152, 0.0
    %v10157 = vcombine.low %v9571, %v9659
    %v10158 = vcombine.high %v9571, %v9659
    %v10160 = vunpack.c.l.s4 1983009808
    %v10161 = vunpack.c.0.s8 %v10160
    %v10162 = vlaneseq
    %v10163 = vshrl.u32 %v10162, 7
    %v10164 = vsub.s32 %v10161, %v10163
    %v10165 = vrot.slane %v10157, %v10164
    %v10167 = vunpack.c.l.s4 1983009808
    %v10168 = vunpack.c.0.s8 %v10167
    %v10169 = vlaneseq
    %v10170 = vshrl.u32 %v10169, 7
    %v10171 = vsub.s32 %v10168, %v10170
    %v10172 = vrot.slane %v10158, %v10171
    %v10173 = vcombine.low %v9615, %v9703
    %v10174 = vcombine.high %v9615, %v9703
    %v10176 = vunpack.c.l.s4 1983009808
    %v10177 = vunpack.c.0.s8 %v10176
    %v10178 = vlaneseq
    %v10179 = vshrl.u32 %v10178, 7
    %v10180 = vsub.s32 %v10177, %v10179
    %v10181 = vrot.slane %v10173, %v10180
    %v10183 = vunpack.c.l.s4 1983009808
    %v10184 = vunpack.c.0.s8 %v10183
    %v10185 = vlaneseq
    %v10186 = vshrl.u32 %v10185, 7
    %v10187 = vsub.s32 %v10184, %v10186
    %v10188 = vrot.slane %v10174, %v10187
    %v10189 = vcombine.low %v10165, %v10181
    %v10190 = vcombine.high %v10165, %v10181
    %v10192 = vunpack.c.l.s4 1934713408
    %v10193 = vunpack.c.0.s8 %v10192
    %v10194 = vlaneseq
    %v10195 = vshrl.u32 %v10194, 7
    %v10196 = vsub.s32 %v10193, %v10195
    %v10197 = vrot.slane %v10189, %v10196
    %v10199 = vunpack.c.l.s4 1934713408
    %v10200 = vunpack.c.0.s8 %v10199
    %v10201 = vlaneseq
    %v10202 = vshrl.u32 %v10201, 7
    %v10203 = vsub.s32 %v10200, %v10202
    %v10204 = vrot.slane %v10190, %v10203
    %v10205 = vcombine.low %v10172, %v10188
    %v10206 = vcombine.high %v10172, %v10188
    %v10208 = vunpack.c.l.s4 1934713408
    %v10209 = vunpack.c.0.s8 %v10208
    %v10210 = vlaneseq
    %v10211 = vshrl.u32 %v10210, 7
    %v10212 = vsub.s32 %v10209, %v10211
    %v10213 = vrot.slane %v10205, %v10212
    %v10215 = vunpack.c.l.s4 1934713408
    %v10216 = vunpack.c.0.s8 %v10215
    %v10217 = vlaneseq
    %v10218 = vshrl.u32 %v10217, 7
    %v10219 = vsub.s32 %v10216, %v10218
    %v10220 = vrot.slane %v10206, %v10219
    %v10221 = vcombine.high %v10197, 0.0
    %v10222 = vcombine.high %v10204, 0.0
    %v10223 = vcombine.high %v10213, 0.0
    %v10224 = vcombine.high %v10220, 0.0
    %v10225 = vcombine.low %v9574, %v9662
    %v10226 = vcombine.high %v9574, %v9662
    %v10228 = vunpack.c.l.s4 1983009808
    %v10229 = vunpack.c.0.s8 %v10228
    %v10230 = vlaneseq
    %v10231 = vshrl.u32 %v10230, 7
    %v10232 = vsub.s32 %v10229, %v10231
    %v10233 = vrot.slane %v10225, %v10232
    %v10235 = vunpack.c.l.s4 1983009808
    %v10236 = vunpack.c.0.s8 %v10235
    %v10237 = vlaneseq
    %v10238 = vshrl.u32 %v10237, 7
    %v10239 = vsub.s32 %v10236, %v10238
    %v10240 = vrot.slane %v10226, %v10239
    %v10241 = vcombine.low %v9618, %v9706
    %v10242 = vcombine.high %v9618, %v9706
    %v10244 = vunpack.c.l.s4 1983009808
    %v10245 = vunpack.c.0.s8 %v10244
    %v10246 = vlaneseq
    %v10247 = vshrl.u32 %v10246, 7
    %v10248 = vsub.s32 %v10245, %v10247
    %v10249 = vrot.slane %v10241, %v10248
    %v10251 = vunpack.c.l.s4 1983009808
    %v10252 = vunpack.c.0.s8 %v10251
    %v10253 = vlaneseq
    %v10254 = vshrl.u32 %v10253, 7
    %v10255 = vsub.s32 %v10252, %v10254
    %v10256 = vrot.slane %v10242, %v10255
    %v10257 = vcombine.low %v10233, %v10249
    %v10258 = vcombine.high %v10233, %v10249
    %v10260 = vunpack.c.l.s4 1934713408
    %v10261 = vunpack.c.0.s8 %v10260
    %v10262 = vlaneseq
    %v10263 = vshrl.u32 %v10262, 7
    %v10264 = vsub.s32 %v10261, %v10263
    %v10265 = vrot.slane %v10257, %v10264
    %v10267 = vunpack.c.l.s4 1934713408
    %v10268 = vunpack.c.0.s8 %v10267
    %v10269 = vlaneseq
    %v10270 = vshrl.u32 %v10269, 7
    %v10271 = vsub.s32 %v10268, %v10270
    %v10272 = vrot.slane %v10258, %v10271
    %v10273 = vcombine.low %v10240, %v10256
    %v10274 = vcombine.high %v10240, %v10256
    %v10276 = vunpack.c.l.s4 1934713408
    %v10277 = vunpack.c.0.s8 %v10276
    %v10278 = vlaneseq
    %v10279 = vshrl.u32 %v10278, 7
    %v10280 = vsub.s32 %v10277, %v10279
    %v10281 = vrot.slane %v10273, %v10280
    %v10283 = vunpack.c.l.s4 1934713408
    %v10284 = vunpack.c.0.s8 %v10283
    %v10285 = vlaneseq
    %v10286 = vshrl.u32 %v10285, 7
    %v10287 = vsub.s32 %v10284, %v10286
    %v10288 = vrot.slane %v10274, %v10287
    %v10289 = vcombine.high %v10265, 0.0
    %v10290 = vcombine.high %v10272, 0.0
    %v10291 = vcombine.high %v10281, 0.0
    %v10292 = vcombine.high %v10288, 0.0
    %v10293 = vcombine.low %v9747, %v9835
    %v10294 = vcombine.high %v9747, %v9835
    %v10296 = vunpack.c.l.s4 1983009808
    %v10297 = vunpack.c.0.s8 %v10296
    %v10298 = vlaneseq
    %v10299 = vshrl.u32 %v10298, 7
    %v10300 = vsub.s32 %v10297, %v10299
    %v10301 = vrot.slane %v10293, %v10300
    %v10303 = vunpack.c.l.s4 1983009808
    %v10304 = vunpack.c.0.s8 %v10303
    %v10305 = vlaneseq
    %v10306 = vshrl.u32 %v10305, 7
    %v10307 = vsub.s32 %v10304, %v10306
    %v10308 = vrot.slane %v10294, %v10307
    %v10309 = vcombine.low %v9791, %v9879
    %v10310 = vcombine.high %v9791, %v9879
    %v10312 = vunpack.c.l.s4 1983009808
    %v10313 = vunpack.c.0.s8 %v10312
    %v10314 = vlaneseq
    %v10315 = vshrl.u32 %v10314, 7
    %v10316 = vsub.s32 %v10313, %v10315
    %v10317 = vrot.slane %v10309, %v10316
    %v10319 = vunpack.c.l.s4 1983009808
    %v10320 = vunpack.c.0.s8 %v10319
    %v10321 = vlaneseq
    %v10322 = vshrl.u32 %v10321, 7
    %v10323 = vsub.s32 %v10320, %v10322
    %v10324 = vrot.slane %v10310, %v10323
    %v10325 = vcombine.low %v10301, %v10317
    %v10326 = vcombine.high %v10301, %v10317
    %v10328 = vunpack.c.l.s4 1934713408
    %v10329 = vunpack.c.0.s8 %v10328
    %v10330 = vlaneseq
    %v10331 = vshrl.u32 %v10330, 7
    %v10332 = vsub.s32 %v10329, %v10331
    %v10333 = vrot.slane %v10325, %v10332
    %v10335 = vunpack.c.l.s4 1934713408
    %v10336 = vunpack.c.0.s8 %v10335
    %v10337 = vlaneseq
    %v10338 = vshrl.u32 %v10337, 7
    %v10339 = vsub.s32 %v10336, %v10338
    %v10340 = vrot.slane %v10326, %v10339
    %v10341 = vcombine.low %v10308, %v10324
    %v10342 = vcombine.high %v10308, %v10324
    %v10344 = vunpack.c.l.s4 1934713408
    %v10345 = vunpack.c.0.s8 %v10344
    %v10346 = vlaneseq
    %v10347 = vshrl.u32 %v10346, 7
    %v10348 = vsub.s32 %v10345, %v10347
    %v10349 = vrot.slane %v10341, %v10348
    %v10351 = vunpack.c.l.s4 1934713408
    %v10352 = vunpack.c.0.s8 %v10351
    %v10353 = vlaneseq
    %v10354 = vshrl.u32 %v10353, 7
    %v10355 = vsub.s32 %v10352, %v10354
    %v10356 = vrot.slane %v10342, %v10355
    %v10357 = vcombine.high %v10333, 0.0
    %v10358 = vcombine.high %v10340, 0.0
    %v10359 = vcombine.high %v10349, 0.0
    %v10360 = vcombine.high %v10356, 0.0
    %v10361 = vcombine.low %v9750, %v9838
    %v10362 = vcombine.high %v9750, %v9838
    %v10364 = vunpack.c.l.s4 1983009808
    %v10365 = vunpack.c.0.s8 %v10364
    %v10366 = vlaneseq
    %v10367 = vshrl.u32 %v10366, 7
    %v10368 = vsub.s32 %v10365, %v10367
    %v10369 = vrot.slane %v10361, %v10368
    %v10371 = vunpack.c.l.s4 1983009808
    %v10372 = vunpack.c.0.s8 %v10371
    %v10373 = vlaneseq
    %v10374 = vshrl.u32 %v10373, 7
    %v10375 = vsub.s32 %v10372, %v10374
    %v10376 = vrot.slane %v10362, %v10375
    %v10377 = vcombine.low %v9794, %v9882
    %v10378 = vcombine.high %v9794, %v9882
    %v10380 = vunpack.c.l.s4 1983009808
    %v10381 = vunpack.c.0.s8 %v10380
    %v10382 = vlaneseq
    %v10383 = vshrl.u32 %v10382, 7
    %v10384 = vsub.s32 %v10381, %v10383
    %v10385 = vrot.slane %v10377, %v10384
    %v10387 = vunpack.c.l.s4 1983009808
    %v10388 = vunpack.c.0.s8 %v10387
    %v10389 = vlaneseq
    %v10390 = vshrl.u32 %v10389, 7
    %v10391 = vsub.s32 %v10388, %v10390
    %v10392 = vrot.slane %v10378, %v10391
    %v10393 = vcombine.low %v10369, %v10385
    %v10394 = vcombine.high %v10369, %v10385
    %v10396 = vunpack.c.l.s4 1934713408
    %v10397 = vunpack.c.0.s8 %v10396
    %v10398 = vlaneseq
    %v10399 = vshrl.u32 %v10398, 7
    %v10400 = vsub.s32 %v10397, %v10399
    %v10401 = vrot.slane %v10393, %v10400
    %v10403 = vunpack.c.l.s4 1934713408
    %v10404 = vunpack.c.0.s8 %v10403
    %v10405 = vlaneseq
    %v10406 = vshrl.u32 %v10405, 7
    %v10407 = vsub.s32 %v10404, %v10406
    %v10408 = vrot.slane %v10394, %v10407
    %v10409 = vcombine.low %v10376, %v10392
    %v10410 = vcombine.high %v10376, %v10392
    %v10412 = vunpack.c.l.s4 1934713408
    %v10413 = vunpack.c.0.s8 %v10412
    %v10414 = vlaneseq
    %v10415 = vshrl.u32 %v10414, 7
    %v10416 = vsub.s32 %v10413, %v10415
    %v10417 = vrot.slane %v10409, %v10416
    %v10419 = vunpack.c.l.s4 1934713408
    %v10420 = vunpack.c.0.s8 %v10419
    %v10421 = vlaneseq
    %v10422 = vshrl.u32 %v10421, 7
    %v10423 = vsub.s32 %v10420, %v10422
    %v10424 = vrot.slane %v10410, %v10423
    %v10425 = vcombine.high %v10401, 0.0
    %v10426 = vcombine.high %v10408, 0.0
    %v10427 = vcombine.high %v10417, 0.0
    %v10428 = vcombine.high %v10424, 0.0
    %v10429 = vcombine.low %v9925, %v9932
    %v10431 = vunpack.c.l.s4 1983009808
    %v10432 = vunpack.c.0.s8 %v10431
    %v10433 = vlaneseq
    %v10434 = vshrl.u32 %v10433, 7
    %v10435 = vsub.s32 %v10432, %v10434
    %v10436 = vrot.slane %v10429, %v10435
    %v10437 = vcombine.low %v9949, %v9950
    %v10439 = vunpack.c.l.s4 1983009808
    %v10440 = vunpack.c.0.s8 %v10439
    %v10441 = vlaneseq
    %v10442 = vshrl.u32 %v10441, 7
    %v10443 = vsub.s32 %v10440, %v10442
    %v10444 = vrot.slane %v10437, %v10443
    %v10445 = vcombine.low %v9941, %v9948
    %v10447 = vunpack.c.l.s4 1983009808
    %v10448 = vunpack.c.0.s8 %v10447
    %v10449 = vlaneseq
    %v10450 = vshrl.u32 %v10449, 7
    %v10451 = vsub.s32 %v10448, %v10450
    %v10452 = vrot.slane %v10445, %v10451
    %v10453 = vcombine.low %v9951, %v9952
    %v10455 = vunpack.c.l.s4 1983009808
    %v10456 = vunpack.c.0.s8 %v10455
    %v10457 = vlaneseq
    %v10458 = vshrl.u32 %v10457, 7
    %v10459 = vsub.s32 %v10456, %v10458
    %v10460 = vrot.slane %v10453, %v10459
    %v10461 = vcombine.low %v10436, %v10444
    %v10462 = vcombine.high %v10436, %v10444
    %v10464 = vunpack.c.l.s4 1934713408
    %v10465 = vunpack.c.0.s8 %v10464
    %v10466 = vlaneseq
    %v10467 = vshrl.u32 %v10466, 7
    %v10468 = vsub.s32 %v10465, %v10467
    %v10469 = vrot.slane %v10461, %v10468
    %v10471 = vunpack.c.l.s4 1934713408
    %v10472 = vunpack.c.0.s8 %v10471
    %v10473 = vlaneseq
    %v10474 = vshrl.u32 %v10473, 7
    %v10475 = vsub.s32 %v10472, %v10474
    %v10476 = vrot.slane %v10462, %v10475
    %v10477 = vcombine.low %v10452, %v10460
    %v10478 = vcombine.high %v10452, %v10460
    %v10480 = vunpack.c.l.s4 1934713408
    %v10481 = vunpack.c.0.s8 %v10480
    %v10482 = vlaneseq
    %v10483 = vshrl.u32 %v10482, 7
    %v10484 = vsub.s32 %v10481, %v10483
    %v10485 = vrot.slane %v10477, %v10484
    %v10487 = vunpack.c.l.s4 1934713408
    %v10488 = vunpack.c.0.s8 %v10487
    %v10489 = vlaneseq
    %v10490 = vshrl.u32 %v10489, 7
    %v10491 = vsub.s32 %v10488, %v10490
    %v10492 = vrot.slane %v10478, %v10491
    %v10493 = vcombine.low %v10469, %v10485
    %v10494 = vcombine.high %v10469, %v10485
    %v10495 = vcombine.low %v10476, %v10492
    %v10496 = vcombine.high %v10476, %v10492
    %v10497 = vcombine.low %v9993, %v10000
    %v10499 = vunpack.c.l.s4 1983009808
    %v10500 = vunpack.c.0.s8 %v10499
    %v10501 = vlaneseq
    %v10502 = vshrl.u32 %v10501, 7
    %v10503 = vsub.s32 %v10500, %v10502
    %v10504 = vrot.slane %v10497, %v10503
    %v10505 = vcombine.low %v10017, %v10018
    %v10507 = vunpack.c.l.s4 1983009808
    %v10508 = vunpack.c.0.s8 %v10507
    %v10509 = vlaneseq
    %v10510 = vshrl.u32 %v10509, 7
    %v10511 = vsub.s32 %v10508, %v10510
    %v10512 = vrot.slane %v10505, %v10511
    %v10513 = vcombine.low %v10009, %v10016
    %v10515 = vunpack.c.l.s4 1983009808
    %v10516 = vunpack.c.0.s8 %v10515
    %v10517 = vlaneseq
    %v10518 = vshrl.u32 %v10517, 7
    %v10519 = vsub.s32 %v10516, %v10518
    %v10520 = vrot.slane %v10513, %v10519
    %v10521 = vcombine.low %v10019, %v10020
    %v10523 = vunpack.c.l.s4 1983009808
    %v10524 = vunpack.c.0.s8 %v10523
    %v10525 = vlaneseq
    %v10526 = vshrl.u32 %v10525, 7
    %v10527 = vsub.s32 %v10524, %v10526
    %v10528 = vrot.slane %v10521, %v10527
    %v10529 = vcombine.low %v10504, %v10512
    %v10530 = vcombine.high %v10504, %v10512
    %v10532 = vunpack.c.l.s4 1934713408
    %v10533 = vunpack.c.0.s8 %v10532
    %v10534 = vlaneseq
    %v10535 = vshrl.u32 %v10534, 7
    %v10536 = vsub.s32 %v10533, %v10535
    %v10537 = vrot.slane %v10529, %v10536
    %v10539 = vunpack.c.l.s4 1934713408
    %v10540 = vunpack.c.0.s8 %v10539
    %v10541 = vlaneseq
    %v10542 = vshrl.u32 %v10541, 7
    %v10543 = vsub.s32 %v10540, %v10542
    %v10544 = vrot.slane %v10530, %v10543
    %v10545 = vcombine.low %v10520, %v10528
    %v10546 = vcombine.high %v10520, %v10528
    %v10548 = vunpack.c.l.s4 1934713408
    %v10549 = vunpack.c.0.s8 %v10548
    %v10550 = vlaneseq
    %v10551 = vshrl.u32 %v10550, 7
    %v10552 = vsub.s32 %v10549, %v10551
    %v10553 = vrot.slane %v10545, %v10552
    %v10555 = vunpack.c.l.s4 1934713408
    %v10556 = vunpack.c.0.s8 %v10555
    %v10557 = vlaneseq
    %v10558 = vshrl.u32 %v10557, 7
    %v10559 = vsub.s32 %v10556, %v10558
    %v10560 = vrot.slane %v10546, %v10559
    %v10561 = vcombine.low %v10537, %v10553
    %v10562 = vcombine.high %v10537, %v10553
    %v10563 = vcombine.low %v10544, %v10560
    %v10564 = vcombine.high %v10544, %v10560
    %v10565 = vcombine.low %v10061, %v10068
    %v10567 = vunpack.c.l.s4 1983009808
    %v10568 = vunpack.c.0.s8 %v10567
    %v10569 = vlaneseq
    %v10570 = vshrl.u32 %v10569, 7
    %v10571 = vsub.s32 %v10568, %v10570
    %v10572 = vrot.slane %v10565, %v10571
    %v10573 = vcombine.low %v10085, %v10086
    %v10575 = vunpack.c.l.s4 1983009808
    %v10576 = vunpack.c.0.s8 %v10575
    %v10577 = vlaneseq
    %v10578 = vshrl.u32 %v10577, 7
    %v10579 = vsub.s32 %v10576, %v10578
    %v10580 = vrot.slane %v10573, %v10579
    %v10581 = vcombine.low %v10077, %v10084
    %v10583 = vunpack.c.l.s4 1983009808
    %v10584 = vunpack.c.0.s8 %v10583
    %v10585 = vlaneseq
    %v10586 = vshrl.u32 %v10585, 7
    %v10587 = vsub.s32 %v10584, %v10586
    %v10588 = vrot.slane %v10581, %v10587
    %v10589 = vcombine.low %v10087, %v10088
    %v10591 = vunpack.c.l.s4 1983009808
    %v10592 = vunpack.c.0.s8 %v10591
    %v10593 = vlaneseq
    %v10594 = vshrl.u32 %v10593, 7
    %v10595 = vsub.s32 %v10592, %v10594
    %v10596 = vrot.slane %v10589, %v10595
    %v10597 = vcombine.low %v10572, %v10580
    %v10598 = vcombine.high %v10572, %v10580
    %v10600 = vunpack.c.l.s4 1934713408
    %v10601 = vunpack.c.0.s8 %v10600
    %v10602 = vlaneseq
    %v10603 = vshrl.u32 %v10602, 7
    %v10604 = vsub.s32 %v10601, %v10603
    %v10605 = vrot.slane %v10597, %v10604
    %v10607 = vunpack.c.l.s4 1934713408
    %v10608 = vunpack.c.0.s8 %v10607
    %v10609 = vlaneseq
    %v10610 = vshrl.u32 %v10609, 7
    %v10611 = vsub.s32 %v10608, %v10610
    %v10612 = vrot.slane %v10598, %v10611
    %v10613 = vcombine.low %v10588, %v10596
    %v10614 = vcombine.high %v10588, %v10596
    %v10616 = vunpack.c.l.s4 1934713408
    %v10617 = vunpack.c.0.s8 %v10616
    %v10618 = vlaneseq
    %v10619 = vshrl.u32 %v10618, 7
    %v10620 = vsub.s32 %v10617, %v10619
    %v10621 = vrot.slane %v10613, %v10620
    %v10623 = vunpack.c.l.s4 1934713408
    %v10624 = vunpack.c.0.s8 %v10623
    %v10625 = vlaneseq
    %v10626 = vshrl.u32 %v10625, 7
    %v10627 = vsub.s32 %v10624, %v10626
    %v10628 = vrot.slane %v10614, %v10627
    %v10629 = vcombine.low %v10605, %v10621
    %v10630 = vcombine.high %v10605, %v10621
    %v10631 = vcombine.low %v10612, %v10628
    %v10632 = vcombine.high %v10612, %v10628
    %v10633 = vcombine.low %v10129, %v10136
    %v10635 = vunpack.c.l.s4 1983009808
    %v10636 = vunpack.c.0.s8 %v10635
    %v10637 = vlaneseq
    %v10638 = vshrl.u32 %v10637, 7
    %v10639 = vsub.s32 %v10636, %v10638
    %v10640 = vrot.slane %v10633, %v10639
    %v10641 = vcombine.low %v10153, %v10154
    %v10643 = vunpack.c.l.s4 1983009808
    %v10644 = vunpack.c.0.s8 %v10643
    %v10645 = vlaneseq
    %v10646 = vshrl.u32 %v10645, 7
    %v10647 = vsub.s32 %v10644, %v10646
    %v10648 = vrot.slane %v10641, %v10647
    %v10649 = vcombine.low %v10145, %v10152
    %v10651 = vunpack.c.l.s4 1983009808
    %v10652 = vunpack.c.0.s8 %v10651
    %v10653 = vlaneseq
    %v10654 = vshrl.u32 %v10653, 7
    %v10655 = vsub.s32 %v10652, %v10654
    %v10656 = vrot.slane %v10649, %v10655
    %v10657 = vcombine.low %v10155, %v10156
    %v10659 = vunpack.c.l.s4 1983009808
    %v10660 = vunpack.c.0.s8 %v10659
    %v10661 = vlaneseq
    %v10662 = vshrl.u32 %v10661, 7
    %v10663 = vsub.s32 %v10660, %v10662
    %v10664 = vrot.slane %v10657, %v10663
    %v10665 = vcombine.low %v10640, %v10648
    %v10666 = vcombine.high %v10640, %v10648
    %v10668 = vunpack.c.l.s4 1934713408
    %v10669 = vunpack.c.0.s8 %v10668
    %v10670 = vlaneseq
    %v10671 = vshrl.u32 %v10670, 7
    %v10672 = vsub.s32 %v10669, %v10671
    %v10673 = vrot.slane %v10665, %v10672
    %v10675 = vunpack.c.l.s4 1934713408
    %v10676 = vunpack.c.0.s8 %v10675
    %v10677 = vlaneseq
    %v10678 = vshrl.u32 %v10677, 7
    %v10679 = vsub.s32 %v10676, %v10678
    %v10680 = vrot.slane %v10666, %v10679
    %v10681 = vcombine.low %v10656, %v10664
    %v10682 = vcombine.high %v10656, %v10664
    %v10684 = vunpack.c.l.s4 1934713408
    %v10685 = vunpack.c.0.s8 %v10684
    %v10686 = vlaneseq
    %v10687 = vshrl.u32 %v10686, 7
    %v10688 = vsub.s32 %v10685, %v10687
    %v10689 = vrot.slane %v10681, %v10688
    %v10691 = vunpack.c.l.s4 1934713408
    %v10692 = vunpack.c.0.s8 %v10691
    %v10693 = vlaneseq
    %v10694 = vshrl.u32 %v10693, 7
    %v10695 = vsub.s32 %v10692, %v10694
    %v10696 = vrot.slane %v10682, %v10695
    %v10697 = vcombine.low %v10673, %v10689
    %v10698 = vcombine.high %v10673, %v10689
    %v10699 = vcombine.low %v10680, %v10696
    %v10700 = vcombine.high %v10680, %v10696
    %v10701 = vcombine.low %v10197, %v10204
    %v10703 = vunpack.c.l.s4 1983009808
    %v10704 = vunpack.c.0.s8 %v10703
    %v10705 = vlaneseq
    %v10706 = vshrl.u32 %v10705, 7
    %v10707 = vsub.s32 %v10704, %v10706
    %v10708 = vrot.slane %v10701, %v10707
    %v10709 = vcombine.low %v10221, %v10222
    %v10711 = vunpack.c.l.s4 1983009808
    %v10712 = vunpack.c.0.s8 %v10711
    %v10713 = vlaneseq
    %v10714 = vshrl.u32 %v10713, 7
    %v10715 = vsub.s32 %v10712, %v10714
    %v10716 = vrot.slane %v10709, %v10715
    %v10717 = vcombine.low %v10213, %v10220
    %v10719 = vunpack.c.l.s4 1983009808
    %v10720 = vunpack.c.0.s8 %v10719
    %v10721 = vlaneseq
    %v10722 = vshrl.u32 %v10721, 7
    %v10723 = vsub.s32 %v10720, %v10722
    %v10724 = vrot.slane %v10717, %v10723
    %v10725 = vcombine.low %v10223, %v10224
    %v10727 = vunpack.c.l.s4 1983009808
    %v10728 = vunpack.c.0.s8 %v10727
    %v10729 = vlaneseq
    %v10730 = vshrl.u32 %v10729, 7
    %v10731 = vsub.s32 %v10728, %v10730
    %v10732 = vrot.slane %v10725, %v10731
    %v10733 = vcombine.low %v10708, %v10716
    %v10734 = vcombine.high %v10708, %v10716
    %v10736 = vunpack.c.l.s4 1934713408
    %v10737 = vunpack.c.0.s8 %v10736
    %v10738 = vlaneseq
    %v10739 = vshrl.u32 %v10738, 7
    %v10740 = vsub.s32 %v10737, %v10739
    %v10741 = vrot.slane %v10733, %v10740
    %v10743 = vunpack.c.l.s4 1934713408
    %v10744 = vunpack.c.0.s8 %v10743
    %v10745 = vlaneseq
    %v10746 = vshrl.u32 %v10745, 7
    %v10747 = vsub.s32 %v10744, %v10746
    %v10748 = vrot.slane %v10734, %v10747
    %v10749 = vcombine.low %v10724, %v10732
    %v10750 = vcombine.high %v10724, %v10732
    %v10752 = vunpack.c.l.s4 1934713408
    %v10753 = vunpack.c.0.s8 %v10752
    %v10754 = vlaneseq
    %v10755 = vshrl.u32 %v10754, 7
    %v10756 = vsub.s32 %v10753, %v10755
    %v10757 = vrot.slane %v10749, %v10756
    %v10759 = vunpack.c.l.s4 1934713408
    %v10760 = vunpack.c.0.s8 %v10759
    %v10761 = vlaneseq
    %v10762 = vshrl.u32 %v10761, 7
    %v10763 = vsub.s32 %v10760, %v10762
    %v10764 = vrot.slane %v10750, %v10763
    %v10765 = vcombine.low %v10741, %v10757
    %v10766 = vcombine.high %v10741, %v10757
    %v10767 = vcombine.low %v10748, %v10764
    %v10768 = vcombine.high %v10748, %v10764
    %v10769 = vcombine.low %v10265, %v10272
    %v10771 = vunpack.c.l.s4 1983009808
    %v10772 = vunpack.c.0.s8 %v10771
    %v10773 = vlaneseq
    %v10774 = vshrl.u32 %v10773, 7
    %v10775 = vsub.s32 %v10772, %v10774
    %v10776 = vrot.slane %v10769, %v10775
    %v10777 = vcombine.low %v10289, %v10290
    %v10779 = vunpack.c.l.s4 1983009808
    %v10780 = vunpack.c.0.s8 %v10779
    %v10781 = vlaneseq
    %v10782 = vshrl.u32 %v10781, 7
    %v10783 = vsub.s32 %v10780, %v10782
    %v10784 = vrot.slane %v10777, %v10783
    %v10785 = vcombine.low %v10281, %v10288
    %v10787 = vunpack.c.l.s4 1983009808
    %v10788 = vunpack.c.0.s8 %v10787
    %v10789 = vlaneseq
    %v10790 = vshrl.u32 %v10789, 7
    %v10791 = vsub.s32 %v10788, %v10790
    %v10792 = vrot.slane %v10785, %v10791
    %v10793 = vcombine.low %v10291, %v10292
    %v10795 = vunpack.c.l.s4 1983009808
    %v10796 = vunpack.c.0.s8 %v10795
    %v10797 = vlaneseq
    %v10798 = vshrl.u32 %v10797, 7
    %v10799 = vsub.s32 %v10796, %v10798
    %v10800 = vrot.slane %v10793, %v10799
    %v10801 = vcombine.low %v10776, %v10784
    %v10802 = vcombine.high %v10776, %v10784
    %v10804 = vunpack.c.l.s4 1934713408
    %v10805 = vunpack.c.0.s8 %v10804
    %v10806 = vlaneseq
    %v10807 = vshrl.u32 %v10806, 7
    %v10808 = vsub.s32 %v10805, %v10807
    %v10809 = vrot.slane %v10801, %v10808
    %v10811 = vunpack.c.l.s4 1934713408
    %v10812 = vunpack.c.0.s8 %v10811
    %v10813 = vlaneseq
    %v10814 = vshrl.u32 %v10813, 7
    %v10815 = vsub.s32 %v10812, %v10814
    %v10816 = vrot.slane %v10802, %v10815
    %v10817 = vcombine.low %v10792, %v10800
    %v10818 = vcombine.high %v10792, %v10800
    %v10820 = vunpack.c.l.s4 1934713408
    %v10821 = vunpack.c.0.s8 %v10820
    %v10822 = vlaneseq
    %v10823 = vshrl.u32 %v10822, 7
    %v10824 = vsub.s32 %v10821, %v10823
    %v10825 = vrot.slane %v10817, %v10824
    %v10827 = vunpack.c.l.s4 1934713408
    %v10828 = vunpack.c.0.s8 %v10827
    %v10829 = vlaneseq
    %v10830 = vshrl.u32 %v10829, 7
    %v10831 = vsub.s32 %v10828, %v10830
    %v10832 = vrot.slane %v10818, %v10831
    %v10833 = vcombine.low %v10809, %v10825
    %v10834 = vcombine.high %v10809, %v10825
    %v10835 = vcombine.low %v10816, %v10832
    %v10836 = vcombine.high %v10816, %v10832
    %v10837 = vcombine.low %v10333, %v10340
    %v10839 = vunpack.c.l.s4 1983009808
    %v10840 = vunpack.c.0.s8 %v10839
    %v10841 = vlaneseq
    %v10842 = vshrl.u32 %v10841, 7
    %v10843 = vsub.s32 %v10840, %v10842
    %v10844 = vrot.slane %v10837, %v10843
    %v10845 = vcombine.low %v10357, %v10358
    %v10847 = vunpack.c.l.s4 1983009808
    %v10848 = vunpack.c.0.s8 %v10847
    %v10849 = vlaneseq
    %v10850 = vshrl.u32 %v10849, 7
    %v10851 = vsub.s32 %v10848, %v10850
    %v10852 = vrot.slane %v10845, %v10851
    %v10853 = vcombine.low %v10349, %v10356
    %v10855 = vunpack.c.l.s4 1983009808
    %v10856 = vunpack.c.0.s8 %v10855
    %v10857 = vlaneseq
    %v10858 = vshrl.u32 %v10857, 7
    %v10859 = vsub.s32 %v10856, %v10858
    %v10860 = vrot.slane %v10853, %v10859
    %v10861 = vcombine.low %v10359, %v10360
    %v10863 = vunpack.c.l.s4 1983009808
    %v10864 = vunpack.c.0.s8 %v10863
    %v10865 = vlaneseq
    %v10866 = vshrl.u32 %v10865, 7
    %v10867 = vsub.s32 %v10864, %v10866
    %v10868 = vrot.slane %v10861, %v10867
    %v10869 = vcombine.low %v10844, %v10852
    %v10870 = vcombine.high %v10844, %v10852
    %v10872 = vunpack.c.l.s4 1934713408
    %v10873 = vunpack.c.0.s8 %v10872
    %v10874 = vlaneseq
    %v10875 = vshrl.u32 %v10874, 7
    %v10876 = vsub.s32 %v10873, %v10875
    %v10877 = vrot.slane %v10869, %v10876
    %v10879 = vunpack.c.l.s4 1934713408
    %v10880 = vunpack.c.0.s8 %v10879
    %v10881 = vlaneseq
    %v10882 = vshrl.u32 %v10881, 7
    %v10883 = vsub.s32 %v10880, %v10882
    %v10884 = vrot.slane %v10870, %v10883
    %v10885 = vcombine.low %v10860, %v10868
    %v10886 = vcombine.high %v10860, %v10868
    %v10888 = vunpack.c.l.s4 1934713408
    %v10889 = vunpack.c.0.s8 %v10888
    %v10890 = vlaneseq
    %v10891 = vshrl.u32 %v10890, 7
    %v10892 = vsub.s32 %v10889, %v10891
    %v10893 = vrot.slane %v10885, %v10892
    %v10895 = vunpack.c.l.s4 1934713408
    %v10896 = vunpack.c.0.s8 %v10895
    %v10897 = vlaneseq
    %v10898 = vshrl.u32 %v10897, 7
    %v10899 = vsub.s32 %v10896, %v10898
    %v10900 = vrot.slane %v10886, %v10899
    %v10901 = vcombine.low %v10877, %v10893
    %v10902 = vcombine.high %v10877, %v10893
    %v10903 = vcombine.low %v10884, %v10900
    %v10904 = vcombine.high %v10884, %v10900
    %v10905 = vcombine.low %v10401, %v10408
    %v10907 = vunpack.c.l.s4 1983009808
    %v10908 = vunpack.c.0.s8 %v10907
    %v10909 = vlaneseq
    %v10910 = vshrl.u32 %v10909, 7
    %v10911 = vsub.s32 %v10908, %v10910
    %v10912 = vrot.slane %v10905, %v10911
    %v10913 = vcombine.low %v10425, %v10426
    %v10915 = vunpack.c.l.s4 1983009808
    %v10916 = vunpack.c.0.s8 %v10915
    %v10917 = vlaneseq
    %v10918 = vshrl.u32 %v10917, 7
    %v10919 = vsub.s32 %v10916, %v10918
    %v10920 = vrot.slane %v10913, %v10919
    %v10921 = vcombine.low %v10417, %v10424
    %v10923 = vunpack.c.l.s4 1983009808
    %v10924 = vunpack.c.0.s8 %v10923
    %v10925 = vlaneseq
    %v10926 = vshrl.u32 %v10925, 7
    %v10927 = vsub.s32 %v10924, %v10926
    %v10928 = vrot.slane %v10921, %v10927
    %v10929 = vcombine.low %v10427, %v10428
    %v10931 = vunpack.c.l.s4 1983009808
    %v10932 = vunpack.c.0.s8 %v10931
    %v10933 = vlaneseq
    %v10934 = vshrl.u32 %v10933, 7
    %v10935 = vsub.s32 %v10932, %v10934
    %v10936 = vrot.slane %v10929, %v10935
    %v10937 = vcombine.low %v10912, %v10920
    %v10938 = vcombine.high %v10912, %v10920
    %v10940 = vunpack.c.l.s4 1934713408
    %v10941 = vunpack.c.0.s8 %v10940
    %v10942 = vlaneseq
    %v10943 = vshrl.u32 %v10942, 7
    %v10944 = vsub.s32 %v10941, %v10943
    %v10945 = vrot.slane %v10937, %v10944
    %v10947 = vunpack.c.l.s4 1934713408
    %v10948 = vunpack.c.0.s8 %v10947
    %v10949 = vlaneseq
    %v10950 = vshrl.u32 %v10949, 7
    %v10951 = vsub.s32 %v10948, %v10950
    %v10952 = vrot.slane %v10938, %v10951
    %v10953 = vcombine.low %v10928, %v10936
    %v10954 = vcombine.high %v10928, %v10936
    %v10956 = vunpack.c.l.s4 1934713408
    %v10957 = vunpack.c.0.s8 %v10956
    %v10958 = vlaneseq
    %v10959 = vshrl.u32 %v10958, 7
    %v10960 = vsub.s32 %v10957, %v10959
    %v10961 = vrot.slane %v10953, %v10960
    %v10963 = vunpack.c.l.s4 1934713408
    %v10964 = vunpack.c.0.s8 %v10963
    %v10965 = vlaneseq
    %v10966 = vshrl.u32 %v10965, 7
    %v10967 = vsub.s32 %v10964, %v10966
    %v10968 = vrot.slane %v10954, %v10967
    %v10969 = vcombine.low %v10945, %v10961
    %v10970 = vcombine.high %v10945, %v10961
    %v10971 = vcombine.low %v10952, %v10968
    %v10972 = vcombine.high %v10952, %v10968
    %10981 = vrot.lane.b32.xlu0 %v10494, 32
    %v10982 = vpop.permute.xlu0 %10981
    %10983 = vrot.lane.b32.xlu0 %v10562, 32
    %v10984 = vpop.permute.xlu0 %10983
    %10985 = vrot.lane.b32.xlu0 %v10630, 32
    %v10986 = vpop.permute.xlu0 %10985
    %10987 = vrot.lane.b32.xlu0 %v10698, 32
    %v10988 = vpop.permute.xlu0 %10987
    %10989 = vrot.lane.b32.xlu0 %v10766, 32
    %v10990 = vpop.permute.xlu0 %10989
    %10991 = vrot.lane.b32.xlu0 %v10834, 32
    %v10992 = vpop.permute.xlu0 %10991
    %10993 = vrot.lane.b32.xlu0 %v10902, 32
    %v10994 = vpop.permute.xlu0 %10993
    %10995 = vrot.lane.b32.xlu0 %v10970, 32
    %v10996 = vpop.permute.xlu0 %10995
    %11013 = vrot.lane.b32.xlu0 %v10495, 64
    %v11014 = vpop.permute.xlu0 %11013
    %11015 = vrot.lane.b32.xlu0 %v10563, 64
    %v11016 = vpop.permute.xlu0 %11015
    %11017 = vrot.lane.b32.xlu0 %v10631, 64
    %v11018 = vpop.permute.xlu0 %11017
    %11019 = vrot.lane.b32.xlu0 %v10699, 64
    %v11020 = vpop.permute.xlu0 %11019
    %11021 = vrot.lane.b32.xlu0 %v10767, 64
    %v11022 = vpop.permute.xlu0 %11021
    %11023 = vrot.lane.b32.xlu0 %v10835, 64
    %v11024 = vpop.permute.xlu0 %11023
    %11025 = vrot.lane.b32.xlu0 %v10903, 64
    %v11026 = vpop.permute.xlu0 %11025
    %11027 = vrot.lane.b32.xlu0 %v10971, 64
    %v11028 = vpop.permute.xlu0 %11027
    %11045 = vrot.lane.b32.xlu0 %v10496, 96
    %v11046 = vpop.permute.xlu0 %11045
    %11047 = vrot.lane.b32.xlu0 %v10564, 96
    %v11048 = vpop.permute.xlu0 %11047
    %11049 = vrot.lane.b32.xlu0 %v10632, 96
    %v11050 = vpop.permute.xlu0 %11049
    %11051 = vrot.lane.b32.xlu0 %v10700, 96
    %v11052 = vpop.permute.xlu0 %11051
    %11053 = vrot.lane.b32.xlu0 %v10768, 96
    %v11054 = vpop.permute.xlu0 %11053
    %11055 = vrot.lane.b32.xlu0 %v10836, 96
    %v11056 = vpop.permute.xlu0 %11055
    %11057 = vrot.lane.b32.xlu0 %v10904, 96
    %v11058 = vpop.permute.xlu0 %11057
    %11059 = vrot.lane.b32.xlu0 %v10972, 96
    %v11060 = vpop.permute.xlu0 %11059
    %v11069 = vsel %vm7784, %v10493, %v10982
    %v11070 = vsel %vm7784, %v10561, %v10984
    %v11071 = vsel %vm7784, %v10629, %v10986
    %v11072 = vsel %vm7784, %v10697, %v10988
    %v11073 = vsel %vm7784, %v10765, %v10990
    %v11074 = vsel %vm7784, %v10833, %v10992
    %v11075 = vsel %vm7784, %v10901, %v10994
    %v11076 = vsel %vm7784, %v10969, %v10996
    %vm11077 = vcmask 523264
    %v11078 = vsel %vm11077, %v11069, %v11014
    %v11079 = vsel %vm11077, %v11070, %v11016
    %v11080 = vsel %vm11077, %v11071, %v11018
    %v11081 = vsel %vm11077, %v11072, %v11020
    %v11082 = vsel %vm11077, %v11073, %v11022
    %v11083 = vsel %vm11077, %v11074, %v11024
    %v11084 = vsel %vm11077, %v11075, %v11026
    %v11085 = vsel %vm11077, %v11076, %v11028
    %vm11086 = vcmask 785408
    %v11087 = vsel %vm11086, %v11078, %v11046
    %v11088 = vsel %vm11086, %v11079, %v11048
    %v11089 = vsel %vm11086, %v11080, %v11050
    %v11090 = vsel %vm11086, %v11081, %v11052
    %v11091 = vsel %vm11086, %v11082, %v11054
    %v11092 = vsel %vm11086, %v11083, %v11056
    %v11093 = vsel %vm11086, %v11084, %v11058
    %v11094 = vsel %vm11086, %v11085, %v11060
    %v11095 = vxor.u32 %v1611, 2147483648
    %v11096 = vxor.u32 %v1615, 2147483648
    %v11097 = vxor.u32 %v1621, 2147483648
    %v11098 = vxor.u32 %v1625, 2147483648
    %v11099 = vxor.u32 %v1631, 2147483648
    %v11100 = vxor.u32 %v1635, 2147483648
    %v11101 = vxor.u32 %v1641, 2147483648
    %v11102 = vxor.u32 %v1645, 2147483648
    %v11103 = vmul.f32 %v11095, 1.442695
    %v11104 = vpow.pop %v11103
    %v11105 = vmul.f32 %v11096, 1.442695
    %v11106 = vpow.pop %v11105
    %v11107 = vmul.f32 %v11097, 1.442695
    %v11108 = vpow.pop %v11107
    %v11109 = vmul.f32 %v11098, 1.442695
    %v11110 = vpow.pop %v11109
    %v11111 = vmul.f32 %v11099, 1.442695
    %v11112 = vpow.pop %v11111
    %v11113 = vmul.f32 %v11100, 1.442695
    %v11114 = vpow.pop %v11113
    %v11115 = vmul.f32 %v11101, 1.442695
    %v11116 = vpow.pop %v11115
    %v11117 = vmul.f32 %v11102, 1.442695
    %v11118 = vpow.pop %v11117
    %v11119 = vadd.f32 %v11104, 1.0
    %v11120 = vadd.f32 %v11106, 1.0
    %v11121 = vadd.f32 %v11108, 1.0
    %v11122 = vadd.f32 %v11110, 1.0
    %v11123 = vadd.f32 %v11112, 1.0
    %v11124 = vadd.f32 %v11114, 1.0
    %v11125 = vadd.f32 %v11116, 1.0
    %v11126 = vadd.f32 %v11118, 1.0
    %v11127 = vrcp.pop %v11119
    %v11128 = vmul.f32 1.0, %v11127
    %v11129 = vrcp.pop %v11120
    %v11130 = vmul.f32 1.0, %v11129
    %v11131 = vrcp.pop %v11121
    %v11132 = vmul.f32 1.0, %v11131
    %v11133 = vrcp.pop %v11122
    %v11134 = vmul.f32 1.0, %v11133
    %v11135 = vrcp.pop %v11123
    %v11136 = vmul.f32 1.0, %v11135
    %v11137 = vrcp.pop %v11124
    %v11138 = vmul.f32 1.0, %v11137
    %v11139 = vrcp.pop %v11125
    %v11140 = vmul.f32 1.0, %v11139
    %v11141 = vrcp.pop %v11126
    %v11142 = vmul.f32 1.0, %v11141
    %v11143 = vmul.f32 %v11087, %v11128
    %v11144 = vmul.f32 %v11088, %v11130
    %v11145 = vmul.f32 %v11089, %v11132
    %v11146 = vmul.f32 %v11090, %v11134
    %v11147 = vmul.f32 %v11091, %v11136
    %v11148 = vmul.f32 %v11092, %v11138
    %v11149 = vmul.f32 %v11093, %v11140
    %v11150 = vmul.f32 %v11094, %v11142
    %v11151 = vpack.c.bf16 %v11144, %v11143
    %v11152 = vpack.c.bf16 %v11146, %v11145
    %v11153 = vpack.c.bf16 %v11148, %v11147
    %v11154 = vpack.c.bf16 %v11150, %v11149
    %v11155 = vld [vmem:[#allocation19] sm:$0xf]
    %v11156 = vld [vmem:[#allocation19 + $0x4] sm:$0xf]
    %v11157 = vld [vmem:[#allocation19 + $0x8] sm:$0xf]
    %v11158 = vld [vmem:[#allocation19 + $0xc] sm:$0xf]
    %v11159 = vld [vmem:[#allocation19 + $0x10] sm:$0xf]
    %v11160 = vld [vmem:[#allocation19 + $0x14] sm:$0xf]
    %v11161 = vld [vmem:[#allocation19 + $0x18] sm:$0xf]
    %v11162 = vld [vmem:[#allocation19 + $0x1c] sm:$0xf]
    %v11163 = vld [vmem:[#allocation19 + $0x20] sm:$0xf]
    %v11164 = vld [vmem:[#allocation19 + $0x24] sm:$0xf]
    %v11165 = vld [vmem:[#allocation19 + $0x28] sm:$0xf]
    %v11166 = vld [vmem:[#allocation19 + $0x2c] sm:$0xf]
    %v11167 = vld [vmem:[#allocation19 + $0x30] sm:$0xf]
    %v11168 = vld [vmem:[#allocation19 + $0x34] sm:$0xf]
    %v11169 = vld [vmem:[#allocation19 + $0x38] sm:$0xf]
    %v11170 = vld [vmem:[#allocation19 + $0x3c] sm:$0xf]
    %v11187 = vunpack.c.l.b16 %v11155
    %v11188 = vunpack.c.l.b16 %v11156
    %v11189 = vunpack.c.l.b16 %v11157
    %v11190 = vunpack.c.l.b16 %v11158
    %v11191 = vunpack.c.l.b16 %v11159
    %v11192 = vunpack.c.l.b16 %v11160
    %v11193 = vunpack.c.l.b16 %v11161
    %v11194 = vunpack.c.l.b16 %v11162
    %v11195 = vunpack.c.l.b16 %v11163
    %v11196 = vunpack.c.l.b16 %v11164
    %v11197 = vunpack.c.l.b16 %v11165
    %v11198 = vunpack.c.l.b16 %v11166
    %v11199 = vunpack.c.l.b16 %v11167
    %v11200 = vunpack.c.l.b16 %v11168
    %v11201 = vunpack.c.l.b16 %v11169
    %v11202 = vunpack.c.l.b16 %v11170
    %v11203 = vpack.c.b16 %v11188, %v11187
    %v11204 = vpack.c.b16 %v11190, %v11189
    %v11205 = vpack.c.b16 %v11192, %v11191
    %v11206 = vpack.c.b16 %v11194, %v11193
    %v11207 = vpack.c.b16 %v11196, %v11195
    %v11208 = vpack.c.b16 %v11198, %v11197
    %v11209 = vpack.c.b16 %v11200, %v11199
    %v11210 = vpack.c.b16 %v11202, %v11201
    %11219 = vmatprep.subr.bf16.mxu0 0
    %11220 = vmatpush1.bf16.msra.mxu0 %v11210
    %11221 = vmatprep.subr.bf16.mxu0 0
    %11222 = vmatpush1.bf16.msra.mxu0 %v11209
    %11223 = vmatprep.subr.bf16.mxu0 0
    %11224 = vmatpush1.bf16.msra.mxu0 %v11208
    %11225 = vmatprep.subr.bf16.mxu0 0
    %11226 = vmatpush1.bf16.msra.mxu0 %v11207
    %11227 = vmatprep.subr.bf16.mxu0 0
    %11228 = vmatpush1.bf16.msra.mxu0 %v11206
    %11229 = vmatprep.subr.bf16.mxu0 0
    %11230 = vmatpush1.bf16.msra.mxu0 %v11205
    %11231 = vmatprep.subr.bf16.mxu0 0
    %11232 = vmatpush1.bf16.msra.mxu0 %v11204
    %11233 = vmatprep.subr.bf16.mxu0 0
    %11234 = vmatpush1.bf16.msra.mxu0 %v11203
    %11235 = vmatprep.subr.bf16.mxu0 0
    %11236 = vmatpush2.bf16.msra.mxu0 0
    %11237 = vmatprep.subr.bf16.mxu0 0
    %11238 = vmatpush2.bf16.msra.mxu0 0
    %11239 = vmatprep.subr.bf16.mxu0 0
    %11240 = vmatpush2.bf16.msra.mxu0 0
    %11241 = vmatprep.subr.bf16.mxu0 0
    %11242 = vmatpush2.bf16.msra.mxu0 0
    %11243 = vmatprep.subr.bf16.mxu0 0
    %11244 = vmatpush2.bf16.msra.mxu0 0
    %11245 = vmatprep.subr.bf16.mxu0 0
    %11246 = vmatpush2.bf16.msra.mxu0 0
    %11247 = vmatprep.subr.bf16.mxu0 0
    %11248 = vmatpush2.bf16.msra.mxu0 0
    %11249 = vmatprep.subr.bf16.mxu0 0
    %11250 = vmatpush2.bf16.msra.mxu0 0
    %11251 = vmatprep.mubr.bf16.mxu0 0
    %11252 = vmatmul.mubr.bf16.gmra.mxu0 %v11151
    %v11253 = vpop.f32.mrf.mxu0
    %v11254 = vadd.f32 0.0, %v11253
    %v11255 = vpop.f32.mrf.mxu0
    %v11256 = vpop.f32.mrf.mxu0
    %v11257 = vadd.f32 0.0, %v11256
    %v11258 = vpop.f32.mrf.mxu0
    %11259 = vmatprep.mubr.bf16.mxu0 0
    %11260 = vmatmul.mubr.bf16.gmra.mxu0 %v11152
    %v11261 = vpop.f32.mrf.mxu0
    %v11262 = vadd.f32 0.0, %v11261
    %v11263 = vpop.f32.mrf.mxu0
    %v11264 = vpop.f32.mrf.mxu0
    %v11265 = vadd.f32 0.0, %v11264
    %v11266 = vpop.f32.mrf.mxu0
    %11267 = vmatprep.mubr.bf16.mxu0 0
    %11268 = vmatmul.mubr.bf16.gmra.mxu0 %v11153
    %v11269 = vpop.f32.mrf.mxu0
    %v11270 = vadd.f32 0.0, %v11269
    %v11271 = vpop.f32.mrf.mxu0
    %v11272 = vpop.f32.mrf.mxu0
    %v11273 = vadd.f32 0.0, %v11272
    %v11274 = vpop.f32.mrf.mxu0
    %11275 = vmatprep.mubr.bf16.mxu0 0
    %11276 = vmatmul.mubr.bf16.gmra.mxu0 %v11154
    %v11277 = vpop.f32.mrf.mxu0
    %v11278 = vadd.f32 0.0, %v11277
    %v11279 = vpop.f32.mrf.mxu0
    %v11280 = vpop.f32.mrf.mxu0
    %v11281 = vadd.f32 0.0, %v11280
    %v11282 = vpop.f32.mrf.mxu0
    %11283 = vdwg.mxu0
    %v11284 = vpack.c.bf16 %v252, %v251
    %v11285 = vpack.c.bf16 %v254, %v253
    %v11286 = vpack.c.bf16 %v256, %v255
    %v11287 = vpack.c.bf16 %v258, %v257
    %v11288 = vld [vmem:[#allocation20] sm:$0xf]
    %v11289 = vld [vmem:[#allocation20 + $0x4] sm:$0xf]
    %v11290 = vld [vmem:[#allocation20 + $0x8] sm:$0xf]
    %v11291 = vld [vmem:[#allocation20 + $0xc] sm:$0xf]
    %v11292 = vld [vmem:[#allocation20 + $0x10] sm:$0xf]
    %v11293 = vld [vmem:[#allocation20 + $0x14] sm:$0xf]
    %v11294 = vld [vmem:[#allocation20 + $0x18] sm:$0xf]
    %v11295 = vld [vmem:[#allocation20 + $0x1c] sm:$0xf]
    %v11296 = vld [vmem:[#allocation20 + $0x20] sm:$0xf]
    %v11297 = vld [vmem:[#allocation20 + $0x24] sm:$0xf]
    %v11298 = vld [vmem:[#allocation20 + $0x28] sm:$0xf]
    %v11299 = vld [vmem:[#allocation20 + $0x2c] sm:$0xf]
    %v11300 = vld [vmem:[#allocation20 + $0x30] sm:$0xf]
    %v11301 = vld [vmem:[#allocation20 + $0x34] sm:$0xf]
    %v11302 = vld [vmem:[#allocation20 + $0x38] sm:$0xf]
    %v11303 = vld [vmem:[#allocation20 + $0x3c] sm:$0xf]
    %v11304 = vld [vmem:[%s18] sm:$0x1]
    %v11306 = vlaneseq
    %v11307 = vshrl.u32 %v11306, 7
    %v11308 = vsub.s32 0, %v11307
    %v11309 = vrot.slane %v11304, %v11308
    %v11327 = vunpack.c.l.b16 %v11288
    %v11328 = vunpack.c.l.b16 %v11289
    %v11329 = vunpack.c.l.b16 %v11290
    %v11330 = vunpack.c.l.b16 %v11291
    %v11331 = vunpack.c.l.b16 %v11292
    %v11332 = vunpack.c.l.b16 %v11293
    %v11333 = vunpack.c.l.b16 %v11294
    %v11334 = vunpack.c.l.b16 %v11295
    %v11335 = vunpack.c.l.b16 %v11296
    %v11336 = vunpack.c.l.b16 %v11297
    %v11337 = vunpack.c.l.b16 %v11298
    %v11338 = vunpack.c.l.b16 %v11299
    %v11339 = vunpack.c.l.b16 %v11300
    %v11340 = vunpack.c.l.b16 %v11301
    %v11341 = vunpack.c.l.b16 %v11302
    %v11342 = vunpack.c.l.b16 %v11303
    %v11343 = vpack.c.b16 %v11328, %v11327
    %v11344 = vpack.c.b16 %v11330, %v11329
    %v11345 = vpack.c.b16 %v11332, %v11331
    %v11346 = vpack.c.b16 %v11334, %v11333
    %v11347 = vpack.c.b16 %v11336, %v11335
    %v11348 = vpack.c.b16 %v11338, %v11337
    %v11349 = vpack.c.b16 %v11340, %v11339
    %v11350 = vpack.c.b16 %v11342, %v11341
    %11359 = vmatprep.subr.bf16.mxu0 0
    %11360 = vmatpush1.bf16.msra.mxu0 %v11350
    %11361 = vmatprep.subr.bf16.mxu0 0
    %11362 = vmatpush1.bf16.msra.mxu0 %v11349
    %11363 = vmatprep.subr.bf16.mxu0 0
    %11364 = vmatpush1.bf16.msra.mxu0 %v11348
    %11365 = vmatprep.subr.bf16.mxu0 0
    %11366 = vmatpush1.bf16.msra.mxu0 %v11347
    %11367 = vmatprep.subr.bf16.mxu0 0
    %11368 = vmatpush1.bf16.msra.mxu0 %v11346
    %11369 = vmatprep.subr.bf16.mxu0 0
    %11370 = vmatpush1.bf16.msra.mxu0 %v11345
    %11371 = vmatprep.subr.bf16.mxu0 0
    %11372 = vmatpush1.bf16.msra.mxu0 %v11344
    %11373 = vmatprep.subr.bf16.mxu0 0
    %11374 = vmatpush1.bf16.msra.mxu0 %v11343
    %11375 = vmatprep.subr.bf16.mxu0 0
    %11376 = vmatpush2.bf16.msra.mxu0 0
    %11377 = vmatprep.subr.bf16.mxu0 0
    %11378 = vmatpush2.bf16.msra.mxu0 0
    %11379 = vmatprep.subr.bf16.mxu0 0
    %11380 = vmatpush2.bf16.msra.mxu0 0
    %11381 = vmatprep.subr.bf16.mxu0 0
    %11382 = vmatpush2.bf16.msra.mxu0 0
    %11383 = vmatprep.subr.bf16.mxu0 0
    %11384 = vmatpush2.bf16.msra.mxu0 0
    %11385 = vmatprep.subr.bf16.mxu0 0
    %11386 = vmatpush2.bf16.msra.mxu0 0
    %11387 = vmatprep.subr.bf16.mxu0 0
    %11388 = vmatpush2.bf16.msra.mxu0 0
    %11389 = vmatprep.subr.bf16.mxu0 0
    %11390 = vmatpush2.bf16.msra.mxu0 0
    %11391 = vmatprep.mubr.bf16.mxu0 0
    %11392 = vmatmul.mubr.bf16.gmra.mxu0 %v11284
    %v11393 = vpop.f32.mrf.mxu0
    %v11394 = vadd.f32 %v11309, %v11393
    %v11395 = vpop.f32.mrf.mxu0
    %v11396 = vpop.f32.mrf.mxu0
    %v11397 = vadd.f32 %v11309, %v11396
    %v11398 = vpop.f32.mrf.mxu0
    %11399 = vmatprep.mubr.bf16.mxu0 0
    %11400 = vmatmul.mubr.bf16.gmra.mxu0 %v11285
    %v11401 = vpop.f32.mrf.mxu0
    %v11402 = vadd.f32 %v11309, %v11401
    %v11403 = vpop.f32.mrf.mxu0
    %v11404 = vpop.f32.mrf.mxu0
    %v11405 = vadd.f32 %v11309, %v11404
    %v11406 = vpop.f32.mrf.mxu0
    %11407 = vmatprep.mubr.bf16.mxu0 0
    %11408 = vmatmul.mubr.bf16.gmra.mxu0 %v11286
    %v11409 = vpop.f32.mrf.mxu0
    %v11410 = vadd.f32 %v11309, %v11409
    %v11411 = vpop.f32.mrf.mxu0
    %v11412 = vpop.f32.mrf.mxu0
    %v11413 = vadd.f32 %v11309, %v11412
    %v11414 = vpop.f32.mrf.mxu0
    %11415 = vmatprep.mubr.bf16.mxu0 0
    %11416 = vmatmul.mubr.bf16.gmra.mxu0 %v11287
    %v11417 = vpop.f32.mrf.mxu0
    %v11418 = vadd.f32 %v11309, %v11417
    %v11419 = vpop.f32.mrf.mxu0
    %v11420 = vpop.f32.mrf.mxu0
    %v11421 = vadd.f32 %v11309, %v11420
    %v11422 = vpop.f32.mrf.mxu0
    %11423 = vdwg.mxu0
    %v11424 = vxor.u32 %v11394, 2147483648
    %v11425 = vxor.u32 %v11397, 2147483648
    %v11426 = vxor.u32 %v11402, 2147483648
    %v11427 = vxor.u32 %v11405, 2147483648
    %v11428 = vxor.u32 %v11410, 2147483648
    %v11429 = vxor.u32 %v11413, 2147483648
    %v11430 = vxor.u32 %v11418, 2147483648
    %v11431 = vxor.u32 %v11421, 2147483648
    %v11432 = vmul.f32 %v11424, 1.442695
    %v11433 = vpow.pop %v11432
    %v11434 = vmul.f32 %v11425, 1.442695
    %v11435 = vpow.pop %v11434
    %v11436 = vmul.f32 %v11426, 1.442695
    %v11437 = vpow.pop %v11436
    %v11438 = vmul.f32 %v11427, 1.442695
    %v11439 = vpow.pop %v11438
    %v11440 = vmul.f32 %v11428, 1.442695
    %v11441 = vpow.pop %v11440
    %v11442 = vmul.f32 %v11429, 1.442695
    %v11443 = vpow.pop %v11442
    %v11444 = vmul.f32 %v11430, 1.442695
    %v11445 = vpow.pop %v11444
    %v11446 = vmul.f32 %v11431, 1.442695
    %v11447 = vpow.pop %v11446
    %v11448 = vadd.f32 %v11433, 1.0
    %v11449 = vadd.f32 %v11435, 1.0
    %v11450 = vadd.f32 %v11437, 1.0
    %v11451 = vadd.f32 %v11439, 1.0
    %v11452 = vadd.f32 %v11441, 1.0
    %v11453 = vadd.f32 %v11443, 1.0
    %v11454 = vadd.f32 %v11445, 1.0
    %v11455 = vadd.f32 %v11447, 1.0
    %v11456 = vrcp.pop %v11448
    %v11457 = vmul.f32 1.0, %v11456
    %v11458 = vrcp.pop %v11449
    %v11459 = vmul.f32 1.0, %v11458
    %v11460 = vrcp.pop %v11450
    %v11461 = vmul.f32 1.0, %v11460
    %v11462 = vrcp.pop %v11451
    %v11463 = vmul.f32 1.0, %v11462
    %v11464 = vrcp.pop %v11452
    %v11465 = vmul.f32 1.0, %v11464
    %v11466 = vrcp.pop %v11453
    %v11467 = vmul.f32 1.0, %v11466
    %v11468 = vrcp.pop %v11454
    %v11469 = vmul.f32 1.0, %v11468
    %v11470 = vrcp.pop %v11455
    %v11471 = vmul.f32 1.0, %v11470
    %v11472 = vmul.f32 %v11457, %v11254
    %v11473 = vmul.f32 %v11459, %v11257
    %v11474 = vmul.f32 %v11461, %v11262
    %v11475 = vmul.f32 %v11463, %v11265
    %v11476 = vmul.f32 %v11465, %v11270
    %v11477 = vmul.f32 %v11467, %v11273
    %v11478 = vmul.f32 %v11469, %v11278
    %v11479 = vmul.f32 %v11471, %v11281
    %11480 = vst [vmem:[#allocation22] sm:$0xff] %v11472
    %11481 = vst [vmem:[#allocation22 + $0x8] sm:$0xff] %v11473
    %11482 = vst [vmem:[#allocation22 + $0x10] sm:$0xff] %v11474
    %11483 = vst [vmem:[#allocation22 + $0x18] sm:$0xff] %v11475
    %11484 = vst [vmem:[#allocation22 + $0x20] sm:$0xff] %v11476
    %11485 = vst [vmem:[#allocation22 + $0x28] sm:$0xff] %v11477
    %11486 = vst [vmem:[#allocation22 + $0x30] sm:$0xff] %v11478
    %11487 = vst [vmem:[#allocation22 + $0x38] sm:$0xff] %v11479
    // Predicated region
    $region126: #{tpu_custom_call.1} parent=1 // pred_check
      _
    $region127: #{tpu_custom_call.1} parent=1 // pred_check_branch
      %11489 = sbr.rel (0) target = $region129
    $region128: #{tpu_custom_call.1} parent=1 // pred_region
      %s11491 = ssub.s32 1024, 1024
      %11492 = vsyncadd [#allocation4], %s11491
      %s11493 = sshll.u32 [#allocation22], 4
      %s11494 = int_to_ptr.vmem [resolvable:$true] %s11493
      %11499 = dma.vmem_to_hbm [thread:$0]  %s11494, 1024, %s19, [#allocation4], 128, 128, 8
    $region129: #{tpu_custom_call.1} parent=1 // pred_fallthru
      _
    // Predicated region
    $region130: #{tpu_custom_call.1} parent=1 // pred_check
      _
    $region131: #{tpu_custom_call.1} parent=1 // pred_check_branch
      %11501 = sbr.rel (0) target = $region133
    $region132: #{tpu_custom_call.1} parent=1 // pred_region
      %11502 = dma.done [#allocation4], 1024
    $region133: #{tpu_custom_call.1} parent=1 // pred_fallthru
      _
    %11503 = vsyncpa [#allocation3], 1
    %11504 = vsyncpa [#allocation6], 1
    %11505 = vsyncpa [#allocation9], 1
    %11506 = vsyncpa [#allocation12], 1
    %11507 = vsyncpa [#allocation15], 1
    %11508 = vsyncpa [#allocation18], 1
    %11509 = vsyncpa [#allocation21], 1
    %11510 = vsyncpa [#allocation4], 1

</llo_original>
